<compile_context>
chip_gen: v7x
topology: tpu7x:2x2x1
jax: 0.10.0
libtpu: 0.0.40
codegen_flags: <defaults>
</compile_context>

<pallas_src>
import functools
import math

import jax
import jax.numpy as jnp
from jax.experimental import pallas as pl
from jax.experimental.pallas import tpu as pltpu


def _cdiv(a, b):
    return -(-a // b)


# ----------------------------- in-kernel math -------------------------------
def _erf(x):
    # Abramowitz & Stegun 7.1.26 (|err| < 1.5e-7); exp() runs on the EUP.
    p = 0.3275911
    a1, a2, a3, a4, a5 = (0.254829592, -0.284496736, 1.421413741,
                          -1.453152027, 1.061405429)
    sign = jnp.where(x >= 0.0, 1.0, -1.0)
    ax = jnp.abs(x)
    t = 1.0 / (1.0 + p * ax)
    poly = ((((a5 * t + a4) * t + a3) * t + a2) * t + a1) * t
    return sign * (1.0 - poly * jnp.exp(-ax * ax))


def _gelu(x):
    # Exact (erf-based) GELU == torch.nn.GELU(approximate='none') to ~1e-7.
    return 0.5 * x * (1.0 + _erf(x * 0.7071067811865476))


# ------------------- fused Conv2d + BatchNorm + GELU kernel ------------------
def _conv_kernel(xm_ref, xh_ref, wt_ref, b_ref, o_ref, xs_ref, slab_ref, *,
                 kh_sz, kw_sz, wp, tr, halo, cin_p):
    """One row tile of a stride-1 conv, channel-major, output-stationary.

    xm_ref : (1, cin_p, tr*wp)      bf16  main rows of the padded input (flat)
    xh_ref : (1, cin_p, halo*wp)    bf16  halo rows below the main slab
    wt_ref : (cout_p, K)            bf16  K = kh*kw*cin_p, BN scale folded in
    b_ref  : (cout_p, 1)            f32   per-channel shift (beta - mean*scale)
    o_ref  : (1, cout_p, tr*wp)     bf16
    xs_ref : (cin_p, (tr+halo)*wp + 128)  bf16 scratch (staged slab + halo)
    slab_ref: (K, tr*wp)            bf16 scratch (im2col, taps in sublanes)
    """
    m = tr * wp

    # Stage main rows + halo contiguously (single aligned copy each); zero the
    # tiny overhang so no stale VMEM ever reaches the MXU / exp.
    xs_ref[:, :m] = xm_ref[0]
    xs_ref[:, m:m + halo * wp] = xh_ref[0]
    xs_ref[:, m + halo * wp:] = jnp.zeros((cin_p, 128), xs_ref.dtype)

    # Build the (K, M) im2col slab: tap group (kh, kw) is a contiguous,
    # sublane-aligned block of cin_p rows; the source is a contiguous lane
    # slice of xs at static offset kh*wp + kw (wrapped columns only ever feed
    # garbage output columns, which are sliced off in the wrapper).
    for kh in range(kh_sz):
        for kw in range(kw_sz):
            g = kh * kw_sz + kw
            off = kh * wp + kw
            slab_ref[g * cin_p:(g + 1) * cin_p, :] = xs_ref[:, off:off + m]

    # Single fused MXU contraction, f32 accumulation.
    acc = jnp.dot(wt_ref[...], slab_ref[...],
                  preferred_element_type=jnp.float32)

    # BN shift + exact GELU epilogue, lane-dense (M in lanes), bf16 store.
    y = _gelu(acc + b_ref[...])
    o_ref[0] = y.astype(o_ref.dtype)


def _conv_stride1(x, w, shift, ph=0, pw=0):
    """Fused stride-1 Conv2d (bias-free) + shift + GELU as one Pallas call.

    x: (N, Cin, H0, W0) (any float dtype); w: (KH, KW, Cin, Cout) f32 with the
    BN scale folded in; shift: (Cout,) f32; ph/pw: the conv's own zero padding.
    Returns (N, Cout, OH, OW) bf16.
    """
    n, cin, h0, w0 = x.shape
    kh_sz, kw_sz, _, cout = w.shape
    hin = h0 + 2 * ph
    win = w0 + 2 * pw
    oh = hin - kh_sz + 1
    ow = win - kw_sz + 1

    cin_p = _cdiv(max(cin, 1), 16) * 16          # bf16 sublane tile
    cout_p = _cdiv(max(cout, 1), 16) * 16
    wp = _cdiv(win, 128) * 128                   # lane-aligned padded width
    k_dim = kh_sz * kw_sz * cin_p

    # Row tile: as big as the ~4 MiB im2col-slab budget allows (amortizes the
    # ~0.35us grid-step overhead) while keeping the whole working set inside
    # even v5e's 16 MiB / v7x's 32 MiB scoped-VMEM defaults.
    max_m = min(4 * 1024 * 1024 // (2 * k_dim), 8192)
    tr = max(8, (max_m // wp) // 8 * 8)
    tr = min(tr, _cdiv(oh, 8) * 8)
    n_tiles = _cdiv(oh, tr)
    oh_pad = n_tiles * tr
    m = tr * wp

    halo = max(1, kh_sz - 1)
    if tr % halo != 0:
        halo = 8
    hpp = oh_pad + halo                          # >= hin by construction

    # Single pad per layer: channel pad to cin_p, conv pad, tile/halo pad.
    xpad = jnp.pad(x.astype(jnp.bfloat16),
                   ((0, 0), (0, cin_p - cin),
                    (ph, hpp - h0 - ph), (pw, wp - w0 - pw)))
    xf = xpad.reshape(n, cin_p, hpp * wp)

    wt = jnp.pad(w, ((0, 0), (0, 0), (0, cin_p - cin), (0, cout_p - cout)))
    wt = wt.reshape(k_dim, cout_p).T.astype(jnp.bfloat16)       # (Cout_p, K)
    bt = jnp.pad(shift, (0, cout_p - cout)).reshape(cout_p, 1)
    bt = bt.astype(jnp.float32)

    cost = pl.CostEstimate(
        flops=2 * n * oh_pad * wp * k_dim * cout_p,
        transcendentals=n * oh_pad * wp * cout_p,
        bytes_accessed=(n * cin_p * hpp * wp * 2 + k_dim * cout_p * 2
                        + n * cout_p * oh_pad * wp * 2))

    kern = functools.partial(_conv_kernel, kh_sz=kh_sz, kw_sz=kw_sz, wp=wp,
                             tr=tr, halo=halo, cin_p=cin_p)
    out = pl.pallas_call(
        kern,
        out_shape=jax.ShapeDtypeStruct((n, cout_p, oh_pad * wp), jnp.bfloat16),
        grid_spec=pltpu.PrefetchScalarGridSpec(
            num_scalar_prefetch=0,
            grid=(n, n_tiles),
            in_specs=[
                pl.BlockSpec((1, cin_p, m), lambda b, i: (b, 0, i)),
                pl.BlockSpec((1, cin_p, halo * wp),
                             lambda b, i: (b, 0, (i + 1) * (tr // halo))),
                pl.BlockSpec((cout_p, k_dim), lambda b, i: (0, 0)),
                pl.BlockSpec((cout_p, 1), lambda b, i: (0, 0)),
            ],
            out_specs=pl.BlockSpec((1, cout_p, m), lambda b, i: (b, 0, i)),
            scratch_shapes=[
                pltpu.VMEM((cin_p, (tr + halo) * wp + 128), jnp.bfloat16),
                pltpu.VMEM((k_dim, m), jnp.bfloat16),
            ],
        ),
        compiler_params=pltpu.CompilerParams(
            dimension_semantics=("parallel", "parallel"),
            vmem_limit_bytes=32 * 1024 * 1024),
        cost_estimate=cost,
    )(xf, xf, wt, bt)

    out = out.reshape(n, cout_p, oh_pad, wp)[:, :cout, :oh, :ow]
    return out


def conv_bn_gelu(x, layer):
    """Conv2d (bias-free) + folded eval-mode BatchNorm + GELU; x is NCHW."""
    w = layer["w"] * layer["scale"]        # fold BN scale into output channels
    shift = layer["shift"]
    sh, sw = layer["stride"]
    ph, pw = layer["pad"]
    k = layer["w"].shape[0]
    cin = layer["w"].shape[2]
    cout = layer["w"].shape[3]

    if sh == 1 and sw == 1:
        return _conv_stride1(x, w, shift, ph, pw)

    # Strided conv -> exact stride-1 conv on a space-to-depth input:
    #   y[oh,ow] = sum_{qh,qw,ci,rh,rw} wq[qh,qw,(ci,rh,rw)]
    #              * xq[(ci,rh,rw), oh+qh, ow+qw]
    n = x.shape[0]
    xp = jnp.pad(x, ((0, 0), (0, 0), (ph, ph), (pw, pw)))
    hp, wp_ = xp.shape[2], xp.shape[3]
    oh = (hp - k) // sh + 1
    ow = (wp_ - k) // sw + 1
    khq = _cdiv(k, sh)
    kwq = _cdiv(k, sw)
    hq = oh + khq - 1
    wq = ow + kwq - 1
    # Crop/pad to exactly (sh*hq, sw*wq): cropped rows/cols are never read by
    # valid outputs; appended zeros are hit only by zero-weight taps.
    xp = xp[:, :, :min(hp, sh * hq), :min(wp_, sw * wq)]
    xp = jnp.pad(xp, ((0, 0), (0, 0), (0, sh * hq - xp.shape[2]),
                      (0, sw * wq - xp.shape[3])))
    xq = xp.reshape(n, cin, hq, sh, wq, sw)
    xq = xq.transpose(0, 1, 3, 5, 2, 4).reshape(n, cin * sh * sw, hq, wq)

    wpd = jnp.pad(w, ((0, sh * khq - k), (0, sw * kwq - k), (0, 0), (0, 0)))
    wq_ = wpd.reshape(khq, sh, kwq, sw, cin, cout)
    wq_ = wq_.transpose(0, 2, 4, 1, 3, 5).reshape(khq, kwq, cin * sh * sw,
                                                  cout)
    return _conv_stride1(xq, wq_, shift, 0, 0)


# ------------------------------- dense head ----------------------------------
def _head_kernel(x_ref, w1_ref, b1_ref, w2_ref, b2_ref, o_ref):
    h = jnp.dot(x_ref[...], w1_ref[...],
                preferred_element_type=jnp.float32) + b1_ref[...]
    h = _gelu(h)
    y = jnp.dot(h, w2_ref[...], preferred_element_type=jnp.float32) + b2_ref[...]
    o_ref[...] = y.astype(o_ref.dtype)


def dense_head(x, w1, b1, w2, b2):
    """hidden Linear + GELU + linOut Linear fused into one tiny Pallas call."""
    n, f = x.shape
    hf = w1.shape[1]
    return pl.pallas_call(
        _head_kernel,
        out_shape=jax.ShapeDtypeStruct((n, 1), jnp.float32),
        grid_spec=pltpu.PrefetchScalarGridSpec(
            num_scalar_prefetch=0,
            grid=(1,),
            in_specs=[
                pl.BlockSpec((n, f), lambda i: (0, 0)),
                pl.BlockSpec((f, hf), lambda i: (0, 0)),
                pl.BlockSpec((1, hf), lambda i: (0, 0)),
                pl.BlockSpec((hf, 1), lambda i: (0, 0)),
                pl.BlockSpec((1, 1), lambda i: (0, 0)),
            ],
            out_specs=pl.BlockSpec((n, 1), lambda i: (0, 0)),
        ),
    )(x, w1, b1.reshape(1, hf), w2, b2.reshape(1, 1))


# --------------------------- model construction ------------------------------
def conv2d_shape(w, h, k, s_w, s_h, p_w, p_h):
    return (w + 2 * p_w - k) // s_w + 1, (h + 2 * p_h - k) // s_h + 1, None


def init_pvi_cnn(key, img_size, size_threshold, kernel, features,
                 interp_depth, hidden_features):
    c, h, w = img_size
    h_lim, w_lim = size_threshold
    eps = 1e-5
    layers = []

    def conv_w(kk, cin, cout):
        fan_in = kernel * kernel * cin
        return jax.random.normal(kk, (kernel, kernel, cin, cout),
                                 jnp.float32) / math.sqrt(fan_in)

    def bn_affine(kk):
        # batchnorm_onlybias=True -> gamma fixed at 1; beta learned (eval fold)
        k1, k2, k3 = jax.random.split(kk, 3)
        gamma = jnp.ones((features,), jnp.float32)
        beta = 0.1 * jax.random.normal(k1, (features,), jnp.float32)
        r_mean = 0.1 * jax.random.normal(k2, (features,), jnp.float32)
        r_var = 1.0 + 0.1 * jax.random.uniform(k3, (features,), jnp.float32)
        scale = gamma / jnp.sqrt(r_var + eps)
        shift = beta - r_mean * scale
        return scale, shift

    keys = iter(jax.random.split(key, 4 * (interp_depth + 16)))
    pad_same = kernel // 2  # 'same' for odd kernel, stride 1

    # ---- CNN_Interpretability_Module: interp_depth x (conv + BN + GELU) ----
    cin = c
    for _ in range(interp_depth):
        s, b = bn_affine(next(keys))
        layers.append(dict(w=conv_w(next(keys), cin, features), scale=s,
                           shift=b, stride=(1, 1), pad=(pad_same, pad_same)))
        cin = features

    # ---- CNN_Reduction_Module ----
    stride = 2
    s, b = bn_affine(next(keys))
    layers.append(dict(w=conv_w(next(keys), features, features), scale=s,
                       shift=b, stride=(stride, stride), pad=(stride, stride)))
    W, H, _ = conv2d_shape(w, h, kernel, stride, stride, stride, stride)
    while W > w_lim or H > h_lim:
        w_str = stride if W > w_lim else 1
        h_str = stride if H > h_lim else 1
        w_pad, h_pad = 2 * w_str, 2 * h_str
        s, b = bn_affine(next(keys))
        layers.append(dict(w=conv_w(next(keys), features, features), scale=s,
                           shift=b, stride=(h_str, w_str), pad=(h_pad, w_pad)))
        W, H, _ = conv2d_shape(W, H, kernel, w_str, h_str, w_pad, h_pad)
    final_w, final_h = W, H

    # ---- endConv (stride 1, 'same', bias-free, no BatchNorm) + GELU ----
    layers.append(dict(w=conv_w(next(keys), features, features),
                       scale=jnp.ones((features,), jnp.float32),
                       shift=jnp.zeros((features,), jnp.float32),
                       stride=(1, 1), pad=(pad_same, pad_same)))

    # ---- dense head ----
    flat = final_h * final_w * features
    k1, k2, k3, k4 = jax.random.split(next(keys), 4)
    hidden_w = (jax.random.normal(k1, (flat, hidden_features), jnp.float32)
                / math.sqrt(flat))
    hidden_b = 0.1 * jax.random.normal(k2, (hidden_features,), jnp.float32)
    out_w = (jax.random.normal(k3, (hidden_features, 1), jnp.float32)
             / math.sqrt(hidden_features))
    out_b = 0.1 * jax.random.normal(k4, (1,), jnp.float32)

    return dict(layers=layers, hidden_w=hidden_w, hidden_b=hidden_b,
                out_w=out_w, out_b=out_b, final_h=final_h, final_w=final_w)


def pvi_cnn_forward(params, x_nchw):
    """Forward pass. Input is NCHW (torch convention); output is (N, 1) f32."""
    x = x_nchw.astype(jnp.bfloat16)            # channel-major throughout
    for lyr in params["layers"]:
        x = conv_bn_gelu(x, lyr)
    n = x.shape[0]
    # NCHW flatten order == torch.flatten(x, start_dim=1)
    xf = x.reshape(n, -1).astype(jnp.float32)
    return dense_head(xf, params["hidden_w"], params["hidden_b"],
                      params["out_w"], params["out_b"])


if __name__ == "__main__":
    key = jax.random.PRNGKey(0)
    kp, kx = jax.random.split(key)

    img_size = (1, 24, 24)          # (C, H, W), small analogue of (1,1700,500)
    params = init_pvi_cnn(kp, img_size=img_size, size_threshold=(8, 8),
                          kernel=5, features=4, interp_depth=3,
                          hidden_features=16)

    x = jax.random.normal(kx, (2,) + img_size, jnp.float32)  # NCHW input
    y = pvi_cnn_forward(params, x)
    y = jax.block_until_ready(y)
    assert y.shape == (2, 1) and y.dtype == jnp.float32
    print("KERNEL_OK")
</pallas_src>

<mosaic_0001>
module attributes {stable_mosaic.version = 11 : i64} {
  func.func @_conv_kernel(%arg0: i32, %arg1: i32, %arg2: memref<1x16x3072xbf16, #tpu.memory_space<vmem>>, %arg3: memref<1x16x512xbf16, #tpu.memory_space<vmem>>, %arg4: memref<16x400xbf16, #tpu.memory_space<vmem>>, %arg5: memref<16x1xf32, #tpu.memory_space<vmem>>, %arg6: memref<1x16x3072xbf16, #tpu.memory_space<vmem>>, %arg7: memref<16x3712xbf16, #tpu.memory_space<vmem>>, %arg8: memref<400x3072xbf16, #tpu.memory_space<vmem>>) attributes {dimension_semantics = [#tpu.dimension_semantics<parallel>, #tpu.dimension_semantics<parallel>], iteration_bounds = array<i64: 2, 1>, scalar_prefetch = 0 : i64, scratch_operands = 2 : i64, tpu.core_type = #tpu.core_type<tc>, window_params = [{transform_indices = @transform_0, window_bounds = array<i64: 1, 16, 3072>}, {transform_indices = @transform_1, window_bounds = array<i64: 1, 16, 512>}, {pipeline_mode = #tpu.pipeline_mode<synchronous>, transform_indices = @transform_2, window_bounds = array<i64: 16, 400>}, {pipeline_mode = #tpu.pipeline_mode<synchronous>, transform_indices = @transform_3, window_bounds = array<i64: 16, 1>}, {transform_indices = @transform_4, window_bounds = array<i64: 1, 16, 3072>}]} {
    %c0 = arith.constant 0 : index
    %c0_0 = arith.constant 0 : index
    %c0_1 = arith.constant 0 : index
    %0 = vector.load %arg2[%c0, %c0_0, %c0_1] : memref<1x16x3072xbf16, #tpu.memory_space<vmem>>, vector<1x16x3072xbf16>
    %1 = vector.shape_cast %0 : vector<1x16x3072xbf16> to vector<16x3072xbf16>
    %c0_2 = arith.constant 0 : index
    %c0_3 = arith.constant 0 : index
    %2 = vector.load %arg7[%c0_2, %c0_3] : memref<16x3712xbf16, #tpu.memory_space<vmem>>, vector<16x3072xbf16>
    tpu.vector_store %arg7[%c0_2, %c0_3], %1 {strides = array<i32>} : memref<16x3712xbf16, #tpu.memory_space<vmem>>, vector<16x3072xbf16>,
    %c0_4 = arith.constant 0 : index
    %c0_5 = arith.constant 0 : index
    %c0_6 = arith.constant 0 : index
    %3 = vector.load %arg3[%c0_4, %c0_5, %c0_6] : memref<1x16x512xbf16, #tpu.memory_space<vmem>>, vector<1x16x512xbf16>
    %4 = vector.shape_cast %3 : vector<1x16x512xbf16> to vector<16x512xbf16>
    %c0_7 = arith.constant 0 : index
    %c3072 = arith.constant 3072 : index
    %5 = vector.load %arg7[%c0_7, %c3072] : memref<16x3712xbf16, #tpu.memory_space<vmem>>, vector<16x512xbf16>
    tpu.vector_store %arg7[%c0_7, %c3072], %4 {strides = array<i32>} : memref<16x3712xbf16, #tpu.memory_space<vmem>>, vector<16x512xbf16>,
    %cst = arith.constant 0.000000e+00 : bf16
    %6 = vector.broadcast %cst : bf16 to vector<16x128xbf16>
    %c0_8 = arith.constant 0 : index
    %c3584 = arith.constant 3584 : index
    %7 = vector.load %arg7[%c0_8, %c3584] : memref<16x3712xbf16, #tpu.memory_space<vmem>>, vector<16x128xbf16>
    tpu.vector_store %arg7[%c0_8, %c3584], %6 {strides = array<i32>} : memref<16x3712xbf16, #tpu.memory_space<vmem>>, vector<16x128xbf16>,
    %c0_9 = arith.constant 0 : index
    %c0_10 = arith.constant 0 : index
    %8 = vector.load %arg7[%c0_9, %c0_10] : memref<16x3712xbf16, #tpu.memory_space<vmem>>, vector<16x3072xbf16>
    %c0_11 = arith.constant 0 : index
    %c0_12 = arith.constant 0 : index
    %9 = vector.load %arg8[%c0_11, %c0_12] : memref<400x3072xbf16, #tpu.memory_space<vmem>>, vector<16x3072xbf16>
    tpu.vector_store %arg8[%c0_11, %c0_12], %8 {strides = array<i32>} : memref<400x3072xbf16, #tpu.memory_space<vmem>>, vector<16x3072xbf16>,
    %c0_13 = arith.constant 0 : index
    %c1 = arith.constant 1 : index
    %10 = vector.load %arg7[%c0_13, %c1] : memref<16x3712xbf16, #tpu.memory_space<vmem>>, vector<16x3072xbf16>
    %c16 = arith.constant 16 : index
    %c0_14 = arith.constant 0 : index
    %11 = vector.load %arg8[%c16, %c0_14] : memref<400x3072xbf16, #tpu.memory_space<vmem>>, vector<16x3072xbf16>
    tpu.vector_store %arg8[%c16, %c0_14], %10 {strides = array<i32>} : memref<400x3072xbf16, #tpu.memory_space<vmem>>, vector<16x3072xbf16>,
    %c0_15 = arith.constant 0 : index
    %c2 = arith.constant 2 : index
    %12 = vector.load %arg7[%c0_15, %c2] : memref<16x3712xbf16, #tpu.memory_space<vmem>>, vector<16x3072xbf16>
    %c32 = arith.constant 32 : index
    %c0_16 = arith.constant 0 : index
    %13 = vector.load %arg8[%c32, %c0_16] : memref<400x3072xbf16, #tpu.memory_space<vmem>>, vector<16x3072xbf16>
    tpu.vector_store %arg8[%c32, %c0_16], %12 {strides = array<i32>} : memref<400x3072xbf16, #tpu.memory_space<vmem>>, vector<16x3072xbf16>,
    %c0_17 = arith.constant 0 : index
    %c3 = arith.constant 3 : index
    %14 = vector.load %arg7[%c0_17, %c3] : memref<16x3712xbf16, #tpu.memory_space<vmem>>, vector<16x3072xbf16>
    %c48 = arith.constant 48 : index
    %c0_18 = arith.constant 0 : index
    %15 = vector.load %arg8[%c48, %c0_18] : memref<400x3072xbf16, #tpu.memory_space<vmem>>, vector<16x3072xbf16>
    tpu.vector_store %arg8[%c48, %c0_18], %14 {strides = array<i32>} : memref<400x3072xbf16, #tpu.memory_space<vmem>>, vector<16x3072xbf16>,
    %c0_19 = arith.constant 0 : index
    %c4 = arith.constant 4 : index
    %16 = vector.load %arg7[%c0_19, %c4] : memref<16x3712xbf16, #tpu.memory_space<vmem>>, vector<16x3072xbf16>
    %c64 = arith.constant 64 : index
    %c0_20 = arith.constant 0 : index
    %17 = vector.load %arg8[%c64, %c0_20] : memref<400x3072xbf16, #tpu.memory_space<vmem>>, vector<16x3072xbf16>
    tpu.vector_store %arg8[%c64, %c0_20], %16 {strides = array<i32>} : memref<400x3072xbf16, #tpu.memory_space<vmem>>, vector<16x3072xbf16>,
    %c0_21 = arith.constant 0 : index
    %c128 = arith.constant 128 : index
    %18 = vector.load %arg7[%c0_21, %c128] : memref<16x3712xbf16, #tpu.memory_space<vmem>>, vector<16x3072xbf16>
    %c80 = arith.constant 80 : index
    %c0_22 = arith.constant 0 : index
    %19 = vector.load %arg8[%c80, %c0_22] : memref<400x3072xbf16, #tpu.memory_space<vmem>>, vector<16x3072xbf16>
    tpu.vector_store %arg8[%c80, %c0_22], %18 {strides = array<i32>} : memref<400x3072xbf16, #tpu.memory_space<vmem>>, vector<16x3072xbf16>,
    %c0_23 = arith.constant 0 : index
    %c129 = arith.constant 129 : index
    %20 = vector.load %arg7[%c0_23, %c129] : memref<16x3712xbf16, #tpu.memory_space<vmem>>, vector<16x3072xbf16>
    %c96 = arith.constant 96 : index
    %c0_24 = arith.constant 0 : index
    %21 = vector.load %arg8[%c96, %c0_24] : memref<400x3072xbf16, #tpu.memory_space<vmem>>, vector<16x3072xbf16>
    tpu.vector_store %arg8[%c96, %c0_24], %20 {strides = array<i32>} : memref<400x3072xbf16, #tpu.memory_space<vmem>>, vector<16x3072xbf16>,
    %c0_25 = arith.constant 0 : index
    %c130 = arith.constant 130 : index
    %22 = vector.load %arg7[%c0_25, %c130] : memref<16x3712xbf16, #tpu.memory_space<vmem>>, vector<16x3072xbf16>
    %c112 = arith.constant 112 : index
    %c0_26 = arith.constant 0 : index
    %23 = vector.load %arg8[%c112, %c0_26] : memref<400x3072xbf16, #tpu.memory_space<vmem>>, vector<16x3072xbf16>
    tpu.vector_store %arg8[%c112, %c0_26], %22 {strides = array<i32>} : memref<400x3072xbf16, #tpu.memory_space<vmem>>, vector<16x3072xbf16>,
    %c0_27 = arith.constant 0 : index
    %c131 = arith.constant 131 : index
    %24 = vector.load %arg7[%c0_27, %c131] : memref<16x3712xbf16, #tpu.memory_space<vmem>>, vector<16x3072xbf16>
    %c128_28 = arith.constant 128 : index
    %c0_29 = arith.constant 0 : index
    %25 = vector.load %arg8[%c128_28, %c0_29] : memref<400x3072xbf16, #tpu.memory_space<vmem>>, vector<16x3072xbf16>
    tpu.vector_store %arg8[%c128_28, %c0_29], %24 {strides = array<i32>} : memref<400x3072xbf16, #tpu.memory_space<vmem>>, vector<16x3072xbf16>,
    %c0_30 = arith.constant 0 : index
    %c132 = arith.constant 132 : index
    %26 = vector.load %arg7[%c0_30, %c132] : memref<16x3712xbf16, #tpu.memory_space<vmem>>, vector<16x3072xbf16>
    %c144 = arith.constant 144 : index
    %c0_31 = arith.constant 0 : index
    %27 = vector.load %arg8[%c144, %c0_31] : memref<400x3072xbf16, #tpu.memory_space<vmem>>, vector<16x3072xbf16>
    tpu.vector_store %arg8[%c144, %c0_31], %26 {strides = array<i32>} : memref<400x3072xbf16, #tpu.memory_space<vmem>>, vector<16x3072xbf16>,
    %c0_32 = arith.constant 0 : index
    %c256 = arith.constant 256 : index
    %28 = vector.load %arg7[%c0_32, %c256] : memref<16x3712xbf16, #tpu.memory_space<vmem>>, vector<16x3072xbf16>
    %c160 = arith.constant 160 : index
    %c0_33 = arith.constant 0 : index
    %29 = vector.load %arg8[%c160, %c0_33] : memref<400x3072xbf16, #tpu.memory_space<vmem>>, vector<16x3072xbf16>
    tpu.vector_store %arg8[%c160, %c0_33], %28 {strides = array<i32>} : memref<400x3072xbf16, #tpu.memory_space<vmem>>, vector<16x3072xbf16>,
    %c0_34 = arith.constant 0 : index
    %c257 = arith.constant 257 : index
    %30 = vector.load %arg7[%c0_34, %c257] : memref<16x3712xbf16, #tpu.memory_space<vmem>>, vector<16x3072xbf16>
    %c176 = arith.constant 176 : index
    %c0_35 = arith.constant 0 : index
    %31 = vector.load %arg8[%c176, %c0_35] : memref<400x3072xbf16, #tpu.memory_space<vmem>>, vector<16x3072xbf16>
    tpu.vector_store %arg8[%c176, %c0_35], %30 {strides = array<i32>} : memref<400x3072xbf16, #tpu.memory_space<vmem>>, vector<16x3072xbf16>,
    %c0_36 = arith.constant 0 : index
    %c258 = arith.constant 258 : index
    %32 = vector.load %arg7[%c0_36, %c258] : memref<16x3712xbf16, #tpu.memory_space<vmem>>, vector<16x3072xbf16>
    %c192 = arith.constant 192 : index
    %c0_37 = arith.constant 0 : index
    %33 = vector.load %arg8[%c192, %c0_37] : memref<400x3072xbf16, #tpu.memory_space<vmem>>, vector<16x3072xbf16>
    tpu.vector_store %arg8[%c192, %c0_37], %32 {strides = array<i32>} : memref<400x3072xbf16, #tpu.memory_space<vmem>>, vector<16x3072xbf16>,
    %c0_38 = arith.constant 0 : index
    %c259 = arith.constant 259 : index
    %34 = vector.load %arg7[%c0_38, %c259] : memref<16x3712xbf16, #tpu.memory_space<vmem>>, vector<16x3072xbf16>
    %c208 = arith.constant 208 : index
    %c0_39 = arith.constant 0 : index
    %35 = vector.load %arg8[%c208, %c0_39] : memref<400x3072xbf16, #tpu.memory_space<vmem>>, vector<16x3072xbf16>
    tpu.vector_store %arg8[%c208, %c0_39], %34 {strides = array<i32>} : memref<400x3072xbf16, #tpu.memory_space<vmem>>, vector<16x3072xbf16>,
    %c0_40 = arith.constant 0 : index
    %c260 = arith.constant 260 : index
    %36 = vector.load %arg7[%c0_40, %c260] : memref<16x3712xbf16, #tpu.memory_space<vmem>>, vector<16x3072xbf16>
    %c224 = arith.constant 224 : index
    %c0_41 = arith.constant 0 : index
    %37 = vector.load %arg8[%c224, %c0_41] : memref<400x3072xbf16, #tpu.memory_space<vmem>>, vector<16x3072xbf16>
    tpu.vector_store %arg8[%c224, %c0_41], %36 {strides = array<i32>} : memref<400x3072xbf16, #tpu.memory_space<vmem>>, vector<16x3072xbf16>,
    %c0_42 = arith.constant 0 : index
    %c384 = arith.constant 384 : index
    %38 = vector.load %arg7[%c0_42, %c384] : memref<16x3712xbf16, #tpu.memory_space<vmem>>, vector<16x3072xbf16>
    %c240 = arith.constant 240 : index
    %c0_43 = arith.constant 0 : index
    %39 = vector.load %arg8[%c240, %c0_43] : memref<400x3072xbf16, #tpu.memory_space<vmem>>, vector<16x3072xbf16>
    tpu.vector_store %arg8[%c240, %c0_43], %38 {strides = array<i32>} : memref<400x3072xbf16, #tpu.memory_space<vmem>>, vector<16x3072xbf16>,
    %c0_44 = arith.constant 0 : index
    %c385 = arith.constant 385 : index
    %40 = vector.load %arg7[%c0_44, %c385] : memref<16x3712xbf16, #tpu.memory_space<vmem>>, vector<16x3072xbf16>
    %c256_45 = arith.constant 256 : index
    %c0_46 = arith.constant 0 : index
    %41 = vector.load %arg8[%c256_45, %c0_46] : memref<400x3072xbf16, #tpu.memory_space<vmem>>, vector<16x3072xbf16>
    tpu.vector_store %arg8[%c256_45, %c0_46], %40 {strides = array<i32>} : memref<400x3072xbf16, #tpu.memory_space<vmem>>, vector<16x3072xbf16>,
    %c0_47 = arith.constant 0 : index
    %c386 = arith.constant 386 : index
    %42 = vector.load %arg7[%c0_47, %c386] : memref<16x3712xbf16, #tpu.memory_space<vmem>>, vector<16x3072xbf16>
    %c272 = arith.constant 272 : index
    %c0_48 = arith.constant 0 : index
    %43 = vector.load %arg8[%c272, %c0_48] : memref<400x3072xbf16, #tpu.memory_space<vmem>>, vector<16x3072xbf16>
    tpu.vector_store %arg8[%c272, %c0_48], %42 {strides = array<i32>} : memref<400x3072xbf16, #tpu.memory_space<vmem>>, vector<16x3072xbf16>,
    %c0_49 = arith.constant 0 : index
    %c387 = arith.constant 387 : index
    %44 = vector.load %arg7[%c0_49, %c387] : memref<16x3712xbf16, #tpu.memory_space<vmem>>, vector<16x3072xbf16>
    %c288 = arith.constant 288 : index
    %c0_50 = arith.constant 0 : index
    %45 = vector.load %arg8[%c288, %c0_50] : memref<400x3072xbf16, #tpu.memory_space<vmem>>, vector<16x3072xbf16>
    tpu.vector_store %arg8[%c288, %c0_50], %44 {strides = array<i32>} : memref<400x3072xbf16, #tpu.memory_space<vmem>>, vector<16x3072xbf16>,
    %c0_51 = arith.constant 0 : index
    %c388 = arith.constant 388 : index
    %46 = vector.load %arg7[%c0_51, %c388] : memref<16x3712xbf16, #tpu.memory_space<vmem>>, vector<16x3072xbf16>
    %c304 = arith.constant 304 : index
    %c0_52 = arith.constant 0 : index
    %47 = vector.load %arg8[%c304, %c0_52] : memref<400x3072xbf16, #tpu.memory_space<vmem>>, vector<16x3072xbf16>
    tpu.vector_store %arg8[%c304, %c0_52], %46 {strides = array<i32>} : memref<400x3072xbf16, #tpu.memory_space<vmem>>, vector<16x3072xbf16>,
    %c0_53 = arith.constant 0 : index
    %c512 = arith.constant 512 : index
    %48 = vector.load %arg7[%c0_53, %c512] : memref<16x3712xbf16, #tpu.memory_space<vmem>>, vector<16x3072xbf16>
    %c320 = arith.constant 320 : index
    %c0_54 = arith.constant 0 : index
    %49 = vector.load %arg8[%c320, %c0_54] : memref<400x3072xbf16, #tpu.memory_space<vmem>>, vector<16x3072xbf16>
    tpu.vector_store %arg8[%c320, %c0_54], %48 {strides = array<i32>} : memref<400x3072xbf16, #tpu.memory_space<vmem>>, vector<16x3072xbf16>,
    %c0_55 = arith.constant 0 : index
    %c513 = arith.constant 513 : index
    %50 = vector.load %arg7[%c0_55, %c513] : memref<16x3712xbf16, #tpu.memory_space<vmem>>, vector<16x3072xbf16>
    %c336 = arith.constant 336 : index
    %c0_56 = arith.constant 0 : index
    %51 = vector.load %arg8[%c336, %c0_56] : memref<400x3072xbf16, #tpu.memory_space<vmem>>, vector<16x3072xbf16>
    tpu.vector_store %arg8[%c336, %c0_56], %50 {strides = array<i32>} : memref<400x3072xbf16, #tpu.memory_space<vmem>>, vector<16x3072xbf16>,
    %c0_57 = arith.constant 0 : index
    %c514 = arith.constant 514 : index
    %52 = vector.load %arg7[%c0_57, %c514] : memref<16x3712xbf16, #tpu.memory_space<vmem>>, vector<16x3072xbf16>
    %c352 = arith.constant 352 : index
    %c0_58 = arith.constant 0 : index
    %53 = vector.load %arg8[%c352, %c0_58] : memref<400x3072xbf16, #tpu.memory_space<vmem>>, vector<16x3072xbf16>
    tpu.vector_store %arg8[%c352, %c0_58], %52 {strides = array<i32>} : memref<400x3072xbf16, #tpu.memory_space<vmem>>, vector<16x3072xbf16>,
    %c0_59 = arith.constant 0 : index
    %c515 = arith.constant 515 : index
    %54 = vector.load %arg7[%c0_59, %c515] : memref<16x3712xbf16, #tpu.memory_space<vmem>>, vector<16x3072xbf16>
    %c368 = arith.constant 368 : index
    %c0_60 = arith.constant 0 : index
    %55 = vector.load %arg8[%c368, %c0_60] : memref<400x3072xbf16, #tpu.memory_space<vmem>>, vector<16x3072xbf16>
    tpu.vector_store %arg8[%c368, %c0_60], %54 {strides = array<i32>} : memref<400x3072xbf16, #tpu.memory_space<vmem>>, vector<16x3072xbf16>,
    %c0_61 = arith.constant 0 : index
    %c516 = arith.constant 516 : index
    %56 = vector.load %arg7[%c0_61, %c516] : memref<16x3712xbf16, #tpu.memory_space<vmem>>, vector<16x3072xbf16>
    %c384_62 = arith.constant 384 : index
    %c0_63 = arith.constant 0 : index
    %57 = vector.load %arg8[%c384_62, %c0_63] : memref<400x3072xbf16, #tpu.memory_space<vmem>>, vector<16x3072xbf16>
    tpu.vector_store %arg8[%c384_62, %c0_63], %56 {strides = array<i32>} : memref<400x3072xbf16, #tpu.memory_space<vmem>>, vector<16x3072xbf16>,
    %c0_64 = arith.constant 0 : index
    %c0_65 = arith.constant 0 : index
    %58 = vector.load %arg4[%c0_64, %c0_65] : memref<16x400xbf16, #tpu.memory_space<vmem>>, vector<16x400xbf16>
    %c0_66 = arith.constant 0 : index
    %c0_67 = arith.constant 0 : index
    %59 = vector.load %arg8[%c0_66, %c0_67] : memref<400x3072xbf16, #tpu.memory_space<vmem>>, vector<400x3072xbf16>
    %cst_68 = arith.constant dense<0.000000e+00> : vector<16x3072xf32>
    %60 = tpu.matmul %58, %59, %cst_68 {dimension_numbers = #tpu.dot_dimension_numbers<[1], [0], [0], [1], [0, 0, 1, 1], [], []>} : vector<16x400xbf16>, vector<400x3072xbf16>, vector<16x3072xf32> -> vector<16x3072xf32>
    %c0_69 = arith.constant 0 : index
    %c0_70 = arith.constant 0 : index
    %61 = vector.load %arg5[%c0_69, %c0_70] : memref<16x1xf32, #tpu.memory_space<vmem>>, vector<16x1xf32>
    %62 = vector.broadcast %61 : vector<16x1xf32> to vector<16x3072xf32>
    %63 = arith.addf %60, %62 : vector<16x3072xf32>
    %cst_71 = arith.constant 5.000000e-01 : f32
    %64 = vector.broadcast %cst_71 : f32 to vector<16x3072xf32>
    %65 = arith.mulf %64, %63 : vector<16x3072xf32>
    %cst_72 = arith.constant 0.707106769 : f32
    %66 = vector.broadcast %cst_72 : f32 to vector<16x3072xf32>
    %67 = arith.mulf %63, %66 : vector<16x3072xf32>
    %cst_73 = arith.constant 0.000000e+00 : f32
    %68 = vector.broadcast %cst_73 : f32 to vector<16x3072xf32>
    %69 = arith.cmpf oge, %67, %68 : vector<16x3072xf32>
    %cst_74 = arith.constant 1.000000e+00 : f32
    %cst_75 = arith.constant -1.000000e+00 : f32
    %70 = vector.broadcast %cst_74 : f32 to vector<16x3072xf32>
    %71 = vector.broadcast %cst_75 : f32 to vector<16x3072xf32>
    %72 = arith.select %69, %70, %71 : vector<16x3072xi1>, vector<16x3072xf32>
    %73 = math.absf %67 : vector<16x3072xf32>
    %cst_76 = arith.constant 0.327591091 : f32
    %74 = vector.broadcast %cst_76 : f32 to vector<16x3072xf32>
    %75 = arith.mulf %74, %73 : vector<16x3072xf32>
    %cst_77 = arith.constant 1.000000e+00 : f32
    %76 = vector.broadcast %cst_77 : f32 to vector<16x3072xf32>
    %77 = arith.addf %76, %75 : vector<16x3072xf32>
    %cst_78 = arith.constant 1.000000e+00 : f32
    %78 = vector.broadcast %cst_78 : f32 to vector<16x3072xf32>
    %79 = arith.divf %78, %77 : vector<16x3072xf32>
    %cst_79 = arith.constant 1.06140542 : f32
    %80 = vector.broadcast %cst_79 : f32 to vector<16x3072xf32>
    %81 = arith.mulf %80, %79 : vector<16x3072xf32>
    %cst_80 = arith.constant -1.45315206 : f32
    %82 = vector.broadcast %cst_80 : f32 to vector<16x3072xf32>
    %83 = arith.addf %81, %82 : vector<16x3072xf32>
    %84 = arith.mulf %83, %79 : vector<16x3072xf32>
    %cst_81 = arith.constant 1.42141378 : f32
    %85 = vector.broadcast %cst_81 : f32 to vector<16x3072xf32>
    %86 = arith.addf %84, %85 : vector<16x3072xf32>
    %87 = arith.mulf %86, %79 : vector<16x3072xf32>
    %cst_82 = arith.constant -0.284496725 : f32
    %88 = vector.broadcast %cst_82 : f32 to vector<16x3072xf32>
    %89 = arith.addf %87, %88 : vector<16x3072xf32>
    %90 = arith.mulf %89, %79 : vector<16x3072xf32>
    %cst_83 = arith.constant 0.254829586 : f32
    %91 = vector.broadcast %cst_83 : f32 to vector<16x3072xf32>
    %92 = arith.addf %90, %91 : vector<16x3072xf32>
    %93 = arith.mulf %92, %79 : vector<16x3072xf32>
    %cst_84 = arith.constant 0.000000e+00 : f32
    %94 = vector.broadcast %cst_84 : f32 to vector<16x3072xf32>
    %95 = arith.subf %94, %73 : vector<16x3072xf32>
    %96 = arith.mulf %95, %73 : vector<16x3072xf32>
    %97 = math.exp %96 : vector<16x3072xf32>
    %98 = arith.mulf %93, %97 : vector<16x3072xf32>
    %cst_85 = arith.constant 1.000000e+00 : f32
    %99 = vector.broadcast %cst_85 : f32 to vector<16x3072xf32>
    %100 = arith.subf %99, %98 : vector<16x3072xf32>
    %101 = arith.mulf %72, %100 : vector<16x3072xf32>
    %cst_86 = arith.constant 1.000000e+00 : f32
    %102 = vector.broadcast %cst_86 : f32 to vector<16x3072xf32>
    %103 = arith.addf %102, %101 : vector<16x3072xf32>
    %104 = arith.mulf %65, %103 : vector<16x3072xf32>
    %105 = arith.truncf %104 : vector<16x3072xf32> to vector<16x3072xbf16>
    %c0_87 = arith.constant 0 : index
    %c0_88 = arith.constant 0 : index
    %c0_89 = arith.constant 0 : index
    %106 = vector.load %arg6[%c0_87, %c0_88, %c0_89] : memref<1x16x3072xbf16, #tpu.memory_space<vmem>>, vector<1x16x3072xbf16>
    %107 = vector.shape_cast %106 : vector<1x16x3072xbf16> to vector<16x3072xbf16>
    %108 = vector.shape_cast %105 : vector<16x3072xbf16> to vector<1x16x3072xbf16>
    tpu.vector_store %arg6[%c0_87, %c0_88, %c0_89], %108 {strides = array<i32>} : memref<1x16x3072xbf16, #tpu.memory_space<vmem>>, vector<1x16x3072xbf16>,
    return
  }
  func.func @transform_0(%arg0: i32, %arg1: i32) -> (i32, i32, i32) {
    %c0_i32 = arith.constant 0 : i32
    %c0_i32_0 = arith.constant 0 : i32
    return %arg0, %c0_i32, %arg1 : i32, i32, i32
  }
  func.func @transform_1(%arg0: i32, %arg1: i32) -> (i32, i32, i32) {
    %c1_i32 = arith.constant 1 : i32
    %0 = arith.addi %arg1, %c1_i32 : i32
    %c6_i32 = arith.constant 6 : i32
    %1 = arith.muli %0, %c6_i32 : i32
    %c0_i32 = arith.constant 0 : i32
    %c0_i32_0 = arith.constant 0 : i32
    return %arg0, %c0_i32, %1 : i32, i32, i32
  }
  func.func @transform_2(%arg0: i32, %arg1: i32) -> (i32, i32) {
    %c0_i32 = arith.constant 0 : i32
    %c0_i32_0 = arith.constant 0 : i32
    %c0_i32_1 = arith.constant 0 : i32
    return %c0_i32, %c0_i32_0 : i32, i32
  }
  func.func @transform_3(%arg0: i32, %arg1: i32) -> (i32, i32) {
    %c0_i32 = arith.constant 0 : i32
    %c0_i32_0 = arith.constant 0 : i32
    %c0_i32_1 = arith.constant 0 : i32
    return %c0_i32, %c0_i32_0 : i32, i32
  }
  func.func @transform_4(%arg0: i32, %arg1: i32) -> (i32, i32, i32) {
    %c0_i32 = arith.constant 0 : i32
    %c0_i32_0 = arith.constant 0 : i32
    return %arg0, %c0_i32, %arg1 : i32, i32, i32
  }
}

</mosaic_0001>

<llo_original>
// kernel: tpu_custom_call.1
$region0: #{tpu_custom_call.1}
  #allocation0 [shape = 'u32[]', space=smem, size = 0x4, offset = 0x4, fixed_abs, tag = 'smem constant byte address 0x4 - core index']
  #allocation1 [shape = 'u32[144,128]{1,0:T(1,128)}', space=vmem, size = 0x12000, scoped, tag = 'internal scratch']
  #allocation2 [shape = 'bf16[16,3712]{1,0:T(16,128)(2,1)}', space=vmem, size = 0x1d000, scoped, tag = 'scratch operand']
  #allocation3 [shape = 'bf16[400,3072]{1,0:T(16,128)(2,1)}', space=vmem, size = 0x258000, scoped, tag = 'scratch operand']
  %s0 = inlined_call_operand.hbm [shape: bf16[2,16,3584], index: 0, kind: input, shape index: {}]
  %s1 = inlined_call_operand.hbm [shape: bf16[2,16,3584], index: 1, kind: input, shape index: {}]
  %s2 = inlined_call_operand.hbm [shape: bf16[16,400], index: 2, kind: input, shape index: {}]
  %s3 = inlined_call_operand.vmem [shape: f32[16,1], index: 3, kind: input, shape index: {}]
  %s4 = inlined_call_operand.hbm [shape: bf16[2,16,3072], index: 4, kind: output, shape index: {}]
  %s5 = sld [smem:[#allocation0]]
  $region61: #{tpu_custom_call.1} parent=0
    _
  %s7 = ssub.s32 1, %s5
  %s8 = scalar_select 0, %s7, %s5
  $region1: #{tpu_custom_call.1} parent=0
    #allocation4 [shape = 'u8[196608]{0}', space=vmem, size = 0x30000, scoped, tag = 'input window, operand 0']
    #allocation5 [shape = 's32[2]{0}', space=sflag, size = 0x8, scoped, tag = 'scoped memory for tpu_custom_call.1']
    #allocation6 [shape = 's32[2]{0}', space=sflag, size = 0x8, scoped, tag = 'scoped memory for tpu_custom_call.1']
    #allocation7 [shape = 'u8[32768]{0}', space=vmem, size = 0x8000, scoped, tag = 'input window, operand 1']
    #allocation8 [shape = 's32[2]{0}', space=sflag, size = 0x8, scoped, tag = 'scoped memory for tpu_custom_call.1']
    #allocation9 [shape = 'u8[16384]{0}', space=vmem, size = 0x4000, scoped, tag = 'input window, operand 2, single buffered']
    #allocation10 [shape = 'u8[196608]{0}', space=vmem, size = 0x30000, scoped, tag = 'output window, operand 0']
    %9 = vsyncpa [#allocation5], 0
    %s10 = scalar_lea.sflag [#allocation5], 1
    %11 = vsyncpa %s10, 0
    %12 = vsyncpa [#allocation8], 0
    %s13 = scalar_lea.sflag [#allocation8], 1
    %14 = vsyncpa %s13, 0
    %15 = vsyncpa [#allocation6], 0
    %s16 = scalar_lea.sflag [#allocation6], 1
    %17 = vsyncpa %s16, 0
    loop: start=0, step=1, limit=4
    $region2: #{tpu_custom_call.1} parent=1 // loop_pre_header
      _
    $region3: #{tpu_custom_call.1} parent=1 // loop_header
      %s19 = sphi 0, %s23
      %p20 = scmp.ge.s32.totalorder %s19, 4
      %s26 = sphi 0, %s38
      %s27 = sphi 0, %s34
      %s28 = sphi 0, %s26
      %s29 = sphi 0, %s27
      %s30 = sphi 0, %s28
      %s31 = sphi 0, %s29
      %s43 = sphi 0, %s45
      %s46 = sphi 0, %s43
      %s47 = sphi 0, %s46
      %s63 = sphi 0, %s47
      %s75 = sphi 0, %s77
      %s78 = sphi 0, %s75
      %s79 = sphi 0, %s78
      %s95 = sphi 0, %s79
      %s99 = sphi 0, %s99
      %s101 = sphi 0, %s99
      %s102 = sphi 0, %s101
      %s116 = sphi 0, %s102
      %s120 = sphi 0, %s120
      %s122 = sphi 0, %s120
      %s123 = sphi 0, %s122
      %s137 = sphi 0, %s123
      %s145 = sphi 0, %s147
      %s148 = sphi 0, %s145
      %s149 = sphi 0, %s148
      %s165 = sphi 0, %s149
    $region4: #{tpu_custom_call.1} parent=1 // loop_header_branch
      %22 = sbr.rel (%p20) target = $region8
    $region5: #{tpu_custom_call.1} parent=1 // loop_body
      %s24 = ssub.s32 %s19, 1
      %s25 = ssub.s32 %s19, 2
      %s32 = sadd.s32 1, %s27
      %p33 = scmp.ge.s32.totalorder %s32, 1
      %s34 = scalar_select %p33, 0, %s32
      %s35 = sadd.s32 1, %s26
      %s36 = scalar_select %p33, %s35, %s26
      %p37 = scmp.ge.s32.totalorder %s36, 2
      %s38 = scalar_select %p37, 0, %s36
      %s39 = ssub.s32 %s26, %s38
      %s40 = ssub.s32 %s27, %s34
      %s41 = sor.u32 %s39, %s40
      %p42 = scmp.eq.s32.totalorder %s41, 0
      %s44 = sadd.s32 %s43, 1
      %s45 = scalar_select %p42, %s43, %s44
      %p48 = pneg %p42
      %p49 = scmp.eq.s32.totalorder %s19, 1
      %p50 = por %p48, %p49
      %p51 = scmp.ne.s32.totalorder %s43, %s46
      %p52 = scmp.eq.s32.totalorder %s19, 0
      %p53 = por %p51, %p52
      %p54 = scmp.ne.s32.totalorder %s43, %s46
      %p55 = scmp.eq.s32.totalorder %s24, 1
      %p56 = por %p54, %p55
      %p57 = scmp.ne.s32.totalorder %s46, %s47
      %p58 = scmp.eq.s32.totalorder %s24, 0
      %p59 = por %p57, %p58
      %p60 = scmp.ne.s32.totalorder %s46, %s47
      %p61 = scmp.eq.s32.totalorder %s25, 1
      %p62 = por %p60, %p61
      %p64 = scmp.ne.s32.totalorder %s47, %s63
      %p65 = scmp.eq.s32.totalorder %s25, 0
      %p66 = por %p64, %p65
      %s67 = sadd.s32 %s27, 1
      %s68 = smul.u32 %s67, 6
      %s69 = sadd.s32 %s34, 1
      %s70 = smul.u32 %s69, 6
      %s71 = ssub.s32 %s26, %s38
      %s72 = ssub.s32 %s68, %s70
      %s73 = sor.u32 %s71, %s72
      %p74 = scmp.eq.s32.totalorder %s73, 0
      %s76 = sadd.s32 %s75, 1
      %s77 = scalar_select %p74, %s75, %s76
      %p80 = pneg %p74
      %p81 = scmp.eq.s32.totalorder %s19, 1
      %p82 = por %p80, %p81
      %p83 = scmp.ne.s32.totalorder %s75, %s78
      %p84 = scmp.eq.s32.totalorder %s19, 0
      %p85 = por %p83, %p84
      %p86 = scmp.ne.s32.totalorder %s75, %s78
      %p87 = scmp.eq.s32.totalorder %s24, 1
      %p88 = por %p86, %p87
      %p89 = scmp.ne.s32.totalorder %s78, %s79
      %p90 = scmp.eq.s32.totalorder %s24, 0
      %p91 = por %p89, %p90
      %p92 = scmp.ne.s32.totalorder %s78, %s79
      %p93 = scmp.eq.s32.totalorder %s25, 1
      %p94 = por %p92, %p93
      %p96 = scmp.ne.s32.totalorder %s79, %s95
      %p97 = scmp.eq.s32.totalorder %s25, 0
      %p98 = por %p96, %p97
      %s100 = sadd.s32 %s99, 1
      %p103 = scmp.eq.s32.totalorder %s19, 1
      %p104 = scmp.ne.s32.totalorder %s99, %s101
      %p105 = scmp.eq.s32.totalorder %s19, 0
      %p106 = por %p104, %p105
      %p107 = scmp.ne.s32.totalorder %s99, %s101
      %p108 = scmp.eq.s32.totalorder %s24, 1
      %p109 = por %p107, %p108
      %p110 = scmp.ne.s32.totalorder %s101, %s102
      %p111 = scmp.eq.s32.totalorder %s24, 0
      %p112 = por %p110, %p111
      %p113 = scmp.ne.s32.totalorder %s101, %s102
      %p114 = scmp.eq.s32.totalorder %s25, 1
      %p115 = por %p113, %p114
      %p117 = scmp.ne.s32.totalorder %s102, %s116
      %p118 = scmp.eq.s32.totalorder %s25, 0
      %p119 = por %p117, %p118
      %s121 = sadd.s32 %s120, 1
      %p124 = scmp.eq.s32.totalorder %s19, 1
      %p125 = scmp.ne.s32.totalorder %s120, %s122
      %p126 = scmp.eq.s32.totalorder %s19, 0
      %p127 = por %p125, %p126
      %p128 = scmp.ne.s32.totalorder %s120, %s122
      %p129 = scmp.eq.s32.totalorder %s24, 1
      %p130 = por %p128, %p129
      %p131 = scmp.ne.s32.totalorder %s122, %s123
      %p132 = scmp.eq.s32.totalorder %s24, 0
      %p133 = por %p131, %p132
      %p134 = scmp.ne.s32.totalorder %s122, %s123
      %p135 = scmp.eq.s32.totalorder %s25, 1
      %p136 = por %p134, %p135
      %p138 = scmp.ne.s32.totalorder %s123, %s137
      %p139 = scmp.eq.s32.totalorder %s25, 0
      %p140 = por %p138, %p139
      %s141 = ssub.s32 %s26, %s38
      %s142 = ssub.s32 %s27, %s34
      %s143 = sor.u32 %s141, %s142
      %p144 = scmp.eq.s32.totalorder %s143, 0
      %s146 = sadd.s32 %s145, 1
      %s147 = scalar_select %p144, %s145, %s146
      %p150 = pneg %p144
      %p151 = scmp.eq.s32.totalorder %s19, 1
      %p152 = por %p150, %p151
      %p153 = scmp.ne.s32.totalorder %s145, %s148
      %p154 = scmp.eq.s32.totalorder %s19, 0
      %p155 = por %p153, %p154
      %p156 = scmp.ne.s32.totalorder %s145, %s148
      %p157 = scmp.eq.s32.totalorder %s24, 1
      %p158 = por %p156, %p157
      %p159 = scmp.ne.s32.totalorder %s148, %s149
      %p160 = scmp.eq.s32.totalorder %s24, 0
      %p161 = por %p159, %p160
      %p162 = scmp.ne.s32.totalorder %s148, %s149
      %p163 = scmp.eq.s32.totalorder %s25, 1
      %p164 = por %p162, %p163
      %p166 = scmp.ne.s32.totalorder %s149, %s165
      %p167 = scmp.eq.s32.totalorder %s25, 0
      %p168 = por %p166, %p167
      %p169 = scmp.le.s32.totalorder 1, %s19
      %p170 = scmp.lt.s32.totalorder %s19, 3
      %p171 = pnand %p169, %p170
      %p172 = pneg %p171
      // Predicated region
      $region9: #{tpu_custom_call.1} parent=5 // pred_check
        _
      $region10: #{tpu_custom_call.1} parent=5 // pred_check_branch
        %174 = sbr.rel (%p171) target = $region12
      $region11: #{tpu_custom_call.1} parent=5 // pred_region
        %s175 = ssub.s32 %s19, 1
        // Predicated region
        $region13: #{tpu_custom_call.1} parent=11 // pred_check
          %p176 = pneg %p112
        $region14: #{tpu_custom_call.1} parent=11 // pred_check_branch
          %178 = sbr.rel (%p176) target = $region16
        $region15: #{tpu_custom_call.1} parent=11 // pred_region
          %s180 = ssub.s32 512, 512
          %181 = vsyncadd [#allocation8], %s180
          %s182 = sshll.u32 [#allocation9], 4
          %s183 = int_to_ptr.vmem [resolvable:$true] %s182
          %188 = dma.hbm_to_vmem [thread:$0]  %s2, 512, %s183, [#allocation8], 256, 256, 16
        $region16: #{tpu_custom_call.1} parent=11 // pred_fallthru
          _
        // Predicated region
        $region17: #{tpu_custom_call.1} parent=11 // pred_check
          %p189 = pneg %p133
        $region18: #{tpu_custom_call.1} parent=11 // pred_check_branch
          %191 = sbr.rel (%p189) target = $region20
        $region19: #{tpu_custom_call.1} parent=11 // pred_region
          _
        $region20: #{tpu_custom_call.1} parent=11 // pred_fallthru
          _
      $region12: #{tpu_custom_call.1} parent=5 // pred_fallthru
        _
      %p192 = scmp.lt.s32.totalorder %s19, 2
      // Predicated region
      $region21: #{tpu_custom_call.1} parent=5 // pred_check
        %p193 = pneg %p192
      $region22: #{tpu_custom_call.1} parent=5 // pred_check_branch
        %195 = sbr.rel (%p193) target = $region24
      $region23: #{tpu_custom_call.1} parent=5 // pred_region
        // Predicated region
        $region25: #{tpu_custom_call.1} parent=23 // pred_check
          %p196 = pneg %p53
        $region26: #{tpu_custom_call.1} parent=23 // pred_check_branch
          %198 = sbr.rel (%p196) target = $region28
        $region27: #{tpu_custom_call.1} parent=23 // pred_region
          %s199 = sand.u32 %s43, 1
          %s200 = scalar_lea.sflag [#allocation5], %s199
          %s201 = sand.u32 %s43, 1
          %s202 = smul.addr %s201, 192
          %s203 = scalar_lea.vmem [#allocation4], %s202
          %s204 = smul.u32 24, %s27
          %s205 = ssub.s32 28, %s204
          %p206 = scmp.lt.s32.totalorder %s205, 24
          %s207 = scalar_select %p206, %s205, 24
          %s208 = smul.u32 128, %s207
          %s210 = ssub.s32 3072, %s208
          %211 = vsyncadd %s200, %s210
          %p212 = scmp.ne.s32.totalorder 0, %s208
          %s213 = smul.addr %s26, 56
          %s214 = sadd.s32 %s204, %s213
          %s215 = smul.addr %s214, 64
          %s216 = scalar_lea.hbm %s0, %s215
          %s217 = smul.u32 %s207, 4
          %s218 = smul.u32 %s217, 2
          %s219 = sshll.u32 %s203, 4
          %s220 = int_to_ptr.vmem [resolvable:$true] %s219
          %s221 = sshll.u32 %s218, 4
          %225 = dma.hbm_to_vmem [thread:$0]  (%p212), %s216, %s221, %s220, %s200, 1792, 1536, %s217
        $region28: #{tpu_custom_call.1} parent=23 // pred_fallthru
          _
        // Predicated region
        $region29: #{tpu_custom_call.1} parent=23 // pred_check
          %p226 = pneg %p85
        $region30: #{tpu_custom_call.1} parent=23 // pred_check_branch
          %228 = sbr.rel (%p226) target = $region32
        $region31: #{tpu_custom_call.1} parent=23 // pred_region
          %s229 = sand.u32 %s19, 1
          %s230 = scalar_lea.sflag [#allocation8], %s229
          %s231 = sand.u32 %s75, 1
          %s232 = smul.addr %s231, 32
          %s233 = scalar_lea.vmem [#allocation7], %s232
          %s234 = sadd.s32 %s27, 1
          %s235 = smul.u32 %s234, 6
          %s236 = smul.u32 4, %s235
          %s238 = ssub.s32 512, 512
          %239 = vsyncadd %s230, %s238
          %s240 = smul.addr %s26, 56
          %s241 = sadd.s32 %s236, %s240
          %s242 = smul.addr %s241, 64
          %s243 = scalar_lea.hbm %s1, %s242
          %s244 = sshll.u32 %s233, 4
          %s245 = int_to_ptr.vmem [resolvable:$true] %s244
          %250 = dma.hbm_to_vmem [thread:$0]  %s243, 512, %s245, %s230, 1792, 256, 16
        $region32: #{tpu_custom_call.1} parent=23 // pred_fallthru
          _
      $region24: #{tpu_custom_call.1} parent=5 // pred_fallthru
        _
      %p251 = scmp.le.s32.totalorder 1, %s19
      %p252 = scmp.lt.s32.totalorder %s19, 3
      %p253 = pnand %p251, %p252
      %p254 = pneg %p253
      // Predicated region
      $region33: #{tpu_custom_call.1} parent=5 // pred_check
        _
      $region34: #{tpu_custom_call.1} parent=5 // pred_check_branch
        %256 = sbr.rel (%p253) target = $region36
      $region35: #{tpu_custom_call.1} parent=5 // pred_region
        %s257 = ssub.s32 %s19, 1
        %s258 = sand.u32 %s46, 1
        %s259 = scalar_lea.sflag [#allocation5], %s258
        %s260 = sand.u32 %s46, 1
        %s261 = smul.addr %s260, 192
        %s262 = scalar_lea.vmem [#allocation4], %s261
        // Predicated region
        $region37: #{tpu_custom_call.1} parent=35 // pred_check
          %p263 = pneg %p59
        $region38: #{tpu_custom_call.1} parent=35 // pred_check_branch
          %265 = sbr.rel (%p263) target = $region40
        $region39: #{tpu_custom_call.1} parent=35 // pred_region
          %266 = dma.done %s259, 3072
        $region40: #{tpu_custom_call.1} parent=35 // pred_fallthru
          _
        %s267 = sand.u32 %s24, 1
        %s268 = scalar_lea.sflag [#allocation8], %s267
        %s269 = sand.u32 %s78, 1
        %s270 = smul.addr %s269, 32
        %s271 = scalar_lea.vmem [#allocation7], %s270
        // Predicated region
        $region41: #{tpu_custom_call.1} parent=35 // pred_check
          %p272 = pneg %p91
        $region42: #{tpu_custom_call.1} parent=35 // pred_check_branch
          %274 = sbr.rel (%p272) target = $region44
        $region43: #{tpu_custom_call.1} parent=35 // pred_region
          %275 = dma.done %s268, 512
        $region44: #{tpu_custom_call.1} parent=35 // pred_fallthru
          _
        // Predicated region
        $region45: #{tpu_custom_call.1} parent=35 // pred_check
          %p276 = pneg %p112
        $region46: #{tpu_custom_call.1} parent=35 // pred_check_branch
          %278 = sbr.rel (%p276) target = $region48
        $region47: #{tpu_custom_call.1} parent=35 // pred_region
          %279 = dma.done [#allocation8], 512
        $region48: #{tpu_custom_call.1} parent=35 // pred_fallthru
          _
        %s280 = sand.u32 %s46, 1
        %s281 = scalar_lea.sflag [#allocation5], %s280
        %s282 = sand.u32 %s46, 1
        %s283 = smul.addr %s282, 192
        %s284 = scalar_lea.vmem [#allocation4], %s283
        %p285 = pneg %p59
        %p286 = pneg %p56
        %s287 = sand.u32 %s24, 1
        %s288 = scalar_lea.sflag [#allocation8], %s287
        %s289 = sand.u32 %s78, 1
        %s290 = smul.addr %s289, 32
        %s291 = scalar_lea.vmem [#allocation7], %s290
        %p292 = pneg %p91
        %p293 = pneg %p88
        %p294 = pneg %p112
        %p295 = pneg %p109
        %p296 = pneg %p133
        %p297 = pneg %p130
        %p298 = pneg %p161
        %p299 = pneg %p158
        %s300 = sand.u32 %s148, 1
        %s301 = scalar_lea.sflag [#allocation6], %s300
        %s302 = sand.u32 %s148, 1
        %s303 = smul.addr %s302, 192
        %s304 = scalar_lea.vmem [#allocation10], %s303
        %s305 = smul.u32 24, %s29
        %s306 = ssub.s32 28, %s305
        %p307 = scmp.lt.s32.totalorder %s306, 24
        %s308 = scalar_select %p307, %s306, 24
        %s309 = smul.u32 128, %s308
        %s310 = sadd.s32 %s29, 1
        %s311 = smul.u32 %s310, 6
        %s312 = smul.u32 4, %s311
        %s313 = smul.u32 24, %s29
        %v315 = vld [vmem:[%s262] sm:$0xff]
        %v316 = vld [vmem:[%s262 + $0x8] sm:$0xff]
        %v317 = vld [vmem:[%s262 + $0x10] sm:$0xff]
        %v318 = vld [vmem:[%s262 + $0x18] sm:$0xff]
        %v319 = vld [vmem:[%s262 + $0x20] sm:$0xff]
        %v320 = vld [vmem:[%s262 + $0x28] sm:$0xff]
        %v321 = vld [vmem:[%s262 + $0x30] sm:$0xff]
        %v322 = vld [vmem:[%s262 + $0x38] sm:$0xff]
        %v323 = vld [vmem:[%s262 + $0x40] sm:$0xff]
        %v324 = vld [vmem:[%s262 + $0x48] sm:$0xff]
        %v325 = vld [vmem:[%s262 + $0x50] sm:$0xff]
        %v326 = vld [vmem:[%s262 + $0x58] sm:$0xff]
        %v327 = vld [vmem:[%s262 + $0x60] sm:$0xff]
        %v328 = vld [vmem:[%s262 + $0x68] sm:$0xff]
        %v329 = vld [vmem:[%s262 + $0x70] sm:$0xff]
        %v330 = vld [vmem:[%s262 + $0x78] sm:$0xff]
        %v331 = vld [vmem:[%s262 + $0x80] sm:$0xff]
        %v332 = vld [vmem:[%s262 + $0x88] sm:$0xff]
        %v333 = vld [vmem:[%s262 + $0x90] sm:$0xff]
        %v334 = vld [vmem:[%s262 + $0x98] sm:$0xff]
        %v335 = vld [vmem:[%s262 + $0xa0] sm:$0xff]
        %v336 = vld [vmem:[%s262 + $0xa8] sm:$0xff]
        %v337 = vld [vmem:[%s262 + $0xb0] sm:$0xff]
        %v338 = vld [vmem:[%s262 + $0xb8] sm:$0xff]
        %v363 = vunpack.c.l.b16 %v315
        %v364 = vunpack.c.h.b16 %v315
        %v365 = vunpack.c.l.b16 %v316
        %v366 = vunpack.c.h.b16 %v316
        %v367 = vunpack.c.l.b16 %v317
        %v368 = vunpack.c.h.b16 %v317
        %v369 = vunpack.c.l.b16 %v318
        %v370 = vunpack.c.h.b16 %v318
        %v371 = vunpack.c.l.b16 %v319
        %v372 = vunpack.c.h.b16 %v319
        %v373 = vunpack.c.l.b16 %v320
        %v374 = vunpack.c.h.b16 %v320
        %v375 = vunpack.c.l.b16 %v321
        %v376 = vunpack.c.h.b16 %v321
        %v377 = vunpack.c.l.b16 %v322
        %v378 = vunpack.c.h.b16 %v322
        %v379 = vunpack.c.l.b16 %v323
        %v380 = vunpack.c.h.b16 %v323
        %v381 = vunpack.c.l.b16 %v324
        %v382 = vunpack.c.h.b16 %v324
        %v383 = vunpack.c.l.b16 %v325
        %v384 = vunpack.c.h.b16 %v325
        %v385 = vunpack.c.l.b16 %v326
        %v386 = vunpack.c.h.b16 %v326
        %v387 = vunpack.c.l.b16 %v327
        %v388 = vunpack.c.h.b16 %v327
        %v389 = vunpack.c.l.b16 %v328
        %v390 = vunpack.c.h.b16 %v328
        %v391 = vunpack.c.l.b16 %v329
        %v392 = vunpack.c.h.b16 %v329
        %v393 = vunpack.c.l.b16 %v330
        %v394 = vunpack.c.h.b16 %v330
        %v395 = vunpack.c.l.b16 %v331
        %v396 = vunpack.c.h.b16 %v331
        %v397 = vunpack.c.l.b16 %v332
        %v398 = vunpack.c.h.b16 %v332
        %v399 = vunpack.c.l.b16 %v333
        %v400 = vunpack.c.h.b16 %v333
        %v401 = vunpack.c.l.b16 %v334
        %v402 = vunpack.c.h.b16 %v334
        %v403 = vunpack.c.l.b16 %v335
        %v404 = vunpack.c.h.b16 %v335
        %v405 = vunpack.c.l.b16 %v336
        %v406 = vunpack.c.h.b16 %v336
        %v407 = vunpack.c.l.b16 %v337
        %v408 = vunpack.c.h.b16 %v337
        %v409 = vunpack.c.l.b16 %v338
        %v410 = vunpack.c.h.b16 %v338
        %v411 = vpack.c.b16 %v387, %v363
        %v412 = vpack.c.b16 %v388, %v364
        %v413 = vpack.c.b16 %v389, %v365
        %v414 = vpack.c.b16 %v390, %v366
        %v415 = vpack.c.b16 %v391, %v367
        %v416 = vpack.c.b16 %v392, %v368
        %v417 = vpack.c.b16 %v393, %v369
        %v418 = vpack.c.b16 %v394, %v370
        %v419 = vpack.c.b16 %v395, %v371
        %v420 = vpack.c.b16 %v396, %v372
        %v421 = vpack.c.b16 %v397, %v373
        %v422 = vpack.c.b16 %v398, %v374
        %v423 = vpack.c.b16 %v399, %v375
        %v424 = vpack.c.b16 %v400, %v376
        %v425 = vpack.c.b16 %v401, %v377
        %v426 = vpack.c.b16 %v402, %v378
        %v427 = vpack.c.b16 %v403, %v379
        %v428 = vpack.c.b16 %v404, %v380
        %v429 = vpack.c.b16 %v405, %v381
        %v430 = vpack.c.b16 %v406, %v382
        %v431 = vpack.c.b16 %v407, %v383
        %v432 = vpack.c.b16 %v408, %v384
        %v433 = vpack.c.b16 %v409, %v385
        %v434 = vpack.c.b16 %v410, %v386
        %459 = vst [vmem:[#allocation2] sm:$0xff] %v411
        %460 = vst [vmem:[#allocation2 + $0x8] sm:$0xff] %v412
        %461 = vst [vmem:[#allocation2 + $0x10] sm:$0xff] %v413
        %462 = vst [vmem:[#allocation2 + $0x18] sm:$0xff] %v414
        %463 = vst [vmem:[#allocation2 + $0x20] sm:$0xff] %v415
        %464 = vst [vmem:[#allocation2 + $0x28] sm:$0xff] %v416
        %465 = vst [vmem:[#allocation2 + $0x30] sm:$0xff] %v417
        %466 = vst [vmem:[#allocation2 + $0x38] sm:$0xff] %v418
        %467 = vst [vmem:[#allocation2 + $0x40] sm:$0xff] %v419
        %468 = vst [vmem:[#allocation2 + $0x48] sm:$0xff] %v420
        %469 = vst [vmem:[#allocation2 + $0x50] sm:$0xff] %v421
        %470 = vst [vmem:[#allocation2 + $0x58] sm:$0xff] %v422
        %471 = vst [vmem:[#allocation2 + $0x60] sm:$0xff] %v423
        %472 = vst [vmem:[#allocation2 + $0x68] sm:$0xff] %v424
        %473 = vst [vmem:[#allocation2 + $0x70] sm:$0xff] %v425
        %474 = vst [vmem:[#allocation2 + $0x78] sm:$0xff] %v426
        %475 = vst [vmem:[#allocation2 + $0x80] sm:$0xff] %v427
        %476 = vst [vmem:[#allocation2 + $0x88] sm:$0xff] %v428
        %477 = vst [vmem:[#allocation2 + $0x90] sm:$0xff] %v429
        %478 = vst [vmem:[#allocation2 + $0x98] sm:$0xff] %v430
        %479 = vst [vmem:[#allocation2 + $0xa0] sm:$0xff] %v431
        %480 = vst [vmem:[#allocation2 + $0xa8] sm:$0xff] %v432
        %481 = vst [vmem:[#allocation2 + $0xb0] sm:$0xff] %v433
        %482 = vst [vmem:[#allocation2 + $0xb8] sm:$0xff] %v434
        %v483 = vld [vmem:[%s271] sm:$0xff]
        %v484 = vld [vmem:[%s271 + $0x8] sm:$0xff]
        %v485 = vld [vmem:[%s271 + $0x10] sm:$0xff]
        %v486 = vld [vmem:[%s271 + $0x18] sm:$0xff]
        %v491 = vunpack.c.l.b16 %v483
        %v492 = vunpack.c.h.b16 %v483
        %v493 = vunpack.c.l.b16 %v484
        %v494 = vunpack.c.h.b16 %v484
        %v495 = vunpack.c.l.b16 %v485
        %v496 = vunpack.c.h.b16 %v485
        %v497 = vunpack.c.l.b16 %v486
        %v498 = vunpack.c.h.b16 %v486
        %v499 = vpack.c.b16 %v495, %v491
        %v500 = vpack.c.b16 %v496, %v492
        %v501 = vpack.c.b16 %v497, %v493
        %v502 = vpack.c.b16 %v498, %v494
        %507 = vst [vmem:[#allocation2 + $0xc0] sm:$0xff] %v499
        %508 = vst [vmem:[#allocation2 + $0xc8] sm:$0xff] %v500
        %509 = vst [vmem:[#allocation2 + $0xd0] sm:$0xff] %v501
        %510 = vst [vmem:[#allocation2 + $0xd8] sm:$0xff] %v502
        %511 = vst [vmem:[#allocation2 + $0xe0] sm:$0xff] 0
        %v512 = vld [vmem:[#allocation2] sm:$0xff]
        %v513 = vld [vmem:[#allocation2 + $0x8] sm:$0xff]
        %v514 = vld [vmem:[#allocation2 + $0x10] sm:$0xff]
        %v515 = vld [vmem:[#allocation2 + $0x18] sm:$0xff]
        %v516 = vld [vmem:[#allocation2 + $0x20] sm:$0xff]
        %v517 = vld [vmem:[#allocation2 + $0x28] sm:$0xff]
        %v518 = vld [vmem:[#allocation2 + $0x30] sm:$0xff]
        %v519 = vld [vmem:[#allocation2 + $0x38] sm:$0xff]
        %v520 = vld [vmem:[#allocation2 + $0x40] sm:$0xff]
        %v521 = vld [vmem:[#allocation2 + $0x48] sm:$0xff]
        %v522 = vld [vmem:[#allocation2 + $0x50] sm:$0xff]
        %v523 = vld [vmem:[#allocation2 + $0x58] sm:$0xff]
        %v524 = vld [vmem:[#allocation2 + $0x60] sm:$0xff]
        %v525 = vld [vmem:[#allocation2 + $0x68] sm:$0xff]
        %v526 = vld [vmem:[#allocation2 + $0x70] sm:$0xff]
        %v527 = vld [vmem:[#allocation2 + $0x78] sm:$0xff]
        %v528 = vld [vmem:[#allocation2 + $0x80] sm:$0xff]
        %v529 = vld [vmem:[#allocation2 + $0x88] sm:$0xff]
        %v530 = vld [vmem:[#allocation2 + $0x90] sm:$0xff]
        %v531 = vld [vmem:[#allocation2 + $0x98] sm:$0xff]
        %v532 = vld [vmem:[#allocation2 + $0xa0] sm:$0xff]
        %v533 = vld [vmem:[#allocation2 + $0xa8] sm:$0xff]
        %v534 = vld [vmem:[#allocation2 + $0xb0] sm:$0xff]
        %v535 = vld [vmem:[#allocation2 + $0xb8] sm:$0xff]
        %536 = vst [vmem:[#allocation3] sm:$0xff] %v512
        %537 = vst [vmem:[#allocation3 + $0x8] sm:$0xff] %v513
        %538 = vst [vmem:[#allocation3 + $0x10] sm:$0xff] %v514
        %539 = vst [vmem:[#allocation3 + $0x18] sm:$0xff] %v515
        %540 = vst [vmem:[#allocation3 + $0x20] sm:$0xff] %v516
        %541 = vst [vmem:[#allocation3 + $0x28] sm:$0xff] %v517
        %542 = vst [vmem:[#allocation3 + $0x30] sm:$0xff] %v518
        %543 = vst [vmem:[#allocation3 + $0x38] sm:$0xff] %v519
        %544 = vst [vmem:[#allocation3 + $0x40] sm:$0xff] %v520
        %545 = vst [vmem:[#allocation3 + $0x48] sm:$0xff] %v521
        %546 = vst [vmem:[#allocation3 + $0x50] sm:$0xff] %v522
        %547 = vst [vmem:[#allocation3 + $0x58] sm:$0xff] %v523
        %548 = vst [vmem:[#allocation3 + $0x60] sm:$0xff] %v524
        %549 = vst [vmem:[#allocation3 + $0x68] sm:$0xff] %v525
        %550 = vst [vmem:[#allocation3 + $0x70] sm:$0xff] %v526
        %551 = vst [vmem:[#allocation3 + $0x78] sm:$0xff] %v527
        %552 = vst [vmem:[#allocation3 + $0x80] sm:$0xff] %v528
        %553 = vst [vmem:[#allocation3 + $0x88] sm:$0xff] %v529
        %554 = vst [vmem:[#allocation3 + $0x90] sm:$0xff] %v530
        %555 = vst [vmem:[#allocation3 + $0x98] sm:$0xff] %v531
        %556 = vst [vmem:[#allocation3 + $0xa0] sm:$0xff] %v532
        %557 = vst [vmem:[#allocation3 + $0xa8] sm:$0xff] %v533
        %558 = vst [vmem:[#allocation3 + $0xb0] sm:$0xff] %v534
        %559 = vst [vmem:[#allocation3 + $0xb8] sm:$0xff] %v535
        %v560 = vld [vmem:[#allocation2] sm:$0xff]
        %v561 = vld [vmem:[#allocation2 + $0x8] sm:$0xff]
        %v562 = vld [vmem:[#allocation2 + $0x10] sm:$0xff]
        %v563 = vld [vmem:[#allocation2 + $0x18] sm:$0xff]
        %v564 = vld [vmem:[#allocation2 + $0x20] sm:$0xff]
        %v565 = vld [vmem:[#allocation2 + $0x28] sm:$0xff]
        %v566 = vld [vmem:[#allocation2 + $0x30] sm:$0xff]
        %v567 = vld [vmem:[#allocation2 + $0x38] sm:$0xff]
        %v568 = vld [vmem:[#allocation2 + $0x40] sm:$0xff]
        %v569 = vld [vmem:[#allocation2 + $0x48] sm:$0xff]
        %v570 = vld [vmem:[#allocation2 + $0x50] sm:$0xff]
        %v571 = vld [vmem:[#allocation2 + $0x58] sm:$0xff]
        %v572 = vld [vmem:[#allocation2 + $0x60] sm:$0xff]
        %v573 = vld [vmem:[#allocation2 + $0x68] sm:$0xff]
        %v574 = vld [vmem:[#allocation2 + $0x70] sm:$0xff]
        %v575 = vld [vmem:[#allocation2 + $0x78] sm:$0xff]
        %v576 = vld [vmem:[#allocation2 + $0x80] sm:$0xff]
        %v577 = vld [vmem:[#allocation2 + $0x88] sm:$0xff]
        %v578 = vld [vmem:[#allocation2 + $0x90] sm:$0xff]
        %v579 = vld [vmem:[#allocation2 + $0x98] sm:$0xff]
        %v580 = vld [vmem:[#allocation2 + $0xa0] sm:$0xff]
        %v581 = vld [vmem:[#allocation2 + $0xa8] sm:$0xff]
        %v582 = vld [vmem:[#allocation2 + $0xb0] sm:$0xff]
        %v583 = vld [vmem:[#allocation2 + $0xb8] sm:$0xff]
        %v584 = vld [vmem:[#allocation2 + $0xc0] sm:$0xff]
        %610 = vrot.lane.b32.xlu0 %v560, 127
        %v611 = vpop.permute.xlu0 %610
        %612 = vrot.lane.b32.xlu0 %v561, 127
        %v613 = vpop.permute.xlu0 %612
        %614 = vrot.lane.b32.xlu0 %v562, 127
        %v615 = vpop.permute.xlu0 %614
        %616 = vrot.lane.b32.xlu0 %v563, 127
        %v617 = vpop.permute.xlu0 %616
        %618 = vrot.lane.b32.xlu0 %v564, 127
        %v619 = vpop.permute.xlu0 %618
        %620 = vrot.lane.b32.xlu0 %v565, 127
        %v621 = vpop.permute.xlu0 %620
        %622 = vrot.lane.b32.xlu0 %v566, 127
        %v623 = vpop.permute.xlu0 %622
        %624 = vrot.lane.b32.xlu0 %v567, 127
        %v625 = vpop.permute.xlu0 %624
        %626 = vrot.lane.b32.xlu0 %v568, 127
        %v627 = vpop.permute.xlu0 %626
        %628 = vrot.lane.b32.xlu0 %v569, 127
        %v629 = vpop.permute.xlu0 %628
        %630 = vrot.lane.b32.xlu0 %v570, 127
        %v631 = vpop.permute.xlu0 %630
        %632 = vrot.lane.b32.xlu0 %v571, 127
        %v633 = vpop.permute.xlu0 %632
        %634 = vrot.lane.b32.xlu0 %v572, 127
        %v635 = vpop.permute.xlu0 %634
        %636 = vrot.lane.b32.xlu0 %v573, 127
        %v637 = vpop.permute.xlu0 %636
        %638 = vrot.lane.b32.xlu0 %v574, 127
        %v639 = vpop.permute.xlu0 %638
        %640 = vrot.lane.b32.xlu0 %v575, 127
        %v641 = vpop.permute.xlu0 %640
        %642 = vrot.lane.b32.xlu0 %v576, 127
        %v643 = vpop.permute.xlu0 %642
        %644 = vrot.lane.b32.xlu0 %v577, 127
        %v645 = vpop.permute.xlu0 %644
        %646 = vrot.lane.b32.xlu0 %v578, 127
        %v647 = vpop.permute.xlu0 %646
        %648 = vrot.lane.b32.xlu0 %v579, 127
        %v649 = vpop.permute.xlu0 %648
        %650 = vrot.lane.b32.xlu0 %v580, 127
        %v651 = vpop.permute.xlu0 %650
        %652 = vrot.lane.b32.xlu0 %v581, 127
        %v653 = vpop.permute.xlu0 %652
        %654 = vrot.lane.b32.xlu0 %v582, 127
        %v655 = vpop.permute.xlu0 %654
        %656 = vrot.lane.b32.xlu0 %v583, 127
        %v657 = vpop.permute.xlu0 %656
        %658 = vrot.lane.b32.xlu0 %v584, 127
        %v659 = vpop.permute.xlu0 %658
        %vm660 = vcmask 1039360
        %v661 = vsel %vm660, %v611, %v613
        %v662 = vsel %vm660, %v613, %v615
        %v663 = vsel %vm660, %v615, %v617
        %v664 = vsel %vm660, %v617, %v619
        %v665 = vsel %vm660, %v619, %v621
        %v666 = vsel %vm660, %v621, %v623
        %v667 = vsel %vm660, %v623, %v625
        %v668 = vsel %vm660, %v625, %v627
        %v669 = vsel %vm660, %v627, %v629
        %v670 = vsel %vm660, %v629, %v631
        %v671 = vsel %vm660, %v631, %v633
        %v672 = vsel %vm660, %v633, %v635
        %v673 = vsel %vm660, %v635, %v637
        %v674 = vsel %vm660, %v637, %v639
        %v675 = vsel %vm660, %v639, %v641
        %v676 = vsel %vm660, %v641, %v643
        %v677 = vsel %vm660, %v643, %v645
        %v678 = vsel %vm660, %v645, %v647
        %v679 = vsel %vm660, %v647, %v649
        %v680 = vsel %vm660, %v649, %v651
        %v681 = vsel %vm660, %v651, %v653
        %v682 = vsel %vm660, %v653, %v655
        %v683 = vsel %vm660, %v655, %v657
        %v684 = vsel %vm660, %v657, %v659
        %709 = vst [vmem:[#allocation3 + $0xc0] sm:$0xff] %v661
        %710 = vst [vmem:[#allocation3 + $0xc8] sm:$0xff] %v662
        %711 = vst [vmem:[#allocation3 + $0xd0] sm:$0xff] %v663
        %712 = vst [vmem:[#allocation3 + $0xd8] sm:$0xff] %v664
        %713 = vst [vmem:[#allocation3 + $0xe0] sm:$0xff] %v665
        %714 = vst [vmem:[#allocation3 + $0xe8] sm:$0xff] %v666
        %715 = vst [vmem:[#allocation3 + $0xf0] sm:$0xff] %v667
        %716 = vst [vmem:[#allocation3 + $0xf8] sm:$0xff] %v668
        %717 = vst [vmem:[#allocation3 + $0x100] sm:$0xff] %v669
        %718 = vst [vmem:[#allocation3 + $0x108] sm:$0xff] %v670
        %719 = vst [vmem:[#allocation3 + $0x110] sm:$0xff] %v671
        %720 = vst [vmem:[#allocation3 + $0x118] sm:$0xff] %v672
        %721 = vst [vmem:[#allocation3 + $0x120] sm:$0xff] %v673
        %722 = vst [vmem:[#allocation3 + $0x128] sm:$0xff] %v674
        %723 = vst [vmem:[#allocation3 + $0x130] sm:$0xff] %v675
        %724 = vst [vmem:[#allocation3 + $0x138] sm:$0xff] %v676
        %725 = vst [vmem:[#allocation3 + $0x140] sm:$0xff] %v677
        %726 = vst [vmem:[#allocation3 + $0x148] sm:$0xff] %v678
        %727 = vst [vmem:[#allocation3 + $0x150] sm:$0xff] %v679
        %728 = vst [vmem:[#allocation3 + $0x158] sm:$0xff] %v680
        %729 = vst [vmem:[#allocation3 + $0x160] sm:$0xff] %v681
        %730 = vst [vmem:[#allocation3 + $0x168] sm:$0xff] %v682
        %731 = vst [vmem:[#allocation3 + $0x170] sm:$0xff] %v683
        %732 = vst [vmem:[#allocation3 + $0x178] sm:$0xff] %v684
        %v733 = vld [vmem:[#allocation2] sm:$0xff]
        %v734 = vld [vmem:[#allocation2 + $0x8] sm:$0xff]
        %v735 = vld [vmem:[#allocation2 + $0x10] sm:$0xff]
        %v736 = vld [vmem:[#allocation2 + $0x18] sm:$0xff]
        %v737 = vld [vmem:[#allocation2 + $0x20] sm:$0xff]
        %v738 = vld [vmem:[#allocation2 + $0x28] sm:$0xff]
        %v739 = vld [vmem:[#allocation2 + $0x30] sm:$0xff]
        %v740 = vld [vmem:[#allocation2 + $0x38] sm:$0xff]
        %v741 = vld [vmem:[#allocation2 + $0x40] sm:$0xff]
        %v742 = vld [vmem:[#allocation2 + $0x48] sm:$0xff]
        %v743 = vld [vmem:[#allocation2 + $0x50] sm:$0xff]
        %v744 = vld [vmem:[#allocation2 + $0x58] sm:$0xff]
        %v745 = vld [vmem:[#allocation2 + $0x60] sm:$0xff]
        %v746 = vld [vmem:[#allocation2 + $0x68] sm:$0xff]
        %v747 = vld [vmem:[#allocation2 + $0x70] sm:$0xff]
        %v748 = vld [vmem:[#allocation2 + $0x78] sm:$0xff]
        %v749 = vld [vmem:[#allocation2 + $0x80] sm:$0xff]
        %v750 = vld [vmem:[#allocation2 + $0x88] sm:$0xff]
        %v751 = vld [vmem:[#allocation2 + $0x90] sm:$0xff]
        %v752 = vld [vmem:[#allocation2 + $0x98] sm:$0xff]
        %v753 = vld [vmem:[#allocation2 + $0xa0] sm:$0xff]
        %v754 = vld [vmem:[#allocation2 + $0xa8] sm:$0xff]
        %v755 = vld [vmem:[#allocation2 + $0xb0] sm:$0xff]
        %v756 = vld [vmem:[#allocation2 + $0xb8] sm:$0xff]
        %v757 = vld [vmem:[#allocation2 + $0xc0] sm:$0xff]
        %783 = vrot.lane.b32.xlu0 %v733, 126
        %v784 = vpop.permute.xlu0 %783
        %785 = vrot.lane.b32.xlu0 %v734, 126
        %v786 = vpop.permute.xlu0 %785
        %787 = vrot.lane.b32.xlu0 %v735, 126
        %v788 = vpop.permute.xlu0 %787
        %789 = vrot.lane.b32.xlu0 %v736, 126
        %v790 = vpop.permute.xlu0 %789
        %791 = vrot.lane.b32.xlu0 %v737, 126
        %v792 = vpop.permute.xlu0 %791
        %793 = vrot.lane.b32.xlu0 %v738, 126
        %v794 = vpop.permute.xlu0 %793
        %795 = vrot.lane.b32.xlu0 %v739, 126
        %v796 = vpop.permute.xlu0 %795
        %797 = vrot.lane.b32.xlu0 %v740, 126
        %v798 = vpop.permute.xlu0 %797
        %799 = vrot.lane.b32.xlu0 %v741, 126
        %v800 = vpop.permute.xlu0 %799
        %801 = vrot.lane.b32.xlu0 %v742, 126
        %v802 = vpop.permute.xlu0 %801
        %803 = vrot.lane.b32.xlu0 %v743, 126
        %v804 = vpop.permute.xlu0 %803
        %805 = vrot.lane.b32.xlu0 %v744, 126
        %v806 = vpop.permute.xlu0 %805
        %807 = vrot.lane.b32.xlu0 %v745, 126
        %v808 = vpop.permute.xlu0 %807
        %809 = vrot.lane.b32.xlu0 %v746, 126
        %v810 = vpop.permute.xlu0 %809
        %811 = vrot.lane.b32.xlu0 %v747, 126
        %v812 = vpop.permute.xlu0 %811
        %813 = vrot.lane.b32.xlu0 %v748, 126
        %v814 = vpop.permute.xlu0 %813
        %815 = vrot.lane.b32.xlu0 %v749, 126
        %v816 = vpop.permute.xlu0 %815
        %817 = vrot.lane.b32.xlu0 %v750, 126
        %v818 = vpop.permute.xlu0 %817
        %819 = vrot.lane.b32.xlu0 %v751, 126
        %v820 = vpop.permute.xlu0 %819
        %821 = vrot.lane.b32.xlu0 %v752, 126
        %v822 = vpop.permute.xlu0 %821
        %823 = vrot.lane.b32.xlu0 %v753, 126
        %v824 = vpop.permute.xlu0 %823
        %825 = vrot.lane.b32.xlu0 %v754, 126
        %v826 = vpop.permute.xlu0 %825
        %827 = vrot.lane.b32.xlu0 %v755, 126
        %v828 = vpop.permute.xlu0 %827
        %829 = vrot.lane.b32.xlu0 %v756, 126
        %v830 = vpop.permute.xlu0 %829
        %831 = vrot.lane.b32.xlu0 %v757, 126
        %v832 = vpop.permute.xlu0 %831
        %vm833 = vcmask 1031168
        %v834 = vsel %vm833, %v784, %v786
        %v835 = vsel %vm833, %v786, %v788
        %v836 = vsel %vm833, %v788, %v790
        %v837 = vsel %vm833, %v790, %v792
        %v838 = vsel %vm833, %v792, %v794
        %v839 = vsel %vm833, %v794, %v796
        %v840 = vsel %vm833, %v796, %v798
        %v841 = vsel %vm833, %v798, %v800
        %v842 = vsel %vm833, %v800, %v802
        %v843 = vsel %vm833, %v802, %v804
        %v844 = vsel %vm833, %v804, %v806
        %v845 = vsel %vm833, %v806, %v808
        %v846 = vsel %vm833, %v808, %v810
        %v847 = vsel %vm833, %v810, %v812
        %v848 = vsel %vm833, %v812, %v814
        %v849 = vsel %vm833, %v814, %v816
        %v850 = vsel %vm833, %v816, %v818
        %v851 = vsel %vm833, %v818, %v820
        %v852 = vsel %vm833, %v820, %v822
        %v853 = vsel %vm833, %v822, %v824
        %v854 = vsel %vm833, %v824, %v826
        %v855 = vsel %vm833, %v826, %v828
        %v856 = vsel %vm833, %v828, %v830
        %v857 = vsel %vm833, %v830, %v832
        %882 = vst [vmem:[#allocation3 + $0x180] sm:$0xff] %v834
        %883 = vst [vmem:[#allocation3 + $0x188] sm:$0xff] %v835
        %884 = vst [vmem:[#allocation3 + $0x190] sm:$0xff] %v836
        %885 = vst [vmem:[#allocation3 + $0x198] sm:$0xff] %v837
        %886 = vst [vmem:[#allocation3 + $0x1a0] sm:$0xff] %v838
        %887 = vst [vmem:[#allocation3 + $0x1a8] sm:$0xff] %v839
        %888 = vst [vmem:[#allocation3 + $0x1b0] sm:$0xff] %v840
        %889 = vst [vmem:[#allocation3 + $0x1b8] sm:$0xff] %v841
        %890 = vst [vmem:[#allocation3 + $0x1c0] sm:$0xff] %v842
        %891 = vst [vmem:[#allocation3 + $0x1c8] sm:$0xff] %v843
        %892 = vst [vmem:[#allocation3 + $0x1d0] sm:$0xff] %v844
        %893 = vst [vmem:[#allocation3 + $0x1d8] sm:$0xff] %v845
        %894 = vst [vmem:[#allocation3 + $0x1e0] sm:$0xff] %v846
        %895 = vst [vmem:[#allocation3 + $0x1e8] sm:$0xff] %v847
        %896 = vst [vmem:[#allocation3 + $0x1f0] sm:$0xff] %v848
        %897 = vst [vmem:[#allocation3 + $0x1f8] sm:$0xff] %v849
        %898 = vst [vmem:[#allocation3 + $0x200] sm:$0xff] %v850
        %899 = vst [vmem:[#allocation3 + $0x208] sm:$0xff] %v851
        %900 = vst [vmem:[#allocation3 + $0x210] sm:$0xff] %v852
        %901 = vst [vmem:[#allocation3 + $0x218] sm:$0xff] %v853
        %902 = vst [vmem:[#allocation3 + $0x220] sm:$0xff] %v854
        %903 = vst [vmem:[#allocation3 + $0x228] sm:$0xff] %v855
        %904 = vst [vmem:[#allocation3 + $0x230] sm:$0xff] %v856
        %905 = vst [vmem:[#allocation3 + $0x238] sm:$0xff] %v857
        %v906 = vld [vmem:[#allocation2] sm:$0xff]
        %v907 = vld [vmem:[#allocation2 + $0x8] sm:$0xff]
        %v908 = vld [vmem:[#allocation2 + $0x10] sm:$0xff]
        %v909 = vld [vmem:[#allocation2 + $0x18] sm:$0xff]
        %v910 = vld [vmem:[#allocation2 + $0x20] sm:$0xff]
        %v911 = vld [vmem:[#allocation2 + $0x28] sm:$0xff]
        %v912 = vld [vmem:[#allocation2 + $0x30] sm:$0xff]
        %v913 = vld [vmem:[#allocation2 + $0x38] sm:$0xff]
        %v914 = vld [vmem:[#allocation2 + $0x40] sm:$0xff]
        %v915 = vld [vmem:[#allocation2 + $0x48] sm:$0xff]
        %v916 = vld [vmem:[#allocation2 + $0x50] sm:$0xff]
        %v917 = vld [vmem:[#allocation2 + $0x58] sm:$0xff]
        %v918 = vld [vmem:[#allocation2 + $0x60] sm:$0xff]
        %v919 = vld [vmem:[#allocation2 + $0x68] sm:$0xff]
        %v920 = vld [vmem:[#allocation2 + $0x70] sm:$0xff]
        %v921 = vld [vmem:[#allocation2 + $0x78] sm:$0xff]
        %v922 = vld [vmem:[#allocation2 + $0x80] sm:$0xff]
        %v923 = vld [vmem:[#allocation2 + $0x88] sm:$0xff]
        %v924 = vld [vmem:[#allocation2 + $0x90] sm:$0xff]
        %v925 = vld [vmem:[#allocation2 + $0x98] sm:$0xff]
        %v926 = vld [vmem:[#allocation2 + $0xa0] sm:$0xff]
        %v927 = vld [vmem:[#allocation2 + $0xa8] sm:$0xff]
        %v928 = vld [vmem:[#allocation2 + $0xb0] sm:$0xff]
        %v929 = vld [vmem:[#allocation2 + $0xb8] sm:$0xff]
        %v930 = vld [vmem:[#allocation2 + $0xc0] sm:$0xff]
        %956 = vrot.lane.b32.xlu0 %v906, 125
        %v957 = vpop.permute.xlu0 %956
        %958 = vrot.lane.b32.xlu0 %v907, 125
        %v959 = vpop.permute.xlu0 %958
        %960 = vrot.lane.b32.xlu0 %v908, 125
        %v961 = vpop.permute.xlu0 %960
        %962 = vrot.lane.b32.xlu0 %v909, 125
        %v963 = vpop.permute.xlu0 %962
        %964 = vrot.lane.b32.xlu0 %v910, 125
        %v965 = vpop.permute.xlu0 %964
        %966 = vrot.lane.b32.xlu0 %v911, 125
        %v967 = vpop.permute.xlu0 %966
        %968 = vrot.lane.b32.xlu0 %v912, 125
        %v969 = vpop.permute.xlu0 %968
        %970 = vrot.lane.b32.xlu0 %v913, 125
        %v971 = vpop.permute.xlu0 %970
        %972 = vrot.lane.b32.xlu0 %v914, 125
        %v973 = vpop.permute.xlu0 %972
        %974 = vrot.lane.b32.xlu0 %v915, 125
        %v975 = vpop.permute.xlu0 %974
        %976 = vrot.lane.b32.xlu0 %v916, 125
        %v977 = vpop.permute.xlu0 %976
        %978 = vrot.lane.b32.xlu0 %v917, 125
        %v979 = vpop.permute.xlu0 %978
        %980 = vrot.lane.b32.xlu0 %v918, 125
        %v981 = vpop.permute.xlu0 %980
        %982 = vrot.lane.b32.xlu0 %v919, 125
        %v983 = vpop.permute.xlu0 %982
        %984 = vrot.lane.b32.xlu0 %v920, 125
        %v985 = vpop.permute.xlu0 %984
        %986 = vrot.lane.b32.xlu0 %v921, 125
        %v987 = vpop.permute.xlu0 %986
        %988 = vrot.lane.b32.xlu0 %v922, 125
        %v989 = vpop.permute.xlu0 %988
        %990 = vrot.lane.b32.xlu0 %v923, 125
        %v991 = vpop.permute.xlu0 %990
        %992 = vrot.lane.b32.xlu0 %v924, 125
        %v993 = vpop.permute.xlu0 %992
        %994 = vrot.lane.b32.xlu0 %v925, 125
        %v995 = vpop.permute.xlu0 %994
        %996 = vrot.lane.b32.xlu0 %v926, 125
        %v997 = vpop.permute.xlu0 %996
        %998 = vrot.lane.b32.xlu0 %v927, 125
        %v999 = vpop.permute.xlu0 %998
        %1000 = vrot.lane.b32.xlu0 %v928, 125
        %v1001 = vpop.permute.xlu0 %1000
        %1002 = vrot.lane.b32.xlu0 %v929, 125
        %v1003 = vpop.permute.xlu0 %1002
        %1004 = vrot.lane.b32.xlu0 %v930, 125
        %v1005 = vpop.permute.xlu0 %1004
        %vm1006 = vcmask 1022976
        %v1007 = vsel %vm1006, %v957, %v959
        %v1008 = vsel %vm1006, %v959, %v961
        %v1009 = vsel %vm1006, %v961, %v963
        %v1010 = vsel %vm1006, %v963, %v965
        %v1011 = vsel %vm1006, %v965, %v967
        %v1012 = vsel %vm1006, %v967, %v969
        %v1013 = vsel %vm1006, %v969, %v971
        %v1014 = vsel %vm1006, %v971, %v973
        %v1015 = vsel %vm1006, %v973, %v975
        %v1016 = vsel %vm1006, %v975, %v977
        %v1017 = vsel %vm1006, %v977, %v979
        %v1018 = vsel %vm1006, %v979, %v981
        %v1019 = vsel %vm1006, %v981, %v983
        %v1020 = vsel %vm1006, %v983, %v985
        %v1021 = vsel %vm1006, %v985, %v987
        %v1022 = vsel %vm1006, %v987, %v989
        %v1023 = vsel %vm1006, %v989, %v991
        %v1024 = vsel %vm1006, %v991, %v993
        %v1025 = vsel %vm1006, %v993, %v995
        %v1026 = vsel %vm1006, %v995, %v997
        %v1027 = vsel %vm1006, %v997, %v999
        %v1028 = vsel %vm1006, %v999, %v1001
        %v1029 = vsel %vm1006, %v1001, %v1003
        %v1030 = vsel %vm1006, %v1003, %v1005
        %1055 = vst [vmem:[#allocation3 + $0x240] sm:$0xff] %v1007
        %1056 = vst [vmem:[#allocation3 + $0x248] sm:$0xff] %v1008
        %1057 = vst [vmem:[#allocation3 + $0x250] sm:$0xff] %v1009
        %1058 = vst [vmem:[#allocation3 + $0x258] sm:$0xff] %v1010
        %1059 = vst [vmem:[#allocation3 + $0x260] sm:$0xff] %v1011
        %1060 = vst [vmem:[#allocation3 + $0x268] sm:$0xff] %v1012
        %1061 = vst [vmem:[#allocation3 + $0x270] sm:$0xff] %v1013
        %1062 = vst [vmem:[#allocation3 + $0x278] sm:$0xff] %v1014
        %1063 = vst [vmem:[#allocation3 + $0x280] sm:$0xff] %v1015
        %1064 = vst [vmem:[#allocation3 + $0x288] sm:$0xff] %v1016
        %1065 = vst [vmem:[#allocation3 + $0x290] sm:$0xff] %v1017
        %1066 = vst [vmem:[#allocation3 + $0x298] sm:$0xff] %v1018
        %1067 = vst [vmem:[#allocation3 + $0x2a0] sm:$0xff] %v1019
        %1068 = vst [vmem:[#allocation3 + $0x2a8] sm:$0xff] %v1020
        %1069 = vst [vmem:[#allocation3 + $0x2b0] sm:$0xff] %v1021
        %1070 = vst [vmem:[#allocation3 + $0x2b8] sm:$0xff] %v1022
        %1071 = vst [vmem:[#allocation3 + $0x2c0] sm:$0xff] %v1023
        %1072 = vst [vmem:[#allocation3 + $0x2c8] sm:$0xff] %v1024
        %1073 = vst [vmem:[#allocation3 + $0x2d0] sm:$0xff] %v1025
        %1074 = vst [vmem:[#allocation3 + $0x2d8] sm:$0xff] %v1026
        %1075 = vst [vmem:[#allocation3 + $0x2e0] sm:$0xff] %v1027
        %1076 = vst [vmem:[#allocation3 + $0x2e8] sm:$0xff] %v1028
        %1077 = vst [vmem:[#allocation3 + $0x2f0] sm:$0xff] %v1029
        %1078 = vst [vmem:[#allocation3 + $0x2f8] sm:$0xff] %v1030
        %v1079 = vld [vmem:[#allocation2] sm:$0xff]
        %v1080 = vld [vmem:[#allocation2 + $0x8] sm:$0xff]
        %v1081 = vld [vmem:[#allocation2 + $0x10] sm:$0xff]
        %v1082 = vld [vmem:[#allocation2 + $0x18] sm:$0xff]
        %v1083 = vld [vmem:[#allocation2 + $0x20] sm:$0xff]
        %v1084 = vld [vmem:[#allocation2 + $0x28] sm:$0xff]
        %v1085 = vld [vmem:[#allocation2 + $0x30] sm:$0xff]
        %v1086 = vld [vmem:[#allocation2 + $0x38] sm:$0xff]
        %v1087 = vld [vmem:[#allocation2 + $0x40] sm:$0xff]
        %v1088 = vld [vmem:[#allocation2 + $0x48] sm:$0xff]
        %v1089 = vld [vmem:[#allocation2 + $0x50] sm:$0xff]
        %v1090 = vld [vmem:[#allocation2 + $0x58] sm:$0xff]
        %v1091 = vld [vmem:[#allocation2 + $0x60] sm:$0xff]
        %v1092 = vld [vmem:[#allocation2 + $0x68] sm:$0xff]
        %v1093 = vld [vmem:[#allocation2 + $0x70] sm:$0xff]
        %v1094 = vld [vmem:[#allocation2 + $0x78] sm:$0xff]
        %v1095 = vld [vmem:[#allocation2 + $0x80] sm:$0xff]
        %v1096 = vld [vmem:[#allocation2 + $0x88] sm:$0xff]
        %v1097 = vld [vmem:[#allocation2 + $0x90] sm:$0xff]
        %v1098 = vld [vmem:[#allocation2 + $0x98] sm:$0xff]
        %v1099 = vld [vmem:[#allocation2 + $0xa0] sm:$0xff]
        %v1100 = vld [vmem:[#allocation2 + $0xa8] sm:$0xff]
        %v1101 = vld [vmem:[#allocation2 + $0xb0] sm:$0xff]
        %v1102 = vld [vmem:[#allocation2 + $0xb8] sm:$0xff]
        %v1103 = vld [vmem:[#allocation2 + $0xc0] sm:$0xff]
        %1129 = vrot.lane.b32.xlu0 %v1079, 124
        %v1130 = vpop.permute.xlu0 %1129
        %1131 = vrot.lane.b32.xlu0 %v1080, 124
        %v1132 = vpop.permute.xlu0 %1131
        %1133 = vrot.lane.b32.xlu0 %v1081, 124
        %v1134 = vpop.permute.xlu0 %1133
        %1135 = vrot.lane.b32.xlu0 %v1082, 124
        %v1136 = vpop.permute.xlu0 %1135
        %1137 = vrot.lane.b32.xlu0 %v1083, 124
        %v1138 = vpop.permute.xlu0 %1137
        %1139 = vrot.lane.b32.xlu0 %v1084, 124
        %v1140 = vpop.permute.xlu0 %1139
        %1141 = vrot.lane.b32.xlu0 %v1085, 124
        %v1142 = vpop.permute.xlu0 %1141
        %1143 = vrot.lane.b32.xlu0 %v1086, 124
        %v1144 = vpop.permute.xlu0 %1143
        %1145 = vrot.lane.b32.xlu0 %v1087, 124
        %v1146 = vpop.permute.xlu0 %1145
        %1147 = vrot.lane.b32.xlu0 %v1088, 124
        %v1148 = vpop.permute.xlu0 %1147
        %1149 = vrot.lane.b32.xlu0 %v1089, 124
        %v1150 = vpop.permute.xlu0 %1149
        %1151 = vrot.lane.b32.xlu0 %v1090, 124
        %v1152 = vpop.permute.xlu0 %1151
        %1153 = vrot.lane.b32.xlu0 %v1091, 124
        %v1154 = vpop.permute.xlu0 %1153
        %1155 = vrot.lane.b32.xlu0 %v1092, 124
        %v1156 = vpop.permute.xlu0 %1155
        %1157 = vrot.lane.b32.xlu0 %v1093, 124
        %v1158 = vpop.permute.xlu0 %1157
        %1159 = vrot.lane.b32.xlu0 %v1094, 124
        %v1160 = vpop.permute.xlu0 %1159
        %1161 = vrot.lane.b32.xlu0 %v1095, 124
        %v1162 = vpop.permute.xlu0 %1161
        %1163 = vrot.lane.b32.xlu0 %v1096, 124
        %v1164 = vpop.permute.xlu0 %1163
        %1165 = vrot.lane.b32.xlu0 %v1097, 124
        %v1166 = vpop.permute.xlu0 %1165
        %1167 = vrot.lane.b32.xlu0 %v1098, 124
        %v1168 = vpop.permute.xlu0 %1167
        %1169 = vrot.lane.b32.xlu0 %v1099, 124
        %v1170 = vpop.permute.xlu0 %1169
        %1171 = vrot.lane.b32.xlu0 %v1100, 124
        %v1172 = vpop.permute.xlu0 %1171
        %1173 = vrot.lane.b32.xlu0 %v1101, 124
        %v1174 = vpop.permute.xlu0 %1173
        %1175 = vrot.lane.b32.xlu0 %v1102, 124
        %v1176 = vpop.permute.xlu0 %1175
        %1177 = vrot.lane.b32.xlu0 %v1103, 124
        %v1178 = vpop.permute.xlu0 %1177
        %vm1179 = vcmask 1014784
        %v1180 = vsel %vm1179, %v1130, %v1132
        %v1181 = vsel %vm1179, %v1132, %v1134
        %v1182 = vsel %vm1179, %v1134, %v1136
        %v1183 = vsel %vm1179, %v1136, %v1138
        %v1184 = vsel %vm1179, %v1138, %v1140
        %v1185 = vsel %vm1179, %v1140, %v1142
        %v1186 = vsel %vm1179, %v1142, %v1144
        %v1187 = vsel %vm1179, %v1144, %v1146
        %v1188 = vsel %vm1179, %v1146, %v1148
        %v1189 = vsel %vm1179, %v1148, %v1150
        %v1190 = vsel %vm1179, %v1150, %v1152
        %v1191 = vsel %vm1179, %v1152, %v1154
        %v1192 = vsel %vm1179, %v1154, %v1156
        %v1193 = vsel %vm1179, %v1156, %v1158
        %v1194 = vsel %vm1179, %v1158, %v1160
        %v1195 = vsel %vm1179, %v1160, %v1162
        %v1196 = vsel %vm1179, %v1162, %v1164
        %v1197 = vsel %vm1179, %v1164, %v1166
        %v1198 = vsel %vm1179, %v1166, %v1168
        %v1199 = vsel %vm1179, %v1168, %v1170
        %v1200 = vsel %vm1179, %v1170, %v1172
        %v1201 = vsel %vm1179, %v1172, %v1174
        %v1202 = vsel %vm1179, %v1174, %v1176
        %v1203 = vsel %vm1179, %v1176, %v1178
        %1228 = vst [vmem:[#allocation3 + $0x300] sm:$0xff] %v1180
        %1229 = vst [vmem:[#allocation3 + $0x308] sm:$0xff] %v1181
        %1230 = vst [vmem:[#allocation3 + $0x310] sm:$0xff] %v1182
        %1231 = vst [vmem:[#allocation3 + $0x318] sm:$0xff] %v1183
        %1232 = vst [vmem:[#allocation3 + $0x320] sm:$0xff] %v1184
        %1233 = vst [vmem:[#allocation3 + $0x328] sm:$0xff] %v1185
        %1234 = vst [vmem:[#allocation3 + $0x330] sm:$0xff] %v1186
        %1235 = vst [vmem:[#allocation3 + $0x338] sm:$0xff] %v1187
        %1236 = vst [vmem:[#allocation3 + $0x340] sm:$0xff] %v1188
        %1237 = vst [vmem:[#allocation3 + $0x348] sm:$0xff] %v1189
        %1238 = vst [vmem:[#allocation3 + $0x350] sm:$0xff] %v1190
        %1239 = vst [vmem:[#allocation3 + $0x358] sm:$0xff] %v1191
        %1240 = vst [vmem:[#allocation3 + $0x360] sm:$0xff] %v1192
        %1241 = vst [vmem:[#allocation3 + $0x368] sm:$0xff] %v1193
        %1242 = vst [vmem:[#allocation3 + $0x370] sm:$0xff] %v1194
        %1243 = vst [vmem:[#allocation3 + $0x378] sm:$0xff] %v1195
        %1244 = vst [vmem:[#allocation3 + $0x380] sm:$0xff] %v1196
        %1245 = vst [vmem:[#allocation3 + $0x388] sm:$0xff] %v1197
        %1246 = vst [vmem:[#allocation3 + $0x390] sm:$0xff] %v1198
        %1247 = vst [vmem:[#allocation3 + $0x398] sm:$0xff] %v1199
        %1248 = vst [vmem:[#allocation3 + $0x3a0] sm:$0xff] %v1200
        %1249 = vst [vmem:[#allocation3 + $0x3a8] sm:$0xff] %v1201
        %1250 = vst [vmem:[#allocation3 + $0x3b0] sm:$0xff] %v1202
        %1251 = vst [vmem:[#allocation3 + $0x3b8] sm:$0xff] %v1203
        %v1252 = vld [vmem:[#allocation2 + $0x8] sm:$0xff]
        %v1253 = vld [vmem:[#allocation2 + $0x10] sm:$0xff]
        %v1254 = vld [vmem:[#allocation2 + $0x18] sm:$0xff]
        %v1255 = vld [vmem:[#allocation2 + $0x20] sm:$0xff]
        %v1256 = vld [vmem:[#allocation2 + $0x28] sm:$0xff]
        %v1257 = vld [vmem:[#allocation2 + $0x30] sm:$0xff]
        %v1258 = vld [vmem:[#allocation2 + $0x38] sm:$0xff]
        %v1259 = vld [vmem:[#allocation2 + $0x40] sm:$0xff]
        %v1260 = vld [vmem:[#allocation2 + $0x48] sm:$0xff]
        %v1261 = vld [vmem:[#allocation2 + $0x50] sm:$0xff]
        %v1262 = vld [vmem:[#allocation2 + $0x58] sm:$0xff]
        %v1263 = vld [vmem:[#allocation2 + $0x60] sm:$0xff]
        %v1264 = vld [vmem:[#allocation2 + $0x68] sm:$0xff]
        %v1265 = vld [vmem:[#allocation2 + $0x70] sm:$0xff]
        %v1266 = vld [vmem:[#allocation2 + $0x78] sm:$0xff]
        %v1267 = vld [vmem:[#allocation2 + $0x80] sm:$0xff]
        %v1268 = vld [vmem:[#allocation2 + $0x88] sm:$0xff]
        %v1269 = vld [vmem:[#allocation2 + $0x90] sm:$0xff]
        %v1270 = vld [vmem:[#allocation2 + $0x98] sm:$0xff]
        %v1271 = vld [vmem:[#allocation2 + $0xa0] sm:$0xff]
        %v1272 = vld [vmem:[#allocation2 + $0xa8] sm:$0xff]
        %v1273 = vld [vmem:[#allocation2 + $0xb0] sm:$0xff]
        %v1274 = vld [vmem:[#allocation2 + $0xb8] sm:$0xff]
        %v1275 = vld [vmem:[#allocation2 + $0xc0] sm:$0xff]
        %1276 = vst [vmem:[#allocation3 + $0x3c0] sm:$0xff] %v1252
        %1277 = vst [vmem:[#allocation3 + $0x3c8] sm:$0xff] %v1253
        %1278 = vst [vmem:[#allocation3 + $0x3d0] sm:$0xff] %v1254
        %1279 = vst [vmem:[#allocation3 + $0x3d8] sm:$0xff] %v1255
        %1280 = vst [vmem:[#allocation3 + $0x3e0] sm:$0xff] %v1256
        %1281 = vst [vmem:[#allocation3 + $0x3e8] sm:$0xff] %v1257
        %1282 = vst [vmem:[#allocation3 + $0x3f0] sm:$0xff] %v1258
        %1283 = vst [vmem:[#allocation3 + $0x3f8] sm:$0xff] %v1259
        %1284 = vst [vmem:[#allocation3 + $0x400] sm:$0xff] %v1260
        %1285 = vst [vmem:[#allocation3 + $0x408] sm:$0xff] %v1261
        %1286 = vst [vmem:[#allocation3 + $0x410] sm:$0xff] %v1262
        %1287 = vst [vmem:[#allocation3 + $0x418] sm:$0xff] %v1263
        %1288 = vst [vmem:[#allocation3 + $0x420] sm:$0xff] %v1264
        %1289 = vst [vmem:[#allocation3 + $0x428] sm:$0xff] %v1265
        %1290 = vst [vmem:[#allocation3 + $0x430] sm:$0xff] %v1266
        %1291 = vst [vmem:[#allocation3 + $0x438] sm:$0xff] %v1267
        %1292 = vst [vmem:[#allocation3 + $0x440] sm:$0xff] %v1268
        %1293 = vst [vmem:[#allocation3 + $0x448] sm:$0xff] %v1269
        %1294 = vst [vmem:[#allocation3 + $0x450] sm:$0xff] %v1270
        %1295 = vst [vmem:[#allocation3 + $0x458] sm:$0xff] %v1271
        %1296 = vst [vmem:[#allocation3 + $0x460] sm:$0xff] %v1272
        %1297 = vst [vmem:[#allocation3 + $0x468] sm:$0xff] %v1273
        %1298 = vst [vmem:[#allocation3 + $0x470] sm:$0xff] %v1274
        %1299 = vst [vmem:[#allocation3 + $0x478] sm:$0xff] %v1275
        %v1300 = vld [vmem:[#allocation2 + $0x8] sm:$0xff]
        %v1301 = vld [vmem:[#allocation2 + $0x10] sm:$0xff]
        %v1302 = vld [vmem:[#allocation2 + $0x18] sm:$0xff]
        %v1303 = vld [vmem:[#allocation2 + $0x20] sm:$0xff]
        %v1304 = vld [vmem:[#allocation2 + $0x28] sm:$0xff]
        %v1305 = vld [vmem:[#allocation2 + $0x30] sm:$0xff]
        %v1306 = vld [vmem:[#allocation2 + $0x38] sm:$0xff]
        %v1307 = vld [vmem:[#allocation2 + $0x40] sm:$0xff]
        %v1308 = vld [vmem:[#allocation2 + $0x48] sm:$0xff]
        %v1309 = vld [vmem:[#allocation2 + $0x50] sm:$0xff]
        %v1310 = vld [vmem:[#allocation2 + $0x58] sm:$0xff]
        %v1311 = vld [vmem:[#allocation2 + $0x60] sm:$0xff]
        %v1312 = vld [vmem:[#allocation2 + $0x68] sm:$0xff]
        %v1313 = vld [vmem:[#allocation2 + $0x70] sm:$0xff]
        %v1314 = vld [vmem:[#allocation2 + $0x78] sm:$0xff]
        %v1315 = vld [vmem:[#allocation2 + $0x80] sm:$0xff]
        %v1316 = vld [vmem:[#allocation2 + $0x88] sm:$0xff]
        %v1317 = vld [vmem:[#allocation2 + $0x90] sm:$0xff]
        %v1318 = vld [vmem:[#allocation2 + $0x98] sm:$0xff]
        %v1319 = vld [vmem:[#allocation2 + $0xa0] sm:$0xff]
        %v1320 = vld [vmem:[#allocation2 + $0xa8] sm:$0xff]
        %v1321 = vld [vmem:[#allocation2 + $0xb0] sm:$0xff]
        %v1322 = vld [vmem:[#allocation2 + $0xb8] sm:$0xff]
        %v1323 = vld [vmem:[#allocation2 + $0xc0] sm:$0xff]
        %v1324 = vld [vmem:[#allocation2 + $0xc8] sm:$0xff]
        %1350 = vrot.lane.b32.xlu0 %v1300, 127
        %v1351 = vpop.permute.xlu0 %1350
        %1352 = vrot.lane.b32.xlu0 %v1301, 127
        %v1353 = vpop.permute.xlu0 %1352
        %1354 = vrot.lane.b32.xlu0 %v1302, 127
        %v1355 = vpop.permute.xlu0 %1354
        %1356 = vrot.lane.b32.xlu0 %v1303, 127
        %v1357 = vpop.permute.xlu0 %1356
        %1358 = vrot.lane.b32.xlu0 %v1304, 127
        %v1359 = vpop.permute.xlu0 %1358
        %1360 = vrot.lane.b32.xlu0 %v1305, 127
        %v1361 = vpop.permute.xlu0 %1360
        %1362 = vrot.lane.b32.xlu0 %v1306, 127
        %v1363 = vpop.permute.xlu0 %1362
        %1364 = vrot.lane.b32.xlu0 %v1307, 127
        %v1365 = vpop.permute.xlu0 %1364
        %1366 = vrot.lane.b32.xlu0 %v1308, 127
        %v1367 = vpop.permute.xlu0 %1366
        %1368 = vrot.lane.b32.xlu0 %v1309, 127
        %v1369 = vpop.permute.xlu0 %1368
        %1370 = vrot.lane.b32.xlu0 %v1310, 127
        %v1371 = vpop.permute.xlu0 %1370
        %1372 = vrot.lane.b32.xlu0 %v1311, 127
        %v1373 = vpop.permute.xlu0 %1372
        %1374 = vrot.lane.b32.xlu0 %v1312, 127
        %v1375 = vpop.permute.xlu0 %1374
        %1376 = vrot.lane.b32.xlu0 %v1313, 127
        %v1377 = vpop.permute.xlu0 %1376
        %1378 = vrot.lane.b32.xlu0 %v1314, 127
        %v1379 = vpop.permute.xlu0 %1378
        %1380 = vrot.lane.b32.xlu0 %v1315, 127
        %v1381 = vpop.permute.xlu0 %1380
        %1382 = vrot.lane.b32.xlu0 %v1316, 127
        %v1383 = vpop.permute.xlu0 %1382
        %1384 = vrot.lane.b32.xlu0 %v1317, 127
        %v1385 = vpop.permute.xlu0 %1384
        %1386 = vrot.lane.b32.xlu0 %v1318, 127
        %v1387 = vpop.permute.xlu0 %1386
        %1388 = vrot.lane.b32.xlu0 %v1319, 127
        %v1389 = vpop.permute.xlu0 %1388
        %1390 = vrot.lane.b32.xlu0 %v1320, 127
        %v1391 = vpop.permute.xlu0 %1390
        %1392 = vrot.lane.b32.xlu0 %v1321, 127
        %v1393 = vpop.permute.xlu0 %1392
        %1394 = vrot.lane.b32.xlu0 %v1322, 127
        %v1395 = vpop.permute.xlu0 %1394
        %1396 = vrot.lane.b32.xlu0 %v1323, 127
        %v1397 = vpop.permute.xlu0 %1396
        %1398 = vrot.lane.b32.xlu0 %v1324, 127
        %v1399 = vpop.permute.xlu0 %1398
        %v1400 = vsel %vm660, %v1351, %v1353
        %v1401 = vsel %vm660, %v1353, %v1355
        %v1402 = vsel %vm660, %v1355, %v1357
        %v1403 = vsel %vm660, %v1357, %v1359
        %v1404 = vsel %vm660, %v1359, %v1361
        %v1405 = vsel %vm660, %v1361, %v1363
        %v1406 = vsel %vm660, %v1363, %v1365
        %v1407 = vsel %vm660, %v1365, %v1367
        %v1408 = vsel %vm660, %v1367, %v1369
        %v1409 = vsel %vm660, %v1369, %v1371
        %v1410 = vsel %vm660, %v1371, %v1373
        %v1411 = vsel %vm660, %v1373, %v1375
        %v1412 = vsel %vm660, %v1375, %v1377
        %v1413 = vsel %vm660, %v1377, %v1379
        %v1414 = vsel %vm660, %v1379, %v1381
        %v1415 = vsel %vm660, %v1381, %v1383
        %v1416 = vsel %vm660, %v1383, %v1385
        %v1417 = vsel %vm660, %v1385, %v1387
        %v1418 = vsel %vm660, %v1387, %v1389
        %v1419 = vsel %vm660, %v1389, %v1391
        %v1420 = vsel %vm660, %v1391, %v1393
        %v1421 = vsel %vm660, %v1393, %v1395
        %v1422 = vsel %vm660, %v1395, %v1397
        %v1423 = vsel %vm660, %v1397, %v1399
        %1448 = vst [vmem:[#allocation3 + $0x480] sm:$0xff] %v1400
        %1449 = vst [vmem:[#allocation3 + $0x488] sm:$0xff] %v1401
        %1450 = vst [vmem:[#allocation3 + $0x490] sm:$0xff] %v1402
        %1451 = vst [vmem:[#allocation3 + $0x498] sm:$0xff] %v1403
        %1452 = vst [vmem:[#allocation3 + $0x4a0] sm:$0xff] %v1404
        %1453 = vst [vmem:[#allocation3 + $0x4a8] sm:$0xff] %v1405
        %1454 = vst [vmem:[#allocation3 + $0x4b0] sm:$0xff] %v1406
        %1455 = vst [vmem:[#allocation3 + $0x4b8] sm:$0xff] %v1407
        %1456 = vst [vmem:[#allocation3 + $0x4c0] sm:$0xff] %v1408
        %1457 = vst [vmem:[#allocation3 + $0x4c8] sm:$0xff] %v1409
        %1458 = vst [vmem:[#allocation3 + $0x4d0] sm:$0xff] %v1410
        %1459 = vst [vmem:[#allocation3 + $0x4d8] sm:$0xff] %v1411
        %1460 = vst [vmem:[#allocation3 + $0x4e0] sm:$0xff] %v1412
        %1461 = vst [vmem:[#allocation3 + $0x4e8] sm:$0xff] %v1413
        %1462 = vst [vmem:[#allocation3 + $0x4f0] sm:$0xff] %v1414
        %1463 = vst [vmem:[#allocation3 + $0x4f8] sm:$0xff] %v1415
        %1464 = vst [vmem:[#allocation3 + $0x500] sm:$0xff] %v1416
        %1465 = vst [vmem:[#allocation3 + $0x508] sm:$0xff] %v1417
        %1466 = vst [vmem:[#allocation3 + $0x510] sm:$0xff] %v1418
        %1467 = vst [vmem:[#allocation3 + $0x518] sm:$0xff] %v1419
        %1468 = vst [vmem:[#allocation3 + $0x520] sm:$0xff] %v1420
        %1469 = vst [vmem:[#allocation3 + $0x528] sm:$0xff] %v1421
        %1470 = vst [vmem:[#allocation3 + $0x530] sm:$0xff] %v1422
        %1471 = vst [vmem:[#allocation3 + $0x538] sm:$0xff] %v1423
        %v1472 = vld [vmem:[#allocation2 + $0x8] sm:$0xff]
        %v1473 = vld [vmem:[#allocation2 + $0x10] sm:$0xff]
        %v1474 = vld [vmem:[#allocation2 + $0x18] sm:$0xff]
        %v1475 = vld [vmem:[#allocation2 + $0x20] sm:$0xff]
        %v1476 = vld [vmem:[#allocation2 + $0x28] sm:$0xff]
        %v1477 = vld [vmem:[#allocation2 + $0x30] sm:$0xff]
        %v1478 = vld [vmem:[#allocation2 + $0x38] sm:$0xff]
        %v1479 = vld [vmem:[#allocation2 + $0x40] sm:$0xff]
        %v1480 = vld [vmem:[#allocation2 + $0x48] sm:$0xff]
        %v1481 = vld [vmem:[#allocation2 + $0x50] sm:$0xff]
        %v1482 = vld [vmem:[#allocation2 + $0x58] sm:$0xff]
        %v1483 = vld [vmem:[#allocation2 + $0x60] sm:$0xff]
        %v1484 = vld [vmem:[#allocation2 + $0x68] sm:$0xff]
        %v1485 = vld [vmem:[#allocation2 + $0x70] sm:$0xff]
        %v1486 = vld [vmem:[#allocation2 + $0x78] sm:$0xff]
        %v1487 = vld [vmem:[#allocation2 + $0x80] sm:$0xff]
        %v1488 = vld [vmem:[#allocation2 + $0x88] sm:$0xff]
        %v1489 = vld [vmem:[#allocation2 + $0x90] sm:$0xff]
        %v1490 = vld [vmem:[#allocation2 + $0x98] sm:$0xff]
        %v1491 = vld [vmem:[#allocation2 + $0xa0] sm:$0xff]
        %v1492 = vld [vmem:[#allocation2 + $0xa8] sm:$0xff]
        %v1493 = vld [vmem:[#allocation2 + $0xb0] sm:$0xff]
        %v1494 = vld [vmem:[#allocation2 + $0xb8] sm:$0xff]
        %v1495 = vld [vmem:[#allocation2 + $0xc0] sm:$0xff]
        %v1496 = vld [vmem:[#allocation2 + $0xc8] sm:$0xff]
        %1522 = vrot.lane.b32.xlu0 %v1472, 126
        %v1523 = vpop.permute.xlu0 %1522
        %1524 = vrot.lane.b32.xlu0 %v1473, 126
        %v1525 = vpop.permute.xlu0 %1524
        %1526 = vrot.lane.b32.xlu0 %v1474, 126
        %v1527 = vpop.permute.xlu0 %1526
        %1528 = vrot.lane.b32.xlu0 %v1475, 126
        %v1529 = vpop.permute.xlu0 %1528
        %1530 = vrot.lane.b32.xlu0 %v1476, 126
        %v1531 = vpop.permute.xlu0 %1530
        %1532 = vrot.lane.b32.xlu0 %v1477, 126
        %v1533 = vpop.permute.xlu0 %1532
        %1534 = vrot.lane.b32.xlu0 %v1478, 126
        %v1535 = vpop.permute.xlu0 %1534
        %1536 = vrot.lane.b32.xlu0 %v1479, 126
        %v1537 = vpop.permute.xlu0 %1536
        %1538 = vrot.lane.b32.xlu0 %v1480, 126
        %v1539 = vpop.permute.xlu0 %1538
        %1540 = vrot.lane.b32.xlu0 %v1481, 126
        %v1541 = vpop.permute.xlu0 %1540
        %1542 = vrot.lane.b32.xlu0 %v1482, 126
        %v1543 = vpop.permute.xlu0 %1542
        %1544 = vrot.lane.b32.xlu0 %v1483, 126
        %v1545 = vpop.permute.xlu0 %1544
        %1546 = vrot.lane.b32.xlu0 %v1484, 126
        %v1547 = vpop.permute.xlu0 %1546
        %1548 = vrot.lane.b32.xlu0 %v1485, 126
        %v1549 = vpop.permute.xlu0 %1548
        %1550 = vrot.lane.b32.xlu0 %v1486, 126
        %v1551 = vpop.permute.xlu0 %1550
        %1552 = vrot.lane.b32.xlu0 %v1487, 126
        %v1553 = vpop.permute.xlu0 %1552
        %1554 = vrot.lane.b32.xlu0 %v1488, 126
        %v1555 = vpop.permute.xlu0 %1554
        %1556 = vrot.lane.b32.xlu0 %v1489, 126
        %v1557 = vpop.permute.xlu0 %1556
        %1558 = vrot.lane.b32.xlu0 %v1490, 126
        %v1559 = vpop.permute.xlu0 %1558
        %1560 = vrot.lane.b32.xlu0 %v1491, 126
        %v1561 = vpop.permute.xlu0 %1560
        %1562 = vrot.lane.b32.xlu0 %v1492, 126
        %v1563 = vpop.permute.xlu0 %1562
        %1564 = vrot.lane.b32.xlu0 %v1493, 126
        %v1565 = vpop.permute.xlu0 %1564
        %1566 = vrot.lane.b32.xlu0 %v1494, 126
        %v1567 = vpop.permute.xlu0 %1566
        %1568 = vrot.lane.b32.xlu0 %v1495, 126
        %v1569 = vpop.permute.xlu0 %1568
        %1570 = vrot.lane.b32.xlu0 %v1496, 126
        %v1571 = vpop.permute.xlu0 %1570
        %v1572 = vsel %vm833, %v1523, %v1525
        %v1573 = vsel %vm833, %v1525, %v1527
        %v1574 = vsel %vm833, %v1527, %v1529
        %v1575 = vsel %vm833, %v1529, %v1531
        %v1576 = vsel %vm833, %v1531, %v1533
        %v1577 = vsel %vm833, %v1533, %v1535
        %v1578 = vsel %vm833, %v1535, %v1537
        %v1579 = vsel %vm833, %v1537, %v1539
        %v1580 = vsel %vm833, %v1539, %v1541
        %v1581 = vsel %vm833, %v1541, %v1543
        %v1582 = vsel %vm833, %v1543, %v1545
        %v1583 = vsel %vm833, %v1545, %v1547
        %v1584 = vsel %vm833, %v1547, %v1549
        %v1585 = vsel %vm833, %v1549, %v1551
        %v1586 = vsel %vm833, %v1551, %v1553
        %v1587 = vsel %vm833, %v1553, %v1555
        %v1588 = vsel %vm833, %v1555, %v1557
        %v1589 = vsel %vm833, %v1557, %v1559
        %v1590 = vsel %vm833, %v1559, %v1561
        %v1591 = vsel %vm833, %v1561, %v1563
        %v1592 = vsel %vm833, %v1563, %v1565
        %v1593 = vsel %vm833, %v1565, %v1567
        %v1594 = vsel %vm833, %v1567, %v1569
        %v1595 = vsel %vm833, %v1569, %v1571
        %1620 = vst [vmem:[#allocation3 + $0x540] sm:$0xff] %v1572
        %1621 = vst [vmem:[#allocation3 + $0x548] sm:$0xff] %v1573
        %1622 = vst [vmem:[#allocation3 + $0x550] sm:$0xff] %v1574
        %1623 = vst [vmem:[#allocation3 + $0x558] sm:$0xff] %v1575
        %1624 = vst [vmem:[#allocation3 + $0x560] sm:$0xff] %v1576
        %1625 = vst [vmem:[#allocation3 + $0x568] sm:$0xff] %v1577
        %1626 = vst [vmem:[#allocation3 + $0x570] sm:$0xff] %v1578
        %1627 = vst [vmem:[#allocation3 + $0x578] sm:$0xff] %v1579
        %1628 = vst [vmem:[#allocation3 + $0x580] sm:$0xff] %v1580
        %1629 = vst [vmem:[#allocation3 + $0x588] sm:$0xff] %v1581
        %1630 = vst [vmem:[#allocation3 + $0x590] sm:$0xff] %v1582
        %1631 = vst [vmem:[#allocation3 + $0x598] sm:$0xff] %v1583
        %1632 = vst [vmem:[#allocation3 + $0x5a0] sm:$0xff] %v1584
        %1633 = vst [vmem:[#allocation3 + $0x5a8] sm:$0xff] %v1585
        %1634 = vst [vmem:[#allocation3 + $0x5b0] sm:$0xff] %v1586
        %1635 = vst [vmem:[#allocation3 + $0x5b8] sm:$0xff] %v1587
        %1636 = vst [vmem:[#allocation3 + $0x5c0] sm:$0xff] %v1588
        %1637 = vst [vmem:[#allocation3 + $0x5c8] sm:$0xff] %v1589
        %1638 = vst [vmem:[#allocation3 + $0x5d0] sm:$0xff] %v1590
        %1639 = vst [vmem:[#allocation3 + $0x5d8] sm:$0xff] %v1591
        %1640 = vst [vmem:[#allocation3 + $0x5e0] sm:$0xff] %v1592
        %1641 = vst [vmem:[#allocation3 + $0x5e8] sm:$0xff] %v1593
        %1642 = vst [vmem:[#allocation3 + $0x5f0] sm:$0xff] %v1594
        %1643 = vst [vmem:[#allocation3 + $0x5f8] sm:$0xff] %v1595
        %v1644 = vld [vmem:[#allocation2 + $0x8] sm:$0xff]
        %v1645 = vld [vmem:[#allocation2 + $0x10] sm:$0xff]
        %v1646 = vld [vmem:[#allocation2 + $0x18] sm:$0xff]
        %v1647 = vld [vmem:[#allocation2 + $0x20] sm:$0xff]
        %v1648 = vld [vmem:[#allocation2 + $0x28] sm:$0xff]
        %v1649 = vld [vmem:[#allocation2 + $0x30] sm:$0xff]
        %v1650 = vld [vmem:[#allocation2 + $0x38] sm:$0xff]
        %v1651 = vld [vmem:[#allocation2 + $0x40] sm:$0xff]
        %v1652 = vld [vmem:[#allocation2 + $0x48] sm:$0xff]
        %v1653 = vld [vmem:[#allocation2 + $0x50] sm:$0xff]
        %v1654 = vld [vmem:[#allocation2 + $0x58] sm:$0xff]
        %v1655 = vld [vmem:[#allocation2 + $0x60] sm:$0xff]
        %v1656 = vld [vmem:[#allocation2 + $0x68] sm:$0xff]
        %v1657 = vld [vmem:[#allocation2 + $0x70] sm:$0xff]
        %v1658 = vld [vmem:[#allocation2 + $0x78] sm:$0xff]
        %v1659 = vld [vmem:[#allocation2 + $0x80] sm:$0xff]
        %v1660 = vld [vmem:[#allocation2 + $0x88] sm:$0xff]
        %v1661 = vld [vmem:[#allocation2 + $0x90] sm:$0xff]
        %v1662 = vld [vmem:[#allocation2 + $0x98] sm:$0xff]
        %v1663 = vld [vmem:[#allocation2 + $0xa0] sm:$0xff]
        %v1664 = vld [vmem:[#allocation2 + $0xa8] sm:$0xff]
        %v1665 = vld [vmem:[#allocation2 + $0xb0] sm:$0xff]
        %v1666 = vld [vmem:[#allocation2 + $0xb8] sm:$0xff]
        %v1667 = vld [vmem:[#allocation2 + $0xc0] sm:$0xff]
        %v1668 = vld [vmem:[#allocation2 + $0xc8] sm:$0xff]
        %1694 = vrot.lane.b32.xlu0 %v1644, 125
        %v1695 = vpop.permute.xlu0 %1694
        %1696 = vrot.lane.b32.xlu0 %v1645, 125
        %v1697 = vpop.permute.xlu0 %1696
        %1698 = vrot.lane.b32.xlu0 %v1646, 125
        %v1699 = vpop.permute.xlu0 %1698
        %1700 = vrot.lane.b32.xlu0 %v1647, 125
        %v1701 = vpop.permute.xlu0 %1700
        %1702 = vrot.lane.b32.xlu0 %v1648, 125
        %v1703 = vpop.permute.xlu0 %1702
        %1704 = vrot.lane.b32.xlu0 %v1649, 125
        %v1705 = vpop.permute.xlu0 %1704
        %1706 = vrot.lane.b32.xlu0 %v1650, 125
        %v1707 = vpop.permute.xlu0 %1706
        %1708 = vrot.lane.b32.xlu0 %v1651, 125
        %v1709 = vpop.permute.xlu0 %1708
        %1710 = vrot.lane.b32.xlu0 %v1652, 125
        %v1711 = vpop.permute.xlu0 %1710
        %1712 = vrot.lane.b32.xlu0 %v1653, 125
        %v1713 = vpop.permute.xlu0 %1712
        %1714 = vrot.lane.b32.xlu0 %v1654, 125
        %v1715 = vpop.permute.xlu0 %1714
        %1716 = vrot.lane.b32.xlu0 %v1655, 125
        %v1717 = vpop.permute.xlu0 %1716
        %1718 = vrot.lane.b32.xlu0 %v1656, 125
        %v1719 = vpop.permute.xlu0 %1718
        %1720 = vrot.lane.b32.xlu0 %v1657, 125
        %v1721 = vpop.permute.xlu0 %1720
        %1722 = vrot.lane.b32.xlu0 %v1658, 125
        %v1723 = vpop.permute.xlu0 %1722
        %1724 = vrot.lane.b32.xlu0 %v1659, 125
        %v1725 = vpop.permute.xlu0 %1724
        %1726 = vrot.lane.b32.xlu0 %v1660, 125
        %v1727 = vpop.permute.xlu0 %1726
        %1728 = vrot.lane.b32.xlu0 %v1661, 125
        %v1729 = vpop.permute.xlu0 %1728
        %1730 = vrot.lane.b32.xlu0 %v1662, 125
        %v1731 = vpop.permute.xlu0 %1730
        %1732 = vrot.lane.b32.xlu0 %v1663, 125
        %v1733 = vpop.permute.xlu0 %1732
        %1734 = vrot.lane.b32.xlu0 %v1664, 125
        %v1735 = vpop.permute.xlu0 %1734
        %1736 = vrot.lane.b32.xlu0 %v1665, 125
        %v1737 = vpop.permute.xlu0 %1736
        %1738 = vrot.lane.b32.xlu0 %v1666, 125
        %v1739 = vpop.permute.xlu0 %1738
        %1740 = vrot.lane.b32.xlu0 %v1667, 125
        %v1741 = vpop.permute.xlu0 %1740
        %1742 = vrot.lane.b32.xlu0 %v1668, 125
        %v1743 = vpop.permute.xlu0 %1742
        %v1744 = vsel %vm1006, %v1695, %v1697
        %v1745 = vsel %vm1006, %v1697, %v1699
        %v1746 = vsel %vm1006, %v1699, %v1701
        %v1747 = vsel %vm1006, %v1701, %v1703
        %v1748 = vsel %vm1006, %v1703, %v1705
        %v1749 = vsel %vm1006, %v1705, %v1707
        %v1750 = vsel %vm1006, %v1707, %v1709
        %v1751 = vsel %vm1006, %v1709, %v1711
        %v1752 = vsel %vm1006, %v1711, %v1713
        %v1753 = vsel %vm1006, %v1713, %v1715
        %v1754 = vsel %vm1006, %v1715, %v1717
        %v1755 = vsel %vm1006, %v1717, %v1719
        %v1756 = vsel %vm1006, %v1719, %v1721
        %v1757 = vsel %vm1006, %v1721, %v1723
        %v1758 = vsel %vm1006, %v1723, %v1725
        %v1759 = vsel %vm1006, %v1725, %v1727
        %v1760 = vsel %vm1006, %v1727, %v1729
        %v1761 = vsel %vm1006, %v1729, %v1731
        %v1762 = vsel %vm1006, %v1731, %v1733
        %v1763 = vsel %vm1006, %v1733, %v1735
        %v1764 = vsel %vm1006, %v1735, %v1737
        %v1765 = vsel %vm1006, %v1737, %v1739
        %v1766 = vsel %vm1006, %v1739, %v1741
        %v1767 = vsel %vm1006, %v1741, %v1743
        %1792 = vst [vmem:[#allocation3 + $0x600] sm:$0xff] %v1744
        %1793 = vst [vmem:[#allocation3 + $0x608] sm:$0xff] %v1745
        %1794 = vst [vmem:[#allocation3 + $0x610] sm:$0xff] %v1746
        %1795 = vst [vmem:[#allocation3 + $0x618] sm:$0xff] %v1747
        %1796 = vst [vmem:[#allocation3 + $0x620] sm:$0xff] %v1748
        %1797 = vst [vmem:[#allocation3 + $0x628] sm:$0xff] %v1749
        %1798 = vst [vmem:[#allocation3 + $0x630] sm:$0xff] %v1750
        %1799 = vst [vmem:[#allocation3 + $0x638] sm:$0xff] %v1751
        %1800 = vst [vmem:[#allocation3 + $0x640] sm:$0xff] %v1752
        %1801 = vst [vmem:[#allocation3 + $0x648] sm:$0xff] %v1753
        %1802 = vst [vmem:[#allocation3 + $0x650] sm:$0xff] %v1754
        %1803 = vst [vmem:[#allocation3 + $0x658] sm:$0xff] %v1755
        %1804 = vst [vmem:[#allocation3 + $0x660] sm:$0xff] %v1756
        %1805 = vst [vmem:[#allocation3 + $0x668] sm:$0xff] %v1757
        %1806 = vst [vmem:[#allocation3 + $0x670] sm:$0xff] %v1758
        %1807 = vst [vmem:[#allocation3 + $0x678] sm:$0xff] %v1759
        %1808 = vst [vmem:[#allocation3 + $0x680] sm:$0xff] %v1760
        %1809 = vst [vmem:[#allocation3 + $0x688] sm:$0xff] %v1761
        %1810 = vst [vmem:[#allocation3 + $0x690] sm:$0xff] %v1762
        %1811 = vst [vmem:[#allocation3 + $0x698] sm:$0xff] %v1763
        %1812 = vst [vmem:[#allocation3 + $0x6a0] sm:$0xff] %v1764
        %1813 = vst [vmem:[#allocation3 + $0x6a8] sm:$0xff] %v1765
        %1814 = vst [vmem:[#allocation3 + $0x6b0] sm:$0xff] %v1766
        %1815 = vst [vmem:[#allocation3 + $0x6b8] sm:$0xff] %v1767
        %v1816 = vld [vmem:[#allocation2 + $0x8] sm:$0xff]
        %v1817 = vld [vmem:[#allocation2 + $0x10] sm:$0xff]
        %v1818 = vld [vmem:[#allocation2 + $0x18] sm:$0xff]
        %v1819 = vld [vmem:[#allocation2 + $0x20] sm:$0xff]
        %v1820 = vld [vmem:[#allocation2 + $0x28] sm:$0xff]
        %v1821 = vld [vmem:[#allocation2 + $0x30] sm:$0xff]
        %v1822 = vld [vmem:[#allocation2 + $0x38] sm:$0xff]
        %v1823 = vld [vmem:[#allocation2 + $0x40] sm:$0xff]
        %v1824 = vld [vmem:[#allocation2 + $0x48] sm:$0xff]
        %v1825 = vld [vmem:[#allocation2 + $0x50] sm:$0xff]
        %v1826 = vld [vmem:[#allocation2 + $0x58] sm:$0xff]
        %v1827 = vld [vmem:[#allocation2 + $0x60] sm:$0xff]
        %v1828 = vld [vmem:[#allocation2 + $0x68] sm:$0xff]
        %v1829 = vld [vmem:[#allocation2 + $0x70] sm:$0xff]
        %v1830 = vld [vmem:[#allocation2 + $0x78] sm:$0xff]
        %v1831 = vld [vmem:[#allocation2 + $0x80] sm:$0xff]
        %v1832 = vld [vmem:[#allocation2 + $0x88] sm:$0xff]
        %v1833 = vld [vmem:[#allocation2 + $0x90] sm:$0xff]
        %v1834 = vld [vmem:[#allocation2 + $0x98] sm:$0xff]
        %v1835 = vld [vmem:[#allocation2 + $0xa0] sm:$0xff]
        %v1836 = vld [vmem:[#allocation2 + $0xa8] sm:$0xff]
        %v1837 = vld [vmem:[#allocation2 + $0xb0] sm:$0xff]
        %v1838 = vld [vmem:[#allocation2 + $0xb8] sm:$0xff]
        %v1839 = vld [vmem:[#allocation2 + $0xc0] sm:$0xff]
        %v1840 = vld [vmem:[#allocation2 + $0xc8] sm:$0xff]
        %1866 = vrot.lane.b32.xlu0 %v1816, 124
        %v1867 = vpop.permute.xlu0 %1866
        %1868 = vrot.lane.b32.xlu0 %v1817, 124
        %v1869 = vpop.permute.xlu0 %1868
        %1870 = vrot.lane.b32.xlu0 %v1818, 124
        %v1871 = vpop.permute.xlu0 %1870
        %1872 = vrot.lane.b32.xlu0 %v1819, 124
        %v1873 = vpop.permute.xlu0 %1872
        %1874 = vrot.lane.b32.xlu0 %v1820, 124
        %v1875 = vpop.permute.xlu0 %1874
        %1876 = vrot.lane.b32.xlu0 %v1821, 124
        %v1877 = vpop.permute.xlu0 %1876
        %1878 = vrot.lane.b32.xlu0 %v1822, 124
        %v1879 = vpop.permute.xlu0 %1878
        %1880 = vrot.lane.b32.xlu0 %v1823, 124
        %v1881 = vpop.permute.xlu0 %1880
        %1882 = vrot.lane.b32.xlu0 %v1824, 124
        %v1883 = vpop.permute.xlu0 %1882
        %1884 = vrot.lane.b32.xlu0 %v1825, 124
        %v1885 = vpop.permute.xlu0 %1884
        %1886 = vrot.lane.b32.xlu0 %v1826, 124
        %v1887 = vpop.permute.xlu0 %1886
        %1888 = vrot.lane.b32.xlu0 %v1827, 124
        %v1889 = vpop.permute.xlu0 %1888
        %1890 = vrot.lane.b32.xlu0 %v1828, 124
        %v1891 = vpop.permute.xlu0 %1890
        %1892 = vrot.lane.b32.xlu0 %v1829, 124
        %v1893 = vpop.permute.xlu0 %1892
        %1894 = vrot.lane.b32.xlu0 %v1830, 124
        %v1895 = vpop.permute.xlu0 %1894
        %1896 = vrot.lane.b32.xlu0 %v1831, 124
        %v1897 = vpop.permute.xlu0 %1896
        %1898 = vrot.lane.b32.xlu0 %v1832, 124
        %v1899 = vpop.permute.xlu0 %1898
        %1900 = vrot.lane.b32.xlu0 %v1833, 124
        %v1901 = vpop.permute.xlu0 %1900
        %1902 = vrot.lane.b32.xlu0 %v1834, 124
        %v1903 = vpop.permute.xlu0 %1902
        %1904 = vrot.lane.b32.xlu0 %v1835, 124
        %v1905 = vpop.permute.xlu0 %1904
        %1906 = vrot.lane.b32.xlu0 %v1836, 124
        %v1907 = vpop.permute.xlu0 %1906
        %1908 = vrot.lane.b32.xlu0 %v1837, 124
        %v1909 = vpop.permute.xlu0 %1908
        %1910 = vrot.lane.b32.xlu0 %v1838, 124
        %v1911 = vpop.permute.xlu0 %1910
        %1912 = vrot.lane.b32.xlu0 %v1839, 124
        %v1913 = vpop.permute.xlu0 %1912
        %1914 = vrot.lane.b32.xlu0 %v1840, 124
        %v1915 = vpop.permute.xlu0 %1914
        %v1916 = vsel %vm1179, %v1867, %v1869
        %v1917 = vsel %vm1179, %v1869, %v1871
        %v1918 = vsel %vm1179, %v1871, %v1873
        %v1919 = vsel %vm1179, %v1873, %v1875
        %v1920 = vsel %vm1179, %v1875, %v1877
        %v1921 = vsel %vm1179, %v1877, %v1879
        %v1922 = vsel %vm1179, %v1879, %v1881
        %v1923 = vsel %vm1179, %v1881, %v1883
        %v1924 = vsel %vm1179, %v1883, %v1885
        %v1925 = vsel %vm1179, %v1885, %v1887
        %v1926 = vsel %vm1179, %v1887, %v1889
        %v1927 = vsel %vm1179, %v1889, %v1891
        %v1928 = vsel %vm1179, %v1891, %v1893
        %v1929 = vsel %vm1179, %v1893, %v1895
        %v1930 = vsel %vm1179, %v1895, %v1897
        %v1931 = vsel %vm1179, %v1897, %v1899
        %v1932 = vsel %vm1179, %v1899, %v1901
        %v1933 = vsel %vm1179, %v1901, %v1903
        %v1934 = vsel %vm1179, %v1903, %v1905
        %v1935 = vsel %vm1179, %v1905, %v1907
        %v1936 = vsel %vm1179, %v1907, %v1909
        %v1937 = vsel %vm1179, %v1909, %v1911
        %v1938 = vsel %vm1179, %v1911, %v1913
        %v1939 = vsel %vm1179, %v1913, %v1915
        %1964 = vst [vmem:[#allocation3 + $0x6c0] sm:$0xff] %v1916
        %1965 = vst [vmem:[#allocation3 + $0x6c8] sm:$0xff] %v1917
        %1966 = vst [vmem:[#allocation3 + $0x6d0] sm:$0xff] %v1918
        %1967 = vst [vmem:[#allocation3 + $0x6d8] sm:$0xff] %v1919
        %1968 = vst [vmem:[#allocation3 + $0x6e0] sm:$0xff] %v1920
        %1969 = vst [vmem:[#allocation3 + $0x6e8] sm:$0xff] %v1921
        %1970 = vst [vmem:[#allocation3 + $0x6f0] sm:$0xff] %v1922
        %1971 = vst [vmem:[#allocation3 + $0x6f8] sm:$0xff] %v1923
        %1972 = vst [vmem:[#allocation3 + $0x700] sm:$0xff] %v1924
        %1973 = vst [vmem:[#allocation3 + $0x708] sm:$0xff] %v1925
        %1974 = vst [vmem:[#allocation3 + $0x710] sm:$0xff] %v1926
        %1975 = vst [vmem:[#allocation3 + $0x718] sm:$0xff] %v1927
        %1976 = vst [vmem:[#allocation3 + $0x720] sm:$0xff] %v1928
        %1977 = vst [vmem:[#allocation3 + $0x728] sm:$0xff] %v1929
        %1978 = vst [vmem:[#allocation3 + $0x730] sm:$0xff] %v1930
        %1979 = vst [vmem:[#allocation3 + $0x738] sm:$0xff] %v1931
        %1980 = vst [vmem:[#allocation3 + $0x740] sm:$0xff] %v1932
        %1981 = vst [vmem:[#allocation3 + $0x748] sm:$0xff] %v1933
        %1982 = vst [vmem:[#allocation3 + $0x750] sm:$0xff] %v1934
        %1983 = vst [vmem:[#allocation3 + $0x758] sm:$0xff] %v1935
        %1984 = vst [vmem:[#allocation3 + $0x760] sm:$0xff] %v1936
        %1985 = vst [vmem:[#allocation3 + $0x768] sm:$0xff] %v1937
        %1986 = vst [vmem:[#allocation3 + $0x770] sm:$0xff] %v1938
        %1987 = vst [vmem:[#allocation3 + $0x778] sm:$0xff] %v1939
        %v1988 = vld [vmem:[#allocation2 + $0x10] sm:$0xff]
        %v1989 = vld [vmem:[#allocation2 + $0x18] sm:$0xff]
        %v1990 = vld [vmem:[#allocation2 + $0x20] sm:$0xff]
        %v1991 = vld [vmem:[#allocation2 + $0x28] sm:$0xff]
        %v1992 = vld [vmem:[#allocation2 + $0x30] sm:$0xff]
        %v1993 = vld [vmem:[#allocation2 + $0x38] sm:$0xff]
        %v1994 = vld [vmem:[#allocation2 + $0x40] sm:$0xff]
        %v1995 = vld [vmem:[#allocation2 + $0x48] sm:$0xff]
        %v1996 = vld [vmem:[#allocation2 + $0x50] sm:$0xff]
        %v1997 = vld [vmem:[#allocation2 + $0x58] sm:$0xff]
        %v1998 = vld [vmem:[#allocation2 + $0x60] sm:$0xff]
        %v1999 = vld [vmem:[#allocation2 + $0x68] sm:$0xff]
        %v2000 = vld [vmem:[#allocation2 + $0x70] sm:$0xff]
        %v2001 = vld [vmem:[#allocation2 + $0x78] sm:$0xff]
        %v2002 = vld [vmem:[#allocation2 + $0x80] sm:$0xff]
        %v2003 = vld [vmem:[#allocation2 + $0x88] sm:$0xff]
        %v2004 = vld [vmem:[#allocation2 + $0x90] sm:$0xff]
        %v2005 = vld [vmem:[#allocation2 + $0x98] sm:$0xff]
        %v2006 = vld [vmem:[#allocation2 + $0xa0] sm:$0xff]
        %v2007 = vld [vmem:[#allocation2 + $0xa8] sm:$0xff]
        %v2008 = vld [vmem:[#allocation2 + $0xb0] sm:$0xff]
        %v2009 = vld [vmem:[#allocation2 + $0xb8] sm:$0xff]
        %v2010 = vld [vmem:[#allocation2 + $0xc0] sm:$0xff]
        %v2011 = vld [vmem:[#allocation2 + $0xc8] sm:$0xff]
        %2012 = vst [vmem:[#allocation3 + $0x780] sm:$0xff] %v1988
        %2013 = vst [vmem:[#allocation3 + $0x788] sm:$0xff] %v1989
        %2014 = vst [vmem:[#allocation3 + $0x790] sm:$0xff] %v1990
        %2015 = vst [vmem:[#allocation3 + $0x798] sm:$0xff] %v1991
        %2016 = vst [vmem:[#allocation3 + $0x7a0] sm:$0xff] %v1992
        %2017 = vst [vmem:[#allocation3 + $0x7a8] sm:$0xff] %v1993
        %2018 = vst [vmem:[#allocation3 + $0x7b0] sm:$0xff] %v1994
        %2019 = vst [vmem:[#allocation3 + $0x7b8] sm:$0xff] %v1995
        %2020 = vst [vmem:[#allocation3 + $0x7c0] sm:$0xff] %v1996
        %2021 = vst [vmem:[#allocation3 + $0x7c8] sm:$0xff] %v1997
        %2022 = vst [vmem:[#allocation3 + $0x7d0] sm:$0xff] %v1998
        %2023 = vst [vmem:[#allocation3 + $0x7d8] sm:$0xff] %v1999
        %2024 = vst [vmem:[#allocation3 + $0x7e0] sm:$0xff] %v2000
        %2025 = vst [vmem:[#allocation3 + $0x7e8] sm:$0xff] %v2001
        %2026 = vst [vmem:[#allocation3 + $0x7f0] sm:$0xff] %v2002
        %2027 = vst [vmem:[#allocation3 + $0x7f8] sm:$0xff] %v2003
        %2028 = vst [vmem:[#allocation3 + $0x800] sm:$0xff] %v2004
        %2029 = vst [vmem:[#allocation3 + $0x808] sm:$0xff] %v2005
        %2030 = vst [vmem:[#allocation3 + $0x810] sm:$0xff] %v2006
        %2031 = vst [vmem:[#allocation3 + $0x818] sm:$0xff] %v2007
        %2032 = vst [vmem:[#allocation3 + $0x820] sm:$0xff] %v2008
        %2033 = vst [vmem:[#allocation3 + $0x828] sm:$0xff] %v2009
        %2034 = vst [vmem:[#allocation3 + $0x830] sm:$0xff] %v2010
        %2035 = vst [vmem:[#allocation3 + $0x838] sm:$0xff] %v2011
        %v2036 = vld [vmem:[#allocation2 + $0x10] sm:$0xff]
        %v2037 = vld [vmem:[#allocation2 + $0x18] sm:$0xff]
        %v2038 = vld [vmem:[#allocation2 + $0x20] sm:$0xff]
        %v2039 = vld [vmem:[#allocation2 + $0x28] sm:$0xff]
        %v2040 = vld [vmem:[#allocation2 + $0x30] sm:$0xff]
        %v2041 = vld [vmem:[#allocation2 + $0x38] sm:$0xff]
        %v2042 = vld [vmem:[#allocation2 + $0x40] sm:$0xff]
        %v2043 = vld [vmem:[#allocation2 + $0x48] sm:$0xff]
        %v2044 = vld [vmem:[#allocation2 + $0x50] sm:$0xff]
        %v2045 = vld [vmem:[#allocation2 + $0x58] sm:$0xff]
        %v2046 = vld [vmem:[#allocation2 + $0x60] sm:$0xff]
        %v2047 = vld [vmem:[#allocation2 + $0x68] sm:$0xff]
        %v2048 = vld [vmem:[#allocation2 + $0x70] sm:$0xff]
        %v2049 = vld [vmem:[#allocation2 + $0x78] sm:$0xff]
        %v2050 = vld [vmem:[#allocation2 + $0x80] sm:$0xff]
        %v2051 = vld [vmem:[#allocation2 + $0x88] sm:$0xff]
        %v2052 = vld [vmem:[#allocation2 + $0x90] sm:$0xff]
        %v2053 = vld [vmem:[#allocation2 + $0x98] sm:$0xff]
        %v2054 = vld [vmem:[#allocation2 + $0xa0] sm:$0xff]
        %v2055 = vld [vmem:[#allocation2 + $0xa8] sm:$0xff]
        %v2056 = vld [vmem:[#allocation2 + $0xb0] sm:$0xff]
        %v2057 = vld [vmem:[#allocation2 + $0xb8] sm:$0xff]
        %v2058 = vld [vmem:[#allocation2 + $0xc0] sm:$0xff]
        %v2059 = vld [vmem:[#allocation2 + $0xc8] sm:$0xff]
        %v2060 = vld [vmem:[#allocation2 + $0xd0] sm:$0xff]
        %2086 = vrot.lane.b32.xlu0 %v2036, 127
        %v2087 = vpop.permute.xlu0 %2086
        %2088 = vrot.lane.b32.xlu0 %v2037, 127
        %v2089 = vpop.permute.xlu0 %2088
        %2090 = vrot.lane.b32.xlu0 %v2038, 127
        %v2091 = vpop.permute.xlu0 %2090
        %2092 = vrot.lane.b32.xlu0 %v2039, 127
        %v2093 = vpop.permute.xlu0 %2092
        %2094 = vrot.lane.b32.xlu0 %v2040, 127
        %v2095 = vpop.permute.xlu0 %2094
        %2096 = vrot.lane.b32.xlu0 %v2041, 127
        %v2097 = vpop.permute.xlu0 %2096
        %2098 = vrot.lane.b32.xlu0 %v2042, 127
        %v2099 = vpop.permute.xlu0 %2098
        %2100 = vrot.lane.b32.xlu0 %v2043, 127
        %v2101 = vpop.permute.xlu0 %2100
        %2102 = vrot.lane.b32.xlu0 %v2044, 127
        %v2103 = vpop.permute.xlu0 %2102
        %2104 = vrot.lane.b32.xlu0 %v2045, 127
        %v2105 = vpop.permute.xlu0 %2104
        %2106 = vrot.lane.b32.xlu0 %v2046, 127
        %v2107 = vpop.permute.xlu0 %2106
        %2108 = vrot.lane.b32.xlu0 %v2047, 127
        %v2109 = vpop.permute.xlu0 %2108
        %2110 = vrot.lane.b32.xlu0 %v2048, 127
        %v2111 = vpop.permute.xlu0 %2110
        %2112 = vrot.lane.b32.xlu0 %v2049, 127
        %v2113 = vpop.permute.xlu0 %2112
        %2114 = vrot.lane.b32.xlu0 %v2050, 127
        %v2115 = vpop.permute.xlu0 %2114
        %2116 = vrot.lane.b32.xlu0 %v2051, 127
        %v2117 = vpop.permute.xlu0 %2116
        %2118 = vrot.lane.b32.xlu0 %v2052, 127
        %v2119 = vpop.permute.xlu0 %2118
        %2120 = vrot.lane.b32.xlu0 %v2053, 127
        %v2121 = vpop.permute.xlu0 %2120
        %2122 = vrot.lane.b32.xlu0 %v2054, 127
        %v2123 = vpop.permute.xlu0 %2122
        %2124 = vrot.lane.b32.xlu0 %v2055, 127
        %v2125 = vpop.permute.xlu0 %2124
        %2126 = vrot.lane.b32.xlu0 %v2056, 127
        %v2127 = vpop.permute.xlu0 %2126
        %2128 = vrot.lane.b32.xlu0 %v2057, 127
        %v2129 = vpop.permute.xlu0 %2128
        %2130 = vrot.lane.b32.xlu0 %v2058, 127
        %v2131 = vpop.permute.xlu0 %2130
        %2132 = vrot.lane.b32.xlu0 %v2059, 127
        %v2133 = vpop.permute.xlu0 %2132
        %2134 = vrot.lane.b32.xlu0 %v2060, 127
        %v2135 = vpop.permute.xlu0 %2134
        %v2136 = vsel %vm660, %v2087, %v2089
        %v2137 = vsel %vm660, %v2089, %v2091
        %v2138 = vsel %vm660, %v2091, %v2093
        %v2139 = vsel %vm660, %v2093, %v2095
        %v2140 = vsel %vm660, %v2095, %v2097
        %v2141 = vsel %vm660, %v2097, %v2099
        %v2142 = vsel %vm660, %v2099, %v2101
        %v2143 = vsel %vm660, %v2101, %v2103
        %v2144 = vsel %vm660, %v2103, %v2105
        %v2145 = vsel %vm660, %v2105, %v2107
        %v2146 = vsel %vm660, %v2107, %v2109
        %v2147 = vsel %vm660, %v2109, %v2111
        %v2148 = vsel %vm660, %v2111, %v2113
        %v2149 = vsel %vm660, %v2113, %v2115
        %v2150 = vsel %vm660, %v2115, %v2117
        %v2151 = vsel %vm660, %v2117, %v2119
        %v2152 = vsel %vm660, %v2119, %v2121
        %v2153 = vsel %vm660, %v2121, %v2123
        %v2154 = vsel %vm660, %v2123, %v2125
        %v2155 = vsel %vm660, %v2125, %v2127
        %v2156 = vsel %vm660, %v2127, %v2129
        %v2157 = vsel %vm660, %v2129, %v2131
        %v2158 = vsel %vm660, %v2131, %v2133
        %v2159 = vsel %vm660, %v2133, %v2135
        %2184 = vst [vmem:[#allocation3 + $0x840] sm:$0xff] %v2136
        %2185 = vst [vmem:[#allocation3 + $0x848] sm:$0xff] %v2137
        %2186 = vst [vmem:[#allocation3 + $0x850] sm:$0xff] %v2138
        %2187 = vst [vmem:[#allocation3 + $0x858] sm:$0xff] %v2139
        %2188 = vst [vmem:[#allocation3 + $0x860] sm:$0xff] %v2140
        %2189 = vst [vmem:[#allocation3 + $0x868] sm:$0xff] %v2141
        %2190 = vst [vmem:[#allocation3 + $0x870] sm:$0xff] %v2142
        %2191 = vst [vmem:[#allocation3 + $0x878] sm:$0xff] %v2143
        %2192 = vst [vmem:[#allocation3 + $0x880] sm:$0xff] %v2144
        %2193 = vst [vmem:[#allocation3 + $0x888] sm:$0xff] %v2145
        %2194 = vst [vmem:[#allocation3 + $0x890] sm:$0xff] %v2146
        %2195 = vst [vmem:[#allocation3 + $0x898] sm:$0xff] %v2147
        %2196 = vst [vmem:[#allocation3 + $0x8a0] sm:$0xff] %v2148
        %2197 = vst [vmem:[#allocation3 + $0x8a8] sm:$0xff] %v2149
        %2198 = vst [vmem:[#allocation3 + $0x8b0] sm:$0xff] %v2150
        %2199 = vst [vmem:[#allocation3 + $0x8b8] sm:$0xff] %v2151
        %2200 = vst [vmem:[#allocation3 + $0x8c0] sm:$0xff] %v2152
        %2201 = vst [vmem:[#allocation3 + $0x8c8] sm:$0xff] %v2153
        %2202 = vst [vmem:[#allocation3 + $0x8d0] sm:$0xff] %v2154
        %2203 = vst [vmem:[#allocation3 + $0x8d8] sm:$0xff] %v2155
        %2204 = vst [vmem:[#allocation3 + $0x8e0] sm:$0xff] %v2156
        %2205 = vst [vmem:[#allocation3 + $0x8e8] sm:$0xff] %v2157
        %2206 = vst [vmem:[#allocation3 + $0x8f0] sm:$0xff] %v2158
        %2207 = vst [vmem:[#allocation3 + $0x8f8] sm:$0xff] %v2159
        %v2208 = vld [vmem:[#allocation2 + $0x10] sm:$0xff]
        %v2209 = vld [vmem:[#allocation2 + $0x18] sm:$0xff]
        %v2210 = vld [vmem:[#allocation2 + $0x20] sm:$0xff]
        %v2211 = vld [vmem:[#allocation2 + $0x28] sm:$0xff]
        %v2212 = vld [vmem:[#allocation2 + $0x30] sm:$0xff]
        %v2213 = vld [vmem:[#allocation2 + $0x38] sm:$0xff]
        %v2214 = vld [vmem:[#allocation2 + $0x40] sm:$0xff]
        %v2215 = vld [vmem:[#allocation2 + $0x48] sm:$0xff]
        %v2216 = vld [vmem:[#allocation2 + $0x50] sm:$0xff]
        %v2217 = vld [vmem:[#allocation2 + $0x58] sm:$0xff]
        %v2218 = vld [vmem:[#allocation2 + $0x60] sm:$0xff]
        %v2219 = vld [vmem:[#allocation2 + $0x68] sm:$0xff]
        %v2220 = vld [vmem:[#allocation2 + $0x70] sm:$0xff]
        %v2221 = vld [vmem:[#allocation2 + $0x78] sm:$0xff]
        %v2222 = vld [vmem:[#allocation2 + $0x80] sm:$0xff]
        %v2223 = vld [vmem:[#allocation2 + $0x88] sm:$0xff]
        %v2224 = vld [vmem:[#allocation2 + $0x90] sm:$0xff]
        %v2225 = vld [vmem:[#allocation2 + $0x98] sm:$0xff]
        %v2226 = vld [vmem:[#allocation2 + $0xa0] sm:$0xff]
        %v2227 = vld [vmem:[#allocation2 + $0xa8] sm:$0xff]
        %v2228 = vld [vmem:[#allocation2 + $0xb0] sm:$0xff]
        %v2229 = vld [vmem:[#allocation2 + $0xb8] sm:$0xff]
        %v2230 = vld [vmem:[#allocation2 + $0xc0] sm:$0xff]
        %v2231 = vld [vmem:[#allocation2 + $0xc8] sm:$0xff]
        %v2232 = vld [vmem:[#allocation2 + $0xd0] sm:$0xff]
        %2258 = vrot.lane.b32.xlu0 %v2208, 126
        %v2259 = vpop.permute.xlu0 %2258
        %2260 = vrot.lane.b32.xlu0 %v2209, 126
        %v2261 = vpop.permute.xlu0 %2260
        %2262 = vrot.lane.b32.xlu0 %v2210, 126
        %v2263 = vpop.permute.xlu0 %2262
        %2264 = vrot.lane.b32.xlu0 %v2211, 126
        %v2265 = vpop.permute.xlu0 %2264
        %2266 = vrot.lane.b32.xlu0 %v2212, 126
        %v2267 = vpop.permute.xlu0 %2266
        %2268 = vrot.lane.b32.xlu0 %v2213, 126
        %v2269 = vpop.permute.xlu0 %2268
        %2270 = vrot.lane.b32.xlu0 %v2214, 126
        %v2271 = vpop.permute.xlu0 %2270
        %2272 = vrot.lane.b32.xlu0 %v2215, 126
        %v2273 = vpop.permute.xlu0 %2272
        %2274 = vrot.lane.b32.xlu0 %v2216, 126
        %v2275 = vpop.permute.xlu0 %2274
        %2276 = vrot.lane.b32.xlu0 %v2217, 126
        %v2277 = vpop.permute.xlu0 %2276
        %2278 = vrot.lane.b32.xlu0 %v2218, 126
        %v2279 = vpop.permute.xlu0 %2278
        %2280 = vrot.lane.b32.xlu0 %v2219, 126
        %v2281 = vpop.permute.xlu0 %2280
        %2282 = vrot.lane.b32.xlu0 %v2220, 126
        %v2283 = vpop.permute.xlu0 %2282
        %2284 = vrot.lane.b32.xlu0 %v2221, 126
        %v2285 = vpop.permute.xlu0 %2284
        %2286 = vrot.lane.b32.xlu0 %v2222, 126
        %v2287 = vpop.permute.xlu0 %2286
        %2288 = vrot.lane.b32.xlu0 %v2223, 126
        %v2289 = vpop.permute.xlu0 %2288
        %2290 = vrot.lane.b32.xlu0 %v2224, 126
        %v2291 = vpop.permute.xlu0 %2290
        %2292 = vrot.lane.b32.xlu0 %v2225, 126
        %v2293 = vpop.permute.xlu0 %2292
        %2294 = vrot.lane.b32.xlu0 %v2226, 126
        %v2295 = vpop.permute.xlu0 %2294
        %2296 = vrot.lane.b32.xlu0 %v2227, 126
        %v2297 = vpop.permute.xlu0 %2296
        %2298 = vrot.lane.b32.xlu0 %v2228, 126
        %v2299 = vpop.permute.xlu0 %2298
        %2300 = vrot.lane.b32.xlu0 %v2229, 126
        %v2301 = vpop.permute.xlu0 %2300
        %2302 = vrot.lane.b32.xlu0 %v2230, 126
        %v2303 = vpop.permute.xlu0 %2302
        %2304 = vrot.lane.b32.xlu0 %v2231, 126
        %v2305 = vpop.permute.xlu0 %2304
        %2306 = vrot.lane.b32.xlu0 %v2232, 126
        %v2307 = vpop.permute.xlu0 %2306
        %v2308 = vsel %vm833, %v2259, %v2261
        %v2309 = vsel %vm833, %v2261, %v2263
        %v2310 = vsel %vm833, %v2263, %v2265
        %v2311 = vsel %vm833, %v2265, %v2267
        %v2312 = vsel %vm833, %v2267, %v2269
        %v2313 = vsel %vm833, %v2269, %v2271
        %v2314 = vsel %vm833, %v2271, %v2273
        %v2315 = vsel %vm833, %v2273, %v2275
        %v2316 = vsel %vm833, %v2275, %v2277
        %v2317 = vsel %vm833, %v2277, %v2279
        %v2318 = vsel %vm833, %v2279, %v2281
        %v2319 = vsel %vm833, %v2281, %v2283
        %v2320 = vsel %vm833, %v2283, %v2285
        %v2321 = vsel %vm833, %v2285, %v2287
        %v2322 = vsel %vm833, %v2287, %v2289
        %v2323 = vsel %vm833, %v2289, %v2291
        %v2324 = vsel %vm833, %v2291, %v2293
        %v2325 = vsel %vm833, %v2293, %v2295
        %v2326 = vsel %vm833, %v2295, %v2297
        %v2327 = vsel %vm833, %v2297, %v2299
        %v2328 = vsel %vm833, %v2299, %v2301
        %v2329 = vsel %vm833, %v2301, %v2303
        %v2330 = vsel %vm833, %v2303, %v2305
        %v2331 = vsel %vm833, %v2305, %v2307
        %2356 = vst [vmem:[#allocation3 + $0x900] sm:$0xff] %v2308
        %2357 = vst [vmem:[#allocation3 + $0x908] sm:$0xff] %v2309
        %2358 = vst [vmem:[#allocation3 + $0x910] sm:$0xff] %v2310
        %2359 = vst [vmem:[#allocation3 + $0x918] sm:$0xff] %v2311
        %2360 = vst [vmem:[#allocation3 + $0x920] sm:$0xff] %v2312
        %2361 = vst [vmem:[#allocation3 + $0x928] sm:$0xff] %v2313
        %2362 = vst [vmem:[#allocation3 + $0x930] sm:$0xff] %v2314
        %2363 = vst [vmem:[#allocation3 + $0x938] sm:$0xff] %v2315
        %2364 = vst [vmem:[#allocation3 + $0x940] sm:$0xff] %v2316
        %2365 = vst [vmem:[#allocation3 + $0x948] sm:$0xff] %v2317
        %2366 = vst [vmem:[#allocation3 + $0x950] sm:$0xff] %v2318
        %2367 = vst [vmem:[#allocation3 + $0x958] sm:$0xff] %v2319
        %2368 = vst [vmem:[#allocation3 + $0x960] sm:$0xff] %v2320
        %2369 = vst [vmem:[#allocation3 + $0x968] sm:$0xff] %v2321
        %2370 = vst [vmem:[#allocation3 + $0x970] sm:$0xff] %v2322
        %2371 = vst [vmem:[#allocation3 + $0x978] sm:$0xff] %v2323
        %2372 = vst [vmem:[#allocation3 + $0x980] sm:$0xff] %v2324
        %2373 = vst [vmem:[#allocation3 + $0x988] sm:$0xff] %v2325
        %2374 = vst [vmem:[#allocation3 + $0x990] sm:$0xff] %v2326
        %2375 = vst [vmem:[#allocation3 + $0x998] sm:$0xff] %v2327
        %2376 = vst [vmem:[#allocation3 + $0x9a0] sm:$0xff] %v2328
        %2377 = vst [vmem:[#allocation3 + $0x9a8] sm:$0xff] %v2329
        %2378 = vst [vmem:[#allocation3 + $0x9b0] sm:$0xff] %v2330
        %2379 = vst [vmem:[#allocation3 + $0x9b8] sm:$0xff] %v2331
        %v2380 = vld [vmem:[#allocation2 + $0x10] sm:$0xff]
        %v2381 = vld [vmem:[#allocation2 + $0x18] sm:$0xff]
        %v2382 = vld [vmem:[#allocation2 + $0x20] sm:$0xff]
        %v2383 = vld [vmem:[#allocation2 + $0x28] sm:$0xff]
        %v2384 = vld [vmem:[#allocation2 + $0x30] sm:$0xff]
        %v2385 = vld [vmem:[#allocation2 + $0x38] sm:$0xff]
        %v2386 = vld [vmem:[#allocation2 + $0x40] sm:$0xff]
        %v2387 = vld [vmem:[#allocation2 + $0x48] sm:$0xff]
        %v2388 = vld [vmem:[#allocation2 + $0x50] sm:$0xff]
        %v2389 = vld [vmem:[#allocation2 + $0x58] sm:$0xff]
        %v2390 = vld [vmem:[#allocation2 + $0x60] sm:$0xff]
        %v2391 = vld [vmem:[#allocation2 + $0x68] sm:$0xff]
        %v2392 = vld [vmem:[#allocation2 + $0x70] sm:$0xff]
        %v2393 = vld [vmem:[#allocation2 + $0x78] sm:$0xff]
        %v2394 = vld [vmem:[#allocation2 + $0x80] sm:$0xff]
        %v2395 = vld [vmem:[#allocation2 + $0x88] sm:$0xff]
        %v2396 = vld [vmem:[#allocation2 + $0x90] sm:$0xff]
        %v2397 = vld [vmem:[#allocation2 + $0x98] sm:$0xff]
        %v2398 = vld [vmem:[#allocation2 + $0xa0] sm:$0xff]
        %v2399 = vld [vmem:[#allocation2 + $0xa8] sm:$0xff]
        %v2400 = vld [vmem:[#allocation2 + $0xb0] sm:$0xff]
        %v2401 = vld [vmem:[#allocation2 + $0xb8] sm:$0xff]
        %v2402 = vld [vmem:[#allocation2 + $0xc0] sm:$0xff]
        %v2403 = vld [vmem:[#allocation2 + $0xc8] sm:$0xff]
        %v2404 = vld [vmem:[#allocation2 + $0xd0] sm:$0xff]
        %2430 = vrot.lane.b32.xlu0 %v2380, 125
        %v2431 = vpop.permute.xlu0 %2430
        %2432 = vrot.lane.b32.xlu0 %v2381, 125
        %v2433 = vpop.permute.xlu0 %2432
        %2434 = vrot.lane.b32.xlu0 %v2382, 125
        %v2435 = vpop.permute.xlu0 %2434
        %2436 = vrot.lane.b32.xlu0 %v2383, 125
        %v2437 = vpop.permute.xlu0 %2436
        %2438 = vrot.lane.b32.xlu0 %v2384, 125
        %v2439 = vpop.permute.xlu0 %2438
        %2440 = vrot.lane.b32.xlu0 %v2385, 125
        %v2441 = vpop.permute.xlu0 %2440
        %2442 = vrot.lane.b32.xlu0 %v2386, 125
        %v2443 = vpop.permute.xlu0 %2442
        %2444 = vrot.lane.b32.xlu0 %v2387, 125
        %v2445 = vpop.permute.xlu0 %2444
        %2446 = vrot.lane.b32.xlu0 %v2388, 125
        %v2447 = vpop.permute.xlu0 %2446
        %2448 = vrot.lane.b32.xlu0 %v2389, 125
        %v2449 = vpop.permute.xlu0 %2448
        %2450 = vrot.lane.b32.xlu0 %v2390, 125
        %v2451 = vpop.permute.xlu0 %2450
        %2452 = vrot.lane.b32.xlu0 %v2391, 125
        %v2453 = vpop.permute.xlu0 %2452
        %2454 = vrot.lane.b32.xlu0 %v2392, 125
        %v2455 = vpop.permute.xlu0 %2454
        %2456 = vrot.lane.b32.xlu0 %v2393, 125
        %v2457 = vpop.permute.xlu0 %2456
        %2458 = vrot.lane.b32.xlu0 %v2394, 125
        %v2459 = vpop.permute.xlu0 %2458
        %2460 = vrot.lane.b32.xlu0 %v2395, 125
        %v2461 = vpop.permute.xlu0 %2460
        %2462 = vrot.lane.b32.xlu0 %v2396, 125
        %v2463 = vpop.permute.xlu0 %2462
        %2464 = vrot.lane.b32.xlu0 %v2397, 125
        %v2465 = vpop.permute.xlu0 %2464
        %2466 = vrot.lane.b32.xlu0 %v2398, 125
        %v2467 = vpop.permute.xlu0 %2466
        %2468 = vrot.lane.b32.xlu0 %v2399, 125
        %v2469 = vpop.permute.xlu0 %2468
        %2470 = vrot.lane.b32.xlu0 %v2400, 125
        %v2471 = vpop.permute.xlu0 %2470
        %2472 = vrot.lane.b32.xlu0 %v2401, 125
        %v2473 = vpop.permute.xlu0 %2472
        %2474 = vrot.lane.b32.xlu0 %v2402, 125
        %v2475 = vpop.permute.xlu0 %2474
        %2476 = vrot.lane.b32.xlu0 %v2403, 125
        %v2477 = vpop.permute.xlu0 %2476
        %2478 = vrot.lane.b32.xlu0 %v2404, 125
        %v2479 = vpop.permute.xlu0 %2478
        %v2480 = vsel %vm1006, %v2431, %v2433
        %v2481 = vsel %vm1006, %v2433, %v2435
        %v2482 = vsel %vm1006, %v2435, %v2437
        %v2483 = vsel %vm1006, %v2437, %v2439
        %v2484 = vsel %vm1006, %v2439, %v2441
        %v2485 = vsel %vm1006, %v2441, %v2443
        %v2486 = vsel %vm1006, %v2443, %v2445
        %v2487 = vsel %vm1006, %v2445, %v2447
        %v2488 = vsel %vm1006, %v2447, %v2449
        %v2489 = vsel %vm1006, %v2449, %v2451
        %v2490 = vsel %vm1006, %v2451, %v2453
        %v2491 = vsel %vm1006, %v2453, %v2455
        %v2492 = vsel %vm1006, %v2455, %v2457
        %v2493 = vsel %vm1006, %v2457, %v2459
        %v2494 = vsel %vm1006, %v2459, %v2461
        %v2495 = vsel %vm1006, %v2461, %v2463
        %v2496 = vsel %vm1006, %v2463, %v2465
        %v2497 = vsel %vm1006, %v2465, %v2467
        %v2498 = vsel %vm1006, %v2467, %v2469
        %v2499 = vsel %vm1006, %v2469, %v2471
        %v2500 = vsel %vm1006, %v2471, %v2473
        %v2501 = vsel %vm1006, %v2473, %v2475
        %v2502 = vsel %vm1006, %v2475, %v2477
        %v2503 = vsel %vm1006, %v2477, %v2479
        %2528 = vst [vmem:[#allocation3 + $0x9c0] sm:$0xff] %v2480
        %2529 = vst [vmem:[#allocation3 + $0x9c8] sm:$0xff] %v2481
        %2530 = vst [vmem:[#allocation3 + $0x9d0] sm:$0xff] %v2482
        %2531 = vst [vmem:[#allocation3 + $0x9d8] sm:$0xff] %v2483
        %2532 = vst [vmem:[#allocation3 + $0x9e0] sm:$0xff] %v2484
        %2533 = vst [vmem:[#allocation3 + $0x9e8] sm:$0xff] %v2485
        %2534 = vst [vmem:[#allocation3 + $0x9f0] sm:$0xff] %v2486
        %2535 = vst [vmem:[#allocation3 + $0x9f8] sm:$0xff] %v2487
        %2536 = vst [vmem:[#allocation3 + $0xa00] sm:$0xff] %v2488
        %2537 = vst [vmem:[#allocation3 + $0xa08] sm:$0xff] %v2489
        %2538 = vst [vmem:[#allocation3 + $0xa10] sm:$0xff] %v2490
        %2539 = vst [vmem:[#allocation3 + $0xa18] sm:$0xff] %v2491
        %2540 = vst [vmem:[#allocation3 + $0xa20] sm:$0xff] %v2492
        %2541 = vst [vmem:[#allocation3 + $0xa28] sm:$0xff] %v2493
        %2542 = vst [vmem:[#allocation3 + $0xa30] sm:$0xff] %v2494
        %2543 = vst [vmem:[#allocation3 + $0xa38] sm:$0xff] %v2495
        %2544 = vst [vmem:[#allocation3 + $0xa40] sm:$0xff] %v2496
        %2545 = vst [vmem:[#allocation3 + $0xa48] sm:$0xff] %v2497
        %2546 = vst [vmem:[#allocation3 + $0xa50] sm:$0xff] %v2498
        %2547 = vst [vmem:[#allocation3 + $0xa58] sm:$0xff] %v2499
        %2548 = vst [vmem:[#allocation3 + $0xa60] sm:$0xff] %v2500
        %2549 = vst [vmem:[#allocation3 + $0xa68] sm:$0xff] %v2501
        %2550 = vst [vmem:[#allocation3 + $0xa70] sm:$0xff] %v2502
        %2551 = vst [vmem:[#allocation3 + $0xa78] sm:$0xff] %v2503
        %v2552 = vld [vmem:[#allocation2 + $0x10] sm:$0xff]
        %v2553 = vld [vmem:[#allocation2 + $0x18] sm:$0xff]
        %v2554 = vld [vmem:[#allocation2 + $0x20] sm:$0xff]
        %v2555 = vld [vmem:[#allocation2 + $0x28] sm:$0xff]
        %v2556 = vld [vmem:[#allocation2 + $0x30] sm:$0xff]
        %v2557 = vld [vmem:[#allocation2 + $0x38] sm:$0xff]
        %v2558 = vld [vmem:[#allocation2 + $0x40] sm:$0xff]
        %v2559 = vld [vmem:[#allocation2 + $0x48] sm:$0xff]
        %v2560 = vld [vmem:[#allocation2 + $0x50] sm:$0xff]
        %v2561 = vld [vmem:[#allocation2 + $0x58] sm:$0xff]
        %v2562 = vld [vmem:[#allocation2 + $0x60] sm:$0xff]
        %v2563 = vld [vmem:[#allocation2 + $0x68] sm:$0xff]
        %v2564 = vld [vmem:[#allocation2 + $0x70] sm:$0xff]
        %v2565 = vld [vmem:[#allocation2 + $0x78] sm:$0xff]
        %v2566 = vld [vmem:[#allocation2 + $0x80] sm:$0xff]
        %v2567 = vld [vmem:[#allocation2 + $0x88] sm:$0xff]
        %v2568 = vld [vmem:[#allocation2 + $0x90] sm:$0xff]
        %v2569 = vld [vmem:[#allocation2 + $0x98] sm:$0xff]
        %v2570 = vld [vmem:[#allocation2 + $0xa0] sm:$0xff]
        %v2571 = vld [vmem:[#allocation2 + $0xa8] sm:$0xff]
        %v2572 = vld [vmem:[#allocation2 + $0xb0] sm:$0xff]
        %v2573 = vld [vmem:[#allocation2 + $0xb8] sm:$0xff]
        %v2574 = vld [vmem:[#allocation2 + $0xc0] sm:$0xff]
        %v2575 = vld [vmem:[#allocation2 + $0xc8] sm:$0xff]
        %v2576 = vld [vmem:[#allocation2 + $0xd0] sm:$0xff]
        %2602 = vrot.lane.b32.xlu0 %v2552, 124
        %v2603 = vpop.permute.xlu0 %2602
        %2604 = vrot.lane.b32.xlu0 %v2553, 124
        %v2605 = vpop.permute.xlu0 %2604
        %2606 = vrot.lane.b32.xlu0 %v2554, 124
        %v2607 = vpop.permute.xlu0 %2606
        %2608 = vrot.lane.b32.xlu0 %v2555, 124
        %v2609 = vpop.permute.xlu0 %2608
        %2610 = vrot.lane.b32.xlu0 %v2556, 124
        %v2611 = vpop.permute.xlu0 %2610
        %2612 = vrot.lane.b32.xlu0 %v2557, 124
        %v2613 = vpop.permute.xlu0 %2612
        %2614 = vrot.lane.b32.xlu0 %v2558, 124
        %v2615 = vpop.permute.xlu0 %2614
        %2616 = vrot.lane.b32.xlu0 %v2559, 124
        %v2617 = vpop.permute.xlu0 %2616
        %2618 = vrot.lane.b32.xlu0 %v2560, 124
        %v2619 = vpop.permute.xlu0 %2618
        %2620 = vrot.lane.b32.xlu0 %v2561, 124
        %v2621 = vpop.permute.xlu0 %2620
        %2622 = vrot.lane.b32.xlu0 %v2562, 124
        %v2623 = vpop.permute.xlu0 %2622
        %2624 = vrot.lane.b32.xlu0 %v2563, 124
        %v2625 = vpop.permute.xlu0 %2624
        %2626 = vrot.lane.b32.xlu0 %v2564, 124
        %v2627 = vpop.permute.xlu0 %2626
        %2628 = vrot.lane.b32.xlu0 %v2565, 124
        %v2629 = vpop.permute.xlu0 %2628
        %2630 = vrot.lane.b32.xlu0 %v2566, 124
        %v2631 = vpop.permute.xlu0 %2630
        %2632 = vrot.lane.b32.xlu0 %v2567, 124
        %v2633 = vpop.permute.xlu0 %2632
        %2634 = vrot.lane.b32.xlu0 %v2568, 124
        %v2635 = vpop.permute.xlu0 %2634
        %2636 = vrot.lane.b32.xlu0 %v2569, 124
        %v2637 = vpop.permute.xlu0 %2636
        %2638 = vrot.lane.b32.xlu0 %v2570, 124
        %v2639 = vpop.permute.xlu0 %2638
        %2640 = vrot.lane.b32.xlu0 %v2571, 124
        %v2641 = vpop.permute.xlu0 %2640
        %2642 = vrot.lane.b32.xlu0 %v2572, 124
        %v2643 = vpop.permute.xlu0 %2642
        %2644 = vrot.lane.b32.xlu0 %v2573, 124
        %v2645 = vpop.permute.xlu0 %2644
        %2646 = vrot.lane.b32.xlu0 %v2574, 124
        %v2647 = vpop.permute.xlu0 %2646
        %2648 = vrot.lane.b32.xlu0 %v2575, 124
        %v2649 = vpop.permute.xlu0 %2648
        %2650 = vrot.lane.b32.xlu0 %v2576, 124
        %v2651 = vpop.permute.xlu0 %2650
        %v2652 = vsel %vm1179, %v2603, %v2605
        %v2653 = vsel %vm1179, %v2605, %v2607
        %v2654 = vsel %vm1179, %v2607, %v2609
        %v2655 = vsel %vm1179, %v2609, %v2611
        %v2656 = vsel %vm1179, %v2611, %v2613
        %v2657 = vsel %vm1179, %v2613, %v2615
        %v2658 = vsel %vm1179, %v2615, %v2617
        %v2659 = vsel %vm1179, %v2617, %v2619
        %v2660 = vsel %vm1179, %v2619, %v2621
        %v2661 = vsel %vm1179, %v2621, %v2623
        %v2662 = vsel %vm1179, %v2623, %v2625
        %v2663 = vsel %vm1179, %v2625, %v2627
        %v2664 = vsel %vm1179, %v2627, %v2629
        %v2665 = vsel %vm1179, %v2629, %v2631
        %v2666 = vsel %vm1179, %v2631, %v2633
        %v2667 = vsel %vm1179, %v2633, %v2635
        %v2668 = vsel %vm1179, %v2635, %v2637
        %v2669 = vsel %vm1179, %v2637, %v2639
        %v2670 = vsel %vm1179, %v2639, %v2641
        %v2671 = vsel %vm1179, %v2641, %v2643
        %v2672 = vsel %vm1179, %v2643, %v2645
        %v2673 = vsel %vm1179, %v2645, %v2647
        %v2674 = vsel %vm1179, %v2647, %v2649
        %v2675 = vsel %vm1179, %v2649, %v2651
        %2700 = vst [vmem:[#allocation3 + $0xa80] sm:$0xff] %v2652
        %2701 = vst [vmem:[#allocation3 + $0xa88] sm:$0xff] %v2653
        %2702 = vst [vmem:[#allocation3 + $0xa90] sm:$0xff] %v2654
        %2703 = vst [vmem:[#allocation3 + $0xa98] sm:$0xff] %v2655
        %2704 = vst [vmem:[#allocation3 + $0xaa0] sm:$0xff] %v2656
        %2705 = vst [vmem:[#allocation3 + $0xaa8] sm:$0xff] %v2657
        %2706 = vst [vmem:[#allocation3 + $0xab0] sm:$0xff] %v2658
        %2707 = vst [vmem:[#allocation3 + $0xab8] sm:$0xff] %v2659
        %2708 = vst [vmem:[#allocation3 + $0xac0] sm:$0xff] %v2660
        %2709 = vst [vmem:[#allocation3 + $0xac8] sm:$0xff] %v2661
        %2710 = vst [vmem:[#allocation3 + $0xad0] sm:$0xff] %v2662
        %2711 = vst [vmem:[#allocation3 + $0xad8] sm:$0xff] %v2663
        %2712 = vst [vmem:[#allocation3 + $0xae0] sm:$0xff] %v2664
        %2713 = vst [vmem:[#allocation3 + $0xae8] sm:$0xff] %v2665
        %2714 = vst [vmem:[#allocation3 + $0xaf0] sm:$0xff] %v2666
        %2715 = vst [vmem:[#allocation3 + $0xaf8] sm:$0xff] %v2667
        %2716 = vst [vmem:[#allocation3 + $0xb00] sm:$0xff] %v2668
        %2717 = vst [vmem:[#allocation3 + $0xb08] sm:$0xff] %v2669
        %2718 = vst [vmem:[#allocation3 + $0xb10] sm:$0xff] %v2670
        %2719 = vst [vmem:[#allocation3 + $0xb18] sm:$0xff] %v2671
        %2720 = vst [vmem:[#allocation3 + $0xb20] sm:$0xff] %v2672
        %2721 = vst [vmem:[#allocation3 + $0xb28] sm:$0xff] %v2673
        %2722 = vst [vmem:[#allocation3 + $0xb30] sm:$0xff] %v2674
        %2723 = vst [vmem:[#allocation3 + $0xb38] sm:$0xff] %v2675
        %v2724 = vld [vmem:[#allocation2 + $0x18] sm:$0xff]
        %v2725 = vld [vmem:[#allocation2 + $0x20] sm:$0xff]
        %v2726 = vld [vmem:[#allocation2 + $0x28] sm:$0xff]
        %v2727 = vld [vmem:[#allocation2 + $0x30] sm:$0xff]
        %v2728 = vld [vmem:[#allocation2 + $0x38] sm:$0xff]
        %v2729 = vld [vmem:[#allocation2 + $0x40] sm:$0xff]
        %v2730 = vld [vmem:[#allocation2 + $0x48] sm:$0xff]
        %v2731 = vld [vmem:[#allocation2 + $0x50] sm:$0xff]
        %v2732 = vld [vmem:[#allocation2 + $0x58] sm:$0xff]
        %v2733 = vld [vmem:[#allocation2 + $0x60] sm:$0xff]
        %v2734 = vld [vmem:[#allocation2 + $0x68] sm:$0xff]
        %v2735 = vld [vmem:[#allocation2 + $0x70] sm:$0xff]
        %v2736 = vld [vmem:[#allocation2 + $0x78] sm:$0xff]
        %v2737 = vld [vmem:[#allocation2 + $0x80] sm:$0xff]
        %v2738 = vld [vmem:[#allocation2 + $0x88] sm:$0xff]
        %v2739 = vld [vmem:[#allocation2 + $0x90] sm:$0xff]
        %v2740 = vld [vmem:[#allocation2 + $0x98] sm:$0xff]
        %v2741 = vld [vmem:[#allocation2 + $0xa0] sm:$0xff]
        %v2742 = vld [vmem:[#allocation2 + $0xa8] sm:$0xff]
        %v2743 = vld [vmem:[#allocation2 + $0xb0] sm:$0xff]
        %v2744 = vld [vmem:[#allocation2 + $0xb8] sm:$0xff]
        %v2745 = vld [vmem:[#allocation2 + $0xc0] sm:$0xff]
        %v2746 = vld [vmem:[#allocation2 + $0xc8] sm:$0xff]
        %v2747 = vld [vmem:[#allocation2 + $0xd0] sm:$0xff]
        %2748 = vst [vmem:[#allocation3 + $0xb40] sm:$0xff] %v2724
        %2749 = vst [vmem:[#allocation3 + $0xb48] sm:$0xff] %v2725
        %2750 = vst [vmem:[#allocation3 + $0xb50] sm:$0xff] %v2726
        %2751 = vst [vmem:[#allocation3 + $0xb58] sm:$0xff] %v2727
        %2752 = vst [vmem:[#allocation3 + $0xb60] sm:$0xff] %v2728
        %2753 = vst [vmem:[#allocation3 + $0xb68] sm:$0xff] %v2729
        %2754 = vst [vmem:[#allocation3 + $0xb70] sm:$0xff] %v2730
        %2755 = vst [vmem:[#allocation3 + $0xb78] sm:$0xff] %v2731
        %2756 = vst [vmem:[#allocation3 + $0xb80] sm:$0xff] %v2732
        %2757 = vst [vmem:[#allocation3 + $0xb88] sm:$0xff] %v2733
        %2758 = vst [vmem:[#allocation3 + $0xb90] sm:$0xff] %v2734
        %2759 = vst [vmem:[#allocation3 + $0xb98] sm:$0xff] %v2735
        %2760 = vst [vmem:[#allocation3 + $0xba0] sm:$0xff] %v2736
        %2761 = vst [vmem:[#allocation3 + $0xba8] sm:$0xff] %v2737
        %2762 = vst [vmem:[#allocation3 + $0xbb0] sm:$0xff] %v2738
        %2763 = vst [vmem:[#allocation3 + $0xbb8] sm:$0xff] %v2739
        %2764 = vst [vmem:[#allocation3 + $0xbc0] sm:$0xff] %v2740
        %2765 = vst [vmem:[#allocation3 + $0xbc8] sm:$0xff] %v2741
        %2766 = vst [vmem:[#allocation3 + $0xbd0] sm:$0xff] %v2742
        %2767 = vst [vmem:[#allocation3 + $0xbd8] sm:$0xff] %v2743
        %2768 = vst [vmem:[#allocation3 + $0xbe0] sm:$0xff] %v2744
        %2769 = vst [vmem:[#allocation3 + $0xbe8] sm:$0xff] %v2745
        %2770 = vst [vmem:[#allocation3 + $0xbf0] sm:$0xff] %v2746
        %2771 = vst [vmem:[#allocation3 + $0xbf8] sm:$0xff] %v2747
        %v2772 = vld [vmem:[#allocation2 + $0x18] sm:$0xff]
        %v2773 = vld [vmem:[#allocation2 + $0x20] sm:$0xff]
        %v2774 = vld [vmem:[#allocation2 + $0x28] sm:$0xff]
        %v2775 = vld [vmem:[#allocation2 + $0x30] sm:$0xff]
        %v2776 = vld [vmem:[#allocation2 + $0x38] sm:$0xff]
        %v2777 = vld [vmem:[#allocation2 + $0x40] sm:$0xff]
        %v2778 = vld [vmem:[#allocation2 + $0x48] sm:$0xff]
        %v2779 = vld [vmem:[#allocation2 + $0x50] sm:$0xff]
        %v2780 = vld [vmem:[#allocation2 + $0x58] sm:$0xff]
        %v2781 = vld [vmem:[#allocation2 + $0x60] sm:$0xff]
        %v2782 = vld [vmem:[#allocation2 + $0x68] sm:$0xff]
        %v2783 = vld [vmem:[#allocation2 + $0x70] sm:$0xff]
        %v2784 = vld [vmem:[#allocation2 + $0x78] sm:$0xff]
        %v2785 = vld [vmem:[#allocation2 + $0x80] sm:$0xff]
        %v2786 = vld [vmem:[#allocation2 + $0x88] sm:$0xff]
        %v2787 = vld [vmem:[#allocation2 + $0x90] sm:$0xff]
        %v2788 = vld [vmem:[#allocation2 + $0x98] sm:$0xff]
        %v2789 = vld [vmem:[#allocation2 + $0xa0] sm:$0xff]
        %v2790 = vld [vmem:[#allocation2 + $0xa8] sm:$0xff]
        %v2791 = vld [vmem:[#allocation2 + $0xb0] sm:$0xff]
        %v2792 = vld [vmem:[#allocation2 + $0xb8] sm:$0xff]
        %v2793 = vld [vmem:[#allocation2 + $0xc0] sm:$0xff]
        %v2794 = vld [vmem:[#allocation2 + $0xc8] sm:$0xff]
        %v2795 = vld [vmem:[#allocation2 + $0xd0] sm:$0xff]
        %v2796 = vld [vmem:[#allocation2 + $0xd8] sm:$0xff]
        %2822 = vrot.lane.b32.xlu0 %v2772, 127
        %v2823 = vpop.permute.xlu0 %2822
        %2824 = vrot.lane.b32.xlu0 %v2773, 127
        %v2825 = vpop.permute.xlu0 %2824
        %2826 = vrot.lane.b32.xlu0 %v2774, 127
        %v2827 = vpop.permute.xlu0 %2826
        %2828 = vrot.lane.b32.xlu0 %v2775, 127
        %v2829 = vpop.permute.xlu0 %2828
        %2830 = vrot.lane.b32.xlu0 %v2776, 127
        %v2831 = vpop.permute.xlu0 %2830
        %2832 = vrot.lane.b32.xlu0 %v2777, 127
        %v2833 = vpop.permute.xlu0 %2832
        %2834 = vrot.lane.b32.xlu0 %v2778, 127
        %v2835 = vpop.permute.xlu0 %2834
        %2836 = vrot.lane.b32.xlu0 %v2779, 127
        %v2837 = vpop.permute.xlu0 %2836
        %2838 = vrot.lane.b32.xlu0 %v2780, 127
        %v2839 = vpop.permute.xlu0 %2838
        %2840 = vrot.lane.b32.xlu0 %v2781, 127
        %v2841 = vpop.permute.xlu0 %2840
        %2842 = vrot.lane.b32.xlu0 %v2782, 127
        %v2843 = vpop.permute.xlu0 %2842
        %2844 = vrot.lane.b32.xlu0 %v2783, 127
        %v2845 = vpop.permute.xlu0 %2844
        %2846 = vrot.lane.b32.xlu0 %v2784, 127
        %v2847 = vpop.permute.xlu0 %2846
        %2848 = vrot.lane.b32.xlu0 %v2785, 127
        %v2849 = vpop.permute.xlu0 %2848
        %2850 = vrot.lane.b32.xlu0 %v2786, 127
        %v2851 = vpop.permute.xlu0 %2850
        %2852 = vrot.lane.b32.xlu0 %v2787, 127
        %v2853 = vpop.permute.xlu0 %2852
        %2854 = vrot.lane.b32.xlu0 %v2788, 127
        %v2855 = vpop.permute.xlu0 %2854
        %2856 = vrot.lane.b32.xlu0 %v2789, 127
        %v2857 = vpop.permute.xlu0 %2856
        %2858 = vrot.lane.b32.xlu0 %v2790, 127
        %v2859 = vpop.permute.xlu0 %2858
        %2860 = vrot.lane.b32.xlu0 %v2791, 127
        %v2861 = vpop.permute.xlu0 %2860
        %2862 = vrot.lane.b32.xlu0 %v2792, 127
        %v2863 = vpop.permute.xlu0 %2862
        %2864 = vrot.lane.b32.xlu0 %v2793, 127
        %v2865 = vpop.permute.xlu0 %2864
        %2866 = vrot.lane.b32.xlu0 %v2794, 127
        %v2867 = vpop.permute.xlu0 %2866
        %2868 = vrot.lane.b32.xlu0 %v2795, 127
        %v2869 = vpop.permute.xlu0 %2868
        %2870 = vrot.lane.b32.xlu0 %v2796, 127
        %v2871 = vpop.permute.xlu0 %2870
        %v2872 = vsel %vm660, %v2823, %v2825
        %v2873 = vsel %vm660, %v2825, %v2827
        %v2874 = vsel %vm660, %v2827, %v2829
        %v2875 = vsel %vm660, %v2829, %v2831
        %v2876 = vsel %vm660, %v2831, %v2833
        %v2877 = vsel %vm660, %v2833, %v2835
        %v2878 = vsel %vm660, %v2835, %v2837
        %v2879 = vsel %vm660, %v2837, %v2839
        %v2880 = vsel %vm660, %v2839, %v2841
        %v2881 = vsel %vm660, %v2841, %v2843
        %v2882 = vsel %vm660, %v2843, %v2845
        %v2883 = vsel %vm660, %v2845, %v2847
        %v2884 = vsel %vm660, %v2847, %v2849
        %v2885 = vsel %vm660, %v2849, %v2851
        %v2886 = vsel %vm660, %v2851, %v2853
        %v2887 = vsel %vm660, %v2853, %v2855
        %v2888 = vsel %vm660, %v2855, %v2857
        %v2889 = vsel %vm660, %v2857, %v2859
        %v2890 = vsel %vm660, %v2859, %v2861
        %v2891 = vsel %vm660, %v2861, %v2863
        %v2892 = vsel %vm660, %v2863, %v2865
        %v2893 = vsel %vm660, %v2865, %v2867
        %v2894 = vsel %vm660, %v2867, %v2869
        %v2895 = vsel %vm660, %v2869, %v2871
        %2920 = vst [vmem:[#allocation3 + $0xc00] sm:$0xff] %v2872
        %2921 = vst [vmem:[#allocation3 + $0xc08] sm:$0xff] %v2873
        %2922 = vst [vmem:[#allocation3 + $0xc10] sm:$0xff] %v2874
        %2923 = vst [vmem:[#allocation3 + $0xc18] sm:$0xff] %v2875
        %2924 = vst [vmem:[#allocation3 + $0xc20] sm:$0xff] %v2876
        %2925 = vst [vmem:[#allocation3 + $0xc28] sm:$0xff] %v2877
        %2926 = vst [vmem:[#allocation3 + $0xc30] sm:$0xff] %v2878
        %2927 = vst [vmem:[#allocation3 + $0xc38] sm:$0xff] %v2879
        %2928 = vst [vmem:[#allocation3 + $0xc40] sm:$0xff] %v2880
        %2929 = vst [vmem:[#allocation3 + $0xc48] sm:$0xff] %v2881
        %2930 = vst [vmem:[#allocation3 + $0xc50] sm:$0xff] %v2882
        %2931 = vst [vmem:[#allocation3 + $0xc58] sm:$0xff] %v2883
        %2932 = vst [vmem:[#allocation3 + $0xc60] sm:$0xff] %v2884
        %2933 = vst [vmem:[#allocation3 + $0xc68] sm:$0xff] %v2885
        %2934 = vst [vmem:[#allocation3 + $0xc70] sm:$0xff] %v2886
        %2935 = vst [vmem:[#allocation3 + $0xc78] sm:$0xff] %v2887
        %2936 = vst [vmem:[#allocation3 + $0xc80] sm:$0xff] %v2888
        %2937 = vst [vmem:[#allocation3 + $0xc88] sm:$0xff] %v2889
        %2938 = vst [vmem:[#allocation3 + $0xc90] sm:$0xff] %v2890
        %2939 = vst [vmem:[#allocation3 + $0xc98] sm:$0xff] %v2891
        %2940 = vst [vmem:[#allocation3 + $0xca0] sm:$0xff] %v2892
        %2941 = vst [vmem:[#allocation3 + $0xca8] sm:$0xff] %v2893
        %2942 = vst [vmem:[#allocation3 + $0xcb0] sm:$0xff] %v2894
        %2943 = vst [vmem:[#allocation3 + $0xcb8] sm:$0xff] %v2895
        %v2944 = vld [vmem:[#allocation2 + $0x18] sm:$0xff]
        %v2945 = vld [vmem:[#allocation2 + $0x20] sm:$0xff]
        %v2946 = vld [vmem:[#allocation2 + $0x28] sm:$0xff]
        %v2947 = vld [vmem:[#allocation2 + $0x30] sm:$0xff]
        %v2948 = vld [vmem:[#allocation2 + $0x38] sm:$0xff]
        %v2949 = vld [vmem:[#allocation2 + $0x40] sm:$0xff]
        %v2950 = vld [vmem:[#allocation2 + $0x48] sm:$0xff]
        %v2951 = vld [vmem:[#allocation2 + $0x50] sm:$0xff]
        %v2952 = vld [vmem:[#allocation2 + $0x58] sm:$0xff]
        %v2953 = vld [vmem:[#allocation2 + $0x60] sm:$0xff]
        %v2954 = vld [vmem:[#allocation2 + $0x68] sm:$0xff]
        %v2955 = vld [vmem:[#allocation2 + $0x70] sm:$0xff]
        %v2956 = vld [vmem:[#allocation2 + $0x78] sm:$0xff]
        %v2957 = vld [vmem:[#allocation2 + $0x80] sm:$0xff]
        %v2958 = vld [vmem:[#allocation2 + $0x88] sm:$0xff]
        %v2959 = vld [vmem:[#allocation2 + $0x90] sm:$0xff]
        %v2960 = vld [vmem:[#allocation2 + $0x98] sm:$0xff]
        %v2961 = vld [vmem:[#allocation2 + $0xa0] sm:$0xff]
        %v2962 = vld [vmem:[#allocation2 + $0xa8] sm:$0xff]
        %v2963 = vld [vmem:[#allocation2 + $0xb0] sm:$0xff]
        %v2964 = vld [vmem:[#allocation2 + $0xb8] sm:$0xff]
        %v2965 = vld [vmem:[#allocation2 + $0xc0] sm:$0xff]
        %v2966 = vld [vmem:[#allocation2 + $0xc8] sm:$0xff]
        %v2967 = vld [vmem:[#allocation2 + $0xd0] sm:$0xff]
        %v2968 = vld [vmem:[#allocation2 + $0xd8] sm:$0xff]
        %2994 = vrot.lane.b32.xlu0 %v2944, 126
        %v2995 = vpop.permute.xlu0 %2994
        %2996 = vrot.lane.b32.xlu0 %v2945, 126
        %v2997 = vpop.permute.xlu0 %2996
        %2998 = vrot.lane.b32.xlu0 %v2946, 126
        %v2999 = vpop.permute.xlu0 %2998
        %3000 = vrot.lane.b32.xlu0 %v2947, 126
        %v3001 = vpop.permute.xlu0 %3000
        %3002 = vrot.lane.b32.xlu0 %v2948, 126
        %v3003 = vpop.permute.xlu0 %3002
        %3004 = vrot.lane.b32.xlu0 %v2949, 126
        %v3005 = vpop.permute.xlu0 %3004
        %3006 = vrot.lane.b32.xlu0 %v2950, 126
        %v3007 = vpop.permute.xlu0 %3006
        %3008 = vrot.lane.b32.xlu0 %v2951, 126
        %v3009 = vpop.permute.xlu0 %3008
        %3010 = vrot.lane.b32.xlu0 %v2952, 126
        %v3011 = vpop.permute.xlu0 %3010
        %3012 = vrot.lane.b32.xlu0 %v2953, 126
        %v3013 = vpop.permute.xlu0 %3012
        %3014 = vrot.lane.b32.xlu0 %v2954, 126
        %v3015 = vpop.permute.xlu0 %3014
        %3016 = vrot.lane.b32.xlu0 %v2955, 126
        %v3017 = vpop.permute.xlu0 %3016
        %3018 = vrot.lane.b32.xlu0 %v2956, 126
        %v3019 = vpop.permute.xlu0 %3018
        %3020 = vrot.lane.b32.xlu0 %v2957, 126
        %v3021 = vpop.permute.xlu0 %3020
        %3022 = vrot.lane.b32.xlu0 %v2958, 126
        %v3023 = vpop.permute.xlu0 %3022
        %3024 = vrot.lane.b32.xlu0 %v2959, 126
        %v3025 = vpop.permute.xlu0 %3024
        %3026 = vrot.lane.b32.xlu0 %v2960, 126
        %v3027 = vpop.permute.xlu0 %3026
        %3028 = vrot.lane.b32.xlu0 %v2961, 126
        %v3029 = vpop.permute.xlu0 %3028
        %3030 = vrot.lane.b32.xlu0 %v2962, 126
        %v3031 = vpop.permute.xlu0 %3030
        %3032 = vrot.lane.b32.xlu0 %v2963, 126
        %v3033 = vpop.permute.xlu0 %3032
        %3034 = vrot.lane.b32.xlu0 %v2964, 126
        %v3035 = vpop.permute.xlu0 %3034
        %3036 = vrot.lane.b32.xlu0 %v2965, 126
        %v3037 = vpop.permute.xlu0 %3036
        %3038 = vrot.lane.b32.xlu0 %v2966, 126
        %v3039 = vpop.permute.xlu0 %3038
        %3040 = vrot.lane.b32.xlu0 %v2967, 126
        %v3041 = vpop.permute.xlu0 %3040
        %3042 = vrot.lane.b32.xlu0 %v2968, 126
        %v3043 = vpop.permute.xlu0 %3042
        %v3044 = vsel %vm833, %v2995, %v2997
        %v3045 = vsel %vm833, %v2997, %v2999
        %v3046 = vsel %vm833, %v2999, %v3001
        %v3047 = vsel %vm833, %v3001, %v3003
        %v3048 = vsel %vm833, %v3003, %v3005
        %v3049 = vsel %vm833, %v3005, %v3007
        %v3050 = vsel %vm833, %v3007, %v3009
        %v3051 = vsel %vm833, %v3009, %v3011
        %v3052 = vsel %vm833, %v3011, %v3013
        %v3053 = vsel %vm833, %v3013, %v3015
        %v3054 = vsel %vm833, %v3015, %v3017
        %v3055 = vsel %vm833, %v3017, %v3019
        %v3056 = vsel %vm833, %v3019, %v3021
        %v3057 = vsel %vm833, %v3021, %v3023
        %v3058 = vsel %vm833, %v3023, %v3025
        %v3059 = vsel %vm833, %v3025, %v3027
        %v3060 = vsel %vm833, %v3027, %v3029
        %v3061 = vsel %vm833, %v3029, %v3031
        %v3062 = vsel %vm833, %v3031, %v3033
        %v3063 = vsel %vm833, %v3033, %v3035
        %v3064 = vsel %vm833, %v3035, %v3037
        %v3065 = vsel %vm833, %v3037, %v3039
        %v3066 = vsel %vm833, %v3039, %v3041
        %v3067 = vsel %vm833, %v3041, %v3043
        %3092 = vst [vmem:[#allocation3 + $0xcc0] sm:$0xff] %v3044
        %3093 = vst [vmem:[#allocation3 + $0xcc8] sm:$0xff] %v3045
        %3094 = vst [vmem:[#allocation3 + $0xcd0] sm:$0xff] %v3046
        %3095 = vst [vmem:[#allocation3 + $0xcd8] sm:$0xff] %v3047
        %3096 = vst [vmem:[#allocation3 + $0xce0] sm:$0xff] %v3048
        %3097 = vst [vmem:[#allocation3 + $0xce8] sm:$0xff] %v3049
        %3098 = vst [vmem:[#allocation3 + $0xcf0] sm:$0xff] %v3050
        %3099 = vst [vmem:[#allocation3 + $0xcf8] sm:$0xff] %v3051
        %3100 = vst [vmem:[#allocation3 + $0xd00] sm:$0xff] %v3052
        %3101 = vst [vmem:[#allocation3 + $0xd08] sm:$0xff] %v3053
        %3102 = vst [vmem:[#allocation3 + $0xd10] sm:$0xff] %v3054
        %3103 = vst [vmem:[#allocation3 + $0xd18] sm:$0xff] %v3055
        %3104 = vst [vmem:[#allocation3 + $0xd20] sm:$0xff] %v3056
        %3105 = vst [vmem:[#allocation3 + $0xd28] sm:$0xff] %v3057
        %3106 = vst [vmem:[#allocation3 + $0xd30] sm:$0xff] %v3058
        %3107 = vst [vmem:[#allocation3 + $0xd38] sm:$0xff] %v3059
        %3108 = vst [vmem:[#allocation3 + $0xd40] sm:$0xff] %v3060
        %3109 = vst [vmem:[#allocation3 + $0xd48] sm:$0xff] %v3061
        %3110 = vst [vmem:[#allocation3 + $0xd50] sm:$0xff] %v3062
        %3111 = vst [vmem:[#allocation3 + $0xd58] sm:$0xff] %v3063
        %3112 = vst [vmem:[#allocation3 + $0xd60] sm:$0xff] %v3064
        %3113 = vst [vmem:[#allocation3 + $0xd68] sm:$0xff] %v3065
        %3114 = vst [vmem:[#allocation3 + $0xd70] sm:$0xff] %v3066
        %3115 = vst [vmem:[#allocation3 + $0xd78] sm:$0xff] %v3067
        %v3116 = vld [vmem:[#allocation2 + $0x18] sm:$0xff]
        %v3117 = vld [vmem:[#allocation2 + $0x20] sm:$0xff]
        %v3118 = vld [vmem:[#allocation2 + $0x28] sm:$0xff]
        %v3119 = vld [vmem:[#allocation2 + $0x30] sm:$0xff]
        %v3120 = vld [vmem:[#allocation2 + $0x38] sm:$0xff]
        %v3121 = vld [vmem:[#allocation2 + $0x40] sm:$0xff]
        %v3122 = vld [vmem:[#allocation2 + $0x48] sm:$0xff]
        %v3123 = vld [vmem:[#allocation2 + $0x50] sm:$0xff]
        %v3124 = vld [vmem:[#allocation2 + $0x58] sm:$0xff]
        %v3125 = vld [vmem:[#allocation2 + $0x60] sm:$0xff]
        %v3126 = vld [vmem:[#allocation2 + $0x68] sm:$0xff]
        %v3127 = vld [vmem:[#allocation2 + $0x70] sm:$0xff]
        %v3128 = vld [vmem:[#allocation2 + $0x78] sm:$0xff]
        %v3129 = vld [vmem:[#allocation2 + $0x80] sm:$0xff]
        %v3130 = vld [vmem:[#allocation2 + $0x88] sm:$0xff]
        %v3131 = vld [vmem:[#allocation2 + $0x90] sm:$0xff]
        %v3132 = vld [vmem:[#allocation2 + $0x98] sm:$0xff]
        %v3133 = vld [vmem:[#allocation2 + $0xa0] sm:$0xff]
        %v3134 = vld [vmem:[#allocation2 + $0xa8] sm:$0xff]
        %v3135 = vld [vmem:[#allocation2 + $0xb0] sm:$0xff]
        %v3136 = vld [vmem:[#allocation2 + $0xb8] sm:$0xff]
        %v3137 = vld [vmem:[#allocation2 + $0xc0] sm:$0xff]
        %v3138 = vld [vmem:[#allocation2 + $0xc8] sm:$0xff]
        %v3139 = vld [vmem:[#allocation2 + $0xd0] sm:$0xff]
        %v3140 = vld [vmem:[#allocation2 + $0xd8] sm:$0xff]
        %3166 = vrot.lane.b32.xlu0 %v3116, 125
        %v3167 = vpop.permute.xlu0 %3166
        %3168 = vrot.lane.b32.xlu0 %v3117, 125
        %v3169 = vpop.permute.xlu0 %3168
        %3170 = vrot.lane.b32.xlu0 %v3118, 125
        %v3171 = vpop.permute.xlu0 %3170
        %3172 = vrot.lane.b32.xlu0 %v3119, 125
        %v3173 = vpop.permute.xlu0 %3172
        %3174 = vrot.lane.b32.xlu0 %v3120, 125
        %v3175 = vpop.permute.xlu0 %3174
        %3176 = vrot.lane.b32.xlu0 %v3121, 125
        %v3177 = vpop.permute.xlu0 %3176
        %3178 = vrot.lane.b32.xlu0 %v3122, 125
        %v3179 = vpop.permute.xlu0 %3178
        %3180 = vrot.lane.b32.xlu0 %v3123, 125
        %v3181 = vpop.permute.xlu0 %3180
        %3182 = vrot.lane.b32.xlu0 %v3124, 125
        %v3183 = vpop.permute.xlu0 %3182
        %3184 = vrot.lane.b32.xlu0 %v3125, 125
        %v3185 = vpop.permute.xlu0 %3184
        %3186 = vrot.lane.b32.xlu0 %v3126, 125
        %v3187 = vpop.permute.xlu0 %3186
        %3188 = vrot.lane.b32.xlu0 %v3127, 125
        %v3189 = vpop.permute.xlu0 %3188
        %3190 = vrot.lane.b32.xlu0 %v3128, 125
        %v3191 = vpop.permute.xlu0 %3190
        %3192 = vrot.lane.b32.xlu0 %v3129, 125
        %v3193 = vpop.permute.xlu0 %3192
        %3194 = vrot.lane.b32.xlu0 %v3130, 125
        %v3195 = vpop.permute.xlu0 %3194
        %3196 = vrot.lane.b32.xlu0 %v3131, 125
        %v3197 = vpop.permute.xlu0 %3196
        %3198 = vrot.lane.b32.xlu0 %v3132, 125
        %v3199 = vpop.permute.xlu0 %3198
        %3200 = vrot.lane.b32.xlu0 %v3133, 125
        %v3201 = vpop.permute.xlu0 %3200
        %3202 = vrot.lane.b32.xlu0 %v3134, 125
        %v3203 = vpop.permute.xlu0 %3202
        %3204 = vrot.lane.b32.xlu0 %v3135, 125
        %v3205 = vpop.permute.xlu0 %3204
        %3206 = vrot.lane.b32.xlu0 %v3136, 125
        %v3207 = vpop.permute.xlu0 %3206
        %3208 = vrot.lane.b32.xlu0 %v3137, 125
        %v3209 = vpop.permute.xlu0 %3208
        %3210 = vrot.lane.b32.xlu0 %v3138, 125
        %v3211 = vpop.permute.xlu0 %3210
        %3212 = vrot.lane.b32.xlu0 %v3139, 125
        %v3213 = vpop.permute.xlu0 %3212
        %3214 = vrot.lane.b32.xlu0 %v3140, 125
        %v3215 = vpop.permute.xlu0 %3214
        %v3216 = vsel %vm1006, %v3167, %v3169
        %v3217 = vsel %vm1006, %v3169, %v3171
        %v3218 = vsel %vm1006, %v3171, %v3173
        %v3219 = vsel %vm1006, %v3173, %v3175
        %v3220 = vsel %vm1006, %v3175, %v3177
        %v3221 = vsel %vm1006, %v3177, %v3179
        %v3222 = vsel %vm1006, %v3179, %v3181
        %v3223 = vsel %vm1006, %v3181, %v3183
        %v3224 = vsel %vm1006, %v3183, %v3185
        %v3225 = vsel %vm1006, %v3185, %v3187
        %v3226 = vsel %vm1006, %v3187, %v3189
        %v3227 = vsel %vm1006, %v3189, %v3191
        %v3228 = vsel %vm1006, %v3191, %v3193
        %v3229 = vsel %vm1006, %v3193, %v3195
        %v3230 = vsel %vm1006, %v3195, %v3197
        %v3231 = vsel %vm1006, %v3197, %v3199
        %v3232 = vsel %vm1006, %v3199, %v3201
        %v3233 = vsel %vm1006, %v3201, %v3203
        %v3234 = vsel %vm1006, %v3203, %v3205
        %v3235 = vsel %vm1006, %v3205, %v3207
        %v3236 = vsel %vm1006, %v3207, %v3209
        %v3237 = vsel %vm1006, %v3209, %v3211
        %v3238 = vsel %vm1006, %v3211, %v3213
        %v3239 = vsel %vm1006, %v3213, %v3215
        %3264 = vst [vmem:[#allocation3 + $0xd80] sm:$0xff] %v3216
        %3265 = vst [vmem:[#allocation3 + $0xd88] sm:$0xff] %v3217
        %3266 = vst [vmem:[#allocation3 + $0xd90] sm:$0xff] %v3218
        %3267 = vst [vmem:[#allocation3 + $0xd98] sm:$0xff] %v3219
        %3268 = vst [vmem:[#allocation3 + $0xda0] sm:$0xff] %v3220
        %3269 = vst [vmem:[#allocation3 + $0xda8] sm:$0xff] %v3221
        %3270 = vst [vmem:[#allocation3 + $0xdb0] sm:$0xff] %v3222
        %3271 = vst [vmem:[#allocation3 + $0xdb8] sm:$0xff] %v3223
        %3272 = vst [vmem:[#allocation3 + $0xdc0] sm:$0xff] %v3224
        %3273 = vst [vmem:[#allocation3 + $0xdc8] sm:$0xff] %v3225
        %3274 = vst [vmem:[#allocation3 + $0xdd0] sm:$0xff] %v3226
        %3275 = vst [vmem:[#allocation3 + $0xdd8] sm:$0xff] %v3227
        %3276 = vst [vmem:[#allocation3 + $0xde0] sm:$0xff] %v3228
        %3277 = vst [vmem:[#allocation3 + $0xde8] sm:$0xff] %v3229
        %3278 = vst [vmem:[#allocation3 + $0xdf0] sm:$0xff] %v3230
        %3279 = vst [vmem:[#allocation3 + $0xdf8] sm:$0xff] %v3231
        %3280 = vst [vmem:[#allocation3 + $0xe00] sm:$0xff] %v3232
        %3281 = vst [vmem:[#allocation3 + $0xe08] sm:$0xff] %v3233
        %3282 = vst [vmem:[#allocation3 + $0xe10] sm:$0xff] %v3234
        %3283 = vst [vmem:[#allocation3 + $0xe18] sm:$0xff] %v3235
        %3284 = vst [vmem:[#allocation3 + $0xe20] sm:$0xff] %v3236
        %3285 = vst [vmem:[#allocation3 + $0xe28] sm:$0xff] %v3237
        %3286 = vst [vmem:[#allocation3 + $0xe30] sm:$0xff] %v3238
        %3287 = vst [vmem:[#allocation3 + $0xe38] sm:$0xff] %v3239
        %v3288 = vld [vmem:[#allocation2 + $0x18] sm:$0xff]
        %v3289 = vld [vmem:[#allocation2 + $0x20] sm:$0xff]
        %v3290 = vld [vmem:[#allocation2 + $0x28] sm:$0xff]
        %v3291 = vld [vmem:[#allocation2 + $0x30] sm:$0xff]
        %v3292 = vld [vmem:[#allocation2 + $0x38] sm:$0xff]
        %v3293 = vld [vmem:[#allocation2 + $0x40] sm:$0xff]
        %v3294 = vld [vmem:[#allocation2 + $0x48] sm:$0xff]
        %v3295 = vld [vmem:[#allocation2 + $0x50] sm:$0xff]
        %v3296 = vld [vmem:[#allocation2 + $0x58] sm:$0xff]
        %v3297 = vld [vmem:[#allocation2 + $0x60] sm:$0xff]
        %v3298 = vld [vmem:[#allocation2 + $0x68] sm:$0xff]
        %v3299 = vld [vmem:[#allocation2 + $0x70] sm:$0xff]
        %v3300 = vld [vmem:[#allocation2 + $0x78] sm:$0xff]
        %v3301 = vld [vmem:[#allocation2 + $0x80] sm:$0xff]
        %v3302 = vld [vmem:[#allocation2 + $0x88] sm:$0xff]
        %v3303 = vld [vmem:[#allocation2 + $0x90] sm:$0xff]
        %v3304 = vld [vmem:[#allocation2 + $0x98] sm:$0xff]
        %v3305 = vld [vmem:[#allocation2 + $0xa0] sm:$0xff]
        %v3306 = vld [vmem:[#allocation2 + $0xa8] sm:$0xff]
        %v3307 = vld [vmem:[#allocation2 + $0xb0] sm:$0xff]
        %v3308 = vld [vmem:[#allocation2 + $0xb8] sm:$0xff]
        %v3309 = vld [vmem:[#allocation2 + $0xc0] sm:$0xff]
        %v3310 = vld [vmem:[#allocation2 + $0xc8] sm:$0xff]
        %v3311 = vld [vmem:[#allocation2 + $0xd0] sm:$0xff]
        %v3312 = vld [vmem:[#allocation2 + $0xd8] sm:$0xff]
        %3338 = vrot.lane.b32.xlu0 %v3288, 124
        %v3339 = vpop.permute.xlu0 %3338
        %3340 = vrot.lane.b32.xlu0 %v3289, 124
        %v3341 = vpop.permute.xlu0 %3340
        %3342 = vrot.lane.b32.xlu0 %v3290, 124
        %v3343 = vpop.permute.xlu0 %3342
        %3344 = vrot.lane.b32.xlu0 %v3291, 124
        %v3345 = vpop.permute.xlu0 %3344
        %3346 = vrot.lane.b32.xlu0 %v3292, 124
        %v3347 = vpop.permute.xlu0 %3346
        %3348 = vrot.lane.b32.xlu0 %v3293, 124
        %v3349 = vpop.permute.xlu0 %3348
        %3350 = vrot.lane.b32.xlu0 %v3294, 124
        %v3351 = vpop.permute.xlu0 %3350
        %3352 = vrot.lane.b32.xlu0 %v3295, 124
        %v3353 = vpop.permute.xlu0 %3352
        %3354 = vrot.lane.b32.xlu0 %v3296, 124
        %v3355 = vpop.permute.xlu0 %3354
        %3356 = vrot.lane.b32.xlu0 %v3297, 124
        %v3357 = vpop.permute.xlu0 %3356
        %3358 = vrot.lane.b32.xlu0 %v3298, 124
        %v3359 = vpop.permute.xlu0 %3358
        %3360 = vrot.lane.b32.xlu0 %v3299, 124
        %v3361 = vpop.permute.xlu0 %3360
        %3362 = vrot.lane.b32.xlu0 %v3300, 124
        %v3363 = vpop.permute.xlu0 %3362
        %3364 = vrot.lane.b32.xlu0 %v3301, 124
        %v3365 = vpop.permute.xlu0 %3364
        %3366 = vrot.lane.b32.xlu0 %v3302, 124
        %v3367 = vpop.permute.xlu0 %3366
        %3368 = vrot.lane.b32.xlu0 %v3303, 124
        %v3369 = vpop.permute.xlu0 %3368
        %3370 = vrot.lane.b32.xlu0 %v3304, 124
        %v3371 = vpop.permute.xlu0 %3370
        %3372 = vrot.lane.b32.xlu0 %v3305, 124
        %v3373 = vpop.permute.xlu0 %3372
        %3374 = vrot.lane.b32.xlu0 %v3306, 124
        %v3375 = vpop.permute.xlu0 %3374
        %3376 = vrot.lane.b32.xlu0 %v3307, 124
        %v3377 = vpop.permute.xlu0 %3376
        %3378 = vrot.lane.b32.xlu0 %v3308, 124
        %v3379 = vpop.permute.xlu0 %3378
        %3380 = vrot.lane.b32.xlu0 %v3309, 124
        %v3381 = vpop.permute.xlu0 %3380
        %3382 = vrot.lane.b32.xlu0 %v3310, 124
        %v3383 = vpop.permute.xlu0 %3382
        %3384 = vrot.lane.b32.xlu0 %v3311, 124
        %v3385 = vpop.permute.xlu0 %3384
        %3386 = vrot.lane.b32.xlu0 %v3312, 124
        %v3387 = vpop.permute.xlu0 %3386
        %v3388 = vsel %vm1179, %v3339, %v3341
        %v3389 = vsel %vm1179, %v3341, %v3343
        %v3390 = vsel %vm1179, %v3343, %v3345
        %v3391 = vsel %vm1179, %v3345, %v3347
        %v3392 = vsel %vm1179, %v3347, %v3349
        %v3393 = vsel %vm1179, %v3349, %v3351
        %v3394 = vsel %vm1179, %v3351, %v3353
        %v3395 = vsel %vm1179, %v3353, %v3355
        %v3396 = vsel %vm1179, %v3355, %v3357
        %v3397 = vsel %vm1179, %v3357, %v3359
        %v3398 = vsel %vm1179, %v3359, %v3361
        %v3399 = vsel %vm1179, %v3361, %v3363
        %v3400 = vsel %vm1179, %v3363, %v3365
        %v3401 = vsel %vm1179, %v3365, %v3367
        %v3402 = vsel %vm1179, %v3367, %v3369
        %v3403 = vsel %vm1179, %v3369, %v3371
        %v3404 = vsel %vm1179, %v3371, %v3373
        %v3405 = vsel %vm1179, %v3373, %v3375
        %v3406 = vsel %vm1179, %v3375, %v3377
        %v3407 = vsel %vm1179, %v3377, %v3379
        %v3408 = vsel %vm1179, %v3379, %v3381
        %v3409 = vsel %vm1179, %v3381, %v3383
        %v3410 = vsel %vm1179, %v3383, %v3385
        %v3411 = vsel %vm1179, %v3385, %v3387
        %3436 = vst [vmem:[#allocation3 + $0xe40] sm:$0xff] %v3388
        %3437 = vst [vmem:[#allocation3 + $0xe48] sm:$0xff] %v3389
        %3438 = vst [vmem:[#allocation3 + $0xe50] sm:$0xff] %v3390
        %3439 = vst [vmem:[#allocation3 + $0xe58] sm:$0xff] %v3391
        %3440 = vst [vmem:[#allocation3 + $0xe60] sm:$0xff] %v3392
        %3441 = vst [vmem:[#allocation3 + $0xe68] sm:$0xff] %v3393
        %3442 = vst [vmem:[#allocation3 + $0xe70] sm:$0xff] %v3394
        %3443 = vst [vmem:[#allocation3 + $0xe78] sm:$0xff] %v3395
        %3444 = vst [vmem:[#allocation3 + $0xe80] sm:$0xff] %v3396
        %3445 = vst [vmem:[#allocation3 + $0xe88] sm:$0xff] %v3397
        %3446 = vst [vmem:[#allocation3 + $0xe90] sm:$0xff] %v3398
        %3447 = vst [vmem:[#allocation3 + $0xe98] sm:$0xff] %v3399
        %3448 = vst [vmem:[#allocation3 + $0xea0] sm:$0xff] %v3400
        %3449 = vst [vmem:[#allocation3 + $0xea8] sm:$0xff] %v3401
        %3450 = vst [vmem:[#allocation3 + $0xeb0] sm:$0xff] %v3402
        %3451 = vst [vmem:[#allocation3 + $0xeb8] sm:$0xff] %v3403
        %3452 = vst [vmem:[#allocation3 + $0xec0] sm:$0xff] %v3404
        %3453 = vst [vmem:[#allocation3 + $0xec8] sm:$0xff] %v3405
        %3454 = vst [vmem:[#allocation3 + $0xed0] sm:$0xff] %v3406
        %3455 = vst [vmem:[#allocation3 + $0xed8] sm:$0xff] %v3407
        %3456 = vst [vmem:[#allocation3 + $0xee0] sm:$0xff] %v3408
        %3457 = vst [vmem:[#allocation3 + $0xee8] sm:$0xff] %v3409
        %3458 = vst [vmem:[#allocation3 + $0xef0] sm:$0xff] %v3410
        %3459 = vst [vmem:[#allocation3 + $0xef8] sm:$0xff] %v3411
        %v3460 = vld [vmem:[#allocation2 + $0x20] sm:$0xff]
        %v3461 = vld [vmem:[#allocation2 + $0x28] sm:$0xff]
        %v3462 = vld [vmem:[#allocation2 + $0x30] sm:$0xff]
        %v3463 = vld [vmem:[#allocation2 + $0x38] sm:$0xff]
        %v3464 = vld [vmem:[#allocation2 + $0x40] sm:$0xff]
        %v3465 = vld [vmem:[#allocation2 + $0x48] sm:$0xff]
        %v3466 = vld [vmem:[#allocation2 + $0x50] sm:$0xff]
        %v3467 = vld [vmem:[#allocation2 + $0x58] sm:$0xff]
        %v3468 = vld [vmem:[#allocation2 + $0x60] sm:$0xff]
        %v3469 = vld [vmem:[#allocation2 + $0x68] sm:$0xff]
        %v3470 = vld [vmem:[#allocation2 + $0x70] sm:$0xff]
        %v3471 = vld [vmem:[#allocation2 + $0x78] sm:$0xff]
        %v3472 = vld [vmem:[#allocation2 + $0x80] sm:$0xff]
        %v3473 = vld [vmem:[#allocation2 + $0x88] sm:$0xff]
        %v3474 = vld [vmem:[#allocation2 + $0x90] sm:$0xff]
        %v3475 = vld [vmem:[#allocation2 + $0x98] sm:$0xff]
        %v3476 = vld [vmem:[#allocation2 + $0xa0] sm:$0xff]
        %v3477 = vld [vmem:[#allocation2 + $0xa8] sm:$0xff]
        %v3478 = vld [vmem:[#allocation2 + $0xb0] sm:$0xff]
        %v3479 = vld [vmem:[#allocation2 + $0xb8] sm:$0xff]
        %v3480 = vld [vmem:[#allocation2 + $0xc0] sm:$0xff]
        %v3481 = vld [vmem:[#allocation2 + $0xc8] sm:$0xff]
        %v3482 = vld [vmem:[#allocation2 + $0xd0] sm:$0xff]
        %v3483 = vld [vmem:[#allocation2 + $0xd8] sm:$0xff]
        %3484 = vst [vmem:[#allocation3 + $0xf00] sm:$0xff] %v3460
        %3485 = vst [vmem:[#allocation3 + $0xf08] sm:$0xff] %v3461
        %3486 = vst [vmem:[#allocation3 + $0xf10] sm:$0xff] %v3462
        %3487 = vst [vmem:[#allocation3 + $0xf18] sm:$0xff] %v3463
        %3488 = vst [vmem:[#allocation3 + $0xf20] sm:$0xff] %v3464
        %3489 = vst [vmem:[#allocation3 + $0xf28] sm:$0xff] %v3465
        %3490 = vst [vmem:[#allocation3 + $0xf30] sm:$0xff] %v3466
        %3491 = vst [vmem:[#allocation3 + $0xf38] sm:$0xff] %v3467
        %3492 = vst [vmem:[#allocation3 + $0xf40] sm:$0xff] %v3468
        %3493 = vst [vmem:[#allocation3 + $0xf48] sm:$0xff] %v3469
        %3494 = vst [vmem:[#allocation3 + $0xf50] sm:$0xff] %v3470
        %3495 = vst [vmem:[#allocation3 + $0xf58] sm:$0xff] %v3471
        %3496 = vst [vmem:[#allocation3 + $0xf60] sm:$0xff] %v3472
        %3497 = vst [vmem:[#allocation3 + $0xf68] sm:$0xff] %v3473
        %3498 = vst [vmem:[#allocation3 + $0xf70] sm:$0xff] %v3474
        %3499 = vst [vmem:[#allocation3 + $0xf78] sm:$0xff] %v3475
        %3500 = vst [vmem:[#allocation3 + $0xf80] sm:$0xff] %v3476
        %3501 = vst [vmem:[#allocation3 + $0xf88] sm:$0xff] %v3477
        %3502 = vst [vmem:[#allocation3 + $0xf90] sm:$0xff] %v3478
        %3503 = vst [vmem:[#allocation3 + $0xf98] sm:$0xff] %v3479
        %3504 = vst [vmem:[#allocation3 + $0xfa0] sm:$0xff] %v3480
        %3505 = vst [vmem:[#allocation3 + $0xfa8] sm:$0xff] %v3481
        %3506 = vst [vmem:[#allocation3 + $0xfb0] sm:$0xff] %v3482
        %3507 = vst [vmem:[#allocation3 + $0xfb8] sm:$0xff] %v3483
        %v3508 = vld [vmem:[#allocation2 + $0x20] sm:$0xff]
        %v3509 = vld [vmem:[#allocation2 + $0x28] sm:$0xff]
        %v3510 = vld [vmem:[#allocation2 + $0x30] sm:$0xff]
        %v3511 = vld [vmem:[#allocation2 + $0x38] sm:$0xff]
        %v3512 = vld [vmem:[#allocation2 + $0x40] sm:$0xff]
        %v3513 = vld [vmem:[#allocation2 + $0x48] sm:$0xff]
        %v3514 = vld [vmem:[#allocation2 + $0x50] sm:$0xff]
        %v3515 = vld [vmem:[#allocation2 + $0x58] sm:$0xff]
        %v3516 = vld [vmem:[#allocation2 + $0x60] sm:$0xff]
        %v3517 = vld [vmem:[#allocation2 + $0x68] sm:$0xff]
        %v3518 = vld [vmem:[#allocation2 + $0x70] sm:$0xff]
        %v3519 = vld [vmem:[#allocation2 + $0x78] sm:$0xff]
        %v3520 = vld [vmem:[#allocation2 + $0x80] sm:$0xff]
        %v3521 = vld [vmem:[#allocation2 + $0x88] sm:$0xff]
        %v3522 = vld [vmem:[#allocation2 + $0x90] sm:$0xff]
        %v3523 = vld [vmem:[#allocation2 + $0x98] sm:$0xff]
        %v3524 = vld [vmem:[#allocation2 + $0xa0] sm:$0xff]
        %v3525 = vld [vmem:[#allocation2 + $0xa8] sm:$0xff]
        %v3526 = vld [vmem:[#allocation2 + $0xb0] sm:$0xff]
        %v3527 = vld [vmem:[#allocation2 + $0xb8] sm:$0xff]
        %v3528 = vld [vmem:[#allocation2 + $0xc0] sm:$0xff]
        %v3529 = vld [vmem:[#allocation2 + $0xc8] sm:$0xff]
        %v3530 = vld [vmem:[#allocation2 + $0xd0] sm:$0xff]
        %v3531 = vld [vmem:[#allocation2 + $0xd8] sm:$0xff]
        %v3532 = vld [vmem:[#allocation2 + $0xe0] sm:$0xff]
        %3558 = vrot.lane.b32.xlu0 %v3508, 127
        %v3559 = vpop.permute.xlu0 %3558
        %3560 = vrot.lane.b32.xlu0 %v3509, 127
        %v3561 = vpop.permute.xlu0 %3560
        %3562 = vrot.lane.b32.xlu0 %v3510, 127
        %v3563 = vpop.permute.xlu0 %3562
        %3564 = vrot.lane.b32.xlu0 %v3511, 127
        %v3565 = vpop.permute.xlu0 %3564
        %3566 = vrot.lane.b32.xlu0 %v3512, 127
        %v3567 = vpop.permute.xlu0 %3566
        %3568 = vrot.lane.b32.xlu0 %v3513, 127
        %v3569 = vpop.permute.xlu0 %3568
        %3570 = vrot.lane.b32.xlu0 %v3514, 127
        %v3571 = vpop.permute.xlu0 %3570
        %3572 = vrot.lane.b32.xlu0 %v3515, 127
        %v3573 = vpop.permute.xlu0 %3572
        %3574 = vrot.lane.b32.xlu0 %v3516, 127
        %v3575 = vpop.permute.xlu0 %3574
        %3576 = vrot.lane.b32.xlu0 %v3517, 127
        %v3577 = vpop.permute.xlu0 %3576
        %3578 = vrot.lane.b32.xlu0 %v3518, 127
        %v3579 = vpop.permute.xlu0 %3578
        %3580 = vrot.lane.b32.xlu0 %v3519, 127
        %v3581 = vpop.permute.xlu0 %3580
        %3582 = vrot.lane.b32.xlu0 %v3520, 127
        %v3583 = vpop.permute.xlu0 %3582
        %3584 = vrot.lane.b32.xlu0 %v3521, 127
        %v3585 = vpop.permute.xlu0 %3584
        %3586 = vrot.lane.b32.xlu0 %v3522, 127
        %v3587 = vpop.permute.xlu0 %3586
        %3588 = vrot.lane.b32.xlu0 %v3523, 127
        %v3589 = vpop.permute.xlu0 %3588
        %3590 = vrot.lane.b32.xlu0 %v3524, 127
        %v3591 = vpop.permute.xlu0 %3590
        %3592 = vrot.lane.b32.xlu0 %v3525, 127
        %v3593 = vpop.permute.xlu0 %3592
        %3594 = vrot.lane.b32.xlu0 %v3526, 127
        %v3595 = vpop.permute.xlu0 %3594
        %3596 = vrot.lane.b32.xlu0 %v3527, 127
        %v3597 = vpop.permute.xlu0 %3596
        %3598 = vrot.lane.b32.xlu0 %v3528, 127
        %v3599 = vpop.permute.xlu0 %3598
        %3600 = vrot.lane.b32.xlu0 %v3529, 127
        %v3601 = vpop.permute.xlu0 %3600
        %3602 = vrot.lane.b32.xlu0 %v3530, 127
        %v3603 = vpop.permute.xlu0 %3602
        %3604 = vrot.lane.b32.xlu0 %v3531, 127
        %v3605 = vpop.permute.xlu0 %3604
        %3606 = vrot.lane.b32.xlu0 %v3532, 127
        %v3607 = vpop.permute.xlu0 %3606
        %v3608 = vsel %vm660, %v3559, %v3561
        %v3609 = vsel %vm660, %v3561, %v3563
        %v3610 = vsel %vm660, %v3563, %v3565
        %v3611 = vsel %vm660, %v3565, %v3567
        %v3612 = vsel %vm660, %v3567, %v3569
        %v3613 = vsel %vm660, %v3569, %v3571
        %v3614 = vsel %vm660, %v3571, %v3573
        %v3615 = vsel %vm660, %v3573, %v3575
        %v3616 = vsel %vm660, %v3575, %v3577
        %v3617 = vsel %vm660, %v3577, %v3579
        %v3618 = vsel %vm660, %v3579, %v3581
        %v3619 = vsel %vm660, %v3581, %v3583
        %v3620 = vsel %vm660, %v3583, %v3585
        %v3621 = vsel %vm660, %v3585, %v3587
        %v3622 = vsel %vm660, %v3587, %v3589
        %v3623 = vsel %vm660, %v3589, %v3591
        %v3624 = vsel %vm660, %v3591, %v3593
        %v3625 = vsel %vm660, %v3593, %v3595
        %v3626 = vsel %vm660, %v3595, %v3597
        %v3627 = vsel %vm660, %v3597, %v3599
        %v3628 = vsel %vm660, %v3599, %v3601
        %v3629 = vsel %vm660, %v3601, %v3603
        %v3630 = vsel %vm660, %v3603, %v3605
        %v3631 = vsel %vm660, %v3605, %v3607
        %3656 = vst [vmem:[#allocation3 + $0xfc0] sm:$0xff] %v3608
        %3657 = vst [vmem:[#allocation3 + $0xfc8] sm:$0xff] %v3609
        %3658 = vst [vmem:[#allocation3 + $0xfd0] sm:$0xff] %v3610
        %3659 = vst [vmem:[#allocation3 + $0xfd8] sm:$0xff] %v3611
        %3660 = vst [vmem:[#allocation3 + $0xfe0] sm:$0xff] %v3612
        %3661 = vst [vmem:[#allocation3 + $0xfe8] sm:$0xff] %v3613
        %3662 = vst [vmem:[#allocation3 + $0xff0] sm:$0xff] %v3614
        %3663 = vst [vmem:[#allocation3 + $0xff8] sm:$0xff] %v3615
        %3664 = vst [vmem:[#allocation3 + $0x1000] sm:$0xff] %v3616
        %3665 = vst [vmem:[#allocation3 + $0x1008] sm:$0xff] %v3617
        %3666 = vst [vmem:[#allocation3 + $0x1010] sm:$0xff] %v3618
        %3667 = vst [vmem:[#allocation3 + $0x1018] sm:$0xff] %v3619
        %3668 = vst [vmem:[#allocation3 + $0x1020] sm:$0xff] %v3620
        %3669 = vst [vmem:[#allocation3 + $0x1028] sm:$0xff] %v3621
        %3670 = vst [vmem:[#allocation3 + $0x1030] sm:$0xff] %v3622
        %3671 = vst [vmem:[#allocation3 + $0x1038] sm:$0xff] %v3623
        %3672 = vst [vmem:[#allocation3 + $0x1040] sm:$0xff] %v3624
        %3673 = vst [vmem:[#allocation3 + $0x1048] sm:$0xff] %v3625
        %3674 = vst [vmem:[#allocation3 + $0x1050] sm:$0xff] %v3626
        %3675 = vst [vmem:[#allocation3 + $0x1058] sm:$0xff] %v3627
        %3676 = vst [vmem:[#allocation3 + $0x1060] sm:$0xff] %v3628
        %3677 = vst [vmem:[#allocation3 + $0x1068] sm:$0xff] %v3629
        %3678 = vst [vmem:[#allocation3 + $0x1070] sm:$0xff] %v3630
        %3679 = vst [vmem:[#allocation3 + $0x1078] sm:$0xff] %v3631
        %v3680 = vld [vmem:[#allocation2 + $0x20] sm:$0xff]
        %v3681 = vld [vmem:[#allocation2 + $0x28] sm:$0xff]
        %v3682 = vld [vmem:[#allocation2 + $0x30] sm:$0xff]
        %v3683 = vld [vmem:[#allocation2 + $0x38] sm:$0xff]
        %v3684 = vld [vmem:[#allocation2 + $0x40] sm:$0xff]
        %v3685 = vld [vmem:[#allocation2 + $0x48] sm:$0xff]
        %v3686 = vld [vmem:[#allocation2 + $0x50] sm:$0xff]
        %v3687 = vld [vmem:[#allocation2 + $0x58] sm:$0xff]
        %v3688 = vld [vmem:[#allocation2 + $0x60] sm:$0xff]
        %v3689 = vld [vmem:[#allocation2 + $0x68] sm:$0xff]
        %v3690 = vld [vmem:[#allocation2 + $0x70] sm:$0xff]
        %v3691 = vld [vmem:[#allocation2 + $0x78] sm:$0xff]
        %v3692 = vld [vmem:[#allocation2 + $0x80] sm:$0xff]
        %v3693 = vld [vmem:[#allocation2 + $0x88] sm:$0xff]
        %v3694 = vld [vmem:[#allocation2 + $0x90] sm:$0xff]
        %v3695 = vld [vmem:[#allocation2 + $0x98] sm:$0xff]
        %v3696 = vld [vmem:[#allocation2 + $0xa0] sm:$0xff]
        %v3697 = vld [vmem:[#allocation2 + $0xa8] sm:$0xff]
        %v3698 = vld [vmem:[#allocation2 + $0xb0] sm:$0xff]
        %v3699 = vld [vmem:[#allocation2 + $0xb8] sm:$0xff]
        %v3700 = vld [vmem:[#allocation2 + $0xc0] sm:$0xff]
        %v3701 = vld [vmem:[#allocation2 + $0xc8] sm:$0xff]
        %v3702 = vld [vmem:[#allocation2 + $0xd0] sm:$0xff]
        %v3703 = vld [vmem:[#allocation2 + $0xd8] sm:$0xff]
        %v3704 = vld [vmem:[#allocation2 + $0xe0] sm:$0xff]
        %3730 = vrot.lane.b32.xlu0 %v3680, 126
        %v3731 = vpop.permute.xlu0 %3730
        %3732 = vrot.lane.b32.xlu0 %v3681, 126
        %v3733 = vpop.permute.xlu0 %3732
        %3734 = vrot.lane.b32.xlu0 %v3682, 126
        %v3735 = vpop.permute.xlu0 %3734
        %3736 = vrot.lane.b32.xlu0 %v3683, 126
        %v3737 = vpop.permute.xlu0 %3736
        %3738 = vrot.lane.b32.xlu0 %v3684, 126
        %v3739 = vpop.permute.xlu0 %3738
        %3740 = vrot.lane.b32.xlu0 %v3685, 126
        %v3741 = vpop.permute.xlu0 %3740
        %3742 = vrot.lane.b32.xlu0 %v3686, 126
        %v3743 = vpop.permute.xlu0 %3742
        %3744 = vrot.lane.b32.xlu0 %v3687, 126
        %v3745 = vpop.permute.xlu0 %3744
        %3746 = vrot.lane.b32.xlu0 %v3688, 126
        %v3747 = vpop.permute.xlu0 %3746
        %3748 = vrot.lane.b32.xlu0 %v3689, 126
        %v3749 = vpop.permute.xlu0 %3748
        %3750 = vrot.lane.b32.xlu0 %v3690, 126
        %v3751 = vpop.permute.xlu0 %3750
        %3752 = vrot.lane.b32.xlu0 %v3691, 126
        %v3753 = vpop.permute.xlu0 %3752
        %3754 = vrot.lane.b32.xlu0 %v3692, 126
        %v3755 = vpop.permute.xlu0 %3754
        %3756 = vrot.lane.b32.xlu0 %v3693, 126
        %v3757 = vpop.permute.xlu0 %3756
        %3758 = vrot.lane.b32.xlu0 %v3694, 126
        %v3759 = vpop.permute.xlu0 %3758
        %3760 = vrot.lane.b32.xlu0 %v3695, 126
        %v3761 = vpop.permute.xlu0 %3760
        %3762 = vrot.lane.b32.xlu0 %v3696, 126
        %v3763 = vpop.permute.xlu0 %3762
        %3764 = vrot.lane.b32.xlu0 %v3697, 126
        %v3765 = vpop.permute.xlu0 %3764
        %3766 = vrot.lane.b32.xlu0 %v3698, 126
        %v3767 = vpop.permute.xlu0 %3766
        %3768 = vrot.lane.b32.xlu0 %v3699, 126
        %v3769 = vpop.permute.xlu0 %3768
        %3770 = vrot.lane.b32.xlu0 %v3700, 126
        %v3771 = vpop.permute.xlu0 %3770
        %3772 = vrot.lane.b32.xlu0 %v3701, 126
        %v3773 = vpop.permute.xlu0 %3772
        %3774 = vrot.lane.b32.xlu0 %v3702, 126
        %v3775 = vpop.permute.xlu0 %3774
        %3776 = vrot.lane.b32.xlu0 %v3703, 126
        %v3777 = vpop.permute.xlu0 %3776
        %3778 = vrot.lane.b32.xlu0 %v3704, 126
        %v3779 = vpop.permute.xlu0 %3778
        %v3780 = vsel %vm833, %v3731, %v3733
        %v3781 = vsel %vm833, %v3733, %v3735
        %v3782 = vsel %vm833, %v3735, %v3737
        %v3783 = vsel %vm833, %v3737, %v3739
        %v3784 = vsel %vm833, %v3739, %v3741
        %v3785 = vsel %vm833, %v3741, %v3743
        %v3786 = vsel %vm833, %v3743, %v3745
        %v3787 = vsel %vm833, %v3745, %v3747
        %v3788 = vsel %vm833, %v3747, %v3749
        %v3789 = vsel %vm833, %v3749, %v3751
        %v3790 = vsel %vm833, %v3751, %v3753
        %v3791 = vsel %vm833, %v3753, %v3755
        %v3792 = vsel %vm833, %v3755, %v3757
        %v3793 = vsel %vm833, %v3757, %v3759
        %v3794 = vsel %vm833, %v3759, %v3761
        %v3795 = vsel %vm833, %v3761, %v3763
        %v3796 = vsel %vm833, %v3763, %v3765
        %v3797 = vsel %vm833, %v3765, %v3767
        %v3798 = vsel %vm833, %v3767, %v3769
        %v3799 = vsel %vm833, %v3769, %v3771
        %v3800 = vsel %vm833, %v3771, %v3773
        %v3801 = vsel %vm833, %v3773, %v3775
        %v3802 = vsel %vm833, %v3775, %v3777
        %v3803 = vsel %vm833, %v3777, %v3779
        %3828 = vst [vmem:[#allocation3 + $0x1080] sm:$0xff] %v3780
        %3829 = vst [vmem:[#allocation3 + $0x1088] sm:$0xff] %v3781
        %3830 = vst [vmem:[#allocation3 + $0x1090] sm:$0xff] %v3782
        %3831 = vst [vmem:[#allocation3 + $0x1098] sm:$0xff] %v3783
        %3832 = vst [vmem:[#allocation3 + $0x10a0] sm:$0xff] %v3784
        %3833 = vst [vmem:[#allocation3 + $0x10a8] sm:$0xff] %v3785
        %3834 = vst [vmem:[#allocation3 + $0x10b0] sm:$0xff] %v3786
        %3835 = vst [vmem:[#allocation3 + $0x10b8] sm:$0xff] %v3787
        %3836 = vst [vmem:[#allocation3 + $0x10c0] sm:$0xff] %v3788
        %3837 = vst [vmem:[#allocation3 + $0x10c8] sm:$0xff] %v3789
        %3838 = vst [vmem:[#allocation3 + $0x10d0] sm:$0xff] %v3790
        %3839 = vst [vmem:[#allocation3 + $0x10d8] sm:$0xff] %v3791
        %3840 = vst [vmem:[#allocation3 + $0x10e0] sm:$0xff] %v3792
        %3841 = vst [vmem:[#allocation3 + $0x10e8] sm:$0xff] %v3793
        %3842 = vst [vmem:[#allocation3 + $0x10f0] sm:$0xff] %v3794
        %3843 = vst [vmem:[#allocation3 + $0x10f8] sm:$0xff] %v3795
        %3844 = vst [vmem:[#allocation3 + $0x1100] sm:$0xff] %v3796
        %3845 = vst [vmem:[#allocation3 + $0x1108] sm:$0xff] %v3797
        %3846 = vst [vmem:[#allocation3 + $0x1110] sm:$0xff] %v3798
        %3847 = vst [vmem:[#allocation3 + $0x1118] sm:$0xff] %v3799
        %3848 = vst [vmem:[#allocation3 + $0x1120] sm:$0xff] %v3800
        %3849 = vst [vmem:[#allocation3 + $0x1128] sm:$0xff] %v3801
        %3850 = vst [vmem:[#allocation3 + $0x1130] sm:$0xff] %v3802
        %3851 = vst [vmem:[#allocation3 + $0x1138] sm:$0xff] %v3803
        %v3852 = vld [vmem:[#allocation2 + $0x20] sm:$0xff]
        %v3853 = vld [vmem:[#allocation2 + $0x28] sm:$0xff]
        %v3854 = vld [vmem:[#allocation2 + $0x30] sm:$0xff]
        %v3855 = vld [vmem:[#allocation2 + $0x38] sm:$0xff]
        %v3856 = vld [vmem:[#allocation2 + $0x40] sm:$0xff]
        %v3857 = vld [vmem:[#allocation2 + $0x48] sm:$0xff]
        %v3858 = vld [vmem:[#allocation2 + $0x50] sm:$0xff]
        %v3859 = vld [vmem:[#allocation2 + $0x58] sm:$0xff]
        %v3860 = vld [vmem:[#allocation2 + $0x60] sm:$0xff]
        %v3861 = vld [vmem:[#allocation2 + $0x68] sm:$0xff]
        %v3862 = vld [vmem:[#allocation2 + $0x70] sm:$0xff]
        %v3863 = vld [vmem:[#allocation2 + $0x78] sm:$0xff]
        %v3864 = vld [vmem:[#allocation2 + $0x80] sm:$0xff]
        %v3865 = vld [vmem:[#allocation2 + $0x88] sm:$0xff]
        %v3866 = vld [vmem:[#allocation2 + $0x90] sm:$0xff]
        %v3867 = vld [vmem:[#allocation2 + $0x98] sm:$0xff]
        %v3868 = vld [vmem:[#allocation2 + $0xa0] sm:$0xff]
        %v3869 = vld [vmem:[#allocation2 + $0xa8] sm:$0xff]
        %v3870 = vld [vmem:[#allocation2 + $0xb0] sm:$0xff]
        %v3871 = vld [vmem:[#allocation2 + $0xb8] sm:$0xff]
        %v3872 = vld [vmem:[#allocation2 + $0xc0] sm:$0xff]
        %v3873 = vld [vmem:[#allocation2 + $0xc8] sm:$0xff]
        %v3874 = vld [vmem:[#allocation2 + $0xd0] sm:$0xff]
        %v3875 = vld [vmem:[#allocation2 + $0xd8] sm:$0xff]
        %v3876 = vld [vmem:[#allocation2 + $0xe0] sm:$0xff]
        %3902 = vrot.lane.b32.xlu0 %v3852, 125
        %v3903 = vpop.permute.xlu0 %3902
        %3904 = vrot.lane.b32.xlu0 %v3853, 125
        %v3905 = vpop.permute.xlu0 %3904
        %3906 = vrot.lane.b32.xlu0 %v3854, 125
        %v3907 = vpop.permute.xlu0 %3906
        %3908 = vrot.lane.b32.xlu0 %v3855, 125
        %v3909 = vpop.permute.xlu0 %3908
        %3910 = vrot.lane.b32.xlu0 %v3856, 125
        %v3911 = vpop.permute.xlu0 %3910
        %3912 = vrot.lane.b32.xlu0 %v3857, 125
        %v3913 = vpop.permute.xlu0 %3912
        %3914 = vrot.lane.b32.xlu0 %v3858, 125
        %v3915 = vpop.permute.xlu0 %3914
        %3916 = vrot.lane.b32.xlu0 %v3859, 125
        %v3917 = vpop.permute.xlu0 %3916
        %3918 = vrot.lane.b32.xlu0 %v3860, 125
        %v3919 = vpop.permute.xlu0 %3918
        %3920 = vrot.lane.b32.xlu0 %v3861, 125
        %v3921 = vpop.permute.xlu0 %3920
        %3922 = vrot.lane.b32.xlu0 %v3862, 125
        %v3923 = vpop.permute.xlu0 %3922
        %3924 = vrot.lane.b32.xlu0 %v3863, 125
        %v3925 = vpop.permute.xlu0 %3924
        %3926 = vrot.lane.b32.xlu0 %v3864, 125
        %v3927 = vpop.permute.xlu0 %3926
        %3928 = vrot.lane.b32.xlu0 %v3865, 125
        %v3929 = vpop.permute.xlu0 %3928
        %3930 = vrot.lane.b32.xlu0 %v3866, 125
        %v3931 = vpop.permute.xlu0 %3930
        %3932 = vrot.lane.b32.xlu0 %v3867, 125
        %v3933 = vpop.permute.xlu0 %3932
        %3934 = vrot.lane.b32.xlu0 %v3868, 125
        %v3935 = vpop.permute.xlu0 %3934
        %3936 = vrot.lane.b32.xlu0 %v3869, 125
        %v3937 = vpop.permute.xlu0 %3936
        %3938 = vrot.lane.b32.xlu0 %v3870, 125
        %v3939 = vpop.permute.xlu0 %3938
        %3940 = vrot.lane.b32.xlu0 %v3871, 125
        %v3941 = vpop.permute.xlu0 %3940
        %3942 = vrot.lane.b32.xlu0 %v3872, 125
        %v3943 = vpop.permute.xlu0 %3942
        %3944 = vrot.lane.b32.xlu0 %v3873, 125
        %v3945 = vpop.permute.xlu0 %3944
        %3946 = vrot.lane.b32.xlu0 %v3874, 125
        %v3947 = vpop.permute.xlu0 %3946
        %3948 = vrot.lane.b32.xlu0 %v3875, 125
        %v3949 = vpop.permute.xlu0 %3948
        %3950 = vrot.lane.b32.xlu0 %v3876, 125
        %v3951 = vpop.permute.xlu0 %3950
        %v3952 = vsel %vm1006, %v3903, %v3905
        %v3953 = vsel %vm1006, %v3905, %v3907
        %v3954 = vsel %vm1006, %v3907, %v3909
        %v3955 = vsel %vm1006, %v3909, %v3911
        %v3956 = vsel %vm1006, %v3911, %v3913
        %v3957 = vsel %vm1006, %v3913, %v3915
        %v3958 = vsel %vm1006, %v3915, %v3917
        %v3959 = vsel %vm1006, %v3917, %v3919
        %v3960 = vsel %vm1006, %v3919, %v3921
        %v3961 = vsel %vm1006, %v3921, %v3923
        %v3962 = vsel %vm1006, %v3923, %v3925
        %v3963 = vsel %vm1006, %v3925, %v3927
        %v3964 = vsel %vm1006, %v3927, %v3929
        %v3965 = vsel %vm1006, %v3929, %v3931
        %v3966 = vsel %vm1006, %v3931, %v3933
        %v3967 = vsel %vm1006, %v3933, %v3935
        %v3968 = vsel %vm1006, %v3935, %v3937
        %v3969 = vsel %vm1006, %v3937, %v3939
        %v3970 = vsel %vm1006, %v3939, %v3941
        %v3971 = vsel %vm1006, %v3941, %v3943
        %v3972 = vsel %vm1006, %v3943, %v3945
        %v3973 = vsel %vm1006, %v3945, %v3947
        %v3974 = vsel %vm1006, %v3947, %v3949
        %v3975 = vsel %vm1006, %v3949, %v3951
        %4000 = vst [vmem:[#allocation3 + $0x1140] sm:$0xff] %v3952
        %4001 = vst [vmem:[#allocation3 + $0x1148] sm:$0xff] %v3953
        %4002 = vst [vmem:[#allocation3 + $0x1150] sm:$0xff] %v3954
        %4003 = vst [vmem:[#allocation3 + $0x1158] sm:$0xff] %v3955
        %4004 = vst [vmem:[#allocation3 + $0x1160] sm:$0xff] %v3956
        %4005 = vst [vmem:[#allocation3 + $0x1168] sm:$0xff] %v3957
        %4006 = vst [vmem:[#allocation3 + $0x1170] sm:$0xff] %v3958
        %4007 = vst [vmem:[#allocation3 + $0x1178] sm:$0xff] %v3959
        %4008 = vst [vmem:[#allocation3 + $0x1180] sm:$0xff] %v3960
        %4009 = vst [vmem:[#allocation3 + $0x1188] sm:$0xff] %v3961
        %4010 = vst [vmem:[#allocation3 + $0x1190] sm:$0xff] %v3962
        %4011 = vst [vmem:[#allocation3 + $0x1198] sm:$0xff] %v3963
        %4012 = vst [vmem:[#allocation3 + $0x11a0] sm:$0xff] %v3964
        %4013 = vst [vmem:[#allocation3 + $0x11a8] sm:$0xff] %v3965
        %4014 = vst [vmem:[#allocation3 + $0x11b0] sm:$0xff] %v3966
        %4015 = vst [vmem:[#allocation3 + $0x11b8] sm:$0xff] %v3967
        %4016 = vst [vmem:[#allocation3 + $0x11c0] sm:$0xff] %v3968
        %4017 = vst [vmem:[#allocation3 + $0x11c8] sm:$0xff] %v3969
        %4018 = vst [vmem:[#allocation3 + $0x11d0] sm:$0xff] %v3970
        %4019 = vst [vmem:[#allocation3 + $0x11d8] sm:$0xff] %v3971
        %4020 = vst [vmem:[#allocation3 + $0x11e0] sm:$0xff] %v3972
        %4021 = vst [vmem:[#allocation3 + $0x11e8] sm:$0xff] %v3973
        %4022 = vst [vmem:[#allocation3 + $0x11f0] sm:$0xff] %v3974
        %4023 = vst [vmem:[#allocation3 + $0x11f8] sm:$0xff] %v3975
        %v4024 = vld [vmem:[#allocation2 + $0x20] sm:$0xff]
        %v4025 = vld [vmem:[#allocation2 + $0x28] sm:$0xff]
        %v4026 = vld [vmem:[#allocation2 + $0x30] sm:$0xff]
        %v4027 = vld [vmem:[#allocation2 + $0x38] sm:$0xff]
        %v4028 = vld [vmem:[#allocation2 + $0x40] sm:$0xff]
        %v4029 = vld [vmem:[#allocation2 + $0x48] sm:$0xff]
        %v4030 = vld [vmem:[#allocation2 + $0x50] sm:$0xff]
        %v4031 = vld [vmem:[#allocation2 + $0x58] sm:$0xff]
        %v4032 = vld [vmem:[#allocation2 + $0x60] sm:$0xff]
        %v4033 = vld [vmem:[#allocation2 + $0x68] sm:$0xff]
        %v4034 = vld [vmem:[#allocation2 + $0x70] sm:$0xff]
        %v4035 = vld [vmem:[#allocation2 + $0x78] sm:$0xff]
        %v4036 = vld [vmem:[#allocation2 + $0x80] sm:$0xff]
        %v4037 = vld [vmem:[#allocation2 + $0x88] sm:$0xff]
        %v4038 = vld [vmem:[#allocation2 + $0x90] sm:$0xff]
        %v4039 = vld [vmem:[#allocation2 + $0x98] sm:$0xff]
        %v4040 = vld [vmem:[#allocation2 + $0xa0] sm:$0xff]
        %v4041 = vld [vmem:[#allocation2 + $0xa8] sm:$0xff]
        %v4042 = vld [vmem:[#allocation2 + $0xb0] sm:$0xff]
        %v4043 = vld [vmem:[#allocation2 + $0xb8] sm:$0xff]
        %v4044 = vld [vmem:[#allocation2 + $0xc0] sm:$0xff]
        %v4045 = vld [vmem:[#allocation2 + $0xc8] sm:$0xff]
        %v4046 = vld [vmem:[#allocation2 + $0xd0] sm:$0xff]
        %v4047 = vld [vmem:[#allocation2 + $0xd8] sm:$0xff]
        %v4048 = vld [vmem:[#allocation2 + $0xe0] sm:$0xff]
        %4074 = vrot.lane.b32.xlu0 %v4024, 124
        %v4075 = vpop.permute.xlu0 %4074
        %4076 = vrot.lane.b32.xlu0 %v4025, 124
        %v4077 = vpop.permute.xlu0 %4076
        %4078 = vrot.lane.b32.xlu0 %v4026, 124
        %v4079 = vpop.permute.xlu0 %4078
        %4080 = vrot.lane.b32.xlu0 %v4027, 124
        %v4081 = vpop.permute.xlu0 %4080
        %4082 = vrot.lane.b32.xlu0 %v4028, 124
        %v4083 = vpop.permute.xlu0 %4082
        %4084 = vrot.lane.b32.xlu0 %v4029, 124
        %v4085 = vpop.permute.xlu0 %4084
        %4086 = vrot.lane.b32.xlu0 %v4030, 124
        %v4087 = vpop.permute.xlu0 %4086
        %4088 = vrot.lane.b32.xlu0 %v4031, 124
        %v4089 = vpop.permute.xlu0 %4088
        %4090 = vrot.lane.b32.xlu0 %v4032, 124
        %v4091 = vpop.permute.xlu0 %4090
        %4092 = vrot.lane.b32.xlu0 %v4033, 124
        %v4093 = vpop.permute.xlu0 %4092
        %4094 = vrot.lane.b32.xlu0 %v4034, 124
        %v4095 = vpop.permute.xlu0 %4094
        %4096 = vrot.lane.b32.xlu0 %v4035, 124
        %v4097 = vpop.permute.xlu0 %4096
        %4098 = vrot.lane.b32.xlu0 %v4036, 124
        %v4099 = vpop.permute.xlu0 %4098
        %4100 = vrot.lane.b32.xlu0 %v4037, 124
        %v4101 = vpop.permute.xlu0 %4100
        %4102 = vrot.lane.b32.xlu0 %v4038, 124
        %v4103 = vpop.permute.xlu0 %4102
        %4104 = vrot.lane.b32.xlu0 %v4039, 124
        %v4105 = vpop.permute.xlu0 %4104
        %4106 = vrot.lane.b32.xlu0 %v4040, 124
        %v4107 = vpop.permute.xlu0 %4106
        %4108 = vrot.lane.b32.xlu0 %v4041, 124
        %v4109 = vpop.permute.xlu0 %4108
        %4110 = vrot.lane.b32.xlu0 %v4042, 124
        %v4111 = vpop.permute.xlu0 %4110
        %4112 = vrot.lane.b32.xlu0 %v4043, 124
        %v4113 = vpop.permute.xlu0 %4112
        %4114 = vrot.lane.b32.xlu0 %v4044, 124
        %v4115 = vpop.permute.xlu0 %4114
        %4116 = vrot.lane.b32.xlu0 %v4045, 124
        %v4117 = vpop.permute.xlu0 %4116
        %4118 = vrot.lane.b32.xlu0 %v4046, 124
        %v4119 = vpop.permute.xlu0 %4118
        %4120 = vrot.lane.b32.xlu0 %v4047, 124
        %v4121 = vpop.permute.xlu0 %4120
        %4122 = vrot.lane.b32.xlu0 %v4048, 124
        %v4123 = vpop.permute.xlu0 %4122
        %v4124 = vsel %vm1179, %v4075, %v4077
        %v4125 = vsel %vm1179, %v4077, %v4079
        %v4126 = vsel %vm1179, %v4079, %v4081
        %v4127 = vsel %vm1179, %v4081, %v4083
        %v4128 = vsel %vm1179, %v4083, %v4085
        %v4129 = vsel %vm1179, %v4085, %v4087
        %v4130 = vsel %vm1179, %v4087, %v4089
        %v4131 = vsel %vm1179, %v4089, %v4091
        %v4132 = vsel %vm1179, %v4091, %v4093
        %v4133 = vsel %vm1179, %v4093, %v4095
        %v4134 = vsel %vm1179, %v4095, %v4097
        %v4135 = vsel %vm1179, %v4097, %v4099
        %v4136 = vsel %vm1179, %v4099, %v4101
        %v4137 = vsel %vm1179, %v4101, %v4103
        %v4138 = vsel %vm1179, %v4103, %v4105
        %v4139 = vsel %vm1179, %v4105, %v4107
        %v4140 = vsel %vm1179, %v4107, %v4109
        %v4141 = vsel %vm1179, %v4109, %v4111
        %v4142 = vsel %vm1179, %v4111, %v4113
        %v4143 = vsel %vm1179, %v4113, %v4115
        %v4144 = vsel %vm1179, %v4115, %v4117
        %v4145 = vsel %vm1179, %v4117, %v4119
        %v4146 = vsel %vm1179, %v4119, %v4121
        %v4147 = vsel %vm1179, %v4121, %v4123
        %4172 = vst [vmem:[#allocation3 + $0x1200] sm:$0xff] %v4124
        %4173 = vst [vmem:[#allocation3 + $0x1208] sm:$0xff] %v4125
        %4174 = vst [vmem:[#allocation3 + $0x1210] sm:$0xff] %v4126
        %4175 = vst [vmem:[#allocation3 + $0x1218] sm:$0xff] %v4127
        %4176 = vst [vmem:[#allocation3 + $0x1220] sm:$0xff] %v4128
        %4177 = vst [vmem:[#allocation3 + $0x1228] sm:$0xff] %v4129
        %4178 = vst [vmem:[#allocation3 + $0x1230] sm:$0xff] %v4130
        %4179 = vst [vmem:[#allocation3 + $0x1238] sm:$0xff] %v4131
        %4180 = vst [vmem:[#allocation3 + $0x1240] sm:$0xff] %v4132
        %4181 = vst [vmem:[#allocation3 + $0x1248] sm:$0xff] %v4133
        %4182 = vst [vmem:[#allocation3 + $0x1250] sm:$0xff] %v4134
        %4183 = vst [vmem:[#allocation3 + $0x1258] sm:$0xff] %v4135
        %4184 = vst [vmem:[#allocation3 + $0x1260] sm:$0xff] %v4136
        %4185 = vst [vmem:[#allocation3 + $0x1268] sm:$0xff] %v4137
        %4186 = vst [vmem:[#allocation3 + $0x1270] sm:$0xff] %v4138
        %4187 = vst [vmem:[#allocation3 + $0x1278] sm:$0xff] %v4139
        %4188 = vst [vmem:[#allocation3 + $0x1280] sm:$0xff] %v4140
        %4189 = vst [vmem:[#allocation3 + $0x1288] sm:$0xff] %v4141
        %4190 = vst [vmem:[#allocation3 + $0x1290] sm:$0xff] %v4142
        %4191 = vst [vmem:[#allocation3 + $0x1298] sm:$0xff] %v4143
        %4192 = vst [vmem:[#allocation3 + $0x12a0] sm:$0xff] %v4144
        %4193 = vst [vmem:[#allocation3 + $0x12a8] sm:$0xff] %v4145
        %4194 = vst [vmem:[#allocation3 + $0x12b0] sm:$0xff] %v4146
        %4195 = vst [vmem:[#allocation3 + $0x12b8] sm:$0xff] %v4147
        %v4196 = vld [vmem:[#allocation9] sm:$0xff]
        %v4197 = vld [vmem:[#allocation9 + $0x8] sm:$0xff]
        %v4198 = vld [vmem:[#allocation9 + $0x10] sm:$0xff]
        %v4199 = vld [vmem:[#allocation9 + $0x18] sm:$0xff]
        %v4200 = vld [vmem:[#allocation3] sm:$0xff]
        %v4201 = vld [vmem:[#allocation3 + $0x8] sm:$0xff]
        %v4202 = vld [vmem:[#allocation3 + $0x10] sm:$0xff]
        %v4203 = vld [vmem:[#allocation3 + $0x18] sm:$0xff]
        %v4204 = vld [vmem:[#allocation3 + $0x20] sm:$0xff]
        %v4205 = vld [vmem:[#allocation3 + $0x28] sm:$0xff]
        %v4206 = vld [vmem:[#allocation3 + $0x30] sm:$0xff]
        %v4207 = vld [vmem:[#allocation3 + $0x38] sm:$0xff]
        %v4208 = vld [vmem:[#allocation3 + $0x40] sm:$0xff]
        %v4209 = vld [vmem:[#allocation3 + $0x48] sm:$0xff]
        %v4210 = vld [vmem:[#allocation3 + $0x50] sm:$0xff]
        %v4211 = vld [vmem:[#allocation3 + $0x58] sm:$0xff]
        %v4212 = vld [vmem:[#allocation3 + $0x60] sm:$0xff]
        %v4213 = vld [vmem:[#allocation3 + $0x68] sm:$0xff]
        %v4214 = vld [vmem:[#allocation3 + $0x70] sm:$0xff]
        %v4215 = vld [vmem:[#allocation3 + $0x78] sm:$0xff]
        %v4216 = vld [vmem:[#allocation3 + $0x80] sm:$0xff]
        %v4217 = vld [vmem:[#allocation3 + $0x88] sm:$0xff]
        %v4218 = vld [vmem:[#allocation3 + $0x90] sm:$0xff]
        %v4219 = vld [vmem:[#allocation3 + $0x98] sm:$0xff]
        %v4220 = vld [vmem:[#allocation3 + $0xa0] sm:$0xff]
        %v4221 = vld [vmem:[#allocation3 + $0xa8] sm:$0xff]
        %v4222 = vld [vmem:[#allocation3 + $0xb0] sm:$0xff]
        %v4223 = vld [vmem:[#allocation3 + $0xb8] sm:$0xff]
        %v4224 = vld [vmem:[#allocation3 + $0xc0] sm:$0xff]
        %v4225 = vld [vmem:[#allocation3 + $0xc8] sm:$0xff]
        %v4226 = vld [vmem:[#allocation3 + $0xd0] sm:$0xff]
        %v4227 = vld [vmem:[#allocation3 + $0xd8] sm:$0xff]
        %v4228 = vld [vmem:[#allocation3 + $0xe0] sm:$0xff]
        %v4229 = vld [vmem:[#allocation3 + $0xe8] sm:$0xff]
        %v4230 = vld [vmem:[#allocation3 + $0xf0] sm:$0xff]
        %v4231 = vld [vmem:[#allocation3 + $0xf8] sm:$0xff]
        %v4232 = vld [vmem:[#allocation3 + $0x100] sm:$0xff]
        %v4233 = vld [vmem:[#allocation3 + $0x108] sm:$0xff]
        %v4234 = vld [vmem:[#allocation3 + $0x110] sm:$0xff]
        %v4235 = vld [vmem:[#allocation3 + $0x118] sm:$0xff]
        %v4236 = vld [vmem:[#allocation3 + $0x120] sm:$0xff]
        %v4237 = vld [vmem:[#allocation3 + $0x128] sm:$0xff]
        %v4238 = vld [vmem:[#allocation3 + $0x130] sm:$0xff]
        %v4239 = vld [vmem:[#allocation3 + $0x138] sm:$0xff]
        %v4240 = vld [vmem:[#allocation3 + $0x140] sm:$0xff]
        %v4241 = vld [vmem:[#allocation3 + $0x148] sm:$0xff]
        %v4242 = vld [vmem:[#allocation3 + $0x150] sm:$0xff]
        %v4243 = vld [vmem:[#allocation3 + $0x158] sm:$0xff]
        %v4244 = vld [vmem:[#allocation3 + $0x160] sm:$0xff]
        %v4245 = vld [vmem:[#allocation3 + $0x168] sm:$0xff]
        %v4246 = vld [vmem:[#allocation3 + $0x170] sm:$0xff]
        %v4247 = vld [vmem:[#allocation3 + $0x178] sm:$0xff]
        %v4248 = vld [vmem:[#allocation3 + $0x180] sm:$0xff]
        %v4249 = vld [vmem:[#allocation3 + $0x188] sm:$0xff]
        %v4250 = vld [vmem:[#allocation3 + $0x190] sm:$0xff]
        %v4251 = vld [vmem:[#allocation3 + $0x198] sm:$0xff]
        %v4252 = vld [vmem:[#allocation3 + $0x1a0] sm:$0xff]
        %v4253 = vld [vmem:[#allocation3 + $0x1a8] sm:$0xff]
        %v4254 = vld [vmem:[#allocation3 + $0x1b0] sm:$0xff]
        %v4255 = vld [vmem:[#allocation3 + $0x1b8] sm:$0xff]
        %v4256 = vld [vmem:[#allocation3 + $0x1c0] sm:$0xff]
        %v4257 = vld [vmem:[#allocation3 + $0x1c8] sm:$0xff]
        %v4258 = vld [vmem:[#allocation3 + $0x1d0] sm:$0xff]
        %v4259 = vld [vmem:[#allocation3 + $0x1d8] sm:$0xff]
        %v4260 = vld [vmem:[#allocation3 + $0x1e0] sm:$0xff]
        %v4261 = vld [vmem:[#allocation3 + $0x1e8] sm:$0xff]
        %v4262 = vld [vmem:[#allocation3 + $0x1f0] sm:$0xff]
        %v4263 = vld [vmem:[#allocation3 + $0x1f8] sm:$0xff]
        %v4264 = vld [vmem:[#allocation3 + $0x200] sm:$0xff]
        %v4265 = vld [vmem:[#allocation3 + $0x208] sm:$0xff]
        %v4266 = vld [vmem:[#allocation3 + $0x210] sm:$0xff]
        %v4267 = vld [vmem:[#allocation3 + $0x218] sm:$0xff]
        %v4268 = vld [vmem:[#allocation3 + $0x220] sm:$0xff]
        %v4269 = vld [vmem:[#allocation3 + $0x228] sm:$0xff]
        %v4270 = vld [vmem:[#allocation3 + $0x230] sm:$0xff]
        %v4271 = vld [vmem:[#allocation3 + $0x238] sm:$0xff]
        %v4272 = vld [vmem:[#allocation3 + $0x240] sm:$0xff]
        %v4273 = vld [vmem:[#allocation3 + $0x248] sm:$0xff]
        %v4274 = vld [vmem:[#allocation3 + $0x250] sm:$0xff]
        %v4275 = vld [vmem:[#allocation3 + $0x258] sm:$0xff]
        %v4276 = vld [vmem:[#allocation3 + $0x260] sm:$0xff]
        %v4277 = vld [vmem:[#allocation3 + $0x268] sm:$0xff]
        %v4278 = vld [vmem:[#allocation3 + $0x270] sm:$0xff]
        %v4279 = vld [vmem:[#allocation3 + $0x278] sm:$0xff]
        %v4280 = vld [vmem:[#allocation3 + $0x280] sm:$0xff]
        %v4281 = vld [vmem:[#allocation3 + $0x288] sm:$0xff]
        %v4282 = vld [vmem:[#allocation3 + $0x290] sm:$0xff]
        %v4283 = vld [vmem:[#allocation3 + $0x298] sm:$0xff]
        %v4284 = vld [vmem:[#allocation3 + $0x2a0] sm:$0xff]
        %v4285 = vld [vmem:[#allocation3 + $0x2a8] sm:$0xff]
        %v4286 = vld [vmem:[#allocation3 + $0x2b0] sm:$0xff]
        %v4287 = vld [vmem:[#allocation3 + $0x2b8] sm:$0xff]
        %v4288 = vld [vmem:[#allocation3 + $0x2c0] sm:$0xff]
        %v4289 = vld [vmem:[#allocation3 + $0x2c8] sm:$0xff]
        %v4290 = vld [vmem:[#allocation3 + $0x2d0] sm:$0xff]
        %v4291 = vld [vmem:[#allocation3 + $0x2d8] sm:$0xff]
        %v4292 = vld [vmem:[#allocation3 + $0x2e0] sm:$0xff]
        %v4293 = vld [vmem:[#allocation3 + $0x2e8] sm:$0xff]
        %v4294 = vld [vmem:[#allocation3 + $0x2f0] sm:$0xff]
        %v4295 = vld [vmem:[#allocation3 + $0x2f8] sm:$0xff]
        %v4296 = vld [vmem:[#allocation3 + $0x300] sm:$0xff]
        %v4297 = vld [vmem:[#allocation3 + $0x308] sm:$0xff]
        %v4298 = vld [vmem:[#allocation3 + $0x310] sm:$0xff]
        %v4299 = vld [vmem:[#allocation3 + $0x318] sm:$0xff]
        %v4300 = vld [vmem:[#allocation3 + $0x320] sm:$0xff]
        %v4301 = vld [vmem:[#allocation3 + $0x328] sm:$0xff]
        %v4302 = vld [vmem:[#allocation3 + $0x330] sm:$0xff]
        %v4303 = vld [vmem:[#allocation3 + $0x338] sm:$0xff]
        %v4304 = vld [vmem:[#allocation3 + $0x340] sm:$0xff]
        %v4305 = vld [vmem:[#allocation3 + $0x348] sm:$0xff]
        %v4306 = vld [vmem:[#allocation3 + $0x350] sm:$0xff]
        %v4307 = vld [vmem:[#allocation3 + $0x358] sm:$0xff]
        %v4308 = vld [vmem:[#allocation3 + $0x360] sm:$0xff]
        %v4309 = vld [vmem:[#allocation3 + $0x368] sm:$0xff]
        %v4310 = vld [vmem:[#allocation3 + $0x370] sm:$0xff]
        %v4311 = vld [vmem:[#allocation3 + $0x378] sm:$0xff]
        %v4312 = vld [vmem:[#allocation3 + $0x380] sm:$0xff]
        %v4313 = vld [vmem:[#allocation3 + $0x388] sm:$0xff]
        %v4314 = vld [vmem:[#allocation3 + $0x390] sm:$0xff]
        %v4315 = vld [vmem:[#allocation3 + $0x398] sm:$0xff]
        %v4316 = vld [vmem:[#allocation3 + $0x3a0] sm:$0xff]
        %v4317 = vld [vmem:[#allocation3 + $0x3a8] sm:$0xff]
        %v4318 = vld [vmem:[#allocation3 + $0x3b0] sm:$0xff]
        %v4319 = vld [vmem:[#allocation3 + $0x3b8] sm:$0xff]
        %v4320 = vld [vmem:[#allocation3 + $0x3c0] sm:$0xff]
        %v4321 = vld [vmem:[#allocation3 + $0x3c8] sm:$0xff]
        %v4322 = vld [vmem:[#allocation3 + $0x3d0] sm:$0xff]
        %v4323 = vld [vmem:[#allocation3 + $0x3d8] sm:$0xff]
        %v4324 = vld [vmem:[#allocation3 + $0x3e0] sm:$0xff]
        %v4325 = vld [vmem:[#allocation3 + $0x3e8] sm:$0xff]
        %v4326 = vld [vmem:[#allocation3 + $0x3f0] sm:$0xff]
        %v4327 = vld [vmem:[#allocation3 + $0x3f8] sm:$0xff]
        %v4328 = vld [vmem:[#allocation3 + $0x400] sm:$0xff]
        %v4329 = vld [vmem:[#allocation3 + $0x408] sm:$0xff]
        %v4330 = vld [vmem:[#allocation3 + $0x410] sm:$0xff]
        %v4331 = vld [vmem:[#allocation3 + $0x418] sm:$0xff]
        %v4332 = vld [vmem:[#allocation3 + $0x420] sm:$0xff]
        %v4333 = vld [vmem:[#allocation3 + $0x428] sm:$0xff]
        %v4334 = vld [vmem:[#allocation3 + $0x430] sm:$0xff]
        %v4335 = vld [vmem:[#allocation3 + $0x438] sm:$0xff]
        %v4336 = vld [vmem:[#allocation3 + $0x440] sm:$0xff]
        %v4337 = vld [vmem:[#allocation3 + $0x448] sm:$0xff]
        %v4338 = vld [vmem:[#allocation3 + $0x450] sm:$0xff]
        %v4339 = vld [vmem:[#allocation3 + $0x458] sm:$0xff]
        %v4340 = vld [vmem:[#allocation3 + $0x460] sm:$0xff]
        %v4341 = vld [vmem:[#allocation3 + $0x468] sm:$0xff]
        %v4342 = vld [vmem:[#allocation3 + $0x470] sm:$0xff]
        %v4343 = vld [vmem:[#allocation3 + $0x478] sm:$0xff]
        %v4344 = vld [vmem:[#allocation3 + $0x480] sm:$0xff]
        %v4345 = vld [vmem:[#allocation3 + $0x488] sm:$0xff]
        %v4346 = vld [vmem:[#allocation3 + $0x490] sm:$0xff]
        %v4347 = vld [vmem:[#allocation3 + $0x498] sm:$0xff]
        %v4348 = vld [vmem:[#allocation3 + $0x4a0] sm:$0xff]
        %v4349 = vld [vmem:[#allocation3 + $0x4a8] sm:$0xff]
        %v4350 = vld [vmem:[#allocation3 + $0x4b0] sm:$0xff]
        %v4351 = vld [vmem:[#allocation3 + $0x4b8] sm:$0xff]
        %v4352 = vld [vmem:[#allocation3 + $0x4c0] sm:$0xff]
        %v4353 = vld [vmem:[#allocation3 + $0x4c8] sm:$0xff]
        %v4354 = vld [vmem:[#allocation3 + $0x4d0] sm:$0xff]
        %v4355 = vld [vmem:[#allocation3 + $0x4d8] sm:$0xff]
        %v4356 = vld [vmem:[#allocation3 + $0x4e0] sm:$0xff]
        %v4357 = vld [vmem:[#allocation3 + $0x4e8] sm:$0xff]
        %v4358 = vld [vmem:[#allocation3 + $0x4f0] sm:$0xff]
        %v4359 = vld [vmem:[#allocation3 + $0x4f8] sm:$0xff]
        %v4360 = vld [vmem:[#allocation3 + $0x500] sm:$0xff]
        %v4361 = vld [vmem:[#allocation3 + $0x508] sm:$0xff]
        %v4362 = vld [vmem:[#allocation3 + $0x510] sm:$0xff]
        %v4363 = vld [vmem:[#allocation3 + $0x518] sm:$0xff]
        %v4364 = vld [vmem:[#allocation3 + $0x520] sm:$0xff]
        %v4365 = vld [vmem:[#allocation3 + $0x528] sm:$0xff]
        %v4366 = vld [vmem:[#allocation3 + $0x530] sm:$0xff]
        %v4367 = vld [vmem:[#allocation3 + $0x538] sm:$0xff]
        %v4368 = vld [vmem:[#allocation3 + $0x540] sm:$0xff]
        %v4369 = vld [vmem:[#allocation3 + $0x548] sm:$0xff]
        %v4370 = vld [vmem:[#allocation3 + $0x550] sm:$0xff]
        %v4371 = vld [vmem:[#allocation3 + $0x558] sm:$0xff]
        %v4372 = vld [vmem:[#allocation3 + $0x560] sm:$0xff]
        %v4373 = vld [vmem:[#allocation3 + $0x568] sm:$0xff]
        %v4374 = vld [vmem:[#allocation3 + $0x570] sm:$0xff]
        %v4375 = vld [vmem:[#allocation3 + $0x578] sm:$0xff]
        %v4376 = vld [vmem:[#allocation3 + $0x580] sm:$0xff]
        %v4377 = vld [vmem:[#allocation3 + $0x588] sm:$0xff]
        %v4378 = vld [vmem:[#allocation3 + $0x590] sm:$0xff]
        %v4379 = vld [vmem:[#allocation3 + $0x598] sm:$0xff]
        %v4380 = vld [vmem:[#allocation3 + $0x5a0] sm:$0xff]
        %v4381 = vld [vmem:[#allocation3 + $0x5a8] sm:$0xff]
        %v4382 = vld [vmem:[#allocation3 + $0x5b0] sm:$0xff]
        %v4383 = vld [vmem:[#allocation3 + $0x5b8] sm:$0xff]
        %v4384 = vld [vmem:[#allocation3 + $0x5c0] sm:$0xff]
        %v4385 = vld [vmem:[#allocation3 + $0x5c8] sm:$0xff]
        %v4386 = vld [vmem:[#allocation3 + $0x5d0] sm:$0xff]
        %v4387 = vld [vmem:[#allocation3 + $0x5d8] sm:$0xff]
        %v4388 = vld [vmem:[#allocation3 + $0x5e0] sm:$0xff]
        %v4389 = vld [vmem:[#allocation3 + $0x5e8] sm:$0xff]
        %v4390 = vld [vmem:[#allocation3 + $0x5f0] sm:$0xff]
        %v4391 = vld [vmem:[#allocation3 + $0x5f8] sm:$0xff]
        %v4392 = vld [vmem:[#allocation3 + $0x600] sm:$0xff]
        %v4393 = vld [vmem:[#allocation3 + $0x608] sm:$0xff]
        %v4394 = vld [vmem:[#allocation3 + $0x610] sm:$0xff]
        %v4395 = vld [vmem:[#allocation3 + $0x618] sm:$0xff]
        %v4396 = vld [vmem:[#allocation3 + $0x620] sm:$0xff]
        %v4397 = vld [vmem:[#allocation3 + $0x628] sm:$0xff]
        %v4398 = vld [vmem:[#allocation3 + $0x630] sm:$0xff]
        %v4399 = vld [vmem:[#allocation3 + $0x638] sm:$0xff]
        %v4400 = vld [vmem:[#allocation3 + $0x640] sm:$0xff]
        %v4401 = vld [vmem:[#allocation3 + $0x648] sm:$0xff]
        %v4402 = vld [vmem:[#allocation3 + $0x650] sm:$0xff]
        %v4403 = vld [vmem:[#allocation3 + $0x658] sm:$0xff]
        %v4404 = vld [vmem:[#allocation3 + $0x660] sm:$0xff]
        %v4405 = vld [vmem:[#allocation3 + $0x668] sm:$0xff]
        %v4406 = vld [vmem:[#allocation3 + $0x670] sm:$0xff]
        %v4407 = vld [vmem:[#allocation3 + $0x678] sm:$0xff]
        %v4408 = vld [vmem:[#allocation3 + $0x680] sm:$0xff]
        %v4409 = vld [vmem:[#allocation3 + $0x688] sm:$0xff]
        %v4410 = vld [vmem:[#allocation3 + $0x690] sm:$0xff]
        %v4411 = vld [vmem:[#allocation3 + $0x698] sm:$0xff]
        %v4412 = vld [vmem:[#allocation3 + $0x6a0] sm:$0xff]
        %v4413 = vld [vmem:[#allocation3 + $0x6a8] sm:$0xff]
        %v4414 = vld [vmem:[#allocation3 + $0x6b0] sm:$0xff]
        %v4415 = vld [vmem:[#allocation3 + $0x6b8] sm:$0xff]
        %v4416 = vld [vmem:[#allocation3 + $0x6c0] sm:$0xff]
        %v4417 = vld [vmem:[#allocation3 + $0x6c8] sm:$0xff]
        %v4418 = vld [vmem:[#allocation3 + $0x6d0] sm:$0xff]
        %v4419 = vld [vmem:[#allocation3 + $0x6d8] sm:$0xff]
        %v4420 = vld [vmem:[#allocation3 + $0x6e0] sm:$0xff]
        %v4421 = vld [vmem:[#allocation3 + $0x6e8] sm:$0xff]
        %v4422 = vld [vmem:[#allocation3 + $0x6f0] sm:$0xff]
        %v4423 = vld [vmem:[#allocation3 + $0x6f8] sm:$0xff]
        %v4424 = vld [vmem:[#allocation3 + $0x700] sm:$0xff]
        %v4425 = vld [vmem:[#allocation3 + $0x708] sm:$0xff]
        %v4426 = vld [vmem:[#allocation3 + $0x710] sm:$0xff]
        %v4427 = vld [vmem:[#allocation3 + $0x718] sm:$0xff]
        %v4428 = vld [vmem:[#allocation3 + $0x720] sm:$0xff]
        %v4429 = vld [vmem:[#allocation3 + $0x728] sm:$0xff]
        %v4430 = vld [vmem:[#allocation3 + $0x730] sm:$0xff]
        %v4431 = vld [vmem:[#allocation3 + $0x738] sm:$0xff]
        %v4432 = vld [vmem:[#allocation3 + $0x740] sm:$0xff]
        %v4433 = vld [vmem:[#allocation3 + $0x748] sm:$0xff]
        %v4434 = vld [vmem:[#allocation3 + $0x750] sm:$0xff]
        %v4435 = vld [vmem:[#allocation3 + $0x758] sm:$0xff]
        %v4436 = vld [vmem:[#allocation3 + $0x760] sm:$0xff]
        %v4437 = vld [vmem:[#allocation3 + $0x768] sm:$0xff]
        %v4438 = vld [vmem:[#allocation3 + $0x770] sm:$0xff]
        %v4439 = vld [vmem:[#allocation3 + $0x778] sm:$0xff]
        %v4440 = vld [vmem:[#allocation3 + $0x780] sm:$0xff]
        %v4441 = vld [vmem:[#allocation3 + $0x788] sm:$0xff]
        %v4442 = vld [vmem:[#allocation3 + $0x790] sm:$0xff]
        %v4443 = vld [vmem:[#allocation3 + $0x798] sm:$0xff]
        %v4444 = vld [vmem:[#allocation3 + $0x7a0] sm:$0xff]
        %v4445 = vld [vmem:[#allocation3 + $0x7a8] sm:$0xff]
        %v4446 = vld [vmem:[#allocation3 + $0x7b0] sm:$0xff]
        %v4447 = vld [vmem:[#allocation3 + $0x7b8] sm:$0xff]
        %v4448 = vld [vmem:[#allocation3 + $0x7c0] sm:$0xff]
        %v4449 = vld [vmem:[#allocation3 + $0x7c8] sm:$0xff]
        %v4450 = vld [vmem:[#allocation3 + $0x7d0] sm:$0xff]
        %v4451 = vld [vmem:[#allocation3 + $0x7d8] sm:$0xff]
        %v4452 = vld [vmem:[#allocation3 + $0x7e0] sm:$0xff]
        %v4453 = vld [vmem:[#allocation3 + $0x7e8] sm:$0xff]
        %v4454 = vld [vmem:[#allocation3 + $0x7f0] sm:$0xff]
        %v4455 = vld [vmem:[#allocation3 + $0x7f8] sm:$0xff]
        %v4456 = vld [vmem:[#allocation3 + $0x800] sm:$0xff]
        %v4457 = vld [vmem:[#allocation3 + $0x808] sm:$0xff]
        %v4458 = vld [vmem:[#allocation3 + $0x810] sm:$0xff]
        %v4459 = vld [vmem:[#allocation3 + $0x818] sm:$0xff]
        %v4460 = vld [vmem:[#allocation3 + $0x820] sm:$0xff]
        %v4461 = vld [vmem:[#allocation3 + $0x828] sm:$0xff]
        %v4462 = vld [vmem:[#allocation3 + $0x830] sm:$0xff]
        %v4463 = vld [vmem:[#allocation3 + $0x838] sm:$0xff]
        %v4464 = vld [vmem:[#allocation3 + $0x840] sm:$0xff]
        %v4465 = vld [vmem:[#allocation3 + $0x848] sm:$0xff]
        %v4466 = vld [vmem:[#allocation3 + $0x850] sm:$0xff]
        %v4467 = vld [vmem:[#allocation3 + $0x858] sm:$0xff]
        %v4468 = vld [vmem:[#allocation3 + $0x860] sm:$0xff]
        %v4469 = vld [vmem:[#allocation3 + $0x868] sm:$0xff]
        %v4470 = vld [vmem:[#allocation3 + $0x870] sm:$0xff]
        %v4471 = vld [vmem:[#allocation3 + $0x878] sm:$0xff]
        %v4472 = vld [vmem:[#allocation3 + $0x880] sm:$0xff]
        %v4473 = vld [vmem:[#allocation3 + $0x888] sm:$0xff]
        %v4474 = vld [vmem:[#allocation3 + $0x890] sm:$0xff]
        %v4475 = vld [vmem:[#allocation3 + $0x898] sm:$0xff]
        %v4476 = vld [vmem:[#allocation3 + $0x8a0] sm:$0xff]
        %v4477 = vld [vmem:[#allocation3 + $0x8a8] sm:$0xff]
        %v4478 = vld [vmem:[#allocation3 + $0x8b0] sm:$0xff]
        %v4479 = vld [vmem:[#allocation3 + $0x8b8] sm:$0xff]
        %v4480 = vld [vmem:[#allocation3 + $0x8c0] sm:$0xff]
        %v4481 = vld [vmem:[#allocation3 + $0x8c8] sm:$0xff]
        %v4482 = vld [vmem:[#allocation3 + $0x8d0] sm:$0xff]
        %v4483 = vld [vmem:[#allocation3 + $0x8d8] sm:$0xff]
        %v4484 = vld [vmem:[#allocation3 + $0x8e0] sm:$0xff]
        %v4485 = vld [vmem:[#allocation3 + $0x8e8] sm:$0xff]
        %v4486 = vld [vmem:[#allocation3 + $0x8f0] sm:$0xff]
        %v4487 = vld [vmem:[#allocation3 + $0x8f8] sm:$0xff]
        %v4488 = vld [vmem:[#allocation3 + $0x900] sm:$0xff]
        %v4489 = vld [vmem:[#allocation3 + $0x908] sm:$0xff]
        %v4490 = vld [vmem:[#allocation3 + $0x910] sm:$0xff]
        %v4491 = vld [vmem:[#allocation3 + $0x918] sm:$0xff]
        %v4492 = vld [vmem:[#allocation3 + $0x920] sm:$0xff]
        %v4493 = vld [vmem:[#allocation3 + $0x928] sm:$0xff]
        %v4494 = vld [vmem:[#allocation3 + $0x930] sm:$0xff]
        %v4495 = vld [vmem:[#allocation3 + $0x938] sm:$0xff]
        %v4496 = vld [vmem:[#allocation3 + $0x940] sm:$0xff]
        %v4497 = vld [vmem:[#allocation3 + $0x948] sm:$0xff]
        %v4498 = vld [vmem:[#allocation3 + $0x950] sm:$0xff]
        %v4499 = vld [vmem:[#allocation3 + $0x958] sm:$0xff]
        %v4500 = vld [vmem:[#allocation3 + $0x960] sm:$0xff]
        %v4501 = vld [vmem:[#allocation3 + $0x968] sm:$0xff]
        %v4502 = vld [vmem:[#allocation3 + $0x970] sm:$0xff]
        %v4503 = vld [vmem:[#allocation3 + $0x978] sm:$0xff]
        %v4504 = vld [vmem:[#allocation3 + $0x980] sm:$0xff]
        %v4505 = vld [vmem:[#allocation3 + $0x988] sm:$0xff]
        %v4506 = vld [vmem:[#allocation3 + $0x990] sm:$0xff]
        %v4507 = vld [vmem:[#allocation3 + $0x998] sm:$0xff]
        %v4508 = vld [vmem:[#allocation3 + $0x9a0] sm:$0xff]
        %v4509 = vld [vmem:[#allocation3 + $0x9a8] sm:$0xff]
        %v4510 = vld [vmem:[#allocation3 + $0x9b0] sm:$0xff]
        %v4511 = vld [vmem:[#allocation3 + $0x9b8] sm:$0xff]
        %v4512 = vld [vmem:[#allocation3 + $0x9c0] sm:$0xff]
        %v4513 = vld [vmem:[#allocation3 + $0x9c8] sm:$0xff]
        %v4514 = vld [vmem:[#allocation3 + $0x9d0] sm:$0xff]
        %v4515 = vld [vmem:[#allocation3 + $0x9d8] sm:$0xff]
        %v4516 = vld [vmem:[#allocation3 + $0x9e0] sm:$0xff]
        %v4517 = vld [vmem:[#allocation3 + $0x9e8] sm:$0xff]
        %v4518 = vld [vmem:[#allocation3 + $0x9f0] sm:$0xff]
        %v4519 = vld [vmem:[#allocation3 + $0x9f8] sm:$0xff]
        %v4520 = vld [vmem:[#allocation3 + $0xa00] sm:$0xff]
        %v4521 = vld [vmem:[#allocation3 + $0xa08] sm:$0xff]
        %v4522 = vld [vmem:[#allocation3 + $0xa10] sm:$0xff]
        %v4523 = vld [vmem:[#allocation3 + $0xa18] sm:$0xff]
        %v4524 = vld [vmem:[#allocation3 + $0xa20] sm:$0xff]
        %v4525 = vld [vmem:[#allocation3 + $0xa28] sm:$0xff]
        %v4526 = vld [vmem:[#allocation3 + $0xa30] sm:$0xff]
        %v4527 = vld [vmem:[#allocation3 + $0xa38] sm:$0xff]
        %v4528 = vld [vmem:[#allocation3 + $0xa40] sm:$0xff]
        %v4529 = vld [vmem:[#allocation3 + $0xa48] sm:$0xff]
        %v4530 = vld [vmem:[#allocation3 + $0xa50] sm:$0xff]
        %v4531 = vld [vmem:[#allocation3 + $0xa58] sm:$0xff]
        %v4532 = vld [vmem:[#allocation3 + $0xa60] sm:$0xff]
        %v4533 = vld [vmem:[#allocation3 + $0xa68] sm:$0xff]
        %v4534 = vld [vmem:[#allocation3 + $0xa70] sm:$0xff]
        %v4535 = vld [vmem:[#allocation3 + $0xa78] sm:$0xff]
        %v4536 = vld [vmem:[#allocation3 + $0xa80] sm:$0xff]
        %v4537 = vld [vmem:[#allocation3 + $0xa88] sm:$0xff]
        %v4538 = vld [vmem:[#allocation3 + $0xa90] sm:$0xff]
        %v4539 = vld [vmem:[#allocation3 + $0xa98] sm:$0xff]
        %v4540 = vld [vmem:[#allocation3 + $0xaa0] sm:$0xff]
        %v4541 = vld [vmem:[#allocation3 + $0xaa8] sm:$0xff]
        %v4542 = vld [vmem:[#allocation3 + $0xab0] sm:$0xff]
        %v4543 = vld [vmem:[#allocation3 + $0xab8] sm:$0xff]
        %v4544 = vld [vmem:[#allocation3 + $0xac0] sm:$0xff]
        %v4545 = vld [vmem:[#allocation3 + $0xac8] sm:$0xff]
        %v4546 = vld [vmem:[#allocation3 + $0xad0] sm:$0xff]
        %v4547 = vld [vmem:[#allocation3 + $0xad8] sm:$0xff]
        %v4548 = vld [vmem:[#allocation3 + $0xae0] sm:$0xff]
        %v4549 = vld [vmem:[#allocation3 + $0xae8] sm:$0xff]
        %v4550 = vld [vmem:[#allocation3 + $0xaf0] sm:$0xff]
        %v4551 = vld [vmem:[#allocation3 + $0xaf8] sm:$0xff]
        %v4552 = vld [vmem:[#allocation3 + $0xb00] sm:$0xff]
        %v4553 = vld [vmem:[#allocation3 + $0xb08] sm:$0xff]
        %v4554 = vld [vmem:[#allocation3 + $0xb10] sm:$0xff]
        %v4555 = vld [vmem:[#allocation3 + $0xb18] sm:$0xff]
        %v4556 = vld [vmem:[#allocation3 + $0xb20] sm:$0xff]
        %v4557 = vld [vmem:[#allocation3 + $0xb28] sm:$0xff]
        %v4558 = vld [vmem:[#allocation3 + $0xb30] sm:$0xff]
        %v4559 = vld [vmem:[#allocation3 + $0xb38] sm:$0xff]
        %v4560 = vld [vmem:[#allocation3 + $0xb40] sm:$0xff]
        %v4561 = vld [vmem:[#allocation3 + $0xb48] sm:$0xff]
        %v4562 = vld [vmem:[#allocation3 + $0xb50] sm:$0xff]
        %v4563 = vld [vmem:[#allocation3 + $0xb58] sm:$0xff]
        %v4564 = vld [vmem:[#allocation3 + $0xb60] sm:$0xff]
        %v4565 = vld [vmem:[#allocation3 + $0xb68] sm:$0xff]
        %v4566 = vld [vmem:[#allocation3 + $0xb70] sm:$0xff]
        %v4567 = vld [vmem:[#allocation3 + $0xb78] sm:$0xff]
        %v4568 = vld [vmem:[#allocation3 + $0xb80] sm:$0xff]
        %v4569 = vld [vmem:[#allocation3 + $0xb88] sm:$0xff]
        %v4570 = vld [vmem:[#allocation3 + $0xb90] sm:$0xff]
        %v4571 = vld [vmem:[#allocation3 + $0xb98] sm:$0xff]
        %v4572 = vld [vmem:[#allocation3 + $0xba0] sm:$0xff]
        %v4573 = vld [vmem:[#allocation3 + $0xba8] sm:$0xff]
        %v4574 = vld [vmem:[#allocation3 + $0xbb0] sm:$0xff]
        %v4575 = vld [vmem:[#allocation3 + $0xbb8] sm:$0xff]
        %v4576 = vld [vmem:[#allocation3 + $0xbc0] sm:$0xff]
        %v4577 = vld [vmem:[#allocation3 + $0xbc8] sm:$0xff]
        %v4578 = vld [vmem:[#allocation3 + $0xbd0] sm:$0xff]
        %v4579 = vld [vmem:[#allocation3 + $0xbd8] sm:$0xff]
        %v4580 = vld [vmem:[#allocation3 + $0xbe0] sm:$0xff]
        %v4581 = vld [vmem:[#allocation3 + $0xbe8] sm:$0xff]
        %v4582 = vld [vmem:[#allocation3 + $0xbf0] sm:$0xff]
        %v4583 = vld [vmem:[#allocation3 + $0xbf8] sm:$0xff]
        %v4584 = vld [vmem:[#allocation3 + $0xc00] sm:$0xff]
        %v4585 = vld [vmem:[#allocation3 + $0xc08] sm:$0xff]
        %v4586 = vld [vmem:[#allocation3 + $0xc10] sm:$0xff]
        %v4587 = vld [vmem:[#allocation3 + $0xc18] sm:$0xff]
        %v4588 = vld [vmem:[#allocation3 + $0xc20] sm:$0xff]
        %v4589 = vld [vmem:[#allocation3 + $0xc28] sm:$0xff]
        %v4590 = vld [vmem:[#allocation3 + $0xc30] sm:$0xff]
        %v4591 = vld [vmem:[#allocation3 + $0xc38] sm:$0xff]
        %v4592 = vld [vmem:[#allocation3 + $0xc40] sm:$0xff]
        %v4593 = vld [vmem:[#allocation3 + $0xc48] sm:$0xff]
        %v4594 = vld [vmem:[#allocation3 + $0xc50] sm:$0xff]
        %v4595 = vld [vmem:[#allocation3 + $0xc58] sm:$0xff]
        %v4596 = vld [vmem:[#allocation3 + $0xc60] sm:$0xff]
        %v4597 = vld [vmem:[#allocation3 + $0xc68] sm:$0xff]
        %v4598 = vld [vmem:[#allocation3 + $0xc70] sm:$0xff]
        %v4599 = vld [vmem:[#allocation3 + $0xc78] sm:$0xff]
        %v4600 = vld [vmem:[#allocation3 + $0xc80] sm:$0xff]
        %v4601 = vld [vmem:[#allocation3 + $0xc88] sm:$0xff]
        %v4602 = vld [vmem:[#allocation3 + $0xc90] sm:$0xff]
        %v4603 = vld [vmem:[#allocation3 + $0xc98] sm:$0xff]
        %v4604 = vld [vmem:[#allocation3 + $0xca0] sm:$0xff]
        %v4605 = vld [vmem:[#allocation3 + $0xca8] sm:$0xff]
        %v4606 = vld [vmem:[#allocation3 + $0xcb0] sm:$0xff]
        %v4607 = vld [vmem:[#allocation3 + $0xcb8] sm:$0xff]
        %v4608 = vld [vmem:[#allocation3 + $0xcc0] sm:$0xff]
        %v4609 = vld [vmem:[#allocation3 + $0xcc8] sm:$0xff]
        %v4610 = vld [vmem:[#allocation3 + $0xcd0] sm:$0xff]
        %v4611 = vld [vmem:[#allocation3 + $0xcd8] sm:$0xff]
        %v4612 = vld [vmem:[#allocation3 + $0xce0] sm:$0xff]
        %v4613 = vld [vmem:[#allocation3 + $0xce8] sm:$0xff]
        %v4614 = vld [vmem:[#allocation3 + $0xcf0] sm:$0xff]
        %v4615 = vld [vmem:[#allocation3 + $0xcf8] sm:$0xff]
        %v4616 = vld [vmem:[#allocation3 + $0xd00] sm:$0xff]
        %v4617 = vld [vmem:[#allocation3 + $0xd08] sm:$0xff]
        %v4618 = vld [vmem:[#allocation3 + $0xd10] sm:$0xff]
        %v4619 = vld [vmem:[#allocation3 + $0xd18] sm:$0xff]
        %v4620 = vld [vmem:[#allocation3 + $0xd20] sm:$0xff]
        %v4621 = vld [vmem:[#allocation3 + $0xd28] sm:$0xff]
        %v4622 = vld [vmem:[#allocation3 + $0xd30] sm:$0xff]
        %v4623 = vld [vmem:[#allocation3 + $0xd38] sm:$0xff]
        %v4624 = vld [vmem:[#allocation3 + $0xd40] sm:$0xff]
        %v4625 = vld [vmem:[#allocation3 + $0xd48] sm:$0xff]
        %v4626 = vld [vmem:[#allocation3 + $0xd50] sm:$0xff]
        %v4627 = vld [vmem:[#allocation3 + $0xd58] sm:$0xff]
        %v4628 = vld [vmem:[#allocation3 + $0xd60] sm:$0xff]
        %v4629 = vld [vmem:[#allocation3 + $0xd68] sm:$0xff]
        %v4630 = vld [vmem:[#allocation3 + $0xd70] sm:$0xff]
        %v4631 = vld [vmem:[#allocation3 + $0xd78] sm:$0xff]
        %v4632 = vld [vmem:[#allocation3 + $0xd80] sm:$0xff]
        %v4633 = vld [vmem:[#allocation3 + $0xd88] sm:$0xff]
        %v4634 = vld [vmem:[#allocation3 + $0xd90] sm:$0xff]
        %v4635 = vld [vmem:[#allocation3 + $0xd98] sm:$0xff]
        %v4636 = vld [vmem:[#allocation3 + $0xda0] sm:$0xff]
        %v4637 = vld [vmem:[#allocation3 + $0xda8] sm:$0xff]
        %v4638 = vld [vmem:[#allocation3 + $0xdb0] sm:$0xff]
        %v4639 = vld [vmem:[#allocation3 + $0xdb8] sm:$0xff]
        %v4640 = vld [vmem:[#allocation3 + $0xdc0] sm:$0xff]
        %v4641 = vld [vmem:[#allocation3 + $0xdc8] sm:$0xff]
        %v4642 = vld [vmem:[#allocation3 + $0xdd0] sm:$0xff]
        %v4643 = vld [vmem:[#allocation3 + $0xdd8] sm:$0xff]
        %v4644 = vld [vmem:[#allocation3 + $0xde0] sm:$0xff]
        %v4645 = vld [vmem:[#allocation3 + $0xde8] sm:$0xff]
        %v4646 = vld [vmem:[#allocation3 + $0xdf0] sm:$0xff]
        %v4647 = vld [vmem:[#allocation3 + $0xdf8] sm:$0xff]
        %v4648 = vld [vmem:[#allocation3 + $0xe00] sm:$0xff]
        %v4649 = vld [vmem:[#allocation3 + $0xe08] sm:$0xff]
        %v4650 = vld [vmem:[#allocation3 + $0xe10] sm:$0xff]
        %v4651 = vld [vmem:[#allocation3 + $0xe18] sm:$0xff]
        %v4652 = vld [vmem:[#allocation3 + $0xe20] sm:$0xff]
        %v4653 = vld [vmem:[#allocation3 + $0xe28] sm:$0xff]
        %v4654 = vld [vmem:[#allocation3 + $0xe30] sm:$0xff]
        %v4655 = vld [vmem:[#allocation3 + $0xe38] sm:$0xff]
        %v4656 = vld [vmem:[#allocation3 + $0xe40] sm:$0xff]
        %v4657 = vld [vmem:[#allocation3 + $0xe48] sm:$0xff]
        %v4658 = vld [vmem:[#allocation3 + $0xe50] sm:$0xff]
        %v4659 = vld [vmem:[#allocation3 + $0xe58] sm:$0xff]
        %v4660 = vld [vmem:[#allocation3 + $0xe60] sm:$0xff]
        %v4661 = vld [vmem:[#allocation3 + $0xe68] sm:$0xff]
        %v4662 = vld [vmem:[#allocation3 + $0xe70] sm:$0xff]
        %v4663 = vld [vmem:[#allocation3 + $0xe78] sm:$0xff]
        %v4664 = vld [vmem:[#allocation3 + $0xe80] sm:$0xff]
        %v4665 = vld [vmem:[#allocation3 + $0xe88] sm:$0xff]
        %v4666 = vld [vmem:[#allocation3 + $0xe90] sm:$0xff]
        %v4667 = vld [vmem:[#allocation3 + $0xe98] sm:$0xff]
        %v4668 = vld [vmem:[#allocation3 + $0xea0] sm:$0xff]
        %v4669 = vld [vmem:[#allocation3 + $0xea8] sm:$0xff]
        %v4670 = vld [vmem:[#allocation3 + $0xeb0] sm:$0xff]
        %v4671 = vld [vmem:[#allocation3 + $0xeb8] sm:$0xff]
        %v4672 = vld [vmem:[#allocation3 + $0xec0] sm:$0xff]
        %v4673 = vld [vmem:[#allocation3 + $0xec8] sm:$0xff]
        %v4674 = vld [vmem:[#allocation3 + $0xed0] sm:$0xff]
        %v4675 = vld [vmem:[#allocation3 + $0xed8] sm:$0xff]
        %v4676 = vld [vmem:[#allocation3 + $0xee0] sm:$0xff]
        %v4677 = vld [vmem:[#allocation3 + $0xee8] sm:$0xff]
        %v4678 = vld [vmem:[#allocation3 + $0xef0] sm:$0xff]
        %v4679 = vld [vmem:[#allocation3 + $0xef8] sm:$0xff]
        %v4680 = vld [vmem:[#allocation3 + $0xf00] sm:$0xff]
        %v4681 = vld [vmem:[#allocation3 + $0xf08] sm:$0xff]
        %v4682 = vld [vmem:[#allocation3 + $0xf10] sm:$0xff]
        %v4683 = vld [vmem:[#allocation3 + $0xf18] sm:$0xff]
        %v4684 = vld [vmem:[#allocation3 + $0xf20] sm:$0xff]
        %v4685 = vld [vmem:[#allocation3 + $0xf28] sm:$0xff]
        %v4686 = vld [vmem:[#allocation3 + $0xf30] sm:$0xff]
        %v4687 = vld [vmem:[#allocation3 + $0xf38] sm:$0xff]
        %v4688 = vld [vmem:[#allocation3 + $0xf40] sm:$0xff]
        %v4689 = vld [vmem:[#allocation3 + $0xf48] sm:$0xff]
        %v4690 = vld [vmem:[#allocation3 + $0xf50] sm:$0xff]
        %v4691 = vld [vmem:[#allocation3 + $0xf58] sm:$0xff]
        %v4692 = vld [vmem:[#allocation3 + $0xf60] sm:$0xff]
        %v4693 = vld [vmem:[#allocation3 + $0xf68] sm:$0xff]
        %v4694 = vld [vmem:[#allocation3 + $0xf70] sm:$0xff]
        %v4695 = vld [vmem:[#allocation3 + $0xf78] sm:$0xff]
        %v4696 = vld [vmem:[#allocation3 + $0xf80] sm:$0xff]
        %v4697 = vld [vmem:[#allocation3 + $0xf88] sm:$0xff]
        %v4698 = vld [vmem:[#allocation3 + $0xf90] sm:$0xff]
        %v4699 = vld [vmem:[#allocation3 + $0xf98] sm:$0xff]
        %v4700 = vld [vmem:[#allocation3 + $0xfa0] sm:$0xff]
        %v4701 = vld [vmem:[#allocation3 + $0xfa8] sm:$0xff]
        %v4702 = vld [vmem:[#allocation3 + $0xfb0] sm:$0xff]
        %v4703 = vld [vmem:[#allocation3 + $0xfb8] sm:$0xff]
        %v4704 = vld [vmem:[#allocation3 + $0xfc0] sm:$0xff]
        %v4705 = vld [vmem:[#allocation3 + $0xfc8] sm:$0xff]
        %v4706 = vld [vmem:[#allocation3 + $0xfd0] sm:$0xff]
        %v4707 = vld [vmem:[#allocation3 + $0xfd8] sm:$0xff]
        %v4708 = vld [vmem:[#allocation3 + $0xfe0] sm:$0xff]
        %v4709 = vld [vmem:[#allocation3 + $0xfe8] sm:$0xff]
        %v4710 = vld [vmem:[#allocation3 + $0xff0] sm:$0xff]
        %v4711 = vld [vmem:[#allocation3 + $0xff8] sm:$0xff]
        %v4712 = vld [vmem:[#allocation3 + $0x1000] sm:$0xff]
        %v4713 = vld [vmem:[#allocation3 + $0x1008] sm:$0xff]
        %v4714 = vld [vmem:[#allocation3 + $0x1010] sm:$0xff]
        %v4715 = vld [vmem:[#allocation3 + $0x1018] sm:$0xff]
        %v4716 = vld [vmem:[#allocation3 + $0x1020] sm:$0xff]
        %v4717 = vld [vmem:[#allocation3 + $0x1028] sm:$0xff]
        %v4718 = vld [vmem:[#allocation3 + $0x1030] sm:$0xff]
        %v4719 = vld [vmem:[#allocation3 + $0x1038] sm:$0xff]
        %v4720 = vld [vmem:[#allocation3 + $0x1040] sm:$0xff]
        %v4721 = vld [vmem:[#allocation3 + $0x1048] sm:$0xff]
        %v4722 = vld [vmem:[#allocation3 + $0x1050] sm:$0xff]
        %v4723 = vld [vmem:[#allocation3 + $0x1058] sm:$0xff]
        %v4724 = vld [vmem:[#allocation3 + $0x1060] sm:$0xff]
        %v4725 = vld [vmem:[#allocation3 + $0x1068] sm:$0xff]
        %v4726 = vld [vmem:[#allocation3 + $0x1070] sm:$0xff]
        %v4727 = vld [vmem:[#allocation3 + $0x1078] sm:$0xff]
        %v4728 = vld [vmem:[#allocation3 + $0x1080] sm:$0xff]
        %v4729 = vld [vmem:[#allocation3 + $0x1088] sm:$0xff]
        %v4730 = vld [vmem:[#allocation3 + $0x1090] sm:$0xff]
        %v4731 = vld [vmem:[#allocation3 + $0x1098] sm:$0xff]
        %v4732 = vld [vmem:[#allocation3 + $0x10a0] sm:$0xff]
        %v4733 = vld [vmem:[#allocation3 + $0x10a8] sm:$0xff]
        %v4734 = vld [vmem:[#allocation3 + $0x10b0] sm:$0xff]
        %v4735 = vld [vmem:[#allocation3 + $0x10b8] sm:$0xff]
        %v4736 = vld [vmem:[#allocation3 + $0x10c0] sm:$0xff]
        %v4737 = vld [vmem:[#allocation3 + $0x10c8] sm:$0xff]
        %v4738 = vld [vmem:[#allocation3 + $0x10d0] sm:$0xff]
        %v4739 = vld [vmem:[#allocation3 + $0x10d8] sm:$0xff]
        %v4740 = vld [vmem:[#allocation3 + $0x10e0] sm:$0xff]
        %v4741 = vld [vmem:[#allocation3 + $0x10e8] sm:$0xff]
        %v4742 = vld [vmem:[#allocation3 + $0x10f0] sm:$0xff]
        %v4743 = vld [vmem:[#allocation3 + $0x10f8] sm:$0xff]
        %v4744 = vld [vmem:[#allocation3 + $0x1100] sm:$0xff]
        %v4745 = vld [vmem:[#allocation3 + $0x1108] sm:$0xff]
        %v4746 = vld [vmem:[#allocation3 + $0x1110] sm:$0xff]
        %v4747 = vld [vmem:[#allocation3 + $0x1118] sm:$0xff]
        %v4748 = vld [vmem:[#allocation3 + $0x1120] sm:$0xff]
        %v4749 = vld [vmem:[#allocation3 + $0x1128] sm:$0xff]
        %v4750 = vld [vmem:[#allocation3 + $0x1130] sm:$0xff]
        %v4751 = vld [vmem:[#allocation3 + $0x1138] sm:$0xff]
        %v4752 = vld [vmem:[#allocation3 + $0x1140] sm:$0xff]
        %v4753 = vld [vmem:[#allocation3 + $0x1148] sm:$0xff]
        %v4754 = vld [vmem:[#allocation3 + $0x1150] sm:$0xff]
        %v4755 = vld [vmem:[#allocation3 + $0x1158] sm:$0xff]
        %v4756 = vld [vmem:[#allocation3 + $0x1160] sm:$0xff]
        %v4757 = vld [vmem:[#allocation3 + $0x1168] sm:$0xff]
        %v4758 = vld [vmem:[#allocation3 + $0x1170] sm:$0xff]
        %v4759 = vld [vmem:[#allocation3 + $0x1178] sm:$0xff]
        %v4760 = vld [vmem:[#allocation3 + $0x1180] sm:$0xff]
        %v4761 = vld [vmem:[#allocation3 + $0x1188] sm:$0xff]
        %v4762 = vld [vmem:[#allocation3 + $0x1190] sm:$0xff]
        %v4763 = vld [vmem:[#allocation3 + $0x1198] sm:$0xff]
        %v4764 = vld [vmem:[#allocation3 + $0x11a0] sm:$0xff]
        %v4765 = vld [vmem:[#allocation3 + $0x11a8] sm:$0xff]
        %v4766 = vld [vmem:[#allocation3 + $0x11b0] sm:$0xff]
        %v4767 = vld [vmem:[#allocation3 + $0x11b8] sm:$0xff]
        %v4768 = vld [vmem:[#allocation3 + $0x11c0] sm:$0xff]
        %v4769 = vld [vmem:[#allocation3 + $0x11c8] sm:$0xff]
        %v4770 = vld [vmem:[#allocation3 + $0x11d0] sm:$0xff]
        %v4771 = vld [vmem:[#allocation3 + $0x11d8] sm:$0xff]
        %v4772 = vld [vmem:[#allocation3 + $0x11e0] sm:$0xff]
        %v4773 = vld [vmem:[#allocation3 + $0x11e8] sm:$0xff]
        %v4774 = vld [vmem:[#allocation3 + $0x11f0] sm:$0xff]
        %v4775 = vld [vmem:[#allocation3 + $0x11f8] sm:$0xff]
        %v4776 = vld [vmem:[#allocation3 + $0x1200] sm:$0xff]
        %v4777 = vld [vmem:[#allocation3 + $0x1208] sm:$0xff]
        %v4778 = vld [vmem:[#allocation3 + $0x1210] sm:$0xff]
        %v4779 = vld [vmem:[#allocation3 + $0x1218] sm:$0xff]
        %v4780 = vld [vmem:[#allocation3 + $0x1220] sm:$0xff]
        %v4781 = vld [vmem:[#allocation3 + $0x1228] sm:$0xff]
        %v4782 = vld [vmem:[#allocation3 + $0x1230] sm:$0xff]
        %v4783 = vld [vmem:[#allocation3 + $0x1238] sm:$0xff]
        %v4784 = vld [vmem:[#allocation3 + $0x1240] sm:$0xff]
        %v4785 = vld [vmem:[#allocation3 + $0x1248] sm:$0xff]
        %v4786 = vld [vmem:[#allocation3 + $0x1250] sm:$0xff]
        %v4787 = vld [vmem:[#allocation3 + $0x1258] sm:$0xff]
        %v4788 = vld [vmem:[#allocation3 + $0x1260] sm:$0xff]
        %v4789 = vld [vmem:[#allocation3 + $0x1268] sm:$0xff]
        %v4790 = vld [vmem:[#allocation3 + $0x1270] sm:$0xff]
        %v4791 = vld [vmem:[#allocation3 + $0x1278] sm:$0xff]
        %v4792 = vld [vmem:[#allocation3 + $0x1280] sm:$0xff]
        %v4793 = vld [vmem:[#allocation3 + $0x1288] sm:$0xff]
        %v4794 = vld [vmem:[#allocation3 + $0x1290] sm:$0xff]
        %v4795 = vld [vmem:[#allocation3 + $0x1298] sm:$0xff]
        %v4796 = vld [vmem:[#allocation3 + $0x12a0] sm:$0xff]
        %v4797 = vld [vmem:[#allocation3 + $0x12a8] sm:$0xff]
        %v4798 = vld [vmem:[#allocation3 + $0x12b0] sm:$0xff]
        %v4799 = vld [vmem:[#allocation3 + $0x12b8] sm:$0xff]
        %v4800 = vld [vmem:[%s3] sm:$0xff]
        %v4801 = vld [vmem:[%s3 + $0x8] sm:$0xff]
        %4803 = vset.pattern.permute.xlu0 0
        %4804 = vperm.xlu0 %4803, %v4800
        %v4805 = vpop.permute.xlu0 %4804
        %4808 = vset.pattern.permute.xlu0 0
        %4809 = vperm.xlu0 %4808, %v4801
        %v4810 = vpop.permute.xlu0 %4809
        %v4816 = vunpack.c.l.b16 %v4196
        %v4817 = vunpack.c.h.b16 %v4196
        %v4818 = vunpack.c.l.b16 %v4197
        %v4819 = vunpack.c.h.b16 %v4197
        %v4820 = vunpack.c.l.b16 %v4198
        %v4821 = vunpack.c.h.b16 %v4198
        %v4822 = vunpack.c.l.b16 %v4199
        %v4823 = vunpack.c.h.b16 %v4199
        %v4824 = vpack.c.b16 %v4820, %v4816
        %v4825 = vpack.c.b16 %v4821, %v4817
        %v4826 = vpack.c.b16 %v4822, %v4818
        %v4827 = vpack.c.b16 %v4823, %v4819
        %vm4831 = vcmask 130048
        %v4833 = vsel %vm4831, %v4827, 0
        %4835 = vmatprep.subr.bf16.mxu0 %v4201
        %4836 = vmatpush1.bf16.msra.mxu0 %v4200
        %4837 = vmatprep.subr.bf16.mxu0 %v4225
        %4838 = vmatpush1.bf16.msra.mxu0 %v4224
        %4839 = vmatprep.subr.bf16.mxu0 %v4249
        %4840 = vmatpush1.bf16.msra.mxu0 %v4248
        %4841 = vmatprep.subr.bf16.mxu0 %v4273
        %4842 = vmatpush1.bf16.msra.mxu0 %v4272
        %4843 = vmatprep.subr.bf16.mxu0 %v4297
        %4844 = vmatpush1.bf16.msra.mxu0 %v4296
        %4845 = vmatprep.subr.bf16.mxu0 %v4321
        %4846 = vmatpush1.bf16.msra.mxu0 %v4320
        %4847 = vmatprep.subr.bf16.mxu0 %v4345
        %4848 = vmatpush1.bf16.msra.mxu0 %v4344
        %4849 = vmatprep.subr.bf16.mxu0 %v4369
        %4850 = vmatpush1.bf16.msra.mxu0 %v4368
        %4851 = vmatprep.subr.bf16.mxu0 %v4393
        %4852 = vmatpush1.bf16.msra.mxu0 %v4392
        %4853 = vmatprep.subr.bf16.mxu0 %v4417
        %4854 = vmatpush1.bf16.msra.mxu0 %v4416
        %4855 = vmatprep.subr.bf16.mxu0 %v4441
        %4856 = vmatpush1.bf16.msra.mxu0 %v4440
        %4857 = vmatprep.subr.bf16.mxu0 %v4465
        %4858 = vmatpush1.bf16.msra.mxu0 %v4464
        %4859 = vmatprep.subr.bf16.mxu0 %v4489
        %4860 = vmatpush1.bf16.msra.mxu0 %v4488
        %4861 = vmatprep.subr.bf16.mxu0 %v4513
        %4862 = vmatpush1.bf16.msra.mxu0 %v4512
        %4863 = vmatprep.subr.bf16.mxu0 %v4537
        %4864 = vmatpush1.bf16.msra.mxu0 %v4536
        %4865 = vmatprep.subr.bf16.mxu0 %v4561
        %4866 = vmatpush1.bf16.msra.mxu0 %v4560
        %4867 = vmatprep.mubr.bf16.mxu0 %v4825
        %4868 = vmatmul.mubr.bf16.gmra.mrb[0].mxu0 %v4824
        %v4869 = vpop.f32.mrb[0].mxu0
        %v4870 = vadd.f32 %v4805, %v4869
        %v4871 = vpop.f32.mrb[0].mxu0
        %v4872 = vadd.f32 %v4805, %v4871
        %v4873 = vpop.f32.mrb[0].mxu0
        %v4874 = vadd.f32 %v4810, %v4873
        %v4875 = vpop.f32.mrb[0].mxu0
        %v4876 = vadd.f32 %v4810, %v4875
        %4877 = vdwg.mxu0
        %4878 = vmatprep.subr.bf16.mxu0 %v4585
        %4879 = vmatpush1.bf16.msra.mxu0 %v4584
        %4880 = vmatprep.subr.bf16.mxu0 %v4609
        %4881 = vmatpush1.bf16.msra.mxu0 %v4608
        %4882 = vmatprep.subr.bf16.mxu0 %v4633
        %4883 = vmatpush1.bf16.msra.mxu0 %v4632
        %4884 = vmatprep.subr.bf16.mxu0 %v4657
        %4885 = vmatpush1.bf16.msra.mxu0 %v4656
        %4886 = vmatprep.subr.bf16.mxu0 %v4681
        %4887 = vmatpush1.bf16.msra.mxu0 %v4680
        %4888 = vmatprep.subr.bf16.mxu0 %v4705
        %4889 = vmatpush1.bf16.msra.mxu0 %v4704
        %4890 = vmatprep.subr.bf16.mxu0 %v4729
        %4891 = vmatpush1.bf16.msra.mxu0 %v4728
        %4892 = vmatprep.subr.bf16.mxu0 %v4753
        %4893 = vmatpush1.bf16.msra.mxu0 %v4752
        %4894 = vmatprep.subr.bf16.mxu0 %v4777
        %4895 = vmatpush1.bf16.msra.mxu0 %v4776
        %4896 = vmatprep.subr.bf16.mxu0 0
        %4897 = vmatpush1.bf16.msra.mxu0 0
        %4898 = vmatprep.subr.bf16.mxu0 0
        %4899 = vmatpush1.bf16.msra.mxu0 0
        %4900 = vmatprep.subr.bf16.mxu0 0
        %4901 = vmatpush1.bf16.msra.mxu0 0
        %4902 = vmatprep.subr.bf16.mxu0 0
        %4903 = vmatpush1.bf16.msra.mxu0 0
        %4904 = vmatprep.subr.bf16.mxu0 0
        %4905 = vmatpush1.bf16.msra.mxu0 0
        %4906 = vmatprep.subr.bf16.mxu0 0
        %4907 = vmatpush1.bf16.msra.mxu0 0
        %4908 = vmatprep.subr.bf16.mxu0 0
        %4909 = vmatpush1.bf16.msra.mxu0 0
        %4910 = vmatprep.mubr.bf16.mxu0 %v4833
        %4911 = vmatmul.mubr.bf16.gmra.mrb[0].mxu0 %v4826
        %v4912 = vpop.f32.mrb[0].mxu0
        %v4913 = vadd.f32 %v4870, %v4912
        %v4914 = vpop.f32.mrb[0].mxu0
        %v4915 = vadd.f32 %v4872, %v4914
        %v4916 = vpop.f32.mrb[0].mxu0
        %v4917 = vadd.f32 %v4874, %v4916
        %v4918 = vpop.f32.mrb[0].mxu0
        %v4919 = vadd.f32 %v4876, %v4918
        %4920 = vdwg.mxu0
        %4921 = vmatprep.subr.bf16.mxu0 %v4203
        %4922 = vmatpush1.bf16.msra.mxu0 %v4202
        %4923 = vmatprep.subr.bf16.mxu0 %v4227
        %4924 = vmatpush1.bf16.msra.mxu0 %v4226
        %4925 = vmatprep.subr.bf16.mxu0 %v4251
        %4926 = vmatpush1.bf16.msra.mxu0 %v4250
        %4927 = vmatprep.subr.bf16.mxu0 %v4275
        %4928 = vmatpush1.bf16.msra.mxu0 %v4274
        %4929 = vmatprep.subr.bf16.mxu0 %v4299
        %4930 = vmatpush1.bf16.msra.mxu0 %v4298
        %4931 = vmatprep.subr.bf16.mxu0 %v4323
        %4932 = vmatpush1.bf16.msra.mxu0 %v4322
        %4933 = vmatprep.subr.bf16.mxu0 %v4347
        %4934 = vmatpush1.bf16.msra.mxu0 %v4346
        %4935 = vmatprep.subr.bf16.mxu0 %v4371
        %4936 = vmatpush1.bf16.msra.mxu0 %v4370
        %4937 = vmatprep.subr.bf16.mxu0 %v4395
        %4938 = vmatpush1.bf16.msra.mxu0 %v4394
        %4939 = vmatprep.subr.bf16.mxu0 %v4419
        %4940 = vmatpush1.bf16.msra.mxu0 %v4418
        %4941 = vmatprep.subr.bf16.mxu0 %v4443
        %4942 = vmatpush1.bf16.msra.mxu0 %v4442
        %4943 = vmatprep.subr.bf16.mxu0 %v4467
        %4944 = vmatpush1.bf16.msra.mxu0 %v4466
        %4945 = vmatprep.subr.bf16.mxu0 %v4491
        %4946 = vmatpush1.bf16.msra.mxu0 %v4490
        %4947 = vmatprep.subr.bf16.mxu0 %v4515
        %4948 = vmatpush1.bf16.msra.mxu0 %v4514
        %4949 = vmatprep.subr.bf16.mxu0 %v4539
        %4950 = vmatpush1.bf16.msra.mxu0 %v4538
        %4951 = vmatprep.subr.bf16.mxu0 %v4563
        %4952 = vmatpush1.bf16.msra.mxu0 %v4562
        %4953 = vmatprep.mubr.bf16.mxu0 %v4825
        %4954 = vmatmul.mubr.bf16.gmra.mrb[0].mxu0 %v4824
        %v4955 = vpop.f32.mrb[0].mxu0
        %v4956 = vadd.f32 %v4805, %v4955
        %v4957 = vpop.f32.mrb[0].mxu0
        %v4958 = vadd.f32 %v4805, %v4957
        %v4959 = vpop.f32.mrb[0].mxu0
        %v4960 = vadd.f32 %v4810, %v4959
        %v4961 = vpop.f32.mrb[0].mxu0
        %v4962 = vadd.f32 %v4810, %v4961
        %4963 = vdwg.mxu0
        %4964 = vmatprep.subr.bf16.mxu0 %v4587
        %4965 = vmatpush1.bf16.msra.mxu0 %v4586
        %4966 = vmatprep.subr.bf16.mxu0 %v4611
        %4967 = vmatpush1.bf16.msra.mxu0 %v4610
        %4968 = vmatprep.subr.bf16.mxu0 %v4635
        %4969 = vmatpush1.bf16.msra.mxu0 %v4634
        %4970 = vmatprep.subr.bf16.mxu0 %v4659
        %4971 = vmatpush1.bf16.msra.mxu0 %v4658
        %4972 = vmatprep.subr.bf16.mxu0 %v4683
        %4973 = vmatpush1.bf16.msra.mxu0 %v4682
        %4974 = vmatprep.subr.bf16.mxu0 %v4707
        %4975 = vmatpush1.bf16.msra.mxu0 %v4706
        %4976 = vmatprep.subr.bf16.mxu0 %v4731
        %4977 = vmatpush1.bf16.msra.mxu0 %v4730
        %4978 = vmatprep.subr.bf16.mxu0 %v4755
        %4979 = vmatpush1.bf16.msra.mxu0 %v4754
        %4980 = vmatprep.subr.bf16.mxu0 %v4779
        %4981 = vmatpush1.bf16.msra.mxu0 %v4778
        %4982 = vmatprep.subr.bf16.mxu0 0
        %4983 = vmatpush1.bf16.msra.mxu0 0
        %4984 = vmatprep.subr.bf16.mxu0 0
        %4985 = vmatpush1.bf16.msra.mxu0 0
        %4986 = vmatprep.subr.bf16.mxu0 0
        %4987 = vmatpush1.bf16.msra.mxu0 0
        %4988 = vmatprep.subr.bf16.mxu0 0
        %4989 = vmatpush1.bf16.msra.mxu0 0
        %4990 = vmatprep.subr.bf16.mxu0 0
        %4991 = vmatpush1.bf16.msra.mxu0 0
        %4992 = vmatprep.subr.bf16.mxu0 0
        %4993 = vmatpush1.bf16.msra.mxu0 0
        %4994 = vmatprep.subr.bf16.mxu0 0
        %4995 = vmatpush1.bf16.msra.mxu0 0
        %4996 = vmatprep.mubr.bf16.mxu0 %v4833
        %4997 = vmatmul.mubr.bf16.gmra.mrb[0].mxu0 %v4826
        %v4998 = vpop.f32.mrb[0].mxu0
        %v4999 = vadd.f32 %v4956, %v4998
        %v5000 = vpop.f32.mrb[0].mxu0
        %v5001 = vadd.f32 %v4958, %v5000
        %v5002 = vpop.f32.mrb[0].mxu0
        %v5003 = vadd.f32 %v4960, %v5002
        %v5004 = vpop.f32.mrb[0].mxu0
        %v5005 = vadd.f32 %v4962, %v5004
        %5006 = vdwg.mxu0
        %5007 = vmatprep.subr.bf16.mxu0 %v4205
        %5008 = vmatpush1.bf16.msra.mxu0 %v4204
        %5009 = vmatprep.subr.bf16.mxu0 %v4229
        %5010 = vmatpush1.bf16.msra.mxu0 %v4228
        %5011 = vmatprep.subr.bf16.mxu0 %v4253
        %5012 = vmatpush1.bf16.msra.mxu0 %v4252
        %5013 = vmatprep.subr.bf16.mxu0 %v4277
        %5014 = vmatpush1.bf16.msra.mxu0 %v4276
        %5015 = vmatprep.subr.bf16.mxu0 %v4301
        %5016 = vmatpush1.bf16.msra.mxu0 %v4300
        %5017 = vmatprep.subr.bf16.mxu0 %v4325
        %5018 = vmatpush1.bf16.msra.mxu0 %v4324
        %5019 = vmatprep.subr.bf16.mxu0 %v4349
        %5020 = vmatpush1.bf16.msra.mxu0 %v4348
        %5021 = vmatprep.subr.bf16.mxu0 %v4373
        %5022 = vmatpush1.bf16.msra.mxu0 %v4372
        %5023 = vmatprep.subr.bf16.mxu0 %v4397
        %5024 = vmatpush1.bf16.msra.mxu0 %v4396
        %5025 = vmatprep.subr.bf16.mxu0 %v4421
        %5026 = vmatpush1.bf16.msra.mxu0 %v4420
        %5027 = vmatprep.subr.bf16.mxu0 %v4445
        %5028 = vmatpush1.bf16.msra.mxu0 %v4444
        %5029 = vmatprep.subr.bf16.mxu0 %v4469
        %5030 = vmatpush1.bf16.msra.mxu0 %v4468
        %5031 = vmatprep.subr.bf16.mxu0 %v4493
        %5032 = vmatpush1.bf16.msra.mxu0 %v4492
        %5033 = vmatprep.subr.bf16.mxu0 %v4517
        %5034 = vmatpush1.bf16.msra.mxu0 %v4516
        %5035 = vmatprep.subr.bf16.mxu0 %v4541
        %5036 = vmatpush1.bf16.msra.mxu0 %v4540
        %5037 = vmatprep.subr.bf16.mxu0 %v4565
        %5038 = vmatpush1.bf16.msra.mxu0 %v4564
        %5039 = vmatprep.mubr.bf16.mxu0 %v4825
        %5040 = vmatmul.mubr.bf16.gmra.mrb[0].mxu0 %v4824
        %v5041 = vpop.f32.mrb[0].mxu0
        %v5042 = vadd.f32 %v4805, %v5041
        %v5043 = vpop.f32.mrb[0].mxu0
        %v5044 = vadd.f32 %v4805, %v5043
        %v5045 = vpop.f32.mrb[0].mxu0
        %v5046 = vadd.f32 %v4810, %v5045
        %v5047 = vpop.f32.mrb[0].mxu0
        %v5048 = vadd.f32 %v4810, %v5047
        %5049 = vdwg.mxu0
        %5050 = vmatprep.subr.bf16.mxu0 %v4589
        %5051 = vmatpush1.bf16.msra.mxu0 %v4588
        %5052 = vmatprep.subr.bf16.mxu0 %v4613
        %5053 = vmatpush1.bf16.msra.mxu0 %v4612
        %5054 = vmatprep.subr.bf16.mxu0 %v4637
        %5055 = vmatpush1.bf16.msra.mxu0 %v4636
        %5056 = vmatprep.subr.bf16.mxu0 %v4661
        %5057 = vmatpush1.bf16.msra.mxu0 %v4660
        %5058 = vmatprep.subr.bf16.mxu0 %v4685
        %5059 = vmatpush1.bf16.msra.mxu0 %v4684
        %5060 = vmatprep.subr.bf16.mxu0 %v4709
        %5061 = vmatpush1.bf16.msra.mxu0 %v4708
        %5062 = vmatprep.subr.bf16.mxu0 %v4733
        %5063 = vmatpush1.bf16.msra.mxu0 %v4732
        %5064 = vmatprep.subr.bf16.mxu0 %v4757
        %5065 = vmatpush1.bf16.msra.mxu0 %v4756
        %5066 = vmatprep.subr.bf16.mxu0 %v4781
        %5067 = vmatpush1.bf16.msra.mxu0 %v4780
        %5068 = vmatprep.subr.bf16.mxu0 0
        %5069 = vmatpush1.bf16.msra.mxu0 0
        %5070 = vmatprep.subr.bf16.mxu0 0
        %5071 = vmatpush1.bf16.msra.mxu0 0
        %5072 = vmatprep.subr.bf16.mxu0 0
        %5073 = vmatpush1.bf16.msra.mxu0 0
        %5074 = vmatprep.subr.bf16.mxu0 0
        %5075 = vmatpush1.bf16.msra.mxu0 0
        %5076 = vmatprep.subr.bf16.mxu0 0
        %5077 = vmatpush1.bf16.msra.mxu0 0
        %5078 = vmatprep.subr.bf16.mxu0 0
        %5079 = vmatpush1.bf16.msra.mxu0 0
        %5080 = vmatprep.subr.bf16.mxu0 0
        %5081 = vmatpush1.bf16.msra.mxu0 0
        %5082 = vmatprep.mubr.bf16.mxu0 %v4833
        %5083 = vmatmul.mubr.bf16.gmra.mrb[0].mxu0 %v4826
        %v5084 = vpop.f32.mrb[0].mxu0
        %v5085 = vadd.f32 %v5042, %v5084
        %v5086 = vpop.f32.mrb[0].mxu0
        %v5087 = vadd.f32 %v5044, %v5086
        %v5088 = vpop.f32.mrb[0].mxu0
        %v5089 = vadd.f32 %v5046, %v5088
        %v5090 = vpop.f32.mrb[0].mxu0
        %v5091 = vadd.f32 %v5048, %v5090
        %5092 = vdwg.mxu0
        %5093 = vmatprep.subr.bf16.mxu0 %v4207
        %5094 = vmatpush1.bf16.msra.mxu0 %v4206
        %5095 = vmatprep.subr.bf16.mxu0 %v4231
        %5096 = vmatpush1.bf16.msra.mxu0 %v4230
        %5097 = vmatprep.subr.bf16.mxu0 %v4255
        %5098 = vmatpush1.bf16.msra.mxu0 %v4254
        %5099 = vmatprep.subr.bf16.mxu0 %v4279
        %5100 = vmatpush1.bf16.msra.mxu0 %v4278
        %5101 = vmatprep.subr.bf16.mxu0 %v4303
        %5102 = vmatpush1.bf16.msra.mxu0 %v4302
        %5103 = vmatprep.subr.bf16.mxu0 %v4327
        %5104 = vmatpush1.bf16.msra.mxu0 %v4326
        %5105 = vmatprep.subr.bf16.mxu0 %v4351
        %5106 = vmatpush1.bf16.msra.mxu0 %v4350
        %5107 = vmatprep.subr.bf16.mxu0 %v4375
        %5108 = vmatpush1.bf16.msra.mxu0 %v4374
        %5109 = vmatprep.subr.bf16.mxu0 %v4399
        %5110 = vmatpush1.bf16.msra.mxu0 %v4398
        %5111 = vmatprep.subr.bf16.mxu0 %v4423
        %5112 = vmatpush1.bf16.msra.mxu0 %v4422
        %5113 = vmatprep.subr.bf16.mxu0 %v4447
        %5114 = vmatpush1.bf16.msra.mxu0 %v4446
        %5115 = vmatprep.subr.bf16.mxu0 %v4471
        %5116 = vmatpush1.bf16.msra.mxu0 %v4470
        %5117 = vmatprep.subr.bf16.mxu0 %v4495
        %5118 = vmatpush1.bf16.msra.mxu0 %v4494
        %5119 = vmatprep.subr.bf16.mxu0 %v4519
        %5120 = vmatpush1.bf16.msra.mxu0 %v4518
        %5121 = vmatprep.subr.bf16.mxu0 %v4543
        %5122 = vmatpush1.bf16.msra.mxu0 %v4542
        %5123 = vmatprep.subr.bf16.mxu0 %v4567
        %5124 = vmatpush1.bf16.msra.mxu0 %v4566
        %5125 = vmatprep.mubr.bf16.mxu0 %v4825
        %5126 = vmatmul.mubr.bf16.gmra.mrb[0].mxu0 %v4824
        %v5127 = vpop.f32.mrb[0].mxu0
        %v5128 = vadd.f32 %v4805, %v5127
        %v5129 = vpop.f32.mrb[0].mxu0
        %v5130 = vadd.f32 %v4805, %v5129
        %v5131 = vpop.f32.mrb[0].mxu0
        %v5132 = vadd.f32 %v4810, %v5131
        %v5133 = vpop.f32.mrb[0].mxu0
        %v5134 = vadd.f32 %v4810, %v5133
        %5135 = vdwg.mxu0
        %5136 = vmatprep.subr.bf16.mxu0 %v4591
        %5137 = vmatpush1.bf16.msra.mxu0 %v4590
        %5138 = vmatprep.subr.bf16.mxu0 %v4615
        %5139 = vmatpush1.bf16.msra.mxu0 %v4614
        %5140 = vmatprep.subr.bf16.mxu0 %v4639
        %5141 = vmatpush1.bf16.msra.mxu0 %v4638
        %5142 = vmatprep.subr.bf16.mxu0 %v4663
        %5143 = vmatpush1.bf16.msra.mxu0 %v4662
        %5144 = vmatprep.subr.bf16.mxu0 %v4687
        %5145 = vmatpush1.bf16.msra.mxu0 %v4686
        %5146 = vmatprep.subr.bf16.mxu0 %v4711
        %5147 = vmatpush1.bf16.msra.mxu0 %v4710
        %5148 = vmatprep.subr.bf16.mxu0 %v4735
        %5149 = vmatpush1.bf16.msra.mxu0 %v4734
        %5150 = vmatprep.subr.bf16.mxu0 %v4759
        %5151 = vmatpush1.bf16.msra.mxu0 %v4758
        %5152 = vmatprep.subr.bf16.mxu0 %v4783
        %5153 = vmatpush1.bf16.msra.mxu0 %v4782
        %5154 = vmatprep.subr.bf16.mxu0 0
        %5155 = vmatpush1.bf16.msra.mxu0 0
        %5156 = vmatprep.subr.bf16.mxu0 0
        %5157 = vmatpush1.bf16.msra.mxu0 0
        %5158 = vmatprep.subr.bf16.mxu0 0
        %5159 = vmatpush1.bf16.msra.mxu0 0
        %5160 = vmatprep.subr.bf16.mxu0 0
        %5161 = vmatpush1.bf16.msra.mxu0 0
        %5162 = vmatprep.subr.bf16.mxu0 0
        %5163 = vmatpush1.bf16.msra.mxu0 0
        %5164 = vmatprep.subr.bf16.mxu0 0
        %5165 = vmatpush1.bf16.msra.mxu0 0
        %5166 = vmatprep.subr.bf16.mxu0 0
        %5167 = vmatpush1.bf16.msra.mxu0 0
        %5168 = vmatprep.mubr.bf16.mxu0 %v4833
        %5169 = vmatmul.mubr.bf16.gmra.mrb[0].mxu0 %v4826
        %v5170 = vpop.f32.mrb[0].mxu0
        %v5171 = vadd.f32 %v5128, %v5170
        %v5172 = vpop.f32.mrb[0].mxu0
        %v5173 = vadd.f32 %v5130, %v5172
        %v5174 = vpop.f32.mrb[0].mxu0
        %v5175 = vadd.f32 %v5132, %v5174
        %v5176 = vpop.f32.mrb[0].mxu0
        %v5177 = vadd.f32 %v5134, %v5176
        %5178 = vdwg.mxu0
        %5179 = vmatprep.subr.bf16.mxu0 %v4209
        %5180 = vmatpush1.bf16.msra.mxu0 %v4208
        %5181 = vmatprep.subr.bf16.mxu0 %v4233
        %5182 = vmatpush1.bf16.msra.mxu0 %v4232
        %5183 = vmatprep.subr.bf16.mxu0 %v4257
        %5184 = vmatpush1.bf16.msra.mxu0 %v4256
        %5185 = vmatprep.subr.bf16.mxu0 %v4281
        %5186 = vmatpush1.bf16.msra.mxu0 %v4280
        %5187 = vmatprep.subr.bf16.mxu0 %v4305
        %5188 = vmatpush1.bf16.msra.mxu0 %v4304
        %5189 = vmatprep.subr.bf16.mxu0 %v4329
        %5190 = vmatpush1.bf16.msra.mxu0 %v4328
        %5191 = vmatprep.subr.bf16.mxu0 %v4353
        %5192 = vmatpush1.bf16.msra.mxu0 %v4352
        %5193 = vmatprep.subr.bf16.mxu0 %v4377
        %5194 = vmatpush1.bf16.msra.mxu0 %v4376
        %5195 = vmatprep.subr.bf16.mxu0 %v4401
        %5196 = vmatpush1.bf16.msra.mxu0 %v4400
        %5197 = vmatprep.subr.bf16.mxu0 %v4425
        %5198 = vmatpush1.bf16.msra.mxu0 %v4424
        %5199 = vmatprep.subr.bf16.mxu0 %v4449
        %5200 = vmatpush1.bf16.msra.mxu0 %v4448
        %5201 = vmatprep.subr.bf16.mxu0 %v4473
        %5202 = vmatpush1.bf16.msra.mxu0 %v4472
        %5203 = vmatprep.subr.bf16.mxu0 %v4497
        %5204 = vmatpush1.bf16.msra.mxu0 %v4496
        %5205 = vmatprep.subr.bf16.mxu0 %v4521
        %5206 = vmatpush1.bf16.msra.mxu0 %v4520
        %5207 = vmatprep.subr.bf16.mxu0 %v4545
        %5208 = vmatpush1.bf16.msra.mxu0 %v4544
        %5209 = vmatprep.subr.bf16.mxu0 %v4569
        %5210 = vmatpush1.bf16.msra.mxu0 %v4568
        %5211 = vmatprep.mubr.bf16.mxu0 %v4825
        %5212 = vmatmul.mubr.bf16.gmra.mrb[0].mxu0 %v4824
        %v5213 = vpop.f32.mrb[0].mxu0
        %v5214 = vadd.f32 %v4805, %v5213
        %v5215 = vpop.f32.mrb[0].mxu0
        %v5216 = vadd.f32 %v4805, %v5215
        %v5217 = vpop.f32.mrb[0].mxu0
        %v5218 = vadd.f32 %v4810, %v5217
        %v5219 = vpop.f32.mrb[0].mxu0
        %v5220 = vadd.f32 %v4810, %v5219
        %5221 = vdwg.mxu0
        %5222 = vmatprep.subr.bf16.mxu0 %v4593
        %5223 = vmatpush1.bf16.msra.mxu0 %v4592
        %5224 = vmatprep.subr.bf16.mxu0 %v4617
        %5225 = vmatpush1.bf16.msra.mxu0 %v4616
        %5226 = vmatprep.subr.bf16.mxu0 %v4641
        %5227 = vmatpush1.bf16.msra.mxu0 %v4640
        %5228 = vmatprep.subr.bf16.mxu0 %v4665
        %5229 = vmatpush1.bf16.msra.mxu0 %v4664
        %5230 = vmatprep.subr.bf16.mxu0 %v4689
        %5231 = vmatpush1.bf16.msra.mxu0 %v4688
        %5232 = vmatprep.subr.bf16.mxu0 %v4713
        %5233 = vmatpush1.bf16.msra.mxu0 %v4712
        %5234 = vmatprep.subr.bf16.mxu0 %v4737
        %5235 = vmatpush1.bf16.msra.mxu0 %v4736
        %5236 = vmatprep.subr.bf16.mxu0 %v4761
        %5237 = vmatpush1.bf16.msra.mxu0 %v4760
        %5238 = vmatprep.subr.bf16.mxu0 %v4785
        %5239 = vmatpush1.bf16.msra.mxu0 %v4784
        %5240 = vmatprep.subr.bf16.mxu0 0
        %5241 = vmatpush1.bf16.msra.mxu0 0
        %5242 = vmatprep.subr.bf16.mxu0 0
        %5243 = vmatpush1.bf16.msra.mxu0 0
        %5244 = vmatprep.subr.bf16.mxu0 0
        %5245 = vmatpush1.bf16.msra.mxu0 0
        %5246 = vmatprep.subr.bf16.mxu0 0
        %5247 = vmatpush1.bf16.msra.mxu0 0
        %5248 = vmatprep.subr.bf16.mxu0 0
        %5249 = vmatpush1.bf16.msra.mxu0 0
        %5250 = vmatprep.subr.bf16.mxu0 0
        %5251 = vmatpush1.bf16.msra.mxu0 0
        %5252 = vmatprep.subr.bf16.mxu0 0
        %5253 = vmatpush1.bf16.msra.mxu0 0
        %5254 = vmatprep.mubr.bf16.mxu0 %v4833
        %5255 = vmatmul.mubr.bf16.gmra.mrb[0].mxu0 %v4826
        %v5256 = vpop.f32.mrb[0].mxu0
        %v5257 = vadd.f32 %v5214, %v5256
        %v5258 = vpop.f32.mrb[0].mxu0
        %v5259 = vadd.f32 %v5216, %v5258
        %v5260 = vpop.f32.mrb[0].mxu0
        %v5261 = vadd.f32 %v5218, %v5260
        %v5262 = vpop.f32.mrb[0].mxu0
        %v5263 = vadd.f32 %v5220, %v5262
        %5264 = vdwg.mxu0
        %5265 = vmatprep.subr.bf16.mxu0 %v4211
        %5266 = vmatpush1.bf16.msra.mxu0 %v4210
        %5267 = vmatprep.subr.bf16.mxu0 %v4235
        %5268 = vmatpush1.bf16.msra.mxu0 %v4234
        %5269 = vmatprep.subr.bf16.mxu0 %v4259
        %5270 = vmatpush1.bf16.msra.mxu0 %v4258
        %5271 = vmatprep.subr.bf16.mxu0 %v4283
        %5272 = vmatpush1.bf16.msra.mxu0 %v4282
        %5273 = vmatprep.subr.bf16.mxu0 %v4307
        %5274 = vmatpush1.bf16.msra.mxu0 %v4306
        %5275 = vmatprep.subr.bf16.mxu0 %v4331
        %5276 = vmatpush1.bf16.msra.mxu0 %v4330
        %5277 = vmatprep.subr.bf16.mxu0 %v4355
        %5278 = vmatpush1.bf16.msra.mxu0 %v4354
        %5279 = vmatprep.subr.bf16.mxu0 %v4379
        %5280 = vmatpush1.bf16.msra.mxu0 %v4378
        %5281 = vmatprep.subr.bf16.mxu0 %v4403
        %5282 = vmatpush1.bf16.msra.mxu0 %v4402
        %5283 = vmatprep.subr.bf16.mxu0 %v4427
        %5284 = vmatpush1.bf16.msra.mxu0 %v4426
        %5285 = vmatprep.subr.bf16.mxu0 %v4451
        %5286 = vmatpush1.bf16.msra.mxu0 %v4450
        %5287 = vmatprep.subr.bf16.mxu0 %v4475
        %5288 = vmatpush1.bf16.msra.mxu0 %v4474
        %5289 = vmatprep.subr.bf16.mxu0 %v4499
        %5290 = vmatpush1.bf16.msra.mxu0 %v4498
        %5291 = vmatprep.subr.bf16.mxu0 %v4523
        %5292 = vmatpush1.bf16.msra.mxu0 %v4522
        %5293 = vmatprep.subr.bf16.mxu0 %v4547
        %5294 = vmatpush1.bf16.msra.mxu0 %v4546
        %5295 = vmatprep.subr.bf16.mxu0 %v4571
        %5296 = vmatpush1.bf16.msra.mxu0 %v4570
        %5297 = vmatprep.mubr.bf16.mxu0 %v4825
        %5298 = vmatmul.mubr.bf16.gmra.mrb[0].mxu0 %v4824
        %v5299 = vpop.f32.mrb[0].mxu0
        %v5300 = vadd.f32 %v4805, %v5299
        %v5301 = vpop.f32.mrb[0].mxu0
        %v5302 = vadd.f32 %v4805, %v5301
        %v5303 = vpop.f32.mrb[0].mxu0
        %v5304 = vadd.f32 %v4810, %v5303
        %v5305 = vpop.f32.mrb[0].mxu0
        %v5306 = vadd.f32 %v4810, %v5305
        %5307 = vdwg.mxu0
        %5308 = vmatprep.subr.bf16.mxu0 %v4595
        %5309 = vmatpush1.bf16.msra.mxu0 %v4594
        %5310 = vmatprep.subr.bf16.mxu0 %v4619
        %5311 = vmatpush1.bf16.msra.mxu0 %v4618
        %5312 = vmatprep.subr.bf16.mxu0 %v4643
        %5313 = vmatpush1.bf16.msra.mxu0 %v4642
        %5314 = vmatprep.subr.bf16.mxu0 %v4667
        %5315 = vmatpush1.bf16.msra.mxu0 %v4666
        %5316 = vmatprep.subr.bf16.mxu0 %v4691
        %5317 = vmatpush1.bf16.msra.mxu0 %v4690
        %5318 = vmatprep.subr.bf16.mxu0 %v4715
        %5319 = vmatpush1.bf16.msra.mxu0 %v4714
        %5320 = vmatprep.subr.bf16.mxu0 %v4739
        %5321 = vmatpush1.bf16.msra.mxu0 %v4738
        %5322 = vmatprep.subr.bf16.mxu0 %v4763
        %5323 = vmatpush1.bf16.msra.mxu0 %v4762
        %5324 = vmatprep.subr.bf16.mxu0 %v4787
        %5325 = vmatpush1.bf16.msra.mxu0 %v4786
        %5326 = vmatprep.subr.bf16.mxu0 0
        %5327 = vmatpush1.bf16.msra.mxu0 0
        %5328 = vmatprep.subr.bf16.mxu0 0
        %5329 = vmatpush1.bf16.msra.mxu0 0
        %5330 = vmatprep.subr.bf16.mxu0 0
        %5331 = vmatpush1.bf16.msra.mxu0 0
        %5332 = vmatprep.subr.bf16.mxu0 0
        %5333 = vmatpush1.bf16.msra.mxu0 0
        %5334 = vmatprep.subr.bf16.mxu0 0
        %5335 = vmatpush1.bf16.msra.mxu0 0
        %5336 = vmatprep.subr.bf16.mxu0 0
        %5337 = vmatpush1.bf16.msra.mxu0 0
        %5338 = vmatprep.subr.bf16.mxu0 0
        %5339 = vmatpush1.bf16.msra.mxu0 0
        %5340 = vmatprep.mubr.bf16.mxu0 %v4833
        %5341 = vmatmul.mubr.bf16.gmra.mrb[0].mxu0 %v4826
        %v5342 = vpop.f32.mrb[0].mxu0
        %v5343 = vadd.f32 %v5300, %v5342
        %v5344 = vpop.f32.mrb[0].mxu0
        %v5345 = vadd.f32 %v5302, %v5344
        %v5346 = vpop.f32.mrb[0].mxu0
        %v5347 = vadd.f32 %v5304, %v5346
        %v5348 = vpop.f32.mrb[0].mxu0
        %v5349 = vadd.f32 %v5306, %v5348
        %5350 = vdwg.mxu0
        %5351 = vmatprep.subr.bf16.mxu0 %v4213
        %5352 = vmatpush1.bf16.msra.mxu0 %v4212
        %5353 = vmatprep.subr.bf16.mxu0 %v4237
        %5354 = vmatpush1.bf16.msra.mxu0 %v4236
        %5355 = vmatprep.subr.bf16.mxu0 %v4261
        %5356 = vmatpush1.bf16.msra.mxu0 %v4260
        %5357 = vmatprep.subr.bf16.mxu0 %v4285
        %5358 = vmatpush1.bf16.msra.mxu0 %v4284
        %5359 = vmatprep.subr.bf16.mxu0 %v4309
        %5360 = vmatpush1.bf16.msra.mxu0 %v4308
        %5361 = vmatprep.subr.bf16.mxu0 %v4333
        %5362 = vmatpush1.bf16.msra.mxu0 %v4332
        %5363 = vmatprep.subr.bf16.mxu0 %v4357
        %5364 = vmatpush1.bf16.msra.mxu0 %v4356
        %5365 = vmatprep.subr.bf16.mxu0 %v4381
        %5366 = vmatpush1.bf16.msra.mxu0 %v4380
        %5367 = vmatprep.subr.bf16.mxu0 %v4405
        %5368 = vmatpush1.bf16.msra.mxu0 %v4404
        %5369 = vmatprep.subr.bf16.mxu0 %v4429
        %5370 = vmatpush1.bf16.msra.mxu0 %v4428
        %5371 = vmatprep.subr.bf16.mxu0 %v4453
        %5372 = vmatpush1.bf16.msra.mxu0 %v4452
        %5373 = vmatprep.subr.bf16.mxu0 %v4477
        %5374 = vmatpush1.bf16.msra.mxu0 %v4476
        %5375 = vmatprep.subr.bf16.mxu0 %v4501
        %5376 = vmatpush1.bf16.msra.mxu0 %v4500
        %5377 = vmatprep.subr.bf16.mxu0 %v4525
        %5378 = vmatpush1.bf16.msra.mxu0 %v4524
        %5379 = vmatprep.subr.bf16.mxu0 %v4549
        %5380 = vmatpush1.bf16.msra.mxu0 %v4548
        %5381 = vmatprep.subr.bf16.mxu0 %v4573
        %5382 = vmatpush1.bf16.msra.mxu0 %v4572
        %5383 = vmatprep.mubr.bf16.mxu0 %v4825
        %5384 = vmatmul.mubr.bf16.gmra.mrb[0].mxu0 %v4824
        %v5385 = vpop.f32.mrb[0].mxu0
        %v5386 = vadd.f32 %v4805, %v5385
        %v5387 = vpop.f32.mrb[0].mxu0
        %v5388 = vadd.f32 %v4805, %v5387
        %v5389 = vpop.f32.mrb[0].mxu0
        %v5390 = vadd.f32 %v4810, %v5389
        %v5391 = vpop.f32.mrb[0].mxu0
        %v5392 = vadd.f32 %v4810, %v5391
        %5393 = vdwg.mxu0
        %5394 = vmatprep.subr.bf16.mxu0 %v4597
        %5395 = vmatpush1.bf16.msra.mxu0 %v4596
        %5396 = vmatprep.subr.bf16.mxu0 %v4621
        %5397 = vmatpush1.bf16.msra.mxu0 %v4620
        %5398 = vmatprep.subr.bf16.mxu0 %v4645
        %5399 = vmatpush1.bf16.msra.mxu0 %v4644
        %5400 = vmatprep.subr.bf16.mxu0 %v4669
        %5401 = vmatpush1.bf16.msra.mxu0 %v4668
        %5402 = vmatprep.subr.bf16.mxu0 %v4693
        %5403 = vmatpush1.bf16.msra.mxu0 %v4692
        %5404 = vmatprep.subr.bf16.mxu0 %v4717
        %5405 = vmatpush1.bf16.msra.mxu0 %v4716
        %5406 = vmatprep.subr.bf16.mxu0 %v4741
        %5407 = vmatpush1.bf16.msra.mxu0 %v4740
        %5408 = vmatprep.subr.bf16.mxu0 %v4765
        %5409 = vmatpush1.bf16.msra.mxu0 %v4764
        %5410 = vmatprep.subr.bf16.mxu0 %v4789
        %5411 = vmatpush1.bf16.msra.mxu0 %v4788
        %5412 = vmatprep.subr.bf16.mxu0 0
        %5413 = vmatpush1.bf16.msra.mxu0 0
        %5414 = vmatprep.subr.bf16.mxu0 0
        %5415 = vmatpush1.bf16.msra.mxu0 0
        %5416 = vmatprep.subr.bf16.mxu0 0
        %5417 = vmatpush1.bf16.msra.mxu0 0
        %5418 = vmatprep.subr.bf16.mxu0 0
        %5419 = vmatpush1.bf16.msra.mxu0 0
        %5420 = vmatprep.subr.bf16.mxu0 0
        %5421 = vmatpush1.bf16.msra.mxu0 0
        %5422 = vmatprep.subr.bf16.mxu0 0
        %5423 = vmatpush1.bf16.msra.mxu0 0
        %5424 = vmatprep.subr.bf16.mxu0 0
        %5425 = vmatpush1.bf16.msra.mxu0 0
        %5426 = vmatprep.mubr.bf16.mxu0 %v4833
        %5427 = vmatmul.mubr.bf16.gmra.mrb[0].mxu0 %v4826
        %v5428 = vpop.f32.mrb[0].mxu0
        %v5429 = vadd.f32 %v5386, %v5428
        %v5430 = vpop.f32.mrb[0].mxu0
        %v5431 = vadd.f32 %v5388, %v5430
        %v5432 = vpop.f32.mrb[0].mxu0
        %v5433 = vadd.f32 %v5390, %v5432
        %v5434 = vpop.f32.mrb[0].mxu0
        %v5435 = vadd.f32 %v5392, %v5434
        %5436 = vdwg.mxu0
        %5437 = vmatprep.subr.bf16.mxu0 %v4215
        %5438 = vmatpush1.bf16.msra.mxu0 %v4214
        %5439 = vmatprep.subr.bf16.mxu0 %v4239
        %5440 = vmatpush1.bf16.msra.mxu0 %v4238
        %5441 = vmatprep.subr.bf16.mxu0 %v4263
        %5442 = vmatpush1.bf16.msra.mxu0 %v4262
        %5443 = vmatprep.subr.bf16.mxu0 %v4287
        %5444 = vmatpush1.bf16.msra.mxu0 %v4286
        %5445 = vmatprep.subr.bf16.mxu0 %v4311
        %5446 = vmatpush1.bf16.msra.mxu0 %v4310
        %5447 = vmatprep.subr.bf16.mxu0 %v4335
        %5448 = vmatpush1.bf16.msra.mxu0 %v4334
        %5449 = vmatprep.subr.bf16.mxu0 %v4359
        %5450 = vmatpush1.bf16.msra.mxu0 %v4358
        %5451 = vmatprep.subr.bf16.mxu0 %v4383
        %5452 = vmatpush1.bf16.msra.mxu0 %v4382
        %5453 = vmatprep.subr.bf16.mxu0 %v4407
        %5454 = vmatpush1.bf16.msra.mxu0 %v4406
        %5455 = vmatprep.subr.bf16.mxu0 %v4431
        %5456 = vmatpush1.bf16.msra.mxu0 %v4430
        %5457 = vmatprep.subr.bf16.mxu0 %v4455
        %5458 = vmatpush1.bf16.msra.mxu0 %v4454
        %5459 = vmatprep.subr.bf16.mxu0 %v4479
        %5460 = vmatpush1.bf16.msra.mxu0 %v4478
        %5461 = vmatprep.subr.bf16.mxu0 %v4503
        %5462 = vmatpush1.bf16.msra.mxu0 %v4502
        %5463 = vmatprep.subr.bf16.mxu0 %v4527
        %5464 = vmatpush1.bf16.msra.mxu0 %v4526
        %5465 = vmatprep.subr.bf16.mxu0 %v4551
        %5466 = vmatpush1.bf16.msra.mxu0 %v4550
        %5467 = vmatprep.subr.bf16.mxu0 %v4575
        %5468 = vmatpush1.bf16.msra.mxu0 %v4574
        %5469 = vmatprep.mubr.bf16.mxu0 %v4825
        %5470 = vmatmul.mubr.bf16.gmra.mrb[0].mxu0 %v4824
        %v5471 = vpop.f32.mrb[0].mxu0
        %v5472 = vadd.f32 %v4805, %v5471
        %v5473 = vpop.f32.mrb[0].mxu0
        %v5474 = vadd.f32 %v4805, %v5473
        %v5475 = vpop.f32.mrb[0].mxu0
        %v5476 = vadd.f32 %v4810, %v5475
        %v5477 = vpop.f32.mrb[0].mxu0
        %v5478 = vadd.f32 %v4810, %v5477
        %5479 = vdwg.mxu0
        %5480 = vmatprep.subr.bf16.mxu0 %v4599
        %5481 = vmatpush1.bf16.msra.mxu0 %v4598
        %5482 = vmatprep.subr.bf16.mxu0 %v4623
        %5483 = vmatpush1.bf16.msra.mxu0 %v4622
        %5484 = vmatprep.subr.bf16.mxu0 %v4647
        %5485 = vmatpush1.bf16.msra.mxu0 %v4646
        %5486 = vmatprep.subr.bf16.mxu0 %v4671
        %5487 = vmatpush1.bf16.msra.mxu0 %v4670
        %5488 = vmatprep.subr.bf16.mxu0 %v4695
        %5489 = vmatpush1.bf16.msra.mxu0 %v4694
        %5490 = vmatprep.subr.bf16.mxu0 %v4719
        %5491 = vmatpush1.bf16.msra.mxu0 %v4718
        %5492 = vmatprep.subr.bf16.mxu0 %v4743
        %5493 = vmatpush1.bf16.msra.mxu0 %v4742
        %5494 = vmatprep.subr.bf16.mxu0 %v4767
        %5495 = vmatpush1.bf16.msra.mxu0 %v4766
        %5496 = vmatprep.subr.bf16.mxu0 %v4791
        %5497 = vmatpush1.bf16.msra.mxu0 %v4790
        %5498 = vmatprep.subr.bf16.mxu0 0
        %5499 = vmatpush1.bf16.msra.mxu0 0
        %5500 = vmatprep.subr.bf16.mxu0 0
        %5501 = vmatpush1.bf16.msra.mxu0 0
        %5502 = vmatprep.subr.bf16.mxu0 0
        %5503 = vmatpush1.bf16.msra.mxu0 0
        %5504 = vmatprep.subr.bf16.mxu0 0
        %5505 = vmatpush1.bf16.msra.mxu0 0
        %5506 = vmatprep.subr.bf16.mxu0 0
        %5507 = vmatpush1.bf16.msra.mxu0 0
        %5508 = vmatprep.subr.bf16.mxu0 0
        %5509 = vmatpush1.bf16.msra.mxu0 0
        %5510 = vmatprep.subr.bf16.mxu0 0
        %5511 = vmatpush1.bf16.msra.mxu0 0
        %5512 = vmatprep.mubr.bf16.mxu0 %v4833
        %5513 = vmatmul.mubr.bf16.gmra.mrb[0].mxu0 %v4826
        %v5514 = vpop.f32.mrb[0].mxu0
        %v5515 = vadd.f32 %v5472, %v5514
        %v5516 = vpop.f32.mrb[0].mxu0
        %v5517 = vadd.f32 %v5474, %v5516
        %v5518 = vpop.f32.mrb[0].mxu0
        %v5519 = vadd.f32 %v5476, %v5518
        %v5520 = vpop.f32.mrb[0].mxu0
        %v5521 = vadd.f32 %v5478, %v5520
        %5522 = vdwg.mxu0
        %5523 = vmatprep.subr.bf16.mxu0 %v4217
        %5524 = vmatpush1.bf16.msra.mxu0 %v4216
        %5525 = vmatprep.subr.bf16.mxu0 %v4241
        %5526 = vmatpush1.bf16.msra.mxu0 %v4240
        %5527 = vmatprep.subr.bf16.mxu0 %v4265
        %5528 = vmatpush1.bf16.msra.mxu0 %v4264
        %5529 = vmatprep.subr.bf16.mxu0 %v4289
        %5530 = vmatpush1.bf16.msra.mxu0 %v4288
        %5531 = vmatprep.subr.bf16.mxu0 %v4313
        %5532 = vmatpush1.bf16.msra.mxu0 %v4312
        %5533 = vmatprep.subr.bf16.mxu0 %v4337
        %5534 = vmatpush1.bf16.msra.mxu0 %v4336
        %5535 = vmatprep.subr.bf16.mxu0 %v4361
        %5536 = vmatpush1.bf16.msra.mxu0 %v4360
        %5537 = vmatprep.subr.bf16.mxu0 %v4385
        %5538 = vmatpush1.bf16.msra.mxu0 %v4384
        %5539 = vmatprep.subr.bf16.mxu0 %v4409
        %5540 = vmatpush1.bf16.msra.mxu0 %v4408
        %5541 = vmatprep.subr.bf16.mxu0 %v4433
        %5542 = vmatpush1.bf16.msra.mxu0 %v4432
        %5543 = vmatprep.subr.bf16.mxu0 %v4457
        %5544 = vmatpush1.bf16.msra.mxu0 %v4456
        %5545 = vmatprep.subr.bf16.mxu0 %v4481
        %5546 = vmatpush1.bf16.msra.mxu0 %v4480
        %5547 = vmatprep.subr.bf16.mxu0 %v4505
        %5548 = vmatpush1.bf16.msra.mxu0 %v4504
        %5549 = vmatprep.subr.bf16.mxu0 %v4529
        %5550 = vmatpush1.bf16.msra.mxu0 %v4528
        %5551 = vmatprep.subr.bf16.mxu0 %v4553
        %5552 = vmatpush1.bf16.msra.mxu0 %v4552
        %5553 = vmatprep.subr.bf16.mxu0 %v4577
        %5554 = vmatpush1.bf16.msra.mxu0 %v4576
        %5555 = vmatprep.mubr.bf16.mxu0 %v4825
        %5556 = vmatmul.mubr.bf16.gmra.mrb[0].mxu0 %v4824
        %v5557 = vpop.f32.mrb[0].mxu0
        %v5558 = vadd.f32 %v4805, %v5557
        %v5559 = vpop.f32.mrb[0].mxu0
        %v5560 = vadd.f32 %v4805, %v5559
        %v5561 = vpop.f32.mrb[0].mxu0
        %v5562 = vadd.f32 %v4810, %v5561
        %v5563 = vpop.f32.mrb[0].mxu0
        %v5564 = vadd.f32 %v4810, %v5563
        %5565 = vdwg.mxu0
        %5566 = vmatprep.subr.bf16.mxu0 %v4601
        %5567 = vmatpush1.bf16.msra.mxu0 %v4600
        %5568 = vmatprep.subr.bf16.mxu0 %v4625
        %5569 = vmatpush1.bf16.msra.mxu0 %v4624
        %5570 = vmatprep.subr.bf16.mxu0 %v4649
        %5571 = vmatpush1.bf16.msra.mxu0 %v4648
        %5572 = vmatprep.subr.bf16.mxu0 %v4673
        %5573 = vmatpush1.bf16.msra.mxu0 %v4672
        %5574 = vmatprep.subr.bf16.mxu0 %v4697
        %5575 = vmatpush1.bf16.msra.mxu0 %v4696
        %5576 = vmatprep.subr.bf16.mxu0 %v4721
        %5577 = vmatpush1.bf16.msra.mxu0 %v4720
        %5578 = vmatprep.subr.bf16.mxu0 %v4745
        %5579 = vmatpush1.bf16.msra.mxu0 %v4744
        %5580 = vmatprep.subr.bf16.mxu0 %v4769
        %5581 = vmatpush1.bf16.msra.mxu0 %v4768
        %5582 = vmatprep.subr.bf16.mxu0 %v4793
        %5583 = vmatpush1.bf16.msra.mxu0 %v4792
        %5584 = vmatprep.subr.bf16.mxu0 0
        %5585 = vmatpush1.bf16.msra.mxu0 0
        %5586 = vmatprep.subr.bf16.mxu0 0
        %5587 = vmatpush1.bf16.msra.mxu0 0
        %5588 = vmatprep.subr.bf16.mxu0 0
        %5589 = vmatpush1.bf16.msra.mxu0 0
        %5590 = vmatprep.subr.bf16.mxu0 0
        %5591 = vmatpush1.bf16.msra.mxu0 0
        %5592 = vmatprep.subr.bf16.mxu0 0
        %5593 = vmatpush1.bf16.msra.mxu0 0
        %5594 = vmatprep.subr.bf16.mxu0 0
        %5595 = vmatpush1.bf16.msra.mxu0 0
        %5596 = vmatprep.subr.bf16.mxu0 0
        %5597 = vmatpush1.bf16.msra.mxu0 0
        %5598 = vmatprep.mubr.bf16.mxu0 %v4833
        %5599 = vmatmul.mubr.bf16.gmra.mrb[0].mxu0 %v4826
        %v5600 = vpop.f32.mrb[0].mxu0
        %v5601 = vadd.f32 %v5558, %v5600
        %v5602 = vpop.f32.mrb[0].mxu0
        %v5603 = vadd.f32 %v5560, %v5602
        %v5604 = vpop.f32.mrb[0].mxu0
        %v5605 = vadd.f32 %v5562, %v5604
        %v5606 = vpop.f32.mrb[0].mxu0
        %v5607 = vadd.f32 %v5564, %v5606
        %5608 = vdwg.mxu0
        %5609 = vmatprep.subr.bf16.mxu0 %v4219
        %5610 = vmatpush1.bf16.msra.mxu0 %v4218
        %5611 = vmatprep.subr.bf16.mxu0 %v4243
        %5612 = vmatpush1.bf16.msra.mxu0 %v4242
        %5613 = vmatprep.subr.bf16.mxu0 %v4267
        %5614 = vmatpush1.bf16.msra.mxu0 %v4266
        %5615 = vmatprep.subr.bf16.mxu0 %v4291
        %5616 = vmatpush1.bf16.msra.mxu0 %v4290
        %5617 = vmatprep.subr.bf16.mxu0 %v4315
        %5618 = vmatpush1.bf16.msra.mxu0 %v4314
        %5619 = vmatprep.subr.bf16.mxu0 %v4339
        %5620 = vmatpush1.bf16.msra.mxu0 %v4338
        %5621 = vmatprep.subr.bf16.mxu0 %v4363
        %5622 = vmatpush1.bf16.msra.mxu0 %v4362
        %5623 = vmatprep.subr.bf16.mxu0 %v4387
        %5624 = vmatpush1.bf16.msra.mxu0 %v4386
        %5625 = vmatprep.subr.bf16.mxu0 %v4411
        %5626 = vmatpush1.bf16.msra.mxu0 %v4410
        %5627 = vmatprep.subr.bf16.mxu0 %v4435
        %5628 = vmatpush1.bf16.msra.mxu0 %v4434
        %5629 = vmatprep.subr.bf16.mxu0 %v4459
        %5630 = vmatpush1.bf16.msra.mxu0 %v4458
        %5631 = vmatprep.subr.bf16.mxu0 %v4483
        %5632 = vmatpush1.bf16.msra.mxu0 %v4482
        %5633 = vmatprep.subr.bf16.mxu0 %v4507
        %5634 = vmatpush1.bf16.msra.mxu0 %v4506
        %5635 = vmatprep.subr.bf16.mxu0 %v4531
        %5636 = vmatpush1.bf16.msra.mxu0 %v4530
        %5637 = vmatprep.subr.bf16.mxu0 %v4555
        %5638 = vmatpush1.bf16.msra.mxu0 %v4554
        %5639 = vmatprep.subr.bf16.mxu0 %v4579
        %5640 = vmatpush1.bf16.msra.mxu0 %v4578
        %5641 = vmatprep.mubr.bf16.mxu0 %v4825
        %5642 = vmatmul.mubr.bf16.gmra.mrb[0].mxu0 %v4824
        %v5643 = vpop.f32.mrb[0].mxu0
        %v5644 = vadd.f32 %v4805, %v5643
        %v5645 = vpop.f32.mrb[0].mxu0
        %v5646 = vadd.f32 %v4805, %v5645
        %v5647 = vpop.f32.mrb[0].mxu0
        %v5648 = vadd.f32 %v4810, %v5647
        %v5649 = vpop.f32.mrb[0].mxu0
        %v5650 = vadd.f32 %v4810, %v5649
        %5651 = vdwg.mxu0
        %5652 = vmatprep.subr.bf16.mxu0 %v4603
        %5653 = vmatpush1.bf16.msra.mxu0 %v4602
        %5654 = vmatprep.subr.bf16.mxu0 %v4627
        %5655 = vmatpush1.bf16.msra.mxu0 %v4626
        %5656 = vmatprep.subr.bf16.mxu0 %v4651
        %5657 = vmatpush1.bf16.msra.mxu0 %v4650
        %5658 = vmatprep.subr.bf16.mxu0 %v4675
        %5659 = vmatpush1.bf16.msra.mxu0 %v4674
        %5660 = vmatprep.subr.bf16.mxu0 %v4699
        %5661 = vmatpush1.bf16.msra.mxu0 %v4698
        %5662 = vmatprep.subr.bf16.mxu0 %v4723
        %5663 = vmatpush1.bf16.msra.mxu0 %v4722
        %5664 = vmatprep.subr.bf16.mxu0 %v4747
        %5665 = vmatpush1.bf16.msra.mxu0 %v4746
        %5666 = vmatprep.subr.bf16.mxu0 %v4771
        %5667 = vmatpush1.bf16.msra.mxu0 %v4770
        %5668 = vmatprep.subr.bf16.mxu0 %v4795
        %5669 = vmatpush1.bf16.msra.mxu0 %v4794
        %5670 = vmatprep.subr.bf16.mxu0 0
        %5671 = vmatpush1.bf16.msra.mxu0 0
        %5672 = vmatprep.subr.bf16.mxu0 0
        %5673 = vmatpush1.bf16.msra.mxu0 0
        %5674 = vmatprep.subr.bf16.mxu0 0
        %5675 = vmatpush1.bf16.msra.mxu0 0
        %5676 = vmatprep.subr.bf16.mxu0 0
        %5677 = vmatpush1.bf16.msra.mxu0 0
        %5678 = vmatprep.subr.bf16.mxu0 0
        %5679 = vmatpush1.bf16.msra.mxu0 0
        %5680 = vmatprep.subr.bf16.mxu0 0
        %5681 = vmatpush1.bf16.msra.mxu0 0
        %5682 = vmatprep.subr.bf16.mxu0 0
        %5683 = vmatpush1.bf16.msra.mxu0 0
        %5684 = vmatprep.mubr.bf16.mxu0 %v4833
        %5685 = vmatmul.mubr.bf16.gmra.mrb[0].mxu0 %v4826
        %v5686 = vpop.f32.mrb[0].mxu0
        %v5687 = vadd.f32 %v5644, %v5686
        %v5688 = vpop.f32.mrb[0].mxu0
        %v5689 = vadd.f32 %v5646, %v5688
        %v5690 = vpop.f32.mrb[0].mxu0
        %v5691 = vadd.f32 %v5648, %v5690
        %v5692 = vpop.f32.mrb[0].mxu0
        %v5693 = vadd.f32 %v5650, %v5692
        %5694 = vdwg.mxu0
        %5695 = vmatprep.subr.bf16.mxu0 %v4221
        %5696 = vmatpush1.bf16.msra.mxu0 %v4220
        %5697 = vmatprep.subr.bf16.mxu0 %v4245
        %5698 = vmatpush1.bf16.msra.mxu0 %v4244
        %5699 = vmatprep.subr.bf16.mxu0 %v4269
        %5700 = vmatpush1.bf16.msra.mxu0 %v4268
        %5701 = vmatprep.subr.bf16.mxu0 %v4293
        %5702 = vmatpush1.bf16.msra.mxu0 %v4292
        %5703 = vmatprep.subr.bf16.mxu0 %v4317
        %5704 = vmatpush1.bf16.msra.mxu0 %v4316
        %5705 = vmatprep.subr.bf16.mxu0 %v4341
        %5706 = vmatpush1.bf16.msra.mxu0 %v4340
        %5707 = vmatprep.subr.bf16.mxu0 %v4365
        %5708 = vmatpush1.bf16.msra.mxu0 %v4364
        %5709 = vmatprep.subr.bf16.mxu0 %v4389
        %5710 = vmatpush1.bf16.msra.mxu0 %v4388
        %5711 = vmatprep.subr.bf16.mxu0 %v4413
        %5712 = vmatpush1.bf16.msra.mxu0 %v4412
        %5713 = vmatprep.subr.bf16.mxu0 %v4437
        %5714 = vmatpush1.bf16.msra.mxu0 %v4436
        %5715 = vmatprep.subr.bf16.mxu0 %v4461
        %5716 = vmatpush1.bf16.msra.mxu0 %v4460
        %5717 = vmatprep.subr.bf16.mxu0 %v4485
        %5718 = vmatpush1.bf16.msra.mxu0 %v4484
        %5719 = vmatprep.subr.bf16.mxu0 %v4509
        %5720 = vmatpush1.bf16.msra.mxu0 %v4508
        %5721 = vmatprep.subr.bf16.mxu0 %v4533
        %5722 = vmatpush1.bf16.msra.mxu0 %v4532
        %5723 = vmatprep.subr.bf16.mxu0 %v4557
        %5724 = vmatpush1.bf16.msra.mxu0 %v4556
        %5725 = vmatprep.subr.bf16.mxu0 %v4581
        %5726 = vmatpush1.bf16.msra.mxu0 %v4580
        %5727 = vmatprep.mubr.bf16.mxu0 %v4825
        %5728 = vmatmul.mubr.bf16.gmra.mrb[0].mxu0 %v4824
        %v5729 = vpop.f32.mrb[0].mxu0
        %v5730 = vadd.f32 %v4805, %v5729
        %v5731 = vpop.f32.mrb[0].mxu0
        %v5732 = vadd.f32 %v4805, %v5731
        %v5733 = vpop.f32.mrb[0].mxu0
        %v5734 = vadd.f32 %v4810, %v5733
        %v5735 = vpop.f32.mrb[0].mxu0
        %v5736 = vadd.f32 %v4810, %v5735
        %5737 = vdwg.mxu0
        %5738 = vmatprep.subr.bf16.mxu0 %v4605
        %5739 = vmatpush1.bf16.msra.mxu0 %v4604
        %5740 = vmatprep.subr.bf16.mxu0 %v4629
        %5741 = vmatpush1.bf16.msra.mxu0 %v4628
        %5742 = vmatprep.subr.bf16.mxu0 %v4653
        %5743 = vmatpush1.bf16.msra.mxu0 %v4652
        %5744 = vmatprep.subr.bf16.mxu0 %v4677
        %5745 = vmatpush1.bf16.msra.mxu0 %v4676
        %5746 = vmatprep.subr.bf16.mxu0 %v4701
        %5747 = vmatpush1.bf16.msra.mxu0 %v4700
        %5748 = vmatprep.subr.bf16.mxu0 %v4725
        %5749 = vmatpush1.bf16.msra.mxu0 %v4724
        %5750 = vmatprep.subr.bf16.mxu0 %v4749
        %5751 = vmatpush1.bf16.msra.mxu0 %v4748
        %5752 = vmatprep.subr.bf16.mxu0 %v4773
        %5753 = vmatpush1.bf16.msra.mxu0 %v4772
        %5754 = vmatprep.subr.bf16.mxu0 %v4797
        %5755 = vmatpush1.bf16.msra.mxu0 %v4796
        %5756 = vmatprep.subr.bf16.mxu0 0
        %5757 = vmatpush1.bf16.msra.mxu0 0
        %5758 = vmatprep.subr.bf16.mxu0 0
        %5759 = vmatpush1.bf16.msra.mxu0 0
        %5760 = vmatprep.subr.bf16.mxu0 0
        %5761 = vmatpush1.bf16.msra.mxu0 0
        %5762 = vmatprep.subr.bf16.mxu0 0
        %5763 = vmatpush1.bf16.msra.mxu0 0
        %5764 = vmatprep.subr.bf16.mxu0 0
        %5765 = vmatpush1.bf16.msra.mxu0 0
        %5766 = vmatprep.subr.bf16.mxu0 0
        %5767 = vmatpush1.bf16.msra.mxu0 0
        %5768 = vmatprep.subr.bf16.mxu0 0
        %5769 = vmatpush1.bf16.msra.mxu0 0
        %5770 = vmatprep.mubr.bf16.mxu0 %v4833
        %5771 = vmatmul.mubr.bf16.gmra.mrb[0].mxu0 %v4826
        %v5772 = vpop.f32.mrb[0].mxu0
        %v5773 = vadd.f32 %v5730, %v5772
        %v5774 = vpop.f32.mrb[0].mxu0
        %v5775 = vadd.f32 %v5732, %v5774
        %v5776 = vpop.f32.mrb[0].mxu0
        %v5777 = vadd.f32 %v5734, %v5776
        %v5778 = vpop.f32.mrb[0].mxu0
        %v5779 = vadd.f32 %v5736, %v5778
        %5780 = vdwg.mxu0
        %5781 = vmatprep.subr.bf16.mxu0 %v4223
        %5782 = vmatpush1.bf16.msra.mxu0 %v4222
        %5783 = vmatprep.subr.bf16.mxu0 %v4247
        %5784 = vmatpush1.bf16.msra.mxu0 %v4246
        %5785 = vmatprep.subr.bf16.mxu0 %v4271
        %5786 = vmatpush1.bf16.msra.mxu0 %v4270
        %5787 = vmatprep.subr.bf16.mxu0 %v4295
        %5788 = vmatpush1.bf16.msra.mxu0 %v4294
        %5789 = vmatprep.subr.bf16.mxu0 %v4319
        %5790 = vmatpush1.bf16.msra.mxu0 %v4318
        %5791 = vmatprep.subr.bf16.mxu0 %v4343
        %5792 = vmatpush1.bf16.msra.mxu0 %v4342
        %5793 = vmatprep.subr.bf16.mxu0 %v4367
        %5794 = vmatpush1.bf16.msra.mxu0 %v4366
        %5795 = vmatprep.subr.bf16.mxu0 %v4391
        %5796 = vmatpush1.bf16.msra.mxu0 %v4390
        %5797 = vmatprep.subr.bf16.mxu0 %v4415
        %5798 = vmatpush1.bf16.msra.mxu0 %v4414
        %5799 = vmatprep.subr.bf16.mxu0 %v4439
        %5800 = vmatpush1.bf16.msra.mxu0 %v4438
        %5801 = vmatprep.subr.bf16.mxu0 %v4463
        %5802 = vmatpush1.bf16.msra.mxu0 %v4462
        %5803 = vmatprep.subr.bf16.mxu0 %v4487
        %5804 = vmatpush1.bf16.msra.mxu0 %v4486
        %5805 = vmatprep.subr.bf16.mxu0 %v4511
        %5806 = vmatpush1.bf16.msra.mxu0 %v4510
        %5807 = vmatprep.subr.bf16.mxu0 %v4535
        %5808 = vmatpush1.bf16.msra.mxu0 %v4534
        %5809 = vmatprep.subr.bf16.mxu0 %v4559
        %5810 = vmatpush1.bf16.msra.mxu0 %v4558
        %5811 = vmatprep.subr.bf16.mxu0 %v4583
        %5812 = vmatpush1.bf16.msra.mxu0 %v4582
        %5813 = vmatprep.mubr.bf16.mxu0 %v4825
        %5814 = vmatmul.mubr.bf16.gmra.mrb[0].mxu0 %v4824
        %v5815 = vpop.f32.mrb[0].mxu0
        %v5816 = vadd.f32 %v4805, %v5815
        %v5817 = vpop.f32.mrb[0].mxu0
        %v5818 = vadd.f32 %v4805, %v5817
        %v5819 = vpop.f32.mrb[0].mxu0
        %v5820 = vadd.f32 %v4810, %v5819
        %v5821 = vpop.f32.mrb[0].mxu0
        %v5822 = vadd.f32 %v4810, %v5821
        %5823 = vdwg.mxu0
        %5824 = vmatprep.subr.bf16.mxu0 %v4607
        %5825 = vmatpush1.bf16.msra.mxu0 %v4606
        %5826 = vmatprep.subr.bf16.mxu0 %v4631
        %5827 = vmatpush1.bf16.msra.mxu0 %v4630
        %5828 = vmatprep.subr.bf16.mxu0 %v4655
        %5829 = vmatpush1.bf16.msra.mxu0 %v4654
        %5830 = vmatprep.subr.bf16.mxu0 %v4679
        %5831 = vmatpush1.bf16.msra.mxu0 %v4678
        %5832 = vmatprep.subr.bf16.mxu0 %v4703
        %5833 = vmatpush1.bf16.msra.mxu0 %v4702
        %5834 = vmatprep.subr.bf16.mxu0 %v4727
        %5835 = vmatpush1.bf16.msra.mxu0 %v4726
        %5836 = vmatprep.subr.bf16.mxu0 %v4751
        %5837 = vmatpush1.bf16.msra.mxu0 %v4750
        %5838 = vmatprep.subr.bf16.mxu0 %v4775
        %5839 = vmatpush1.bf16.msra.mxu0 %v4774
        %5840 = vmatprep.subr.bf16.mxu0 %v4799
        %5841 = vmatpush1.bf16.msra.mxu0 %v4798
        %5842 = vmatprep.subr.bf16.mxu0 0
        %5843 = vmatpush1.bf16.msra.mxu0 0
        %5844 = vmatprep.subr.bf16.mxu0 0
        %5845 = vmatpush1.bf16.msra.mxu0 0
        %5846 = vmatprep.subr.bf16.mxu0 0
        %5847 = vmatpush1.bf16.msra.mxu0 0
        %5848 = vmatprep.subr.bf16.mxu0 0
        %5849 = vmatpush1.bf16.msra.mxu0 0
        %5850 = vmatprep.subr.bf16.mxu0 0
        %5851 = vmatpush1.bf16.msra.mxu0 0
        %5852 = vmatprep.subr.bf16.mxu0 0
        %5853 = vmatpush1.bf16.msra.mxu0 0
        %5854 = vmatprep.subr.bf16.mxu0 0
        %5855 = vmatpush1.bf16.msra.mxu0 0
        %5856 = vmatprep.mubr.bf16.mxu0 %v4833
        %5857 = vmatmul.mubr.bf16.gmra.mrb[0].mxu0 %v4826
        %v5858 = vpop.f32.mrb[0].mxu0
        %v5859 = vadd.f32 %v5816, %v5858
        %v5860 = vpop.f32.mrb[0].mxu0
        %v5861 = vadd.f32 %v5818, %v5860
        %v5862 = vpop.f32.mrb[0].mxu0
        %v5863 = vadd.f32 %v5820, %v5862
        %v5864 = vpop.f32.mrb[0].mxu0
        %v5865 = vadd.f32 %v5822, %v5864
        %5866 = vdwg.mxu0
        %v5867 = vmul.f32 %v4913, 0.5
        %v5868 = vmul.f32 %v4915, 0.5
        %v5869 = vmul.f32 %v4999, 0.5
        %v5870 = vmul.f32 %v5001, 0.5
        %v5871 = vmul.f32 %v5085, 0.5
        %v5872 = vmul.f32 %v5087, 0.5
        %v5873 = vmul.f32 %v5171, 0.5
        %v5874 = vmul.f32 %v5173, 0.5
        %v5875 = vmul.f32 %v5257, 0.5
        %v5876 = vmul.f32 %v5259, 0.5
        %v5877 = vmul.f32 %v5343, 0.5
        %v5878 = vmul.f32 %v5345, 0.5
        %v5879 = vmul.f32 %v5429, 0.5
        %v5880 = vmul.f32 %v5431, 0.5
        %v5881 = vmul.f32 %v5515, 0.5
        %v5882 = vmul.f32 %v5517, 0.5
        %v5883 = vmul.f32 %v5601, 0.5
        %v5884 = vmul.f32 %v5603, 0.5
        %v5885 = vmul.f32 %v5687, 0.5
        %v5886 = vmul.f32 %v5689, 0.5
        %v5887 = vmul.f32 %v5773, 0.5
        %v5888 = vmul.f32 %v5775, 0.5
        %v5889 = vmul.f32 %v5859, 0.5
        %v5890 = vmul.f32 %v5861, 0.5
        %v5891 = vmul.f32 %v4917, 0.5
        %v5892 = vmul.f32 %v4919, 0.5
        %v5893 = vmul.f32 %v5003, 0.5
        %v5894 = vmul.f32 %v5005, 0.5
        %v5895 = vmul.f32 %v5089, 0.5
        %v5896 = vmul.f32 %v5091, 0.5
        %v5897 = vmul.f32 %v5175, 0.5
        %v5898 = vmul.f32 %v5177, 0.5
        %v5899 = vmul.f32 %v5261, 0.5
        %v5900 = vmul.f32 %v5263, 0.5
        %v5901 = vmul.f32 %v5347, 0.5
        %v5902 = vmul.f32 %v5349, 0.5
        %v5903 = vmul.f32 %v5433, 0.5
        %v5904 = vmul.f32 %v5435, 0.5
        %v5905 = vmul.f32 %v5519, 0.5
        %v5906 = vmul.f32 %v5521, 0.5
        %v5907 = vmul.f32 %v5605, 0.5
        %v5908 = vmul.f32 %v5607, 0.5
        %v5909 = vmul.f32 %v5691, 0.5
        %v5910 = vmul.f32 %v5693, 0.5
        %v5911 = vmul.f32 %v5777, 0.5
        %v5912 = vmul.f32 %v5779, 0.5
        %v5913 = vmul.f32 %v5863, 0.5
        %v5914 = vmul.f32 %v5865, 0.5
        %v5915 = vmul.f32 %v4913, 0.70710677
        %v5916 = vmul.f32 %v4915, 0.70710677
        %v5917 = vmul.f32 %v4999, 0.70710677
        %v5918 = vmul.f32 %v5001, 0.70710677
        %v5919 = vmul.f32 %v5085, 0.70710677
        %v5920 = vmul.f32 %v5087, 0.70710677
        %v5921 = vmul.f32 %v5171, 0.70710677
        %v5922 = vmul.f32 %v5173, 0.70710677
        %v5923 = vmul.f32 %v5257, 0.70710677
        %v5924 = vmul.f32 %v5259, 0.70710677
        %v5925 = vmul.f32 %v5343, 0.70710677
        %v5926 = vmul.f32 %v5345, 0.70710677
        %v5927 = vmul.f32 %v5429, 0.70710677
        %v5928 = vmul.f32 %v5431, 0.70710677
        %v5929 = vmul.f32 %v5515, 0.70710677
        %v5930 = vmul.f32 %v5517, 0.70710677
        %v5931 = vmul.f32 %v5601, 0.70710677
        %v5932 = vmul.f32 %v5603, 0.70710677
        %v5933 = vmul.f32 %v5687, 0.70710677
        %v5934 = vmul.f32 %v5689, 0.70710677
        %v5935 = vmul.f32 %v5773, 0.70710677
        %v5936 = vmul.f32 %v5775, 0.70710677
        %v5937 = vmul.f32 %v5859, 0.70710677
        %v5938 = vmul.f32 %v5861, 0.70710677
        %v5939 = vmul.f32 %v4917, 0.70710677
        %v5940 = vmul.f32 %v4919, 0.70710677
        %v5941 = vmul.f32 %v5003, 0.70710677
        %v5942 = vmul.f32 %v5005, 0.70710677
        %v5943 = vmul.f32 %v5089, 0.70710677
        %v5944 = vmul.f32 %v5091, 0.70710677
        %v5945 = vmul.f32 %v5175, 0.70710677
        %v5946 = vmul.f32 %v5177, 0.70710677
        %v5947 = vmul.f32 %v5261, 0.70710677
        %v5948 = vmul.f32 %v5263, 0.70710677
        %v5949 = vmul.f32 %v5347, 0.70710677
        %v5950 = vmul.f32 %v5349, 0.70710677
        %v5951 = vmul.f32 %v5433, 0.70710677
        %v5952 = vmul.f32 %v5435, 0.70710677
        %v5953 = vmul.f32 %v5519, 0.70710677
        %v5954 = vmul.f32 %v5521, 0.70710677
        %v5955 = vmul.f32 %v5605, 0.70710677
        %v5956 = vmul.f32 %v5607, 0.70710677
        %v5957 = vmul.f32 %v5691, 0.70710677
        %v5958 = vmul.f32 %v5693, 0.70710677
        %v5959 = vmul.f32 %v5777, 0.70710677
        %v5960 = vmul.f32 %v5779, 0.70710677
        %v5961 = vmul.f32 %v5863, 0.70710677
        %v5962 = vmul.f32 %v5865, 0.70710677
        %vm5963 = vcmp.ge.f32.partialorder %v5915, 0.0
        %vm5964 = vcmp.ge.f32.partialorder %v5916, 0.0
        %vm5965 = vcmp.ge.f32.partialorder %v5917, 0.0
        %vm5966 = vcmp.ge.f32.partialorder %v5918, 0.0
        %vm5967 = vcmp.ge.f32.partialorder %v5919, 0.0
        %vm5968 = vcmp.ge.f32.partialorder %v5920, 0.0
        %vm5969 = vcmp.ge.f32.partialorder %v5921, 0.0
        %vm5970 = vcmp.ge.f32.partialorder %v5922, 0.0
        %vm5971 = vcmp.ge.f32.partialorder %v5923, 0.0
        %vm5972 = vcmp.ge.f32.partialorder %v5924, 0.0
        %vm5973 = vcmp.ge.f32.partialorder %v5925, 0.0
        %vm5974 = vcmp.ge.f32.partialorder %v5926, 0.0
        %vm5975 = vcmp.ge.f32.partialorder %v5927, 0.0
        %vm5976 = vcmp.ge.f32.partialorder %v5928, 0.0
        %vm5977 = vcmp.ge.f32.partialorder %v5929, 0.0
        %vm5978 = vcmp.ge.f32.partialorder %v5930, 0.0
        %vm5979 = vcmp.ge.f32.partialorder %v5931, 0.0
        %vm5980 = vcmp.ge.f32.partialorder %v5932, 0.0
        %vm5981 = vcmp.ge.f32.partialorder %v5933, 0.0
        %vm5982 = vcmp.ge.f32.partialorder %v5934, 0.0
        %vm5983 = vcmp.ge.f32.partialorder %v5935, 0.0
        %vm5984 = vcmp.ge.f32.partialorder %v5936, 0.0
        %vm5985 = vcmp.ge.f32.partialorder %v5937, 0.0
        %vm5986 = vcmp.ge.f32.partialorder %v5938, 0.0
        %vm5987 = vcmp.ge.f32.partialorder %v5939, 0.0
        %vm5988 = vcmp.ge.f32.partialorder %v5940, 0.0
        %vm5989 = vcmp.ge.f32.partialorder %v5941, 0.0
        %vm5990 = vcmp.ge.f32.partialorder %v5942, 0.0
        %vm5991 = vcmp.ge.f32.partialorder %v5943, 0.0
        %vm5992 = vcmp.ge.f32.partialorder %v5944, 0.0
        %vm5993 = vcmp.ge.f32.partialorder %v5945, 0.0
        %vm5994 = vcmp.ge.f32.partialorder %v5946, 0.0
        %vm5995 = vcmp.ge.f32.partialorder %v5947, 0.0
        %vm5996 = vcmp.ge.f32.partialorder %v5948, 0.0
        %vm5997 = vcmp.ge.f32.partialorder %v5949, 0.0
        %vm5998 = vcmp.ge.f32.partialorder %v5950, 0.0
        %vm5999 = vcmp.ge.f32.partialorder %v5951, 0.0
        %vm6000 = vcmp.ge.f32.partialorder %v5952, 0.0
        %vm6001 = vcmp.ge.f32.partialorder %v5953, 0.0
        %vm6002 = vcmp.ge.f32.partialorder %v5954, 0.0
        %vm6003 = vcmp.ge.f32.partialorder %v5955, 0.0
        %vm6004 = vcmp.ge.f32.partialorder %v5956, 0.0
        %vm6005 = vcmp.ge.f32.partialorder %v5957, 0.0
        %vm6006 = vcmp.ge.f32.partialorder %v5958, 0.0
        %vm6007 = vcmp.ge.f32.partialorder %v5959, 0.0
        %vm6008 = vcmp.ge.f32.partialorder %v5960, 0.0
        %vm6009 = vcmp.ge.f32.partialorder %v5961, 0.0
        %vm6010 = vcmp.ge.f32.partialorder %v5962, 0.0
        %v6011 = vsel %vm5963, 1.0, -1.0
        %v6012 = vsel %vm5964, 1.0, -1.0
        %v6013 = vsel %vm5965, 1.0, -1.0
        %v6014 = vsel %vm5966, 1.0, -1.0
        %v6015 = vsel %vm5967, 1.0, -1.0
        %v6016 = vsel %vm5968, 1.0, -1.0
        %v6017 = vsel %vm5969, 1.0, -1.0
        %v6018 = vsel %vm5970, 1.0, -1.0
        %v6019 = vsel %vm5971, 1.0, -1.0
        %v6020 = vsel %vm5972, 1.0, -1.0
        %v6021 = vsel %vm5973, 1.0, -1.0
        %v6022 = vsel %vm5974, 1.0, -1.0
        %v6023 = vsel %vm5975, 1.0, -1.0
        %v6024 = vsel %vm5976, 1.0, -1.0
        %v6025 = vsel %vm5977, 1.0, -1.0
        %v6026 = vsel %vm5978, 1.0, -1.0
        %v6027 = vsel %vm5979, 1.0, -1.0
        %v6028 = vsel %vm5980, 1.0, -1.0
        %v6029 = vsel %vm5981, 1.0, -1.0
        %v6030 = vsel %vm5982, 1.0, -1.0
        %v6031 = vsel %vm5983, 1.0, -1.0
        %v6032 = vsel %vm5984, 1.0, -1.0
        %v6033 = vsel %vm5985, 1.0, -1.0
        %v6034 = vsel %vm5986, 1.0, -1.0
        %v6035 = vsel %vm5987, 1.0, -1.0
        %v6036 = vsel %vm5988, 1.0, -1.0
        %v6037 = vsel %vm5989, 1.0, -1.0
        %v6038 = vsel %vm5990, 1.0, -1.0
        %v6039 = vsel %vm5991, 1.0, -1.0
        %v6040 = vsel %vm5992, 1.0, -1.0
        %v6041 = vsel %vm5993, 1.0, -1.0
        %v6042 = vsel %vm5994, 1.0, -1.0
        %v6043 = vsel %vm5995, 1.0, -1.0
        %v6044 = vsel %vm5996, 1.0, -1.0
        %v6045 = vsel %vm5997, 1.0, -1.0
        %v6046 = vsel %vm5998, 1.0, -1.0
        %v6047 = vsel %vm5999, 1.0, -1.0
        %v6048 = vsel %vm6000, 1.0, -1.0
        %v6049 = vsel %vm6001, 1.0, -1.0
        %v6050 = vsel %vm6002, 1.0, -1.0
        %v6051 = vsel %vm6003, 1.0, -1.0
        %v6052 = vsel %vm6004, 1.0, -1.0
        %v6053 = vsel %vm6005, 1.0, -1.0
        %v6054 = vsel %vm6006, 1.0, -1.0
        %v6055 = vsel %vm6007, 1.0, -1.0
        %v6056 = vsel %vm6008, 1.0, -1.0
        %v6057 = vsel %vm6009, 1.0, -1.0
        %v6058 = vsel %vm6010, 1.0, -1.0
        %v6059 = vand.u32 2147483647, %v5915
        %v6060 = vand.u32 2147483647, %v5916
        %v6061 = vand.u32 2147483647, %v5917
        %v6062 = vand.u32 2147483647, %v5918
        %v6063 = vand.u32 2147483647, %v5919
        %v6064 = vand.u32 2147483647, %v5920
        %v6065 = vand.u32 2147483647, %v5921
        %v6066 = vand.u32 2147483647, %v5922
        %v6067 = vand.u32 2147483647, %v5923
        %v6068 = vand.u32 2147483647, %v5924
        %v6069 = vand.u32 2147483647, %v5925
        %v6070 = vand.u32 2147483647, %v5926
        %v6071 = vand.u32 2147483647, %v5927
        %v6072 = vand.u32 2147483647, %v5928
        %v6073 = vand.u32 2147483647, %v5929
        %v6074 = vand.u32 2147483647, %v5930
        %v6075 = vand.u32 2147483647, %v5931
        %v6076 = vand.u32 2147483647, %v5932
        %v6077 = vand.u32 2147483647, %v5933
        %v6078 = vand.u32 2147483647, %v5934
        %v6079 = vand.u32 2147483647, %v5935
        %v6080 = vand.u32 2147483647, %v5936
        %v6081 = vand.u32 2147483647, %v5937
        %v6082 = vand.u32 2147483647, %v5938
        %v6083 = vand.u32 2147483647, %v5939
        %v6084 = vand.u32 2147483647, %v5940
        %v6085 = vand.u32 2147483647, %v5941
        %v6086 = vand.u32 2147483647, %v5942
        %v6087 = vand.u32 2147483647, %v5943
        %v6088 = vand.u32 2147483647, %v5944
        %v6089 = vand.u32 2147483647, %v5945
        %v6090 = vand.u32 2147483647, %v5946
        %v6091 = vand.u32 2147483647, %v5947
        %v6092 = vand.u32 2147483647, %v5948
        %v6093 = vand.u32 2147483647, %v5949
        %v6094 = vand.u32 2147483647, %v5950
        %v6095 = vand.u32 2147483647, %v5951
        %v6096 = vand.u32 2147483647, %v5952
        %v6097 = vand.u32 2147483647, %v5953
        %v6098 = vand.u32 2147483647, %v5954
        %v6099 = vand.u32 2147483647, %v5955
        %v6100 = vand.u32 2147483647, %v5956
        %v6101 = vand.u32 2147483647, %v5957
        %v6102 = vand.u32 2147483647, %v5958
        %v6103 = vand.u32 2147483647, %v5959
        %v6104 = vand.u32 2147483647, %v5960
        %v6105 = vand.u32 2147483647, %v5961
        %v6106 = vand.u32 2147483647, %v5962
        %v6107 = vmul.f32 %v6059, 0.3275911
        %v6108 = vmul.f32 %v6060, 0.3275911
        %v6109 = vmul.f32 %v6061, 0.3275911
        %v6110 = vmul.f32 %v6062, 0.3275911
        %v6111 = vmul.f32 %v6063, 0.3275911
        %v6112 = vmul.f32 %v6064, 0.3275911
        %v6113 = vmul.f32 %v6065, 0.3275911
        %v6114 = vmul.f32 %v6066, 0.3275911
        %v6115 = vmul.f32 %v6067, 0.3275911
        %v6116 = vmul.f32 %v6068, 0.3275911
        %v6117 = vmul.f32 %v6069, 0.3275911
        %v6118 = vmul.f32 %v6070, 0.3275911
        %v6119 = vmul.f32 %v6071, 0.3275911
        %v6120 = vmul.f32 %v6072, 0.3275911
        %v6121 = vmul.f32 %v6073, 0.3275911
        %v6122 = vmul.f32 %v6074, 0.3275911
        %v6123 = vmul.f32 %v6075, 0.3275911
        %v6124 = vmul.f32 %v6076, 0.3275911
        %v6125 = vmul.f32 %v6077, 0.3275911
        %v6126 = vmul.f32 %v6078, 0.3275911
        %v6127 = vmul.f32 %v6079, 0.3275911
        %v6128 = vmul.f32 %v6080, 0.3275911
        %v6129 = vmul.f32 %v6081, 0.3275911
        %v6130 = vmul.f32 %v6082, 0.3275911
        %v6131 = vmul.f32 %v6083, 0.3275911
        %v6132 = vmul.f32 %v6084, 0.3275911
        %v6133 = vmul.f32 %v6085, 0.3275911
        %v6134 = vmul.f32 %v6086, 0.3275911
        %v6135 = vmul.f32 %v6087, 0.3275911
        %v6136 = vmul.f32 %v6088, 0.3275911
        %v6137 = vmul.f32 %v6089, 0.3275911
        %v6138 = vmul.f32 %v6090, 0.3275911
        %v6139 = vmul.f32 %v6091, 0.3275911
        %v6140 = vmul.f32 %v6092, 0.3275911
        %v6141 = vmul.f32 %v6093, 0.3275911
        %v6142 = vmul.f32 %v6094, 0.3275911
        %v6143 = vmul.f32 %v6095, 0.3275911
        %v6144 = vmul.f32 %v6096, 0.3275911
        %v6145 = vmul.f32 %v6097, 0.3275911
        %v6146 = vmul.f32 %v6098, 0.3275911
        %v6147 = vmul.f32 %v6099, 0.3275911
        %v6148 = vmul.f32 %v6100, 0.3275911
        %v6149 = vmul.f32 %v6101, 0.3275911
        %v6150 = vmul.f32 %v6102, 0.3275911
        %v6151 = vmul.f32 %v6103, 0.3275911
        %v6152 = vmul.f32 %v6104, 0.3275911
        %v6153 = vmul.f32 %v6105, 0.3275911
        %v6154 = vmul.f32 %v6106, 0.3275911
        %v6155 = vadd.f32 %v6107, 1.0
        %v6156 = vadd.f32 %v6108, 1.0
        %v6157 = vadd.f32 %v6109, 1.0
        %v6158 = vadd.f32 %v6110, 1.0
        %v6159 = vadd.f32 %v6111, 1.0
        %v6160 = vadd.f32 %v6112, 1.0
        %v6161 = vadd.f32 %v6113, 1.0
        %v6162 = vadd.f32 %v6114, 1.0
        %v6163 = vadd.f32 %v6115, 1.0
        %v6164 = vadd.f32 %v6116, 1.0
        %v6165 = vadd.f32 %v6117, 1.0
        %v6166 = vadd.f32 %v6118, 1.0
        %v6167 = vadd.f32 %v6119, 1.0
        %v6168 = vadd.f32 %v6120, 1.0
        %v6169 = vadd.f32 %v6121, 1.0
        %v6170 = vadd.f32 %v6122, 1.0
        %v6171 = vadd.f32 %v6123, 1.0
        %v6172 = vadd.f32 %v6124, 1.0
        %v6173 = vadd.f32 %v6125, 1.0
        %v6174 = vadd.f32 %v6126, 1.0
        %v6175 = vadd.f32 %v6127, 1.0
        %v6176 = vadd.f32 %v6128, 1.0
        %v6177 = vadd.f32 %v6129, 1.0
        %v6178 = vadd.f32 %v6130, 1.0
        %v6179 = vadd.f32 %v6131, 1.0
        %v6180 = vadd.f32 %v6132, 1.0
        %v6181 = vadd.f32 %v6133, 1.0
        %v6182 = vadd.f32 %v6134, 1.0
        %v6183 = vadd.f32 %v6135, 1.0
        %v6184 = vadd.f32 %v6136, 1.0
        %v6185 = vadd.f32 %v6137, 1.0
        %v6186 = vadd.f32 %v6138, 1.0
        %v6187 = vadd.f32 %v6139, 1.0
        %v6188 = vadd.f32 %v6140, 1.0
        %v6189 = vadd.f32 %v6141, 1.0
        %v6190 = vadd.f32 %v6142, 1.0
        %v6191 = vadd.f32 %v6143, 1.0
        %v6192 = vadd.f32 %v6144, 1.0
        %v6193 = vadd.f32 %v6145, 1.0
        %v6194 = vadd.f32 %v6146, 1.0
        %v6195 = vadd.f32 %v6147, 1.0
        %v6196 = vadd.f32 %v6148, 1.0
        %v6197 = vadd.f32 %v6149, 1.0
        %v6198 = vadd.f32 %v6150, 1.0
        %v6199 = vadd.f32 %v6151, 1.0
        %v6200 = vadd.f32 %v6152, 1.0
        %v6201 = vadd.f32 %v6153, 1.0
        %v6202 = vadd.f32 %v6154, 1.0
        %v6203 = vrcp.pop %v6155
        %v6204 = vmul.f32 1.0, %v6203
        %v6205 = vrcp.pop %v6156
        %v6206 = vmul.f32 1.0, %v6205
        %v6207 = vrcp.pop %v6157
        %v6208 = vmul.f32 1.0, %v6207
        %v6209 = vrcp.pop %v6158
        %v6210 = vmul.f32 1.0, %v6209
        %v6211 = vrcp.pop %v6159
        %v6212 = vmul.f32 1.0, %v6211
        %v6213 = vrcp.pop %v6160
        %v6214 = vmul.f32 1.0, %v6213
        %v6215 = vrcp.pop %v6161
        %v6216 = vmul.f32 1.0, %v6215
        %v6217 = vrcp.pop %v6162
        %v6218 = vmul.f32 1.0, %v6217
        %v6219 = vrcp.pop %v6163
        %v6220 = vmul.f32 1.0, %v6219
        %v6221 = vrcp.pop %v6164
        %v6222 = vmul.f32 1.0, %v6221
        %v6223 = vrcp.pop %v6165
        %v6224 = vmul.f32 1.0, %v6223
        %v6225 = vrcp.pop %v6166
        %v6226 = vmul.f32 1.0, %v6225
        %v6227 = vrcp.pop %v6167
        %v6228 = vmul.f32 1.0, %v6227
        %v6229 = vrcp.pop %v6168
        %v6230 = vmul.f32 1.0, %v6229
        %v6231 = vrcp.pop %v6169
        %v6232 = vmul.f32 1.0, %v6231
        %v6233 = vrcp.pop %v6170
        %v6234 = vmul.f32 1.0, %v6233
        %v6235 = vrcp.pop %v6171
        %v6236 = vmul.f32 1.0, %v6235
        %v6237 = vrcp.pop %v6172
        %v6238 = vmul.f32 1.0, %v6237
        %v6239 = vrcp.pop %v6173
        %v6240 = vmul.f32 1.0, %v6239
        %v6241 = vrcp.pop %v6174
        %v6242 = vmul.f32 1.0, %v6241
        %v6243 = vrcp.pop %v6175
        %v6244 = vmul.f32 1.0, %v6243
        %v6245 = vrcp.pop %v6176
        %v6246 = vmul.f32 1.0, %v6245
        %v6247 = vrcp.pop %v6177
        %v6248 = vmul.f32 1.0, %v6247
        %v6249 = vrcp.pop %v6178
        %v6250 = vmul.f32 1.0, %v6249
        %v6251 = vrcp.pop %v6179
        %v6252 = vmul.f32 1.0, %v6251
        %v6253 = vrcp.pop %v6180
        %v6254 = vmul.f32 1.0, %v6253
        %v6255 = vrcp.pop %v6181
        %v6256 = vmul.f32 1.0, %v6255
        %v6257 = vrcp.pop %v6182
        %v6258 = vmul.f32 1.0, %v6257
        %v6259 = vrcp.pop %v6183
        %v6260 = vmul.f32 1.0, %v6259
        %v6261 = vrcp.pop %v6184
        %v6262 = vmul.f32 1.0, %v6261
        %v6263 = vrcp.pop %v6185
        %v6264 = vmul.f32 1.0, %v6263
        %v6265 = vrcp.pop %v6186
        %v6266 = vmul.f32 1.0, %v6265
        %v6267 = vrcp.pop %v6187
        %v6268 = vmul.f32 1.0, %v6267
        %v6269 = vrcp.pop %v6188
        %v6270 = vmul.f32 1.0, %v6269
        %v6271 = vrcp.pop %v6189
        %v6272 = vmul.f32 1.0, %v6271
        %v6273 = vrcp.pop %v6190
        %v6274 = vmul.f32 1.0, %v6273
        %v6275 = vrcp.pop %v6191
        %v6276 = vmul.f32 1.0, %v6275
        %v6277 = vrcp.pop %v6192
        %v6278 = vmul.f32 1.0, %v6277
        %v6279 = vrcp.pop %v6193
        %v6280 = vmul.f32 1.0, %v6279
        %v6281 = vrcp.pop %v6194
        %v6282 = vmul.f32 1.0, %v6281
        %v6283 = vrcp.pop %v6195
        %v6284 = vmul.f32 1.0, %v6283
        %v6285 = vrcp.pop %v6196
        %v6286 = vmul.f32 1.0, %v6285
        %v6287 = vrcp.pop %v6197
        %v6288 = vmul.f32 1.0, %v6287
        %v6289 = vrcp.pop %v6198
        %v6290 = vmul.f32 1.0, %v6289
        %v6291 = vrcp.pop %v6199
        %v6292 = vmul.f32 1.0, %v6291
        %v6293 = vrcp.pop %v6200
        %v6294 = vmul.f32 1.0, %v6293
        %v6295 = vrcp.pop %v6201
        %v6296 = vmul.f32 1.0, %v6295
        %v6297 = vrcp.pop %v6202
        %v6298 = vmul.f32 1.0, %v6297
        %v6299 = vmul.f32 %v6204, 1.0614054
        %v6300 = vmul.f32 %v6206, 1.0614054
        %v6301 = vmul.f32 %v6208, 1.0614054
        %v6302 = vmul.f32 %v6210, 1.0614054
        %v6303 = vmul.f32 %v6212, 1.0614054
        %v6304 = vmul.f32 %v6214, 1.0614054
        %v6305 = vmul.f32 %v6216, 1.0614054
        %v6306 = vmul.f32 %v6218, 1.0614054
        %v6307 = vmul.f32 %v6220, 1.0614054
        %v6308 = vmul.f32 %v6222, 1.0614054
        %v6309 = vmul.f32 %v6224, 1.0614054
        %v6310 = vmul.f32 %v6226, 1.0614054
        %v6311 = vmul.f32 %v6228, 1.0614054
        %v6312 = vmul.f32 %v6230, 1.0614054
        %v6313 = vmul.f32 %v6232, 1.0614054
        %v6314 = vmul.f32 %v6234, 1.0614054
        %v6315 = vmul.f32 %v6236, 1.0614054
        %v6316 = vmul.f32 %v6238, 1.0614054
        %v6317 = vmul.f32 %v6240, 1.0614054
        %v6318 = vmul.f32 %v6242, 1.0614054
        %v6319 = vmul.f32 %v6244, 1.0614054
        %v6320 = vmul.f32 %v6246, 1.0614054
        %v6321 = vmul.f32 %v6248, 1.0614054
        %v6322 = vmul.f32 %v6250, 1.0614054
        %v6323 = vmul.f32 %v6252, 1.0614054
        %v6324 = vmul.f32 %v6254, 1.0614054
        %v6325 = vmul.f32 %v6256, 1.0614054
        %v6326 = vmul.f32 %v6258, 1.0614054
        %v6327 = vmul.f32 %v6260, 1.0614054
        %v6328 = vmul.f32 %v6262, 1.0614054
        %v6329 = vmul.f32 %v6264, 1.0614054
        %v6330 = vmul.f32 %v6266, 1.0614054
        %v6331 = vmul.f32 %v6268, 1.0614054
        %v6332 = vmul.f32 %v6270, 1.0614054
        %v6333 = vmul.f32 %v6272, 1.0614054
        %v6334 = vmul.f32 %v6274, 1.0614054
        %v6335 = vmul.f32 %v6276, 1.0614054
        %v6336 = vmul.f32 %v6278, 1.0614054
        %v6337 = vmul.f32 %v6280, 1.0614054
        %v6338 = vmul.f32 %v6282, 1.0614054
        %v6339 = vmul.f32 %v6284, 1.0614054
        %v6340 = vmul.f32 %v6286, 1.0614054
        %v6341 = vmul.f32 %v6288, 1.0614054
        %v6342 = vmul.f32 %v6290, 1.0614054
        %v6343 = vmul.f32 %v6292, 1.0614054
        %v6344 = vmul.f32 %v6294, 1.0614054
        %v6345 = vmul.f32 %v6296, 1.0614054
        %v6346 = vmul.f32 %v6298, 1.0614054
        %v6347 = vadd.f32 %v6299, -1.4531521
        %v6348 = vadd.f32 %v6300, -1.4531521
        %v6349 = vadd.f32 %v6301, -1.4531521
        %v6350 = vadd.f32 %v6302, -1.4531521
        %v6351 = vadd.f32 %v6303, -1.4531521
        %v6352 = vadd.f32 %v6304, -1.4531521
        %v6353 = vadd.f32 %v6305, -1.4531521
        %v6354 = vadd.f32 %v6306, -1.4531521
        %v6355 = vadd.f32 %v6307, -1.4531521
        %v6356 = vadd.f32 %v6308, -1.4531521
        %v6357 = vadd.f32 %v6309, -1.4531521
        %v6358 = vadd.f32 %v6310, -1.4531521
        %v6359 = vadd.f32 %v6311, -1.4531521
        %v6360 = vadd.f32 %v6312, -1.4531521
        %v6361 = vadd.f32 %v6313, -1.4531521
        %v6362 = vadd.f32 %v6314, -1.4531521
        %v6363 = vadd.f32 %v6315, -1.4531521
        %v6364 = vadd.f32 %v6316, -1.4531521
        %v6365 = vadd.f32 %v6317, -1.4531521
        %v6366 = vadd.f32 %v6318, -1.4531521
        %v6367 = vadd.f32 %v6319, -1.4531521
        %v6368 = vadd.f32 %v6320, -1.4531521
        %v6369 = vadd.f32 %v6321, -1.4531521
        %v6370 = vadd.f32 %v6322, -1.4531521
        %v6371 = vadd.f32 %v6323, -1.4531521
        %v6372 = vadd.f32 %v6324, -1.4531521
        %v6373 = vadd.f32 %v6325, -1.4531521
        %v6374 = vadd.f32 %v6326, -1.4531521
        %v6375 = vadd.f32 %v6327, -1.4531521
        %v6376 = vadd.f32 %v6328, -1.4531521
        %v6377 = vadd.f32 %v6329, -1.4531521
        %v6378 = vadd.f32 %v6330, -1.4531521
        %v6379 = vadd.f32 %v6331, -1.4531521
        %v6380 = vadd.f32 %v6332, -1.4531521
        %v6381 = vadd.f32 %v6333, -1.4531521
        %v6382 = vadd.f32 %v6334, -1.4531521
        %v6383 = vadd.f32 %v6335, -1.4531521
        %v6384 = vadd.f32 %v6336, -1.4531521
        %v6385 = vadd.f32 %v6337, -1.4531521
        %v6386 = vadd.f32 %v6338, -1.4531521
        %v6387 = vadd.f32 %v6339, -1.4531521
        %v6388 = vadd.f32 %v6340, -1.4531521
        %v6389 = vadd.f32 %v6341, -1.4531521
        %v6390 = vadd.f32 %v6342, -1.4531521
        %v6391 = vadd.f32 %v6343, -1.4531521
        %v6392 = vadd.f32 %v6344, -1.4531521
        %v6393 = vadd.f32 %v6345, -1.4531521
        %v6394 = vadd.f32 %v6346, -1.4531521
        %v6395 = vmul.f32 %v6347, %v6204
        %v6396 = vmul.f32 %v6348, %v6206
        %v6397 = vmul.f32 %v6349, %v6208
        %v6398 = vmul.f32 %v6350, %v6210
        %v6399 = vmul.f32 %v6351, %v6212
        %v6400 = vmul.f32 %v6352, %v6214
        %v6401 = vmul.f32 %v6353, %v6216
        %v6402 = vmul.f32 %v6354, %v6218
        %v6403 = vmul.f32 %v6355, %v6220
        %v6404 = vmul.f32 %v6356, %v6222
        %v6405 = vmul.f32 %v6357, %v6224
        %v6406 = vmul.f32 %v6358, %v6226
        %v6407 = vmul.f32 %v6359, %v6228
        %v6408 = vmul.f32 %v6360, %v6230
        %v6409 = vmul.f32 %v6361, %v6232
        %v6410 = vmul.f32 %v6362, %v6234
        %v6411 = vmul.f32 %v6363, %v6236
        %v6412 = vmul.f32 %v6364, %v6238
        %v6413 = vmul.f32 %v6365, %v6240
        %v6414 = vmul.f32 %v6366, %v6242
        %v6415 = vmul.f32 %v6367, %v6244
        %v6416 = vmul.f32 %v6368, %v6246
        %v6417 = vmul.f32 %v6369, %v6248
        %v6418 = vmul.f32 %v6370, %v6250
        %v6419 = vmul.f32 %v6371, %v6252
        %v6420 = vmul.f32 %v6372, %v6254
        %v6421 = vmul.f32 %v6373, %v6256
        %v6422 = vmul.f32 %v6374, %v6258
        %v6423 = vmul.f32 %v6375, %v6260
        %v6424 = vmul.f32 %v6376, %v6262
        %v6425 = vmul.f32 %v6377, %v6264
        %v6426 = vmul.f32 %v6378, %v6266
        %v6427 = vmul.f32 %v6379, %v6268
        %v6428 = vmul.f32 %v6380, %v6270
        %v6429 = vmul.f32 %v6381, %v6272
        %v6430 = vmul.f32 %v6382, %v6274
        %v6431 = vmul.f32 %v6383, %v6276
        %v6432 = vmul.f32 %v6384, %v6278
        %v6433 = vmul.f32 %v6385, %v6280
        %v6434 = vmul.f32 %v6386, %v6282
        %v6435 = vmul.f32 %v6387, %v6284
        %v6436 = vmul.f32 %v6388, %v6286
        %v6437 = vmul.f32 %v6389, %v6288
        %v6438 = vmul.f32 %v6390, %v6290
        %v6439 = vmul.f32 %v6391, %v6292
        %v6440 = vmul.f32 %v6392, %v6294
        %v6441 = vmul.f32 %v6393, %v6296
        %v6442 = vmul.f32 %v6394, %v6298
        %v6443 = vadd.f32 %v6395, 1.4214138
        %v6444 = vadd.f32 %v6396, 1.4214138
        %v6445 = vadd.f32 %v6397, 1.4214138
        %v6446 = vadd.f32 %v6398, 1.4214138
        %v6447 = vadd.f32 %v6399, 1.4214138
        %v6448 = vadd.f32 %v6400, 1.4214138
        %v6449 = vadd.f32 %v6401, 1.4214138
        %v6450 = vadd.f32 %v6402, 1.4214138
        %v6451 = vadd.f32 %v6403, 1.4214138
        %v6452 = vadd.f32 %v6404, 1.4214138
        %v6453 = vadd.f32 %v6405, 1.4214138
        %v6454 = vadd.f32 %v6406, 1.4214138
        %v6455 = vadd.f32 %v6407, 1.4214138
        %v6456 = vadd.f32 %v6408, 1.4214138
        %v6457 = vadd.f32 %v6409, 1.4214138
        %v6458 = vadd.f32 %v6410, 1.4214138
        %v6459 = vadd.f32 %v6411, 1.4214138
        %v6460 = vadd.f32 %v6412, 1.4214138
        %v6461 = vadd.f32 %v6413, 1.4214138
        %v6462 = vadd.f32 %v6414, 1.4214138
        %v6463 = vadd.f32 %v6415, 1.4214138
        %v6464 = vadd.f32 %v6416, 1.4214138
        %v6465 = vadd.f32 %v6417, 1.4214138
        %v6466 = vadd.f32 %v6418, 1.4214138
        %v6467 = vadd.f32 %v6419, 1.4214138
        %v6468 = vadd.f32 %v6420, 1.4214138
        %v6469 = vadd.f32 %v6421, 1.4214138
        %v6470 = vadd.f32 %v6422, 1.4214138
        %v6471 = vadd.f32 %v6423, 1.4214138
        %v6472 = vadd.f32 %v6424, 1.4214138
        %v6473 = vadd.f32 %v6425, 1.4214138
        %v6474 = vadd.f32 %v6426, 1.4214138
        %v6475 = vadd.f32 %v6427, 1.4214138
        %v6476 = vadd.f32 %v6428, 1.4214138
        %v6477 = vadd.f32 %v6429, 1.4214138
        %v6478 = vadd.f32 %v6430, 1.4214138
        %v6479 = vadd.f32 %v6431, 1.4214138
        %v6480 = vadd.f32 %v6432, 1.4214138
        %v6481 = vadd.f32 %v6433, 1.4214138
        %v6482 = vadd.f32 %v6434, 1.4214138
        %v6483 = vadd.f32 %v6435, 1.4214138
        %v6484 = vadd.f32 %v6436, 1.4214138
        %v6485 = vadd.f32 %v6437, 1.4214138
        %v6486 = vadd.f32 %v6438, 1.4214138
        %v6487 = vadd.f32 %v6439, 1.4214138
        %v6488 = vadd.f32 %v6440, 1.4214138
        %v6489 = vadd.f32 %v6441, 1.4214138
        %v6490 = vadd.f32 %v6442, 1.4214138
        %v6491 = vmul.f32 %v6443, %v6204
        %v6492 = vmul.f32 %v6444, %v6206
        %v6493 = vmul.f32 %v6445, %v6208
        %v6494 = vmul.f32 %v6446, %v6210
        %v6495 = vmul.f32 %v6447, %v6212
        %v6496 = vmul.f32 %v6448, %v6214
        %v6497 = vmul.f32 %v6449, %v6216
        %v6498 = vmul.f32 %v6450, %v6218
        %v6499 = vmul.f32 %v6451, %v6220
        %v6500 = vmul.f32 %v6452, %v6222
        %v6501 = vmul.f32 %v6453, %v6224
        %v6502 = vmul.f32 %v6454, %v6226
        %v6503 = vmul.f32 %v6455, %v6228
        %v6504 = vmul.f32 %v6456, %v6230
        %v6505 = vmul.f32 %v6457, %v6232
        %v6506 = vmul.f32 %v6458, %v6234
        %v6507 = vmul.f32 %v6459, %v6236
        %v6508 = vmul.f32 %v6460, %v6238
        %v6509 = vmul.f32 %v6461, %v6240
        %v6510 = vmul.f32 %v6462, %v6242
        %v6511 = vmul.f32 %v6463, %v6244
        %v6512 = vmul.f32 %v6464, %v6246
        %v6513 = vmul.f32 %v6465, %v6248
        %v6514 = vmul.f32 %v6466, %v6250
        %v6515 = vmul.f32 %v6467, %v6252
        %v6516 = vmul.f32 %v6468, %v6254
        %v6517 = vmul.f32 %v6469, %v6256
        %v6518 = vmul.f32 %v6470, %v6258
        %v6519 = vmul.f32 %v6471, %v6260
        %v6520 = vmul.f32 %v6472, %v6262
        %v6521 = vmul.f32 %v6473, %v6264
        %v6522 = vmul.f32 %v6474, %v6266
        %v6523 = vmul.f32 %v6475, %v6268
        %v6524 = vmul.f32 %v6476, %v6270
        %v6525 = vmul.f32 %v6477, %v6272
        %v6526 = vmul.f32 %v6478, %v6274
        %v6527 = vmul.f32 %v6479, %v6276
        %v6528 = vmul.f32 %v6480, %v6278
        %v6529 = vmul.f32 %v6481, %v6280
        %v6530 = vmul.f32 %v6482, %v6282
        %v6531 = vmul.f32 %v6483, %v6284
        %v6532 = vmul.f32 %v6484, %v6286
        %v6533 = vmul.f32 %v6485, %v6288
        %v6534 = vmul.f32 %v6486, %v6290
        %v6535 = vmul.f32 %v6487, %v6292
        %v6536 = vmul.f32 %v6488, %v6294
        %v6537 = vmul.f32 %v6489, %v6296
        %v6538 = vmul.f32 %v6490, %v6298
        %v6539 = vadd.f32 %v6491, -0.28449672
        %v6540 = vadd.f32 %v6492, -0.28449672
        %v6541 = vadd.f32 %v6493, -0.28449672
        %v6542 = vadd.f32 %v6494, -0.28449672
        %v6543 = vadd.f32 %v6495, -0.28449672
        %v6544 = vadd.f32 %v6496, -0.28449672
        %v6545 = vadd.f32 %v6497, -0.28449672
        %v6546 = vadd.f32 %v6498, -0.28449672
        %v6547 = vadd.f32 %v6499, -0.28449672
        %v6548 = vadd.f32 %v6500, -0.28449672
        %v6549 = vadd.f32 %v6501, -0.28449672
        %v6550 = vadd.f32 %v6502, -0.28449672
        %v6551 = vadd.f32 %v6503, -0.28449672
        %v6552 = vadd.f32 %v6504, -0.28449672
        %v6553 = vadd.f32 %v6505, -0.28449672
        %v6554 = vadd.f32 %v6506, -0.28449672
        %v6555 = vadd.f32 %v6507, -0.28449672
        %v6556 = vadd.f32 %v6508, -0.28449672
        %v6557 = vadd.f32 %v6509, -0.28449672
        %v6558 = vadd.f32 %v6510, -0.28449672
        %v6559 = vadd.f32 %v6511, -0.28449672
        %v6560 = vadd.f32 %v6512, -0.28449672
        %v6561 = vadd.f32 %v6513, -0.28449672
        %v6562 = vadd.f32 %v6514, -0.28449672
        %v6563 = vadd.f32 %v6515, -0.28449672
        %v6564 = vadd.f32 %v6516, -0.28449672
        %v6565 = vadd.f32 %v6517, -0.28449672
        %v6566 = vadd.f32 %v6518, -0.28449672
        %v6567 = vadd.f32 %v6519, -0.28449672
        %v6568 = vadd.f32 %v6520, -0.28449672
        %v6569 = vadd.f32 %v6521, -0.28449672
        %v6570 = vadd.f32 %v6522, -0.28449672
        %v6571 = vadd.f32 %v6523, -0.28449672
        %v6572 = vadd.f32 %v6524, -0.28449672
        %v6573 = vadd.f32 %v6525, -0.28449672
        %v6574 = vadd.f32 %v6526, -0.28449672
        %v6575 = vadd.f32 %v6527, -0.28449672
        %v6576 = vadd.f32 %v6528, -0.28449672
        %v6577 = vadd.f32 %v6529, -0.28449672
        %v6578 = vadd.f32 %v6530, -0.28449672
        %v6579 = vadd.f32 %v6531, -0.28449672
        %v6580 = vadd.f32 %v6532, -0.28449672
        %v6581 = vadd.f32 %v6533, -0.28449672
        %v6582 = vadd.f32 %v6534, -0.28449672
        %v6583 = vadd.f32 %v6535, -0.28449672
        %v6584 = vadd.f32 %v6536, -0.28449672
        %v6585 = vadd.f32 %v6537, -0.28449672
        %v6586 = vadd.f32 %v6538, -0.28449672
        %v6587 = vmul.f32 %v6539, %v6204
        %v6588 = vmul.f32 %v6540, %v6206
        %v6589 = vmul.f32 %v6541, %v6208
        %v6590 = vmul.f32 %v6542, %v6210
        %v6591 = vmul.f32 %v6543, %v6212
        %v6592 = vmul.f32 %v6544, %v6214
        %v6593 = vmul.f32 %v6545, %v6216
        %v6594 = vmul.f32 %v6546, %v6218
        %v6595 = vmul.f32 %v6547, %v6220
        %v6596 = vmul.f32 %v6548, %v6222
        %v6597 = vmul.f32 %v6549, %v6224
        %v6598 = vmul.f32 %v6550, %v6226
        %v6599 = vmul.f32 %v6551, %v6228
        %v6600 = vmul.f32 %v6552, %v6230
        %v6601 = vmul.f32 %v6553, %v6232
        %v6602 = vmul.f32 %v6554, %v6234
        %v6603 = vmul.f32 %v6555, %v6236
        %v6604 = vmul.f32 %v6556, %v6238
        %v6605 = vmul.f32 %v6557, %v6240
        %v6606 = vmul.f32 %v6558, %v6242
        %v6607 = vmul.f32 %v6559, %v6244
        %v6608 = vmul.f32 %v6560, %v6246
        %v6609 = vmul.f32 %v6561, %v6248
        %v6610 = vmul.f32 %v6562, %v6250
        %v6611 = vmul.f32 %v6563, %v6252
        %v6612 = vmul.f32 %v6564, %v6254
        %v6613 = vmul.f32 %v6565, %v6256
        %v6614 = vmul.f32 %v6566, %v6258
        %v6615 = vmul.f32 %v6567, %v6260
        %v6616 = vmul.f32 %v6568, %v6262
        %v6617 = vmul.f32 %v6569, %v6264
        %v6618 = vmul.f32 %v6570, %v6266
        %v6619 = vmul.f32 %v6571, %v6268
        %v6620 = vmul.f32 %v6572, %v6270
        %v6621 = vmul.f32 %v6573, %v6272
        %v6622 = vmul.f32 %v6574, %v6274
        %v6623 = vmul.f32 %v6575, %v6276
        %v6624 = vmul.f32 %v6576, %v6278
        %v6625 = vmul.f32 %v6577, %v6280
        %v6626 = vmul.f32 %v6578, %v6282
        %v6627 = vmul.f32 %v6579, %v6284
        %v6628 = vmul.f32 %v6580, %v6286
        %v6629 = vmul.f32 %v6581, %v6288
        %v6630 = vmul.f32 %v6582, %v6290
        %v6631 = vmul.f32 %v6583, %v6292
        %v6632 = vmul.f32 %v6584, %v6294
        %v6633 = vmul.f32 %v6585, %v6296
        %v6634 = vmul.f32 %v6586, %v6298
        %v6635 = vadd.f32 %v6587, 0.2548296
        %v6636 = vadd.f32 %v6588, 0.2548296
        %v6637 = vadd.f32 %v6589, 0.2548296
        %v6638 = vadd.f32 %v6590, 0.2548296
        %v6639 = vadd.f32 %v6591, 0.2548296
        %v6640 = vadd.f32 %v6592, 0.2548296
        %v6641 = vadd.f32 %v6593, 0.2548296
        %v6642 = vadd.f32 %v6594, 0.2548296
        %v6643 = vadd.f32 %v6595, 0.2548296
        %v6644 = vadd.f32 %v6596, 0.2548296
        %v6645 = vadd.f32 %v6597, 0.2548296
        %v6646 = vadd.f32 %v6598, 0.2548296
        %v6647 = vadd.f32 %v6599, 0.2548296
        %v6648 = vadd.f32 %v6600, 0.2548296
        %v6649 = vadd.f32 %v6601, 0.2548296
        %v6650 = vadd.f32 %v6602, 0.2548296
        %v6651 = vadd.f32 %v6603, 0.2548296
        %v6652 = vadd.f32 %v6604, 0.2548296
        %v6653 = vadd.f32 %v6605, 0.2548296
        %v6654 = vadd.f32 %v6606, 0.2548296
        %v6655 = vadd.f32 %v6607, 0.2548296
        %v6656 = vadd.f32 %v6608, 0.2548296
        %v6657 = vadd.f32 %v6609, 0.2548296
        %v6658 = vadd.f32 %v6610, 0.2548296
        %v6659 = vadd.f32 %v6611, 0.2548296
        %v6660 = vadd.f32 %v6612, 0.2548296
        %v6661 = vadd.f32 %v6613, 0.2548296
        %v6662 = vadd.f32 %v6614, 0.2548296
        %v6663 = vadd.f32 %v6615, 0.2548296
        %v6664 = vadd.f32 %v6616, 0.2548296
        %v6665 = vadd.f32 %v6617, 0.2548296
        %v6666 = vadd.f32 %v6618, 0.2548296
        %v6667 = vadd.f32 %v6619, 0.2548296
        %v6668 = vadd.f32 %v6620, 0.2548296
        %v6669 = vadd.f32 %v6621, 0.2548296
        %v6670 = vadd.f32 %v6622, 0.2548296
        %v6671 = vadd.f32 %v6623, 0.2548296
        %v6672 = vadd.f32 %v6624, 0.2548296
        %v6673 = vadd.f32 %v6625, 0.2548296
        %v6674 = vadd.f32 %v6626, 0.2548296
        %v6675 = vadd.f32 %v6627, 0.2548296
        %v6676 = vadd.f32 %v6628, 0.2548296
        %v6677 = vadd.f32 %v6629, 0.2548296
        %v6678 = vadd.f32 %v6630, 0.2548296
        %v6679 = vadd.f32 %v6631, 0.2548296
        %v6680 = vadd.f32 %v6632, 0.2548296
        %v6681 = vadd.f32 %v6633, 0.2548296
        %v6682 = vadd.f32 %v6634, 0.2548296
        %v6683 = vmul.f32 %v6635, %v6204
        %v6684 = vmul.f32 %v6636, %v6206
        %v6685 = vmul.f32 %v6637, %v6208
        %v6686 = vmul.f32 %v6638, %v6210
        %v6687 = vmul.f32 %v6639, %v6212
        %v6688 = vmul.f32 %v6640, %v6214
        %v6689 = vmul.f32 %v6641, %v6216
        %v6690 = vmul.f32 %v6642, %v6218
        %v6691 = vmul.f32 %v6643, %v6220
        %v6692 = vmul.f32 %v6644, %v6222
        %v6693 = vmul.f32 %v6645, %v6224
        %v6694 = vmul.f32 %v6646, %v6226
        %v6695 = vmul.f32 %v6647, %v6228
        %v6696 = vmul.f32 %v6648, %v6230
        %v6697 = vmul.f32 %v6649, %v6232
        %v6698 = vmul.f32 %v6650, %v6234
        %v6699 = vmul.f32 %v6651, %v6236
        %v6700 = vmul.f32 %v6652, %v6238
        %v6701 = vmul.f32 %v6653, %v6240
        %v6702 = vmul.f32 %v6654, %v6242
        %v6703 = vmul.f32 %v6655, %v6244
        %v6704 = vmul.f32 %v6656, %v6246
        %v6705 = vmul.f32 %v6657, %v6248
        %v6706 = vmul.f32 %v6658, %v6250
        %v6707 = vmul.f32 %v6659, %v6252
        %v6708 = vmul.f32 %v6660, %v6254
        %v6709 = vmul.f32 %v6661, %v6256
        %v6710 = vmul.f32 %v6662, %v6258
        %v6711 = vmul.f32 %v6663, %v6260
        %v6712 = vmul.f32 %v6664, %v6262
        %v6713 = vmul.f32 %v6665, %v6264
        %v6714 = vmul.f32 %v6666, %v6266
        %v6715 = vmul.f32 %v6667, %v6268
        %v6716 = vmul.f32 %v6668, %v6270
        %v6717 = vmul.f32 %v6669, %v6272
        %v6718 = vmul.f32 %v6670, %v6274
        %v6719 = vmul.f32 %v6671, %v6276
        %v6720 = vmul.f32 %v6672, %v6278
        %v6721 = vmul.f32 %v6673, %v6280
        %v6722 = vmul.f32 %v6674, %v6282
        %v6723 = vmul.f32 %v6675, %v6284
        %v6724 = vmul.f32 %v6676, %v6286
        %v6725 = vmul.f32 %v6677, %v6288
        %v6726 = vmul.f32 %v6678, %v6290
        %v6727 = vmul.f32 %v6679, %v6292
        %v6728 = vmul.f32 %v6680, %v6294
        %v6729 = vmul.f32 %v6681, %v6296
        %v6730 = vmul.f32 %v6682, %v6298
        %v6731 = vsub.f32 0.0, %v6059
        %v6732 = vsub.f32 0.0, %v6060
        %v6733 = vsub.f32 0.0, %v6061
        %v6734 = vsub.f32 0.0, %v6062
        %v6735 = vsub.f32 0.0, %v6063
        %v6736 = vsub.f32 0.0, %v6064
        %v6737 = vsub.f32 0.0, %v6065
        %v6738 = vsub.f32 0.0, %v6066
        %v6739 = vsub.f32 0.0, %v6067
        %v6740 = vsub.f32 0.0, %v6068
        %v6741 = vsub.f32 0.0, %v6069
        %v6742 = vsub.f32 0.0, %v6070
        %v6743 = vsub.f32 0.0, %v6071
        %v6744 = vsub.f32 0.0, %v6072
        %v6745 = vsub.f32 0.0, %v6073
        %v6746 = vsub.f32 0.0, %v6074
        %v6747 = vsub.f32 0.0, %v6075
        %v6748 = vsub.f32 0.0, %v6076
        %v6749 = vsub.f32 0.0, %v6077
        %v6750 = vsub.f32 0.0, %v6078
        %v6751 = vsub.f32 0.0, %v6079
        %v6752 = vsub.f32 0.0, %v6080
        %v6753 = vsub.f32 0.0, %v6081
        %v6754 = vsub.f32 0.0, %v6082
        %v6755 = vsub.f32 0.0, %v6083
        %v6756 = vsub.f32 0.0, %v6084
        %v6757 = vsub.f32 0.0, %v6085
        %v6758 = vsub.f32 0.0, %v6086
        %v6759 = vsub.f32 0.0, %v6087
        %v6760 = vsub.f32 0.0, %v6088
        %v6761 = vsub.f32 0.0, %v6089
        %v6762 = vsub.f32 0.0, %v6090
        %v6763 = vsub.f32 0.0, %v6091
        %v6764 = vsub.f32 0.0, %v6092
        %v6765 = vsub.f32 0.0, %v6093
        %v6766 = vsub.f32 0.0, %v6094
        %v6767 = vsub.f32 0.0, %v6095
        %v6768 = vsub.f32 0.0, %v6096
        %v6769 = vsub.f32 0.0, %v6097
        %v6770 = vsub.f32 0.0, %v6098
        %v6771 = vsub.f32 0.0, %v6099
        %v6772 = vsub.f32 0.0, %v6100
        %v6773 = vsub.f32 0.0, %v6101
        %v6774 = vsub.f32 0.0, %v6102
        %v6775 = vsub.f32 0.0, %v6103
        %v6776 = vsub.f32 0.0, %v6104
        %v6777 = vsub.f32 0.0, %v6105
        %v6778 = vsub.f32 0.0, %v6106
        %v6779 = vmul.f32 %v6731, %v6059
        %v6780 = vmul.f32 %v6732, %v6060
        %v6781 = vmul.f32 %v6733, %v6061
        %v6782 = vmul.f32 %v6734, %v6062
        %v6783 = vmul.f32 %v6735, %v6063
        %v6784 = vmul.f32 %v6736, %v6064
        %v6785 = vmul.f32 %v6737, %v6065
        %v6786 = vmul.f32 %v6738, %v6066
        %v6787 = vmul.f32 %v6739, %v6067
        %v6788 = vmul.f32 %v6740, %v6068
        %v6789 = vmul.f32 %v6741, %v6069
        %v6790 = vmul.f32 %v6742, %v6070
        %v6791 = vmul.f32 %v6743, %v6071
        %v6792 = vmul.f32 %v6744, %v6072
        %v6793 = vmul.f32 %v6745, %v6073
        %v6794 = vmul.f32 %v6746, %v6074
        %v6795 = vmul.f32 %v6747, %v6075
        %v6796 = vmul.f32 %v6748, %v6076
        %v6797 = vmul.f32 %v6749, %v6077
        %v6798 = vmul.f32 %v6750, %v6078
        %v6799 = vmul.f32 %v6751, %v6079
        %v6800 = vmul.f32 %v6752, %v6080
        %v6801 = vmul.f32 %v6753, %v6081
        %v6802 = vmul.f32 %v6754, %v6082
        %v6803 = vmul.f32 %v6755, %v6083
        %v6804 = vmul.f32 %v6756, %v6084
        %v6805 = vmul.f32 %v6757, %v6085
        %v6806 = vmul.f32 %v6758, %v6086
        %v6807 = vmul.f32 %v6759, %v6087
        %v6808 = vmul.f32 %v6760, %v6088
        %v6809 = vmul.f32 %v6761, %v6089
        %v6810 = vmul.f32 %v6762, %v6090
        %v6811 = vmul.f32 %v6763, %v6091
        %v6812 = vmul.f32 %v6764, %v6092
        %v6813 = vmul.f32 %v6765, %v6093
        %v6814 = vmul.f32 %v6766, %v6094
        %v6815 = vmul.f32 %v6767, %v6095
        %v6816 = vmul.f32 %v6768, %v6096
        %v6817 = vmul.f32 %v6769, %v6097
        %v6818 = vmul.f32 %v6770, %v6098
        %v6819 = vmul.f32 %v6771, %v6099
        %v6820 = vmul.f32 %v6772, %v6100
        %v6821 = vmul.f32 %v6773, %v6101
        %v6822 = vmul.f32 %v6774, %v6102
        %v6823 = vmul.f32 %v6775, %v6103
        %v6824 = vmul.f32 %v6776, %v6104
        %v6825 = vmul.f32 %v6777, %v6105
        %v6826 = vmul.f32 %v6778, %v6106
        %v6827 = vmul.f32 %v6779, 1.442695
        %v6828 = vpow.pop %v6827
        %v6829 = vmul.f32 %v6780, 1.442695
        %v6830 = vpow.pop %v6829
        %v6831 = vmul.f32 %v6781, 1.442695
        %v6832 = vpow.pop %v6831
        %v6833 = vmul.f32 %v6782, 1.442695
        %v6834 = vpow.pop %v6833
        %v6835 = vmul.f32 %v6783, 1.442695
        %v6836 = vpow.pop %v6835
        %v6837 = vmul.f32 %v6784, 1.442695
        %v6838 = vpow.pop %v6837
        %v6839 = vmul.f32 %v6785, 1.442695
        %v6840 = vpow.pop %v6839
        %v6841 = vmul.f32 %v6786, 1.442695
        %v6842 = vpow.pop %v6841
        %v6843 = vmul.f32 %v6787, 1.442695
        %v6844 = vpow.pop %v6843
        %v6845 = vmul.f32 %v6788, 1.442695
        %v6846 = vpow.pop %v6845
        %v6847 = vmul.f32 %v6789, 1.442695
        %v6848 = vpow.pop %v6847
        %v6849 = vmul.f32 %v6790, 1.442695
        %v6850 = vpow.pop %v6849
        %v6851 = vmul.f32 %v6791, 1.442695
        %v6852 = vpow.pop %v6851
        %v6853 = vmul.f32 %v6792, 1.442695
        %v6854 = vpow.pop %v6853
        %v6855 = vmul.f32 %v6793, 1.442695
        %v6856 = vpow.pop %v6855
        %v6857 = vmul.f32 %v6794, 1.442695
        %v6858 = vpow.pop %v6857
        %v6859 = vmul.f32 %v6795, 1.442695
        %v6860 = vpow.pop %v6859
        %v6861 = vmul.f32 %v6796, 1.442695
        %v6862 = vpow.pop %v6861
        %v6863 = vmul.f32 %v6797, 1.442695
        %v6864 = vpow.pop %v6863
        %v6865 = vmul.f32 %v6798, 1.442695
        %v6866 = vpow.pop %v6865
        %v6867 = vmul.f32 %v6799, 1.442695
        %v6868 = vpow.pop %v6867
        %v6869 = vmul.f32 %v6800, 1.442695
        %v6870 = vpow.pop %v6869
        %v6871 = vmul.f32 %v6801, 1.442695
        %v6872 = vpow.pop %v6871
        %v6873 = vmul.f32 %v6802, 1.442695
        %v6874 = vpow.pop %v6873
        %v6875 = vmul.f32 %v6803, 1.442695
        %v6876 = vpow.pop %v6875
        %v6877 = vmul.f32 %v6804, 1.442695
        %v6878 = vpow.pop %v6877
        %v6879 = vmul.f32 %v6805, 1.442695
        %v6880 = vpow.pop %v6879
        %v6881 = vmul.f32 %v6806, 1.442695
        %v6882 = vpow.pop %v6881
        %v6883 = vmul.f32 %v6807, 1.442695
        %v6884 = vpow.pop %v6883
        %v6885 = vmul.f32 %v6808, 1.442695
        %v6886 = vpow.pop %v6885
        %v6887 = vmul.f32 %v6809, 1.442695
        %v6888 = vpow.pop %v6887
        %v6889 = vmul.f32 %v6810, 1.442695
        %v6890 = vpow.pop %v6889
        %v6891 = vmul.f32 %v6811, 1.442695
        %v6892 = vpow.pop %v6891
        %v6893 = vmul.f32 %v6812, 1.442695
        %v6894 = vpow.pop %v6893
        %v6895 = vmul.f32 %v6813, 1.442695
        %v6896 = vpow.pop %v6895
        %v6897 = vmul.f32 %v6814, 1.442695
        %v6898 = vpow.pop %v6897
        %v6899 = vmul.f32 %v6815, 1.442695
        %v6900 = vpow.pop %v6899
        %v6901 = vmul.f32 %v6816, 1.442695
        %v6902 = vpow.pop %v6901
        %v6903 = vmul.f32 %v6817, 1.442695
        %v6904 = vpow.pop %v6903
        %v6905 = vmul.f32 %v6818, 1.442695
        %v6906 = vpow.pop %v6905
        %v6907 = vmul.f32 %v6819, 1.442695
        %v6908 = vpow.pop %v6907
        %v6909 = vmul.f32 %v6820, 1.442695
        %v6910 = vpow.pop %v6909
        %v6911 = vmul.f32 %v6821, 1.442695
        %v6912 = vpow.pop %v6911
        %v6913 = vmul.f32 %v6822, 1.442695
        %v6914 = vpow.pop %v6913
        %v6915 = vmul.f32 %v6823, 1.442695
        %v6916 = vpow.pop %v6915
        %v6917 = vmul.f32 %v6824, 1.442695
        %v6918 = vpow.pop %v6917
        %v6919 = vmul.f32 %v6825, 1.442695
        %v6920 = vpow.pop %v6919
        %v6921 = vmul.f32 %v6826, 1.442695
        %v6922 = vpow.pop %v6921
        %v6923 = vmul.f32 %v6683, %v6828
        %v6924 = vmul.f32 %v6684, %v6830
        %v6925 = vmul.f32 %v6685, %v6832
        %v6926 = vmul.f32 %v6686, %v6834
        %v6927 = vmul.f32 %v6687, %v6836
        %v6928 = vmul.f32 %v6688, %v6838
        %v6929 = vmul.f32 %v6689, %v6840
        %v6930 = vmul.f32 %v6690, %v6842
        %v6931 = vmul.f32 %v6691, %v6844
        %v6932 = vmul.f32 %v6692, %v6846
        %v6933 = vmul.f32 %v6693, %v6848
        %v6934 = vmul.f32 %v6694, %v6850
        %v6935 = vmul.f32 %v6695, %v6852
        %v6936 = vmul.f32 %v6696, %v6854
        %v6937 = vmul.f32 %v6697, %v6856
        %v6938 = vmul.f32 %v6698, %v6858
        %v6939 = vmul.f32 %v6699, %v6860
        %v6940 = vmul.f32 %v6700, %v6862
        %v6941 = vmul.f32 %v6701, %v6864
        %v6942 = vmul.f32 %v6702, %v6866
        %v6943 = vmul.f32 %v6703, %v6868
        %v6944 = vmul.f32 %v6704, %v6870
        %v6945 = vmul.f32 %v6705, %v6872
        %v6946 = vmul.f32 %v6706, %v6874
        %v6947 = vmul.f32 %v6707, %v6876
        %v6948 = vmul.f32 %v6708, %v6878
        %v6949 = vmul.f32 %v6709, %v6880
        %v6950 = vmul.f32 %v6710, %v6882
        %v6951 = vmul.f32 %v6711, %v6884
        %v6952 = vmul.f32 %v6712, %v6886
        %v6953 = vmul.f32 %v6713, %v6888
        %v6954 = vmul.f32 %v6714, %v6890
        %v6955 = vmul.f32 %v6715, %v6892
        %v6956 = vmul.f32 %v6716, %v6894
        %v6957 = vmul.f32 %v6717, %v6896
        %v6958 = vmul.f32 %v6718, %v6898
        %v6959 = vmul.f32 %v6719, %v6900
        %v6960 = vmul.f32 %v6720, %v6902
        %v6961 = vmul.f32 %v6721, %v6904
        %v6962 = vmul.f32 %v6722, %v6906
        %v6963 = vmul.f32 %v6723, %v6908
        %v6964 = vmul.f32 %v6724, %v6910
        %v6965 = vmul.f32 %v6725, %v6912
        %v6966 = vmul.f32 %v6726, %v6914
        %v6967 = vmul.f32 %v6727, %v6916
        %v6968 = vmul.f32 %v6728, %v6918
        %v6969 = vmul.f32 %v6729, %v6920
        %v6970 = vmul.f32 %v6730, %v6922
        %v6971 = vsub.f32 1.0, %v6923
        %v6972 = vsub.f32 1.0, %v6924
        %v6973 = vsub.f32 1.0, %v6925
        %v6974 = vsub.f32 1.0, %v6926
        %v6975 = vsub.f32 1.0, %v6927
        %v6976 = vsub.f32 1.0, %v6928
        %v6977 = vsub.f32 1.0, %v6929
        %v6978 = vsub.f32 1.0, %v6930
        %v6979 = vsub.f32 1.0, %v6931
        %v6980 = vsub.f32 1.0, %v6932
        %v6981 = vsub.f32 1.0, %v6933
        %v6982 = vsub.f32 1.0, %v6934
        %v6983 = vsub.f32 1.0, %v6935
        %v6984 = vsub.f32 1.0, %v6936
        %v6985 = vsub.f32 1.0, %v6937
        %v6986 = vsub.f32 1.0, %v6938
        %v6987 = vsub.f32 1.0, %v6939
        %v6988 = vsub.f32 1.0, %v6940
        %v6989 = vsub.f32 1.0, %v6941
        %v6990 = vsub.f32 1.0, %v6942
        %v6991 = vsub.f32 1.0, %v6943
        %v6992 = vsub.f32 1.0, %v6944
        %v6993 = vsub.f32 1.0, %v6945
        %v6994 = vsub.f32 1.0, %v6946
        %v6995 = vsub.f32 1.0, %v6947
        %v6996 = vsub.f32 1.0, %v6948
        %v6997 = vsub.f32 1.0, %v6949
        %v6998 = vsub.f32 1.0, %v6950
        %v6999 = vsub.f32 1.0, %v6951
        %v7000 = vsub.f32 1.0, %v6952
        %v7001 = vsub.f32 1.0, %v6953
        %v7002 = vsub.f32 1.0, %v6954
        %v7003 = vsub.f32 1.0, %v6955
        %v7004 = vsub.f32 1.0, %v6956
        %v7005 = vsub.f32 1.0, %v6957
        %v7006 = vsub.f32 1.0, %v6958
        %v7007 = vsub.f32 1.0, %v6959
        %v7008 = vsub.f32 1.0, %v6960
        %v7009 = vsub.f32 1.0, %v6961
        %v7010 = vsub.f32 1.0, %v6962
        %v7011 = vsub.f32 1.0, %v6963
        %v7012 = vsub.f32 1.0, %v6964
        %v7013 = vsub.f32 1.0, %v6965
        %v7014 = vsub.f32 1.0, %v6966
        %v7015 = vsub.f32 1.0, %v6967
        %v7016 = vsub.f32 1.0, %v6968
        %v7017 = vsub.f32 1.0, %v6969
        %v7018 = vsub.f32 1.0, %v6970
        %v7019 = vmul.f32 %v6011, %v6971
        %v7020 = vmul.f32 %v6012, %v6972
        %v7021 = vmul.f32 %v6013, %v6973
        %v7022 = vmul.f32 %v6014, %v6974
        %v7023 = vmul.f32 %v6015, %v6975
        %v7024 = vmul.f32 %v6016, %v6976
        %v7025 = vmul.f32 %v6017, %v6977
        %v7026 = vmul.f32 %v6018, %v6978
        %v7027 = vmul.f32 %v6019, %v6979
        %v7028 = vmul.f32 %v6020, %v6980
        %v7029 = vmul.f32 %v6021, %v6981
        %v7030 = vmul.f32 %v6022, %v6982
        %v7031 = vmul.f32 %v6023, %v6983
        %v7032 = vmul.f32 %v6024, %v6984
        %v7033 = vmul.f32 %v6025, %v6985
        %v7034 = vmul.f32 %v6026, %v6986
        %v7035 = vmul.f32 %v6027, %v6987
        %v7036 = vmul.f32 %v6028, %v6988
        %v7037 = vmul.f32 %v6029, %v6989
        %v7038 = vmul.f32 %v6030, %v6990
        %v7039 = vmul.f32 %v6031, %v6991
        %v7040 = vmul.f32 %v6032, %v6992
        %v7041 = vmul.f32 %v6033, %v6993
        %v7042 = vmul.f32 %v6034, %v6994
        %v7043 = vmul.f32 %v6035, %v6995
        %v7044 = vmul.f32 %v6036, %v6996
        %v7045 = vmul.f32 %v6037, %v6997
        %v7046 = vmul.f32 %v6038, %v6998
        %v7047 = vmul.f32 %v6039, %v6999
        %v7048 = vmul.f32 %v6040, %v7000
        %v7049 = vmul.f32 %v6041, %v7001
        %v7050 = vmul.f32 %v6042, %v7002
        %v7051 = vmul.f32 %v6043, %v7003
        %v7052 = vmul.f32 %v6044, %v7004
        %v7053 = vmul.f32 %v6045, %v7005
        %v7054 = vmul.f32 %v6046, %v7006
        %v7055 = vmul.f32 %v6047, %v7007
        %v7056 = vmul.f32 %v6048, %v7008
        %v7057 = vmul.f32 %v6049, %v7009
        %v7058 = vmul.f32 %v6050, %v7010
        %v7059 = vmul.f32 %v6051, %v7011
        %v7060 = vmul.f32 %v6052, %v7012
        %v7061 = vmul.f32 %v6053, %v7013
        %v7062 = vmul.f32 %v6054, %v7014
        %v7063 = vmul.f32 %v6055, %v7015
        %v7064 = vmul.f32 %v6056, %v7016
        %v7065 = vmul.f32 %v6057, %v7017
        %v7066 = vmul.f32 %v6058, %v7018
        %v7067 = vadd.f32 %v7019, 1.0
        %v7068 = vadd.f32 %v7020, 1.0
        %v7069 = vadd.f32 %v7021, 1.0
        %v7070 = vadd.f32 %v7022, 1.0
        %v7071 = vadd.f32 %v7023, 1.0
        %v7072 = vadd.f32 %v7024, 1.0
        %v7073 = vadd.f32 %v7025, 1.0
        %v7074 = vadd.f32 %v7026, 1.0
        %v7075 = vadd.f32 %v7027, 1.0
        %v7076 = vadd.f32 %v7028, 1.0
        %v7077 = vadd.f32 %v7029, 1.0
        %v7078 = vadd.f32 %v7030, 1.0
        %v7079 = vadd.f32 %v7031, 1.0
        %v7080 = vadd.f32 %v7032, 1.0
        %v7081 = vadd.f32 %v7033, 1.0
        %v7082 = vadd.f32 %v7034, 1.0
        %v7083 = vadd.f32 %v7035, 1.0
        %v7084 = vadd.f32 %v7036, 1.0
        %v7085 = vadd.f32 %v7037, 1.0
        %v7086 = vadd.f32 %v7038, 1.0
        %v7087 = vadd.f32 %v7039, 1.0
        %v7088 = vadd.f32 %v7040, 1.0
        %v7089 = vadd.f32 %v7041, 1.0
        %v7090 = vadd.f32 %v7042, 1.0
        %v7091 = vadd.f32 %v7043, 1.0
        %v7092 = vadd.f32 %v7044, 1.0
        %v7093 = vadd.f32 %v7045, 1.0
        %v7094 = vadd.f32 %v7046, 1.0
        %v7095 = vadd.f32 %v7047, 1.0
        %v7096 = vadd.f32 %v7048, 1.0
        %v7097 = vadd.f32 %v7049, 1.0
        %v7098 = vadd.f32 %v7050, 1.0
        %v7099 = vadd.f32 %v7051, 1.0
        %v7100 = vadd.f32 %v7052, 1.0
        %v7101 = vadd.f32 %v7053, 1.0
        %v7102 = vadd.f32 %v7054, 1.0
        %v7103 = vadd.f32 %v7055, 1.0
        %v7104 = vadd.f32 %v7056, 1.0
        %v7105 = vadd.f32 %v7057, 1.0
        %v7106 = vadd.f32 %v7058, 1.0
        %v7107 = vadd.f32 %v7059, 1.0
        %v7108 = vadd.f32 %v7060, 1.0
        %v7109 = vadd.f32 %v7061, 1.0
        %v7110 = vadd.f32 %v7062, 1.0
        %v7111 = vadd.f32 %v7063, 1.0
        %v7112 = vadd.f32 %v7064, 1.0
        %v7113 = vadd.f32 %v7065, 1.0
        %v7114 = vadd.f32 %v7066, 1.0
        %v7115 = vmul.f32 %v5867, %v7067
        %v7116 = vmul.f32 %v5868, %v7068
        %v7117 = vmul.f32 %v5869, %v7069
        %v7118 = vmul.f32 %v5870, %v7070
        %v7119 = vmul.f32 %v5871, %v7071
        %v7120 = vmul.f32 %v5872, %v7072
        %v7121 = vmul.f32 %v5873, %v7073
        %v7122 = vmul.f32 %v5874, %v7074
        %v7123 = vmul.f32 %v5875, %v7075
        %v7124 = vmul.f32 %v5876, %v7076
        %v7125 = vmul.f32 %v5877, %v7077
        %v7126 = vmul.f32 %v5878, %v7078
        %v7127 = vmul.f32 %v5879, %v7079
        %v7128 = vmul.f32 %v5880, %v7080
        %v7129 = vmul.f32 %v5881, %v7081
        %v7130 = vmul.f32 %v5882, %v7082
        %v7131 = vmul.f32 %v5883, %v7083
        %v7132 = vmul.f32 %v5884, %v7084
        %v7133 = vmul.f32 %v5885, %v7085
        %v7134 = vmul.f32 %v5886, %v7086
        %v7135 = vmul.f32 %v5887, %v7087
        %v7136 = vmul.f32 %v5888, %v7088
        %v7137 = vmul.f32 %v5889, %v7089
        %v7138 = vmul.f32 %v5890, %v7090
        %v7139 = vmul.f32 %v5891, %v7091
        %v7140 = vmul.f32 %v5892, %v7092
        %v7141 = vmul.f32 %v5893, %v7093
        %v7142 = vmul.f32 %v5894, %v7094
        %v7143 = vmul.f32 %v5895, %v7095
        %v7144 = vmul.f32 %v5896, %v7096
        %v7145 = vmul.f32 %v5897, %v7097
        %v7146 = vmul.f32 %v5898, %v7098
        %v7147 = vmul.f32 %v5899, %v7099
        %v7148 = vmul.f32 %v5900, %v7100
        %v7149 = vmul.f32 %v5901, %v7101
        %v7150 = vmul.f32 %v5902, %v7102
        %v7151 = vmul.f32 %v5903, %v7103
        %v7152 = vmul.f32 %v5904, %v7104
        %v7153 = vmul.f32 %v5905, %v7105
        %v7154 = vmul.f32 %v5906, %v7106
        %v7155 = vmul.f32 %v5907, %v7107
        %v7156 = vmul.f32 %v5908, %v7108
        %v7157 = vmul.f32 %v5909, %v7109
        %v7158 = vmul.f32 %v5910, %v7110
        %v7159 = vmul.f32 %v5911, %v7111
        %v7160 = vmul.f32 %v5912, %v7112
        %v7161 = vmul.f32 %v5913, %v7113
        %v7162 = vmul.f32 %v5914, %v7114
        %v7163 = vpack.c.bf16 %v7139, %v7115
        %v7164 = vpack.c.bf16 %v7140, %v7116
        %v7165 = vpack.c.bf16 %v7141, %v7117
        %v7166 = vpack.c.bf16 %v7142, %v7118
        %v7167 = vpack.c.bf16 %v7143, %v7119
        %v7168 = vpack.c.bf16 %v7144, %v7120
        %v7169 = vpack.c.bf16 %v7145, %v7121
        %v7170 = vpack.c.bf16 %v7146, %v7122
        %v7171 = vpack.c.bf16 %v7147, %v7123
        %v7172 = vpack.c.bf16 %v7148, %v7124
        %v7173 = vpack.c.bf16 %v7149, %v7125
        %v7174 = vpack.c.bf16 %v7150, %v7126
        %v7175 = vpack.c.bf16 %v7151, %v7127
        %v7176 = vpack.c.bf16 %v7152, %v7128
        %v7177 = vpack.c.bf16 %v7153, %v7129
        %v7178 = vpack.c.bf16 %v7154, %v7130
        %v7179 = vpack.c.bf16 %v7155, %v7131
        %v7180 = vpack.c.bf16 %v7156, %v7132
        %v7181 = vpack.c.bf16 %v7157, %v7133
        %v7182 = vpack.c.bf16 %v7158, %v7134
        %v7183 = vpack.c.bf16 %v7159, %v7135
        %v7184 = vpack.c.bf16 %v7160, %v7136
        %v7185 = vpack.c.bf16 %v7161, %v7137
        %v7186 = vpack.c.bf16 %v7162, %v7138
        %v7211 = vunpack.c.l.b16 %v7163
        %v7212 = vunpack.c.l.b16 %v7164
        %v7213 = vunpack.c.l.b16 %v7165
        %v7214 = vunpack.c.l.b16 %v7166
        %v7215 = vunpack.c.l.b16 %v7167
        %v7216 = vunpack.c.l.b16 %v7168
        %v7217 = vunpack.c.l.b16 %v7169
        %v7218 = vunpack.c.l.b16 %v7170
        %v7219 = vunpack.c.l.b16 %v7171
        %v7220 = vunpack.c.l.b16 %v7172
        %v7221 = vunpack.c.l.b16 %v7173
        %v7222 = vunpack.c.l.b16 %v7174
        %v7223 = vunpack.c.l.b16 %v7175
        %v7224 = vunpack.c.l.b16 %v7176
        %v7225 = vunpack.c.l.b16 %v7177
        %v7226 = vunpack.c.l.b16 %v7178
        %v7227 = vunpack.c.l.b16 %v7179
        %v7228 = vunpack.c.l.b16 %v7180
        %v7229 = vunpack.c.l.b16 %v7181
        %v7230 = vunpack.c.l.b16 %v7182
        %v7231 = vunpack.c.l.b16 %v7183
        %v7232 = vunpack.c.l.b16 %v7184
        %v7233 = vunpack.c.l.b16 %v7185
        %v7234 = vunpack.c.l.b16 %v7186
        %v7235 = vunpack.c.h.b16 %v7163
        %v7236 = vunpack.c.h.b16 %v7164
        %v7237 = vunpack.c.h.b16 %v7165
        %v7238 = vunpack.c.h.b16 %v7166
        %v7239 = vunpack.c.h.b16 %v7167
        %v7240 = vunpack.c.h.b16 %v7168
        %v7241 = vunpack.c.h.b16 %v7169
        %v7242 = vunpack.c.h.b16 %v7170
        %v7243 = vunpack.c.h.b16 %v7171
        %v7244 = vunpack.c.h.b16 %v7172
        %v7245 = vunpack.c.h.b16 %v7173
        %v7246 = vunpack.c.h.b16 %v7174
        %v7247 = vunpack.c.h.b16 %v7175
        %v7248 = vunpack.c.h.b16 %v7176
        %v7249 = vunpack.c.h.b16 %v7177
        %v7250 = vunpack.c.h.b16 %v7178
        %v7251 = vunpack.c.h.b16 %v7179
        %v7252 = vunpack.c.h.b16 %v7180
        %v7253 = vunpack.c.h.b16 %v7181
        %v7254 = vunpack.c.h.b16 %v7182
        %v7255 = vunpack.c.h.b16 %v7183
        %v7256 = vunpack.c.h.b16 %v7184
        %v7257 = vunpack.c.h.b16 %v7185
        %v7258 = vunpack.c.h.b16 %v7186
        %v7259 = vpack.c.b16 %v7212, %v7211
        %v7260 = vpack.c.b16 %v7214, %v7213
        %v7261 = vpack.c.b16 %v7216, %v7215
        %v7262 = vpack.c.b16 %v7218, %v7217
        %v7263 = vpack.c.b16 %v7220, %v7219
        %v7264 = vpack.c.b16 %v7222, %v7221
        %v7265 = vpack.c.b16 %v7224, %v7223
        %v7266 = vpack.c.b16 %v7226, %v7225
        %v7267 = vpack.c.b16 %v7228, %v7227
        %v7268 = vpack.c.b16 %v7230, %v7229
        %v7269 = vpack.c.b16 %v7232, %v7231
        %v7270 = vpack.c.b16 %v7234, %v7233
        %v7271 = vpack.c.b16 %v7236, %v7235
        %v7272 = vpack.c.b16 %v7238, %v7237
        %v7273 = vpack.c.b16 %v7240, %v7239
        %v7274 = vpack.c.b16 %v7242, %v7241
        %v7275 = vpack.c.b16 %v7244, %v7243
        %v7276 = vpack.c.b16 %v7246, %v7245
        %v7277 = vpack.c.b16 %v7248, %v7247
        %v7278 = vpack.c.b16 %v7250, %v7249
        %v7279 = vpack.c.b16 %v7252, %v7251
        %v7280 = vpack.c.b16 %v7254, %v7253
        %v7281 = vpack.c.b16 %v7256, %v7255
        %v7282 = vpack.c.b16 %v7258, %v7257
        %7307 = vst [vmem:[%s304] sm:$0xff] %v7259
        %7308 = vst [vmem:[%s304 + $0x8] sm:$0xff] %v7260
        %7309 = vst [vmem:[%s304 + $0x10] sm:$0xff] %v7261
        %7310 = vst [vmem:[%s304 + $0x18] sm:$0xff] %v7262
        %7311 = vst [vmem:[%s304 + $0x20] sm:$0xff] %v7263
        %7312 = vst [vmem:[%s304 + $0x28] sm:$0xff] %v7264
        %7313 = vst [vmem:[%s304 + $0x30] sm:$0xff] %v7265
        %7314 = vst [vmem:[%s304 + $0x38] sm:$0xff] %v7266
        %7315 = vst [vmem:[%s304 + $0x40] sm:$0xff] %v7267
        %7316 = vst [vmem:[%s304 + $0x48] sm:$0xff] %v7268
        %7317 = vst [vmem:[%s304 + $0x50] sm:$0xff] %v7269
        %7318 = vst [vmem:[%s304 + $0x58] sm:$0xff] %v7270
        %7319 = vst [vmem:[%s304 + $0x60] sm:$0xff] %v7271
        %7320 = vst [vmem:[%s304 + $0x68] sm:$0xff] %v7272
        %7321 = vst [vmem:[%s304 + $0x70] sm:$0xff] %v7273
        %7322 = vst [vmem:[%s304 + $0x78] sm:$0xff] %v7274
        %7323 = vst [vmem:[%s304 + $0x80] sm:$0xff] %v7275
        %7324 = vst [vmem:[%s304 + $0x88] sm:$0xff] %v7276
        %7325 = vst [vmem:[%s304 + $0x90] sm:$0xff] %v7277
        %7326 = vst [vmem:[%s304 + $0x98] sm:$0xff] %v7278
        %7327 = vst [vmem:[%s304 + $0xa0] sm:$0xff] %v7279
        %7328 = vst [vmem:[%s304 + $0xa8] sm:$0xff] %v7280
        %7329 = vst [vmem:[%s304 + $0xb0] sm:$0xff] %v7281
        %7330 = vst [vmem:[%s304 + $0xb8] sm:$0xff] %v7282
        %s7331 = sand.u32 %s148, 1
        %s7332 = scalar_lea.sflag [#allocation6], %s7331
        %s7333 = sand.u32 %s148, 1
        %s7334 = smul.addr %s7333, 192
        %s7335 = scalar_lea.vmem [#allocation10], %s7334
        // Predicated region
        $region49: #{tpu_custom_call.1} parent=35 // pred_check
          %p7336 = pneg %p158
        $region50: #{tpu_custom_call.1} parent=35 // pred_check_branch
          %7338 = sbr.rel (%p7336) target = $region52
        $region51: #{tpu_custom_call.1} parent=35 // pred_region
          %s7339 = smul.u32 24, %s29
          %s7341 = ssub.s32 3072, 3072
          %7342 = vsyncadd %s7332, %s7341
          %s7343 = smul.addr %s28, 48
          %s7344 = sadd.s32 %s7339, %s7343
          %s7345 = smul.addr %s7344, 64
          %s7346 = scalar_lea.hbm %s4, %s7345
          %s7347 = sshll.u32 %s7335, 4
          %s7348 = int_to_ptr.vmem [resolvable:$true] %s7347
          %7353 = dma.vmem_to_hbm [thread:$0]  %s7348, 3072, %s7346, %s7332, 1536, 1536, 96
        $region52: #{tpu_custom_call.1} parent=35 // pred_fallthru
          _
      $region36: #{tpu_custom_call.1} parent=5 // pred_fallthru
        _
      %p7354 = scmp.le.s32.totalorder 2, %s19
      // Predicated region
      $region53: #{tpu_custom_call.1} parent=5 // pred_check
        %p7355 = pneg %p7354
      $region54: #{tpu_custom_call.1} parent=5 // pred_check_branch
        %7357 = sbr.rel (%p7355) target = $region56
      $region55: #{tpu_custom_call.1} parent=5 // pred_region
        %s7358 = ssub.s32 %s19, 2
        // Predicated region
        $region57: #{tpu_custom_call.1} parent=55 // pred_check
          %p7359 = pneg %p164
        $region58: #{tpu_custom_call.1} parent=55 // pred_check_branch
          %7361 = sbr.rel (%p7359) target = $region60
        $region59: #{tpu_custom_call.1} parent=55 // pred_region
          %s7362 = sand.u32 %s149, 1
          %s7363 = scalar_lea.sflag [#allocation6], %s7362
          %s7364 = sand.u32 %s149, 1
          %s7365 = smul.addr %s7364, 192
          %s7366 = scalar_lea.vmem [#allocation10], %s7365
          %7367 = dma.done %s7363, 3072
        $region60: #{tpu_custom_call.1} parent=55 // pred_fallthru
          _
      $region56: #{tpu_custom_call.1} parent=5 // pred_fallthru
        _
    $region6: #{tpu_custom_call.1} parent=1 // loop_footer
      %s23 = sadd.s32 1, %s19
    $region7: #{tpu_custom_call.1} parent=1 // loop_footer_branch
      %18 = sbr.rel target = $region3
    $region8: #{tpu_custom_call.1} parent=1 // loop_exit
      _
    %7368 = vsyncpa [#allocation5], 1
    %s7369 = scalar_lea.sflag [#allocation5], 1
    %7370 = vsyncpa %s7369, 1
    %7371 = vsyncpa [#allocation8], 1
    %s7372 = scalar_lea.sflag [#allocation8], 1
    %7373 = vsyncpa %s7372, 1
    %7374 = vsyncpa [#allocation6], 1
    %s7375 = scalar_lea.sflag [#allocation6], 1
    %7376 = vsyncpa %s7375, 1

</llo_original>
